<compile_context>
chip_gen: v7x
topology: tpu7x:2x2x1
jax: 0.10.0
libtpu: 0.0.40
codegen_flags: <defaults>
</compile_context>

<pallas_src>
import functools

import jax
import jax.numpy as jnp
from jax.experimental import pallas as pl
from jax.experimental.pallas import tpu as pltpu

_LANE = 128   # pad K and Cout to a multiple of this (lane-dense loads/stores)
_TM = 256     # rows per M tile


def _round_up(x, m):
    return (x + m - 1) // m * m


# ----------------------------------------------------------------------------
# Pallas kernel: single matmul + fused scale/shift (+ ReLU)
# ----------------------------------------------------------------------------
def _mm_kernel(x_ref, w_ref, scale_ref, shift_ref, out_ref, *, apply_relu):
    # x_ref: (1, tm, Kp) bf16; w_ref: (1, Kp, Coutp) bf16
    # scale/shift: (1, Coutp) f32;  out_ref: (1, tm, Coutp) f32/bf16
    y = jnp.dot(x_ref[0], w_ref[0], preferred_element_type=jnp.float32)
    y = y * scale_ref[...] + shift_ref[...]
    if apply_relu:
        y = jnp.maximum(y, 0.0)
    out_ref[0] = y.astype(out_ref.dtype)


def fused_matmul_bias_act(x, w, scale, shift, relu, out_dtype=jnp.float32):
    """x: (P, M, K), w: (P, K, Cout), scale/shift: (Cout,) -> (P, M, Cout)."""
    P, M, K = x.shape
    Cout = w.shape[-1]
    Kp = _round_up(K, _LANE)
    Coutp = _round_up(Cout, _LANE)
    tm = _TM if M > _TM else _round_up(M, 16)   # 16: bf16 sublane packing
    Mp = _round_up(M, tm)

    xb = jnp.pad(x.astype(jnp.bfloat16), ((0, 0), (0, Mp - M), (0, Kp - K)))
    wb = jnp.pad(w.astype(jnp.bfloat16), ((0, 0), (0, Kp - K), (0, Coutp - Cout)))
    scale = jnp.pad(scale.astype(jnp.float32), (0, Coutp - Cout)).reshape(1, Coutp)
    shift = jnp.pad(shift.astype(jnp.float32), (0, Coutp - Cout)).reshape(1, Coutp)

    out = pl.pallas_call(
        functools.partial(_mm_kernel, apply_relu=relu),
        out_shape=jax.ShapeDtypeStruct((P, Mp, Coutp), out_dtype),
        grid_spec=pltpu.PrefetchScalarGridSpec(
            num_scalar_prefetch=0,
            grid=(P, Mp // tm),
            in_specs=[
                pl.BlockSpec((1, tm, Kp), lambda p, i: (p, i, 0)),
                pl.BlockSpec((1, Kp, Coutp), lambda p, i: (p, 0, 0)),
                pl.BlockSpec((1, Coutp), lambda p, i: (0, 0)),
                pl.BlockSpec((1, Coutp), lambda p, i: (0, 0)),
            ],
            out_specs=pl.BlockSpec((1, tm, Coutp), lambda p, i: (p, i, 0)),
        ),
        compiler_params=pltpu.CompilerParams(
            dimension_semantics=("parallel", "parallel")),
    )(xb, wb, scale, shift)
    return out[:, :M, :Cout]


# ----------------------------------------------------------------------------
# Conv wrappers (im2col glue: pad / slice / concat only)
# ----------------------------------------------------------------------------
def conv2d(x, w, scale, shift, *, stride=1, pad=1, relu=True,
           out_dtype=jnp.float32):
    """x: NHWC, w: (kh, kw, Cin, Cout). Cross-correlation, matching nn.Conv2d."""
    k = w.shape[0]
    N, H, W, Cin = x.shape
    Cout = w.shape[-1]
    Ho = (H + 2 * pad - k) // stride + 1
    Wo = (W + 2 * pad - k) // stride + 1
    xb = x.astype(jnp.bfloat16)
    if pad:
        xb = jnp.pad(xb, ((0, 0), (pad, pad), (pad, pad), (0, 0)))
    taps = []
    for i in range(k):
        for j in range(k):
            taps.append(xb[:, i:i + stride * Ho:stride, j:j + stride * Wo:stride, :])
    x_im = jnp.concatenate(taps, axis=-1).reshape(1, N * Ho * Wo, k * k * Cin)
    w_im = w.reshape(1, k * k * Cin, Cout)          # rows ordered (i, j, ci)
    out = fused_matmul_bias_act(x_im, w_im, scale, shift, relu, out_dtype)
    return out[0].reshape(N, Ho, Wo, Cout)


def conv_transpose2d(x, w_t, scale, shift, *, relu=True, out_dtype=jnp.float32):
    """nn.ConvTranspose2d(k=4, s=2, p=1, bias=False), sub-pixel decomposition.

    x: NHWC, w_t: PyTorch layout (Cin, Cout, 4, 4).
    Output parity (py, px) is a 2x2 stride-1 conv of the un-dilated input with
    the flipped sub-kernel taps dy in {py, py+2}, dx in {px, px+2}; the four
    parity planes are interleaved to (N, 2H, 2W, Cout).
    """
    N, H, W, Cin = x.shape
    Cout = w_t.shape[1]
    xb = jnp.pad(x.astype(jnp.bfloat16), ((0, 0), (1, 1), (1, 1), (0, 0)))
    patches, wsubs = [], []
    for py in range(2):
        for px in range(2):
            taps, wt = [], []
            for ty in range(2):
                for tx in range(2):
                    taps.append(xb[:, py + ty:py + ty + H, px + tx:px + tx + W, :])
                    dy, dx = py + 2 * ty, px + 2 * tx
                    wt.append(w_t[:, :, 3 - dy, 3 - dx])       # (Cin, Cout), flipped tap
            patches.append(
                jnp.concatenate(taps, axis=-1).reshape(N * H * W, 4 * Cin))
            wsubs.append(jnp.concatenate(wt, axis=0))           # (4*Cin, Cout)
    x_im = jnp.stack(patches, axis=0)                            # (4, M, 4*Cin)
    w_im = jnp.stack(wsubs, axis=0)                              # (4, 4*Cin, Cout)
    out = fused_matmul_bias_act(x_im, w_im, scale, shift, relu, out_dtype)
    out = out.reshape(2, 2, N, H, W, Cout)
    out = jnp.transpose(out, (2, 3, 0, 4, 1, 5)).reshape(N, 2 * H, 2 * W, Cout)
    return out


def _conv_bn_relu(x, p, *, stride):
    return conv2d(x, p["w"], p["scale"], p["shift"], stride=stride, pad=1,
                  relu=True, out_dtype=jnp.bfloat16)


def _convt_bn_relu(x, p):
    return conv_transpose2d(x, p["w"], p["scale"], p["shift"], relu=True,
                            out_dtype=jnp.bfloat16)


# ----------------------------------------------------------------------------
# Parameter initialization (deterministic, synthetic)
# ----------------------------------------------------------------------------
def init_params(key, in_channels, condition_channels):
    hd = [64, 128]
    ic = in_channels + condition_channels
    keys = iter(jax.random.split(key, 128))

    def bn_fold(cout):
        gamma = 1.0 + 0.1 * jax.random.normal(next(keys), (cout,), jnp.float32)
        beta = 0.1 * jax.random.normal(next(keys), (cout,), jnp.float32)
        mean = 0.1 * jax.random.normal(next(keys), (cout,), jnp.float32)
        var = jnp.abs(1.0 + 0.1 * jax.random.normal(next(keys), (cout,), jnp.float32))
        scale = gamma / jnp.sqrt(var + 1e-5)
        shift = beta - mean * scale
        return scale, shift

    def conv_bn(cin, cout, k=3):
        w = 0.05 * jax.random.normal(next(keys), (k, k, cin, cout), jnp.float32)
        scale, shift = bn_fold(cout)
        return {"w": w, "scale": scale, "shift": shift}

    def convt_bn(cin, cout, k=4):
        # PyTorch ConvTranspose2d weight layout: (Cin, Cout, kH, kW)
        w = 0.05 * jax.random.normal(next(keys), (cin, cout, k, k), jnp.float32)
        scale, shift = bn_fold(cout)
        return {"w": w, "scale": scale, "shift": shift}

    cc = condition_channels
    params = {
        "decoder_input0": conv_bn(hd[1] * 2, hd[1] * 2),
        "decoder_input1": conv_bn(hd[0] * 2, hd[0] * 2),
        "decoder_input2": conv_bn(ic, ic),
        "decconv1": convt_bn(hd[1] * 2, hd[1]),
        "decconv2": convt_bn(hd[1] * 2, ic),
        "final": {
            "w": 0.05 * jax.random.normal(next(keys), (3, 3, 2 * ic, in_channels),
                                          jnp.float32),
            "scale": jnp.ones((in_channels,), jnp.float32),
            "shift": jnp.zeros((in_channels,), jnp.float32),
        },
        "embed_class0": {
            "w": 0.05 * jax.random.normal(next(keys), (1, 1, cc, cc), jnp.float32),
            "b": 0.05 * jax.random.normal(next(keys), (cc,), jnp.float32),
        },
        "embed_class1": conv_bn(cc, hd[0]),
        "embed_class2": conv_bn(hd[0], hd[1]),
    }
    return params


# ----------------------------------------------------------------------------
# Decoder forward (semantics of Decoder.forward)
# ----------------------------------------------------------------------------
def decoder_forward(params, z0, z1, z2, y):
    # Inputs are NCHW (PyTorch convention); compute in NHWC / bf16 activations
    # (every conv casts its input to bf16 anyway, so casting once up-front is
    # numerically identical and saves HBM traffic on the concats).
    to_nhwc = lambda a: jnp.transpose(a, (0, 2, 3, 1)).astype(jnp.bfloat16)
    z0, z1, z2, y = map(to_nhwc, (z0, z1, z2, y))

    cc = params["embed_class0"]["b"].shape[0]
    # embed_class0: 1x1 conv with bias (no BN / ReLU)
    e0 = conv2d(y, params["embed_class0"]["w"],
                jnp.ones((cc,), jnp.float32), params["embed_class0"]["b"],
                stride=1, pad=0, relu=False, out_dtype=jnp.bfloat16)
    e1 = _conv_bn_relu(e0, params["embed_class1"], stride=2)
    e2 = _conv_bn_relu(e1, params["embed_class2"], stride=2)

    z0c = jnp.concatenate([z0, e2], axis=-1)
    z1c = jnp.concatenate([z1, e1], axis=-1)
    z2c = jnp.concatenate([z2, e0], axis=-1)

    # decode()
    r0 = _conv_bn_relu(z0c, params["decoder_input0"], stride=1)
    r0 = _convt_bn_relu(r0, params["decconv1"])
    r1 = _conv_bn_relu(z1c, params["decoder_input1"], stride=1)
    r1 = jnp.concatenate([r1, r0], axis=-1)
    r1 = _convt_bn_relu(r1, params["decconv2"])
    r2 = _conv_bn_relu(z2c, params["decoder_input2"], stride=1)
    r2 = jnp.concatenate([r2, r1], axis=-1)
    out = conv2d(r2, params["final"]["w"], params["final"]["scale"],
                 params["final"]["shift"], stride=1, pad=1, relu=False,
                 out_dtype=jnp.float32)

    return jnp.transpose(out, (0, 3, 1, 2))  # back to NCHW


if __name__ == "__main__":
    in_channels = 4
    condition_channels = 4
    B, H, W = 2, 16, 16

    key = jax.random.PRNGKey(0)
    kp, k0, k1, k2, ky = jax.random.split(key, 5)
    params = init_params(kp, in_channels, condition_channels)

    # Shapes implied by forward(): z0 at H/4 with 256-in channels path (128 ch),
    # z1 at H/2 with 64 ch, z2 at full res with in_channels, y at full res with
    # condition_channels.
    z0 = jax.random.normal(k0, (B, 128, H // 4, W // 4), jnp.float32)
    z1 = jax.random.normal(k1, (B, 64, H // 2, W // 2), jnp.float32)
    z2 = jax.random.normal(k2, (B, in_channels, H, W), jnp.float32)
    y = jax.random.normal(ky, (B, condition_channels, H, W), jnp.float32)

    recon = jax.jit(decoder_forward)(params, z0, z1, z2, y)
    recon = jax.block_until_ready(recon)
    assert recon.shape == (B, in_channels, H, W), recon.shape
    assert jnp.isfinite(recon).all()
    print("KERNEL_OK")
</pallas_src>

<mosaic_0001>
module attributes {stable_mosaic.version = 11 : i64} {
  func.func @_mm_kernel(%arg0: i32, %arg1: i32, %arg2: memref<1x256x128xbf16, #tpu.memory_space<vmem>>, %arg3: memref<1x128x128xbf16, #tpu.memory_space<vmem>>, %arg4: memref<1x128xf32, #tpu.memory_space<vmem>>, %arg5: memref<1x128xf32, #tpu.memory_space<vmem>>, %arg6: memref<1x256x128xbf16, #tpu.memory_space<vmem>>) attributes {dimension_semantics = [#tpu.dimension_semantics<parallel>, #tpu.dimension_semantics<parallel>], iteration_bounds = array<i64: 1, 2>, scalar_prefetch = 0 : i64, scratch_operands = 0 : i64, tpu.core_type = #tpu.core_type<tc>, window_params = [{transform_indices = @transform_0, window_bounds = array<i64: 1, 256, 128>}, {transform_indices = @transform_1, window_bounds = array<i64: 1, 128, 128>}, {pipeline_mode = #tpu.pipeline_mode<synchronous>, transform_indices = @transform_2, window_bounds = array<i64: 1, 128>}, {pipeline_mode = #tpu.pipeline_mode<synchronous>, transform_indices = @transform_3, window_bounds = array<i64: 1, 128>}, {transform_indices = @transform_4, window_bounds = array<i64: 1, 256, 128>}]} {
    %c0 = arith.constant 0 : index
    %c0_0 = arith.constant 0 : index
    %c0_1 = arith.constant 0 : index
    %0 = vector.load %arg2[%c0, %c0_0, %c0_1] : memref<1x256x128xbf16, #tpu.memory_space<vmem>>, vector<1x256x128xbf16>
    %1 = vector.shape_cast %0 : vector<1x256x128xbf16> to vector<256x128xbf16>
    %c0_2 = arith.constant 0 : index
    %c0_3 = arith.constant 0 : index
    %c0_4 = arith.constant 0 : index
    %2 = vector.load %arg3[%c0_2, %c0_3, %c0_4] : memref<1x128x128xbf16, #tpu.memory_space<vmem>>, vector<1x128x128xbf16>
    %3 = vector.shape_cast %2 : vector<1x128x128xbf16> to vector<128x128xbf16>
    %cst = arith.constant dense<0.000000e+00> : vector<256x128xf32>
    %4 = tpu.matmul %1, %3, %cst {dimension_numbers = #tpu.dot_dimension_numbers<[1], [0], [0], [1], [0, 0, 1, 1], [], []>} : vector<256x128xbf16>, vector<128x128xbf16>, vector<256x128xf32> -> vector<256x128xf32>
    %c0_5 = arith.constant 0 : index
    %c0_6 = arith.constant 0 : index
    %5 = vector.load %arg4[%c0_5, %c0_6] : memref<1x128xf32, #tpu.memory_space<vmem>>, vector<1x128xf32>
    %6 = vector.broadcast %5 : vector<1x128xf32> to vector<256x128xf32>
    %7 = arith.mulf %4, %6 : vector<256x128xf32>
    %c0_7 = arith.constant 0 : index
    %c0_8 = arith.constant 0 : index
    %8 = vector.load %arg5[%c0_7, %c0_8] : memref<1x128xf32, #tpu.memory_space<vmem>>, vector<1x128xf32>
    %9 = vector.broadcast %8 : vector<1x128xf32> to vector<256x128xf32>
    %10 = arith.addf %7, %9 : vector<256x128xf32>
    %11 = arith.truncf %10 : vector<256x128xf32> to vector<256x128xbf16>
    %c0_9 = arith.constant 0 : index
    %c0_10 = arith.constant 0 : index
    %c0_11 = arith.constant 0 : index
    %12 = vector.load %arg6[%c0_9, %c0_10, %c0_11] : memref<1x256x128xbf16, #tpu.memory_space<vmem>>, vector<1x256x128xbf16>
    %13 = vector.shape_cast %12 : vector<1x256x128xbf16> to vector<256x128xbf16>
    %14 = vector.shape_cast %11 : vector<256x128xbf16> to vector<1x256x128xbf16>
    tpu.vector_store %arg6[%c0_9, %c0_10, %c0_11], %14 {strides = array<i32>} : memref<1x256x128xbf16, #tpu.memory_space<vmem>>, vector<1x256x128xbf16>,
    return
  }
  func.func @transform_0(%arg0: i32, %arg1: i32) -> (i32, i32, i32) {
    %c0_i32 = arith.constant 0 : i32
    %c0_i32_0 = arith.constant 0 : i32
    return %arg0, %arg1, %c0_i32 : i32, i32, i32
  }
  func.func @transform_1(%arg0: i32, %arg1: i32) -> (i32, i32, i32) {
    %c0_i32 = arith.constant 0 : i32
    %c0_i32_0 = arith.constant 0 : i32
    %c0_i32_1 = arith.constant 0 : i32
    return %arg0, %c0_i32, %c0_i32_0 : i32, i32, i32
  }
  func.func @transform_2(%arg0: i32, %arg1: i32) -> (i32, i32) {
    %c0_i32 = arith.constant 0 : i32
    %c0_i32_0 = arith.constant 0 : i32
    %c0_i32_1 = arith.constant 0 : i32
    return %c0_i32, %c0_i32_0 : i32, i32
  }
  func.func @transform_3(%arg0: i32, %arg1: i32) -> (i32, i32) {
    %c0_i32 = arith.constant 0 : i32
    %c0_i32_0 = arith.constant 0 : i32
    %c0_i32_1 = arith.constant 0 : i32
    return %c0_i32, %c0_i32_0 : i32, i32
  }
  func.func @transform_4(%arg0: i32, %arg1: i32) -> (i32, i32, i32) {
    %c0_i32 = arith.constant 0 : i32
    %c0_i32_0 = arith.constant 0 : i32
    return %arg0, %arg1, %c0_i32 : i32, i32, i32
  }
}

module attributes {stable_mosaic.version = 11 : i64} {
  func.func @_mm_kernel(%arg0: i32, %arg1: i32, %arg2: memref<1x128x128xbf16, #tpu.memory_space<vmem>>, %arg3: memref<1x128x128xbf16, #tpu.memory_space<vmem>>, %arg4: memref<1x128xf32, #tpu.memory_space<vmem>>, %arg5: memref<1x128xf32, #tpu.memory_space<vmem>>, %arg6: memref<1x128x128xbf16, #tpu.memory_space<vmem>>) attributes {dimension_semantics = [#tpu.dimension_semantics<parallel>, #tpu.dimension_semantics<parallel>], iteration_bounds = array<i64: 1, 1>, scalar_prefetch = 0 : i64, scratch_operands = 0 : i64, tpu.core_type = #tpu.core_type<tc>, window_params = [{transform_indices = @transform_0, window_bounds = array<i64: 1, 128, 128>}, {transform_indices = @transform_1, window_bounds = array<i64: 1, 128, 128>}, {pipeline_mode = #tpu.pipeline_mode<synchronous>, transform_indices = @transform_2, window_bounds = array<i64: 1, 128>}, {pipeline_mode = #tpu.pipeline_mode<synchronous>, transform_indices = @transform_3, window_bounds = array<i64: 1, 128>}, {transform_indices = @transform_4, window_bounds = array<i64: 1, 128, 128>}]} {
    %c0 = arith.constant 0 : index
    %c0_0 = arith.constant 0 : index
    %c0_1 = arith.constant 0 : index
    %0 = vector.load %arg2[%c0, %c0_0, %c0_1] : memref<1x128x128xbf16, #tpu.memory_space<vmem>>, vector<1x128x128xbf16>
    %1 = vector.shape_cast %0 : vector<1x128x128xbf16> to vector<128x128xbf16>
    %c0_2 = arith.constant 0 : index
    %c0_3 = arith.constant 0 : index
    %c0_4 = arith.constant 0 : index
    %2 = vector.load %arg3[%c0_2, %c0_3, %c0_4] : memref<1x128x128xbf16, #tpu.memory_space<vmem>>, vector<1x128x128xbf16>
    %3 = vector.shape_cast %2 : vector<1x128x128xbf16> to vector<128x128xbf16>
    %cst = arith.constant dense<0.000000e+00> : vector<128x128xf32>
    %4 = tpu.matmul %1, %3, %cst {dimension_numbers = #tpu.dot_dimension_numbers<[1], [0], [0], [1], [0, 0, 1, 1], [], []>} : vector<128x128xbf16>, vector<128x128xbf16>, vector<128x128xf32> -> vector<128x128xf32>
    %c0_5 = arith.constant 0 : index
    %c0_6 = arith.constant 0 : index
    %5 = vector.load %arg4[%c0_5, %c0_6] : memref<1x128xf32, #tpu.memory_space<vmem>>, vector<1x128xf32>
    %6 = vector.broadcast %5 : vector<1x128xf32> to vector<128x128xf32>
    %7 = arith.mulf %4, %6 : vector<128x128xf32>
    %c0_7 = arith.constant 0 : index
    %c0_8 = arith.constant 0 : index
    %8 = vector.load %arg5[%c0_7, %c0_8] : memref<1x128xf32, #tpu.memory_space<vmem>>, vector<1x128xf32>
    %9 = vector.broadcast %8 : vector<1x128xf32> to vector<128x128xf32>
    %10 = arith.addf %7, %9 : vector<128x128xf32>
    %cst_9 = arith.constant 0.000000e+00 : f32
    %11 = vector.broadcast %cst_9 : f32 to vector<128x128xf32>
    %12 = arith.maximumf %10, %11 : vector<128x128xf32>
    %13 = arith.truncf %12 : vector<128x128xf32> to vector<128x128xbf16>
    %c0_10 = arith.constant 0 : index
    %c0_11 = arith.constant 0 : index
    %c0_12 = arith.constant 0 : index
    %14 = vector.load %arg6[%c0_10, %c0_11, %c0_12] : memref<1x128x128xbf16, #tpu.memory_space<vmem>>, vector<1x128x128xbf16>
    %15 = vector.shape_cast %14 : vector<1x128x128xbf16> to vector<128x128xbf16>
    %16 = vector.shape_cast %13 : vector<128x128xbf16> to vector<1x128x128xbf16>
    tpu.vector_store %arg6[%c0_10, %c0_11, %c0_12], %16 {strides = array<i32>} : memref<1x128x128xbf16, #tpu.memory_space<vmem>>, vector<1x128x128xbf16>,
    return
  }
  func.func @transform_0(%arg0: i32, %arg1: i32) -> (i32, i32, i32) {
    %c0_i32 = arith.constant 0 : i32
    %c0_i32_0 = arith.constant 0 : i32
    return %arg0, %arg1, %c0_i32 : i32, i32, i32
  }
  func.func @transform_1(%arg0: i32, %arg1: i32) -> (i32, i32, i32) {
    %c0_i32 = arith.constant 0 : i32
    %c0_i32_0 = arith.constant 0 : i32
    %c0_i32_1 = arith.constant 0 : i32
    return %arg0, %c0_i32, %c0_i32_0 : i32, i32, i32
  }
  func.func @transform_2(%arg0: i32, %arg1: i32) -> (i32, i32) {
    %c0_i32 = arith.constant 0 : i32
    %c0_i32_0 = arith.constant 0 : i32
    %c0_i32_1 = arith.constant 0 : i32
    return %c0_i32, %c0_i32_0 : i32, i32
  }
  func.func @transform_3(%arg0: i32, %arg1: i32) -> (i32, i32) {
    %c0_i32 = arith.constant 0 : i32
    %c0_i32_0 = arith.constant 0 : i32
    %c0_i32_1 = arith.constant 0 : i32
    return %c0_i32, %c0_i32_0 : i32, i32
  }
  func.func @transform_4(%arg0: i32, %arg1: i32) -> (i32, i32, i32) {
    %c0_i32 = arith.constant 0 : i32
    %c0_i32_0 = arith.constant 0 : i32
    return %arg0, %arg1, %c0_i32 : i32, i32, i32
  }
}

module attributes {stable_mosaic.version = 11 : i64} {
  func.func @_mm_kernel(%arg0: i32, %arg1: i32, %arg2: memref<1x128x1152xbf16, #tpu.memory_space<vmem>>, %arg3: memref<1x1152x128xbf16, #tpu.memory_space<vmem>>, %arg4: memref<1x128xf32, #tpu.memory_space<vmem>>, %arg5: memref<1x128xf32, #tpu.memory_space<vmem>>, %arg6: memref<1x128x128xbf16, #tpu.memory_space<vmem>>) attributes {dimension_semantics = [#tpu.dimension_semantics<parallel>, #tpu.dimension_semantics<parallel>], iteration_bounds = array<i64: 1, 1>, scalar_prefetch = 0 : i64, scratch_operands = 0 : i64, tpu.core_type = #tpu.core_type<tc>, window_params = [{transform_indices = @transform_0, window_bounds = array<i64: 1, 128, 1152>}, {transform_indices = @transform_1, window_bounds = array<i64: 1, 1152, 128>}, {pipeline_mode = #tpu.pipeline_mode<synchronous>, transform_indices = @transform_2, window_bounds = array<i64: 1, 128>}, {pipeline_mode = #tpu.pipeline_mode<synchronous>, transform_indices = @transform_3, window_bounds = array<i64: 1, 128>}, {transform_indices = @transform_4, window_bounds = array<i64: 1, 128, 128>}]} {
    %c0 = arith.constant 0 : index
    %c0_0 = arith.constant 0 : index
    %c0_1 = arith.constant 0 : index
    %0 = vector.load %arg2[%c0, %c0_0, %c0_1] : memref<1x128x1152xbf16, #tpu.memory_space<vmem>>, vector<1x128x1152xbf16>
    %1 = vector.shape_cast %0 : vector<1x128x1152xbf16> to vector<128x1152xbf16>
    %c0_2 = arith.constant 0 : index
    %c0_3 = arith.constant 0 : index
    %c0_4 = arith.constant 0 : index
    %2 = vector.load %arg3[%c0_2, %c0_3, %c0_4] : memref<1x1152x128xbf16, #tpu.memory_space<vmem>>, vector<1x1152x128xbf16>
    %3 = vector.shape_cast %2 : vector<1x1152x128xbf16> to vector<1152x128xbf16>
    %cst = arith.constant dense<0.000000e+00> : vector<128x128xf32>
    %4 = tpu.matmul %1, %3, %cst {dimension_numbers = #tpu.dot_dimension_numbers<[1], [0], [0], [1], [0, 0, 1, 1], [], []>} : vector<128x1152xbf16>, vector<1152x128xbf16>, vector<128x128xf32> -> vector<128x128xf32>
    %c0_5 = arith.constant 0 : index
    %c0_6 = arith.constant 0 : index
    %5 = vector.load %arg4[%c0_5, %c0_6] : memref<1x128xf32, #tpu.memory_space<vmem>>, vector<1x128xf32>
    %6 = vector.broadcast %5 : vector<1x128xf32> to vector<128x128xf32>
    %7 = arith.mulf %4, %6 : vector<128x128xf32>
    %c0_7 = arith.constant 0 : index
    %c0_8 = arith.constant 0 : index
    %8 = vector.load %arg5[%c0_7, %c0_8] : memref<1x128xf32, #tpu.memory_space<vmem>>, vector<1x128xf32>
    %9 = vector.broadcast %8 : vector<1x128xf32> to vector<128x128xf32>
    %10 = arith.addf %7, %9 : vector<128x128xf32>
    %cst_9 = arith.constant 0.000000e+00 : f32
    %11 = vector.broadcast %cst_9 : f32 to vector<128x128xf32>
    %12 = arith.maximumf %10, %11 : vector<128x128xf32>
    %13 = arith.truncf %12 : vector<128x128xf32> to vector<128x128xbf16>
    %c0_10 = arith.constant 0 : index
    %c0_11 = arith.constant 0 : index
    %c0_12 = arith.constant 0 : index
    %14 = vector.load %arg6[%c0_10, %c0_11, %c0_12] : memref<1x128x128xbf16, #tpu.memory_space<vmem>>, vector<1x128x128xbf16>
    %15 = vector.shape_cast %14 : vector<1x128x128xbf16> to vector<128x128xbf16>
    %16 = vector.shape_cast %13 : vector<128x128xbf16> to vector<1x128x128xbf16>
    tpu.vector_store %arg6[%c0_10, %c0_11, %c0_12], %16 {strides = array<i32>} : memref<1x128x128xbf16, #tpu.memory_space<vmem>>, vector<1x128x128xbf16>,
    return
  }
  func.func @transform_0(%arg0: i32, %arg1: i32) -> (i32, i32, i32) {
    %c0_i32 = arith.constant 0 : i32
    %c0_i32_0 = arith.constant 0 : i32
    return %arg0, %arg1, %c0_i32 : i32, i32, i32
  }
  func.func @transform_1(%arg0: i32, %arg1: i32) -> (i32, i32, i32) {
    %c0_i32 = arith.constant 0 : i32
    %c0_i32_0 = arith.constant 0 : i32
    %c0_i32_1 = arith.constant 0 : i32
    return %arg0, %c0_i32, %c0_i32_0 : i32, i32, i32
  }
  func.func @transform_2(%arg0: i32, %arg1: i32) -> (i32, i32) {
    %c0_i32 = arith.constant 0 : i32
    %c0_i32_0 = arith.constant 0 : i32
    %c0_i32_1 = arith.constant 0 : i32
    return %c0_i32, %c0_i32_0 : i32, i32
  }
  func.func @transform_3(%arg0: i32, %arg1: i32) -> (i32, i32) {
    %c0_i32 = arith.constant 0 : i32
    %c0_i32_0 = arith.constant 0 : i32
    %c0_i32_1 = arith.constant 0 : i32
    return %c0_i32, %c0_i32_0 : i32, i32
  }
  func.func @transform_4(%arg0: i32, %arg1: i32) -> (i32, i32, i32) {
    %c0_i32 = arith.constant 0 : i32
    %c0_i32_0 = arith.constant 0 : i32
    return %arg0, %arg1, %c0_i32 : i32, i32, i32
  }
}

module attributes {stable_mosaic.version = 11 : i64} {
  func.func @_mm_kernel(%arg0: i32, %arg1: i32, %arg2: memref<1x32x640xbf16, #tpu.memory_space<vmem>>, %arg3: memref<1x640x128xbf16, #tpu.memory_space<vmem>>, %arg4: memref<1x128xf32, #tpu.memory_space<vmem>>, %arg5: memref<1x128xf32, #tpu.memory_space<vmem>>, %arg6: memref<1x32x128xbf16, #tpu.memory_space<vmem>>) attributes {dimension_semantics = [#tpu.dimension_semantics<parallel>, #tpu.dimension_semantics<parallel>], iteration_bounds = array<i64: 1, 1>, scalar_prefetch = 0 : i64, scratch_operands = 0 : i64, tpu.core_type = #tpu.core_type<tc>, window_params = [{transform_indices = @transform_0, window_bounds = array<i64: 1, 32, 640>}, {transform_indices = @transform_1, window_bounds = array<i64: 1, 640, 128>}, {pipeline_mode = #tpu.pipeline_mode<synchronous>, transform_indices = @transform_2, window_bounds = array<i64: 1, 128>}, {pipeline_mode = #tpu.pipeline_mode<synchronous>, transform_indices = @transform_3, window_bounds = array<i64: 1, 128>}, {transform_indices = @transform_4, window_bounds = array<i64: 1, 32, 128>}]} {
    %c0 = arith.constant 0 : index
    %c0_0 = arith.constant 0 : index
    %c0_1 = arith.constant 0 : index
    %0 = vector.load %arg2[%c0, %c0_0, %c0_1] : memref<1x32x640xbf16, #tpu.memory_space<vmem>>, vector<1x32x640xbf16>
    %1 = vector.shape_cast %0 : vector<1x32x640xbf16> to vector<32x640xbf16>
    %c0_2 = arith.constant 0 : index
    %c0_3 = arith.constant 0 : index
    %c0_4 = arith.constant 0 : index
    %2 = vector.load %arg3[%c0_2, %c0_3, %c0_4] : memref<1x640x128xbf16, #tpu.memory_space<vmem>>, vector<1x640x128xbf16>
    %3 = vector.shape_cast %2 : vector<1x640x128xbf16> to vector<640x128xbf16>
    %cst = arith.constant dense<0.000000e+00> : vector<32x128xf32>
    %4 = tpu.matmul %1, %3, %cst {dimension_numbers = #tpu.dot_dimension_numbers<[1], [0], [0], [1], [0, 0, 1, 1], [], []>} : vector<32x640xbf16>, vector<640x128xbf16>, vector<32x128xf32> -> vector<32x128xf32>
    %c0_5 = arith.constant 0 : index
    %c0_6 = arith.constant 0 : index
    %5 = vector.load %arg4[%c0_5, %c0_6] : memref<1x128xf32, #tpu.memory_space<vmem>>, vector<1x128xf32>
    %6 = vector.broadcast %5 : vector<1x128xf32> to vector<32x128xf32>
    %7 = arith.mulf %4, %6 : vector<32x128xf32>
    %c0_7 = arith.constant 0 : index
    %c0_8 = arith.constant 0 : index
    %8 = vector.load %arg5[%c0_7, %c0_8] : memref<1x128xf32, #tpu.memory_space<vmem>>, vector<1x128xf32>
    %9 = vector.broadcast %8 : vector<1x128xf32> to vector<32x128xf32>
    %10 = arith.addf %7, %9 : vector<32x128xf32>
    %cst_9 = arith.constant 0.000000e+00 : f32
    %11 = vector.broadcast %cst_9 : f32 to vector<32x128xf32>
    %12 = arith.maximumf %10, %11 : vector<32x128xf32>
    %13 = arith.truncf %12 : vector<32x128xf32> to vector<32x128xbf16>
    %c0_10 = arith.constant 0 : index
    %c0_11 = arith.constant 0 : index
    %c0_12 = arith.constant 0 : index
    %14 = vector.load %arg6[%c0_10, %c0_11, %c0_12] : memref<1x32x128xbf16, #tpu.memory_space<vmem>>, vector<1x32x128xbf16>
    %15 = vector.shape_cast %14 : vector<1x32x128xbf16> to vector<32x128xbf16>
    %16 = vector.shape_cast %13 : vector<32x128xbf16> to vector<1x32x128xbf16>
    tpu.vector_store %arg6[%c0_10, %c0_11, %c0_12], %16 {strides = array<i32>} : memref<1x32x128xbf16, #tpu.memory_space<vmem>>, vector<1x32x128xbf16>,
    return
  }
  func.func @transform_0(%arg0: i32, %arg1: i32) -> (i32, i32, i32) {
    %c0_i32 = arith.constant 0 : i32
    %c0_i32_0 = arith.constant 0 : i32
    return %arg0, %arg1, %c0_i32 : i32, i32, i32
  }
  func.func @transform_1(%arg0: i32, %arg1: i32) -> (i32, i32, i32) {
    %c0_i32 = arith.constant 0 : i32
    %c0_i32_0 = arith.constant 0 : i32
    %c0_i32_1 = arith.constant 0 : i32
    return %arg0, %c0_i32, %c0_i32_0 : i32, i32, i32
  }
  func.func @transform_2(%arg0: i32, %arg1: i32) -> (i32, i32) {
    %c0_i32 = arith.constant 0 : i32
    %c0_i32_0 = arith.constant 0 : i32
    %c0_i32_1 = arith.constant 0 : i32
    return %c0_i32, %c0_i32_0 : i32, i32
  }
  func.func @transform_3(%arg0: i32, %arg1: i32) -> (i32, i32) {
    %c0_i32 = arith.constant 0 : i32
    %c0_i32_0 = arith.constant 0 : i32
    %c0_i32_1 = arith.constant 0 : i32
    return %c0_i32, %c0_i32_0 : i32, i32
  }
  func.func @transform_4(%arg0: i32, %arg1: i32) -> (i32, i32, i32) {
    %c0_i32 = arith.constant 0 : i32
    %c0_i32_0 = arith.constant 0 : i32
    return %arg0, %arg1, %c0_i32 : i32, i32, i32
  }
}

module attributes {stable_mosaic.version = 11 : i64} {
  func.func @_mm_kernel(%arg0: i32, %arg1: i32, %arg2: memref<1x32x2304xbf16, #tpu.memory_space<vmem>>, %arg3: memref<1x2304x256xbf16, #tpu.memory_space<vmem>>, %arg4: memref<1x256xf32, #tpu.memory_space<vmem>>, %arg5: memref<1x256xf32, #tpu.memory_space<vmem>>, %arg6: memref<1x32x256xbf16, #tpu.memory_space<vmem>>) attributes {dimension_semantics = [#tpu.dimension_semantics<parallel>, #tpu.dimension_semantics<parallel>], iteration_bounds = array<i64: 1, 1>, scalar_prefetch = 0 : i64, scratch_operands = 0 : i64, tpu.core_type = #tpu.core_type<tc>, window_params = [{transform_indices = @transform_0, window_bounds = array<i64: 1, 32, 2304>}, {transform_indices = @transform_1, window_bounds = array<i64: 1, 2304, 256>}, {pipeline_mode = #tpu.pipeline_mode<synchronous>, transform_indices = @transform_2, window_bounds = array<i64: 1, 256>}, {pipeline_mode = #tpu.pipeline_mode<synchronous>, transform_indices = @transform_3, window_bounds = array<i64: 1, 256>}, {transform_indices = @transform_4, window_bounds = array<i64: 1, 32, 256>}]} {
    %c0 = arith.constant 0 : index
    %c0_0 = arith.constant 0 : index
    %c0_1 = arith.constant 0 : index
    %0 = vector.load %arg2[%c0, %c0_0, %c0_1] : memref<1x32x2304xbf16, #tpu.memory_space<vmem>>, vector<1x32x2304xbf16>
    %1 = vector.shape_cast %0 : vector<1x32x2304xbf16> to vector<32x2304xbf16>
    %c0_2 = arith.constant 0 : index
    %c0_3 = arith.constant 0 : index
    %c0_4 = arith.constant 0 : index
    %2 = vector.load %arg3[%c0_2, %c0_3, %c0_4] : memref<1x2304x256xbf16, #tpu.memory_space<vmem>>, vector<1x2304x256xbf16>
    %3 = vector.shape_cast %2 : vector<1x2304x256xbf16> to vector<2304x256xbf16>
    %cst = arith.constant dense<0.000000e+00> : vector<32x256xf32>
    %4 = tpu.matmul %1, %3, %cst {dimension_numbers = #tpu.dot_dimension_numbers<[1], [0], [0], [1], [0, 0, 1, 1], [], []>} : vector<32x2304xbf16>, vector<2304x256xbf16>, vector<32x256xf32> -> vector<32x256xf32>
    %c0_5 = arith.constant 0 : index
    %c0_6 = arith.constant 0 : index
    %5 = vector.load %arg4[%c0_5, %c0_6] : memref<1x256xf32, #tpu.memory_space<vmem>>, vector<1x256xf32>
    %6 = vector.broadcast %5 : vector<1x256xf32> to vector<32x256xf32>
    %7 = arith.mulf %4, %6 : vector<32x256xf32>
    %c0_7 = arith.constant 0 : index
    %c0_8 = arith.constant 0 : index
    %8 = vector.load %arg5[%c0_7, %c0_8] : memref<1x256xf32, #tpu.memory_space<vmem>>, vector<1x256xf32>
    %9 = vector.broadcast %8 : vector<1x256xf32> to vector<32x256xf32>
    %10 = arith.addf %7, %9 : vector<32x256xf32>
    %cst_9 = arith.constant 0.000000e+00 : f32
    %11 = vector.broadcast %cst_9 : f32 to vector<32x256xf32>
    %12 = arith.maximumf %10, %11 : vector<32x256xf32>
    %13 = arith.truncf %12 : vector<32x256xf32> to vector<32x256xbf16>
    %c0_10 = arith.constant 0 : index
    %c0_11 = arith.constant 0 : index
    %c0_12 = arith.constant 0 : index
    %14 = vector.load %arg6[%c0_10, %c0_11, %c0_12] : memref<1x32x256xbf16, #tpu.memory_space<vmem>>, vector<1x32x256xbf16>
    %15 = vector.shape_cast %14 : vector<1x32x256xbf16> to vector<32x256xbf16>
    %16 = vector.shape_cast %13 : vector<32x256xbf16> to vector<1x32x256xbf16>
    tpu.vector_store %arg6[%c0_10, %c0_11, %c0_12], %16 {strides = array<i32>} : memref<1x32x256xbf16, #tpu.memory_space<vmem>>, vector<1x32x256xbf16>,
    return
  }
  func.func @transform_0(%arg0: i32, %arg1: i32) -> (i32, i32, i32) {
    %c0_i32 = arith.constant 0 : i32
    %c0_i32_0 = arith.constant 0 : i32
    return %arg0, %arg1, %c0_i32 : i32, i32, i32
  }
  func.func @transform_1(%arg0: i32, %arg1: i32) -> (i32, i32, i32) {
    %c0_i32 = arith.constant 0 : i32
    %c0_i32_0 = arith.constant 0 : i32
    %c0_i32_1 = arith.constant 0 : i32
    return %arg0, %c0_i32, %c0_i32_0 : i32, i32, i32
  }
  func.func @transform_2(%arg0: i32, %arg1: i32) -> (i32, i32) {
    %c0_i32 = arith.constant 0 : i32
    %c0_i32_0 = arith.constant 0 : i32
    %c0_i32_1 = arith.constant 0 : i32
    return %c0_i32, %c0_i32_0 : i32, i32
  }
  func.func @transform_3(%arg0: i32, %arg1: i32) -> (i32, i32) {
    %c0_i32 = arith.constant 0 : i32
    %c0_i32_0 = arith.constant 0 : i32
    %c0_i32_1 = arith.constant 0 : i32
    return %c0_i32, %c0_i32_0 : i32, i32
  }
  func.func @transform_4(%arg0: i32, %arg1: i32) -> (i32, i32, i32) {
    %c0_i32 = arith.constant 0 : i32
    %c0_i32_0 = arith.constant 0 : i32
    return %arg0, %arg1, %c0_i32 : i32, i32, i32
  }
}

module attributes {stable_mosaic.version = 11 : i64} {
  func.func @_mm_kernel(%arg0: i32, %arg1: i32, %arg2: memref<1x32x1024xbf16, #tpu.memory_space<vmem>>, %arg3: memref<1x1024x128xbf16, #tpu.memory_space<vmem>>, %arg4: memref<1x128xf32, #tpu.memory_space<vmem>>, %arg5: memref<1x128xf32, #tpu.memory_space<vmem>>, %arg6: memref<1x32x128xbf16, #tpu.memory_space<vmem>>) attributes {dimension_semantics = [#tpu.dimension_semantics<parallel>, #tpu.dimension_semantics<parallel>], iteration_bounds = array<i64: 4, 1>, scalar_prefetch = 0 : i64, scratch_operands = 0 : i64, tpu.core_type = #tpu.core_type<tc>, window_params = [{transform_indices = @transform_0, window_bounds = array<i64: 1, 32, 1024>}, {transform_indices = @transform_1, window_bounds = array<i64: 1, 1024, 128>}, {pipeline_mode = #tpu.pipeline_mode<synchronous>, transform_indices = @transform_2, window_bounds = array<i64: 1, 128>}, {pipeline_mode = #tpu.pipeline_mode<synchronous>, transform_indices = @transform_3, window_bounds = array<i64: 1, 128>}, {transform_indices = @transform_4, window_bounds = array<i64: 1, 32, 128>}]} {
    %c0 = arith.constant 0 : index
    %c0_0 = arith.constant 0 : index
    %c0_1 = arith.constant 0 : index
    %0 = vector.load %arg2[%c0, %c0_0, %c0_1] : memref<1x32x1024xbf16, #tpu.memory_space<vmem>>, vector<1x32x1024xbf16>
    %1 = vector.shape_cast %0 : vector<1x32x1024xbf16> to vector<32x1024xbf16>
    %c0_2 = arith.constant 0 : index
    %c0_3 = arith.constant 0 : index
    %c0_4 = arith.constant 0 : index
    %2 = vector.load %arg3[%c0_2, %c0_3, %c0_4] : memref<1x1024x128xbf16, #tpu.memory_space<vmem>>, vector<1x1024x128xbf16>
    %3 = vector.shape_cast %2 : vector<1x1024x128xbf16> to vector<1024x128xbf16>
    %cst = arith.constant dense<0.000000e+00> : vector<32x128xf32>
    %4 = tpu.matmul %1, %3, %cst {dimension_numbers = #tpu.dot_dimension_numbers<[1], [0], [0], [1], [0, 0, 1, 1], [], []>} : vector<32x1024xbf16>, vector<1024x128xbf16>, vector<32x128xf32> -> vector<32x128xf32>
    %c0_5 = arith.constant 0 : index
    %c0_6 = arith.constant 0 : index
    %5 = vector.load %arg4[%c0_5, %c0_6] : memref<1x128xf32, #tpu.memory_space<vmem>>, vector<1x128xf32>
    %6 = vector.broadcast %5 : vector<1x128xf32> to vector<32x128xf32>
    %7 = arith.mulf %4, %6 : vector<32x128xf32>
    %c0_7 = arith.constant 0 : index
    %c0_8 = arith.constant 0 : index
    %8 = vector.load %arg5[%c0_7, %c0_8] : memref<1x128xf32, #tpu.memory_space<vmem>>, vector<1x128xf32>
    %9 = vector.broadcast %8 : vector<1x128xf32> to vector<32x128xf32>
    %10 = arith.addf %7, %9 : vector<32x128xf32>
    %cst_9 = arith.constant 0.000000e+00 : f32
    %11 = vector.broadcast %cst_9 : f32 to vector<32x128xf32>
    %12 = arith.maximumf %10, %11 : vector<32x128xf32>
    %13 = arith.truncf %12 : vector<32x128xf32> to vector<32x128xbf16>
    %c0_10 = arith.constant 0 : index
    %c0_11 = arith.constant 0 : index
    %c0_12 = arith.constant 0 : index
    %14 = vector.load %arg6[%c0_10, %c0_11, %c0_12] : memref<1x32x128xbf16, #tpu.memory_space<vmem>>, vector<1x32x128xbf16>
    %15 = vector.shape_cast %14 : vector<1x32x128xbf16> to vector<32x128xbf16>
    %16 = vector.shape_cast %13 : vector<32x128xbf16> to vector<1x32x128xbf16>
    tpu.vector_store %arg6[%c0_10, %c0_11, %c0_12], %16 {strides = array<i32>} : memref<1x32x128xbf16, #tpu.memory_space<vmem>>, vector<1x32x128xbf16>,
    return
  }
  func.func @transform_0(%arg0: i32, %arg1: i32) -> (i32, i32, i32) {
    %c0_i32 = arith.constant 0 : i32
    %c0_i32_0 = arith.constant 0 : i32
    return %arg0, %arg1, %c0_i32 : i32, i32, i32
  }
  func.func @transform_1(%arg0: i32, %arg1: i32) -> (i32, i32, i32) {
    %c0_i32 = arith.constant 0 : i32
    %c0_i32_0 = arith.constant 0 : i32
    %c0_i32_1 = arith.constant 0 : i32
    return %arg0, %c0_i32, %c0_i32_0 : i32, i32, i32
  }
  func.func @transform_2(%arg0: i32, %arg1: i32) -> (i32, i32) {
    %c0_i32 = arith.constant 0 : i32
    %c0_i32_0 = arith.constant 0 : i32
    %c0_i32_1 = arith.constant 0 : i32
    return %c0_i32, %c0_i32_0 : i32, i32
  }
  func.func @transform_3(%arg0: i32, %arg1: i32) -> (i32, i32) {
    %c0_i32 = arith.constant 0 : i32
    %c0_i32_0 = arith.constant 0 : i32
    %c0_i32_1 = arith.constant 0 : i32
    return %c0_i32, %c0_i32_0 : i32, i32
  }
  func.func @transform_4(%arg0: i32, %arg1: i32) -> (i32, i32, i32) {
    %c0_i32 = arith.constant 0 : i32
    %c0_i32_0 = arith.constant 0 : i32
    return %arg0, %arg1, %c0_i32 : i32, i32, i32
  }
}

module attributes {stable_mosaic.version = 11 : i64} {
  func.func @_mm_kernel(%arg0: i32, %arg1: i32, %arg2: memref<1x128x1024xbf16, #tpu.memory_space<vmem>>, %arg3: memref<1x1024x128xbf16, #tpu.memory_space<vmem>>, %arg4: memref<1x128xf32, #tpu.memory_space<vmem>>, %arg5: memref<1x128xf32, #tpu.memory_space<vmem>>, %arg6: memref<1x128x128xbf16, #tpu.memory_space<vmem>>) attributes {dimension_semantics = [#tpu.dimension_semantics<parallel>, #tpu.dimension_semantics<parallel>], iteration_bounds = array<i64: 4, 1>, scalar_prefetch = 0 : i64, scratch_operands = 0 : i64, tpu.core_type = #tpu.core_type<tc>, window_params = [{transform_indices = @transform_0, window_bounds = array<i64: 1, 128, 1024>}, {transform_indices = @transform_1, window_bounds = array<i64: 1, 1024, 128>}, {pipeline_mode = #tpu.pipeline_mode<synchronous>, transform_indices = @transform_2, window_bounds = array<i64: 1, 128>}, {pipeline_mode = #tpu.pipeline_mode<synchronous>, transform_indices = @transform_3, window_bounds = array<i64: 1, 128>}, {transform_indices = @transform_4, window_bounds = array<i64: 1, 128, 128>}]} {
    %c0 = arith.constant 0 : index
    %c0_0 = arith.constant 0 : index
    %c0_1 = arith.constant 0 : index
    %0 = vector.load %arg2[%c0, %c0_0, %c0_1] : memref<1x128x1024xbf16, #tpu.memory_space<vmem>>, vector<1x128x1024xbf16>
    %1 = vector.shape_cast %0 : vector<1x128x1024xbf16> to vector<128x1024xbf16>
    %c0_2 = arith.constant 0 : index
    %c0_3 = arith.constant 0 : index
    %c0_4 = arith.constant 0 : index
    %2 = vector.load %arg3[%c0_2, %c0_3, %c0_4] : memref<1x1024x128xbf16, #tpu.memory_space<vmem>>, vector<1x1024x128xbf16>
    %3 = vector.shape_cast %2 : vector<1x1024x128xbf16> to vector<1024x128xbf16>
    %cst = arith.constant dense<0.000000e+00> : vector<128x128xf32>
    %4 = tpu.matmul %1, %3, %cst {dimension_numbers = #tpu.dot_dimension_numbers<[1], [0], [0], [1], [0, 0, 1, 1], [], []>} : vector<128x1024xbf16>, vector<1024x128xbf16>, vector<128x128xf32> -> vector<128x128xf32>
    %c0_5 = arith.constant 0 : index
    %c0_6 = arith.constant 0 : index
    %5 = vector.load %arg4[%c0_5, %c0_6] : memref<1x128xf32, #tpu.memory_space<vmem>>, vector<1x128xf32>
    %6 = vector.broadcast %5 : vector<1x128xf32> to vector<128x128xf32>
    %7 = arith.mulf %4, %6 : vector<128x128xf32>
    %c0_7 = arith.constant 0 : index
    %c0_8 = arith.constant 0 : index
    %8 = vector.load %arg5[%c0_7, %c0_8] : memref<1x128xf32, #tpu.memory_space<vmem>>, vector<1x128xf32>
    %9 = vector.broadcast %8 : vector<1x128xf32> to vector<128x128xf32>
    %10 = arith.addf %7, %9 : vector<128x128xf32>
    %cst_9 = arith.constant 0.000000e+00 : f32
    %11 = vector.broadcast %cst_9 : f32 to vector<128x128xf32>
    %12 = arith.maximumf %10, %11 : vector<128x128xf32>
    %13 = arith.truncf %12 : vector<128x128xf32> to vector<128x128xbf16>
    %c0_10 = arith.constant 0 : index
    %c0_11 = arith.constant 0 : index
    %c0_12 = arith.constant 0 : index
    %14 = vector.load %arg6[%c0_10, %c0_11, %c0_12] : memref<1x128x128xbf16, #tpu.memory_space<vmem>>, vector<1x128x128xbf16>
    %15 = vector.shape_cast %14 : vector<1x128x128xbf16> to vector<128x128xbf16>
    %16 = vector.shape_cast %13 : vector<128x128xbf16> to vector<1x128x128xbf16>
    tpu.vector_store %arg6[%c0_10, %c0_11, %c0_12], %16 {strides = array<i32>} : memref<1x128x128xbf16, #tpu.memory_space<vmem>>, vector<1x128x128xbf16>,
    return
  }
  func.func @transform_0(%arg0: i32, %arg1: i32) -> (i32, i32, i32) {
    %c0_i32 = arith.constant 0 : i32
    %c0_i32_0 = arith.constant 0 : i32
    return %arg0, %arg1, %c0_i32 : i32, i32, i32
  }
  func.func @transform_1(%arg0: i32, %arg1: i32) -> (i32, i32, i32) {
    %c0_i32 = arith.constant 0 : i32
    %c0_i32_0 = arith.constant 0 : i32
    %c0_i32_1 = arith.constant 0 : i32
    return %arg0, %c0_i32, %c0_i32_0 : i32, i32, i32
  }
  func.func @transform_2(%arg0: i32, %arg1: i32) -> (i32, i32) {
    %c0_i32 = arith.constant 0 : i32
    %c0_i32_0 = arith.constant 0 : i32
    %c0_i32_1 = arith.constant 0 : i32
    return %c0_i32, %c0_i32_0 : i32, i32
  }
  func.func @transform_3(%arg0: i32, %arg1: i32) -> (i32, i32) {
    %c0_i32 = arith.constant 0 : i32
    %c0_i32_0 = arith.constant 0 : i32
    %c0_i32_1 = arith.constant 0 : i32
    return %c0_i32, %c0_i32_0 : i32, i32
  }
  func.func @transform_4(%arg0: i32, %arg1: i32) -> (i32, i32, i32) {
    %c0_i32 = arith.constant 0 : i32
    %c0_i32_0 = arith.constant 0 : i32
    return %arg0, %arg1, %c0_i32 : i32, i32, i32
  }
}

module attributes {stable_mosaic.version = 11 : i64} {
  func.func @_mm_kernel(%arg0: i32, %arg1: i32, %arg2: memref<1x256x128xbf16, #tpu.memory_space<vmem>>, %arg3: memref<1x128x128xbf16, #tpu.memory_space<vmem>>, %arg4: memref<1x128xf32, #tpu.memory_space<vmem>>, %arg5: memref<1x128xf32, #tpu.memory_space<vmem>>, %arg6: memref<1x256x128xbf16, #tpu.memory_space<vmem>>) attributes {dimension_semantics = [#tpu.dimension_semantics<parallel>, #tpu.dimension_semantics<parallel>], iteration_bounds = array<i64: 1, 2>, scalar_prefetch = 0 : i64, scratch_operands = 0 : i64, tpu.core_type = #tpu.core_type<tc>, window_params = [{transform_indices = @transform_0, window_bounds = array<i64: 1, 256, 128>}, {transform_indices = @transform_1, window_bounds = array<i64: 1, 128, 128>}, {pipeline_mode = #tpu.pipeline_mode<synchronous>, transform_indices = @transform_2, window_bounds = array<i64: 1, 128>}, {pipeline_mode = #tpu.pipeline_mode<synchronous>, transform_indices = @transform_3, window_bounds = array<i64: 1, 128>}, {transform_indices = @transform_4, window_bounds = array<i64: 1, 256, 128>}]} {
    %c0 = arith.constant 0 : index
    %c0_0 = arith.constant 0 : index
    %c0_1 = arith.constant 0 : index
    %0 = vector.load %arg2[%c0, %c0_0, %c0_1] : memref<1x256x128xbf16, #tpu.memory_space<vmem>>, vector<1x256x128xbf16>
    %1 = vector.shape_cast %0 : vector<1x256x128xbf16> to vector<256x128xbf16>
    %c0_2 = arith.constant 0 : index
    %c0_3 = arith.constant 0 : index
    %c0_4 = arith.constant 0 : index
    %2 = vector.load %arg3[%c0_2, %c0_3, %c0_4] : memref<1x128x128xbf16, #tpu.memory_space<vmem>>, vector<1x128x128xbf16>
    %3 = vector.shape_cast %2 : vector<1x128x128xbf16> to vector<128x128xbf16>
    %cst = arith.constant dense<0.000000e+00> : vector<256x128xf32>
    %4 = tpu.matmul %1, %3, %cst {dimension_numbers = #tpu.dot_dimension_numbers<[1], [0], [0], [1], [0, 0, 1, 1], [], []>} : vector<256x128xbf16>, vector<128x128xbf16>, vector<256x128xf32> -> vector<256x128xf32>
    %c0_5 = arith.constant 0 : index
    %c0_6 = arith.constant 0 : index
    %5 = vector.load %arg4[%c0_5, %c0_6] : memref<1x128xf32, #tpu.memory_space<vmem>>, vector<1x128xf32>
    %6 = vector.broadcast %5 : vector<1x128xf32> to vector<256x128xf32>
    %7 = arith.mulf %4, %6 : vector<256x128xf32>
    %c0_7 = arith.constant 0 : index
    %c0_8 = arith.constant 0 : index
    %8 = vector.load %arg5[%c0_7, %c0_8] : memref<1x128xf32, #tpu.memory_space<vmem>>, vector<1x128xf32>
    %9 = vector.broadcast %8 : vector<1x128xf32> to vector<256x128xf32>
    %10 = arith.addf %7, %9 : vector<256x128xf32>
    %cst_9 = arith.constant 0.000000e+00 : f32
    %11 = vector.broadcast %cst_9 : f32 to vector<256x128xf32>
    %12 = arith.maximumf %10, %11 : vector<256x128xf32>
    %13 = arith.truncf %12 : vector<256x128xf32> to vector<256x128xbf16>
    %c0_10 = arith.constant 0 : index
    %c0_11 = arith.constant 0 : index
    %c0_12 = arith.constant 0 : index
    %14 = vector.load %arg6[%c0_10, %c0_11, %c0_12] : memref<1x256x128xbf16, #tpu.memory_space<vmem>>, vector<1x256x128xbf16>
    %15 = vector.shape_cast %14 : vector<1x256x128xbf16> to vector<256x128xbf16>
    %16 = vector.shape_cast %13 : vector<256x128xbf16> to vector<1x256x128xbf16>
    tpu.vector_store %arg6[%c0_10, %c0_11, %c0_12], %16 {strides = array<i32>} : memref<1x256x128xbf16, #tpu.memory_space<vmem>>, vector<1x256x128xbf16>,
    return
  }
  func.func @transform_0(%arg0: i32, %arg1: i32) -> (i32, i32, i32) {
    %c0_i32 = arith.constant 0 : i32
    %c0_i32_0 = arith.constant 0 : i32
    return %arg0, %arg1, %c0_i32 : i32, i32, i32
  }
  func.func @transform_1(%arg0: i32, %arg1: i32) -> (i32, i32, i32) {
    %c0_i32 = arith.constant 0 : i32
    %c0_i32_0 = arith.constant 0 : i32
    %c0_i32_1 = arith.constant 0 : i32
    return %arg0, %c0_i32, %c0_i32_0 : i32, i32, i32
  }
  func.func @transform_2(%arg0: i32, %arg1: i32) -> (i32, i32) {
    %c0_i32 = arith.constant 0 : i32
    %c0_i32_0 = arith.constant 0 : i32
    %c0_i32_1 = arith.constant 0 : i32
    return %c0_i32, %c0_i32_0 : i32, i32
  }
  func.func @transform_3(%arg0: i32, %arg1: i32) -> (i32, i32) {
    %c0_i32 = arith.constant 0 : i32
    %c0_i32_0 = arith.constant 0 : i32
    %c0_i32_1 = arith.constant 0 : i32
    return %c0_i32, %c0_i32_0 : i32, i32
  }
  func.func @transform_4(%arg0: i32, %arg1: i32) -> (i32, i32, i32) {
    %c0_i32 = arith.constant 0 : i32
    %c0_i32_0 = arith.constant 0 : i32
    return %arg0, %arg1, %c0_i32 : i32, i32, i32
  }
}

module attributes {stable_mosaic.version = 11 : i64} {
  func.func @_mm_kernel(%arg0: i32, %arg1: i32, %arg2: memref<1x256x256xbf16, #tpu.memory_space<vmem>>, %arg3: memref<1x256x128xbf16, #tpu.memory_space<vmem>>, %arg4: memref<1x128xf32, #tpu.memory_space<vmem>>, %arg5: memref<1x128xf32, #tpu.memory_space<vmem>>, %arg6: memref<1x256x128xf32, #tpu.memory_space<vmem>>) attributes {dimension_semantics = [#tpu.dimension_semantics<parallel>, #tpu.dimension_semantics<parallel>], iteration_bounds = array<i64: 1, 2>, scalar_prefetch = 0 : i64, scratch_operands = 0 : i64, tpu.core_type = #tpu.core_type<tc>, window_params = [{transform_indices = @transform_0, window_bounds = array<i64: 1, 256, 256>}, {transform_indices = @transform_1, window_bounds = array<i64: 1, 256, 128>}, {pipeline_mode = #tpu.pipeline_mode<synchronous>, transform_indices = @transform_2, window_bounds = array<i64: 1, 128>}, {pipeline_mode = #tpu.pipeline_mode<synchronous>, transform_indices = @transform_3, window_bounds = array<i64: 1, 128>}, {transform_indices = @transform_4, window_bounds = array<i64: 1, 256, 128>}]} {
    %c0 = arith.constant 0 : index
    %c0_0 = arith.constant 0 : index
    %c0_1 = arith.constant 0 : index
    %0 = vector.load %arg2[%c0, %c0_0, %c0_1] : memref<1x256x256xbf16, #tpu.memory_space<vmem>>, vector<1x256x256xbf16>
    %1 = vector.shape_cast %0 : vector<1x256x256xbf16> to vector<256x256xbf16>
    %c0_2 = arith.constant 0 : index
    %c0_3 = arith.constant 0 : index
    %c0_4 = arith.constant 0 : index
    %2 = vector.load %arg3[%c0_2, %c0_3, %c0_4] : memref<1x256x128xbf16, #tpu.memory_space<vmem>>, vector<1x256x128xbf16>
    %3 = vector.shape_cast %2 : vector<1x256x128xbf16> to vector<256x128xbf16>
    %cst = arith.constant dense<0.000000e+00> : vector<256x128xf32>
    %4 = tpu.matmul %1, %3, %cst {dimension_numbers = #tpu.dot_dimension_numbers<[1], [0], [0], [1], [0, 0, 1, 1], [], []>} : vector<256x256xbf16>, vector<256x128xbf16>, vector<256x128xf32> -> vector<256x128xf32>
    %c0_5 = arith.constant 0 : index
    %c0_6 = arith.constant 0 : index
    %5 = vector.load %arg4[%c0_5, %c0_6] : memref<1x128xf32, #tpu.memory_space<vmem>>, vector<1x128xf32>
    %6 = vector.broadcast %5 : vector<1x128xf32> to vector<256x128xf32>
    %7 = arith.mulf %4, %6 : vector<256x128xf32>
    %c0_7 = arith.constant 0 : index
    %c0_8 = arith.constant 0 : index
    %8 = vector.load %arg5[%c0_7, %c0_8] : memref<1x128xf32, #tpu.memory_space<vmem>>, vector<1x128xf32>
    %9 = vector.broadcast %8 : vector<1x128xf32> to vector<256x128xf32>
    %10 = arith.addf %7, %9 : vector<256x128xf32>
    %c0_9 = arith.constant 0 : index
    %c0_10 = arith.constant 0 : index
    %c0_11 = arith.constant 0 : index
    %11 = vector.load %arg6[%c0_9, %c0_10, %c0_11] : memref<1x256x128xf32, #tpu.memory_space<vmem>>, vector<1x256x128xf32>
    %12 = vector.shape_cast %11 : vector<1x256x128xf32> to vector<256x128xf32>
    %13 = vector.shape_cast %10 : vector<256x128xf32> to vector<1x256x128xf32>
    tpu.vector_store %arg6[%c0_9, %c0_10, %c0_11], %13 {strides = array<i32>} : memref<1x256x128xf32, #tpu.memory_space<vmem>>, vector<1x256x128xf32>,
    return
  }
  func.func @transform_0(%arg0: i32, %arg1: i32) -> (i32, i32, i32) {
    %c0_i32 = arith.constant 0 : i32
    %c0_i32_0 = arith.constant 0 : i32
    return %arg0, %arg1, %c0_i32 : i32, i32, i32
  }
  func.func @transform_1(%arg0: i32, %arg1: i32) -> (i32, i32, i32) {
    %c0_i32 = arith.constant 0 : i32
    %c0_i32_0 = arith.constant 0 : i32
    %c0_i32_1 = arith.constant 0 : i32
    return %arg0, %c0_i32, %c0_i32_0 : i32, i32, i32
  }
  func.func @transform_2(%arg0: i32, %arg1: i32) -> (i32, i32) {
    %c0_i32 = arith.constant 0 : i32
    %c0_i32_0 = arith.constant 0 : i32
    %c0_i32_1 = arith.constant 0 : i32
    return %c0_i32, %c0_i32_0 : i32, i32
  }
  func.func @transform_3(%arg0: i32, %arg1: i32) -> (i32, i32) {
    %c0_i32 = arith.constant 0 : i32
    %c0_i32_0 = arith.constant 0 : i32
    %c0_i32_1 = arith.constant 0 : i32
    return %c0_i32, %c0_i32_0 : i32, i32
  }
  func.func @transform_4(%arg0: i32, %arg1: i32) -> (i32, i32, i32) {
    %c0_i32 = arith.constant 0 : i32
    %c0_i32_0 = arith.constant 0 : i32
    return %arg0, %arg1, %c0_i32 : i32, i32, i32
  }
}

</mosaic_0001>

<llo_original>
// kernel: decoder_forward.9
$region0: #{decoder_forward.9}
  #allocation0 [shape = 'u32[]', space=smem, size = 0x4, offset = 0x4, fixed_abs, tag = 'smem constant byte address 0x4 - core index']
  #allocation1 [shape = 'u32[144,128]{1,0:T(1,128)}', space=vmem, size = 0x12000, scoped, tag = 'internal scratch']
  %s0 = inlined_call_operand.vmem [shape: bf16[1,512,128], index: 0, kind: input, shape index: {}]
  %s1 = inlined_call_operand.vmem [shape: bf16[1,128,128], index: 1, kind: input, shape index: {}]
  %s2 = inlined_call_operand.vmem [shape: f32[1,128], index: 2, kind: input, shape index: {}]
  %s3 = inlined_call_operand.vmem [shape: f32[1,128], index: 3, kind: input, shape index: {}]
  %s4 = inlined_call_operand.vmem [shape: bf16[1,512,128], index: 4, kind: output, shape index: {}]
  %s5 = sld [smem:[#allocation0]]
  $region49: #{decoder_forward.9} parent=0
    _
  %s7 = ssub.s32 1, %s5
  %s8 = scalar_select 0, %s7, %s5
  loop: start=0, step=1, limit=4
  $region2: #{decoder_forward.9} parent=0 // loop_pre_header
    _
  $region3: #{decoder_forward.9} parent=0 // loop_header
    %s10 = sphi 0, %s14
    %p11 = scmp.ge.s32.totalorder %s10, 4
    %s17 = sphi 0, %s29
    %s18 = sphi 0, %s25
    %s19 = sphi 0, %s17
    %s20 = sphi 0, %s18
    %s21 = sphi 0, %s19
    %s22 = sphi 0, %s20
    %s34 = sphi 0, %s36
    %s37 = sphi 0, %s34
    %s38 = sphi 0, %s37
    %s54 = sphi 0, %s38
    %s60 = sphi 0, %s62
    %s63 = sphi 0, %s60
    %s64 = sphi 0, %s63
    %s80 = sphi 0, %s64
    %s84 = sphi 0, %s84
    %s86 = sphi 0, %s84
    %s87 = sphi 0, %s86
    %s101 = sphi 0, %s87
    %s105 = sphi 0, %s105
    %s107 = sphi 0, %s105
    %s108 = sphi 0, %s107
    %s122 = sphi 0, %s108
    %s130 = sphi 0, %s132
    %s133 = sphi 0, %s130
    %s134 = sphi 0, %s133
    %s150 = sphi 0, %s134
  $region4: #{decoder_forward.9} parent=0 // loop_header_branch
    %13 = sbr.rel (%p11) target = $region8
  $region5: #{decoder_forward.9} parent=0 // loop_body
    %s15 = ssub.s32 %s10, 1
    %s16 = ssub.s32 %s10, 2
    %s23 = sadd.s32 1, %s18
    %p24 = scmp.ge.s32.totalorder %s23, 2
    %s25 = scalar_select %p24, 0, %s23
    %s26 = sadd.s32 1, %s17
    %s27 = scalar_select %p24, %s26, %s17
    %p28 = scmp.ge.s32.totalorder %s27, 1
    %s29 = scalar_select %p28, 0, %s27
    %s30 = ssub.s32 %s17, %s29
    %s31 = ssub.s32 %s18, %s25
    %s32 = sor.u32 %s30, %s31
    %p33 = scmp.eq.s32.totalorder %s32, 0
    %s35 = sadd.s32 %s34, 1
    %s36 = scalar_select %p33, %s34, %s35
    %p39 = pneg %p33
    %p40 = scmp.eq.s32.totalorder %s10, 1
    %p41 = por %p39, %p40
    %p42 = scmp.ne.s32.totalorder %s34, %s37
    %p43 = scmp.eq.s32.totalorder %s10, 0
    %p44 = por %p42, %p43
    %p45 = scmp.ne.s32.totalorder %s34, %s37
    %p46 = scmp.eq.s32.totalorder %s15, 1
    %p47 = por %p45, %p46
    %p48 = scmp.ne.s32.totalorder %s37, %s38
    %p49 = scmp.eq.s32.totalorder %s15, 0
    %p50 = por %p48, %p49
    %p51 = scmp.ne.s32.totalorder %s37, %s38
    %p52 = scmp.eq.s32.totalorder %s16, 1
    %p53 = por %p51, %p52
    %p55 = scmp.ne.s32.totalorder %s38, %s54
    %p56 = scmp.eq.s32.totalorder %s16, 0
    %p57 = por %p55, %p56
    %s58 = ssub.s32 %s17, %s29
    %p59 = scmp.eq.s32.totalorder %s58, 0
    %s61 = sadd.s32 %s60, 1
    %s62 = scalar_select %p59, %s60, %s61
    %p65 = pneg %p59
    %p66 = scmp.eq.s32.totalorder %s10, 1
    %p67 = por %p65, %p66
    %p68 = scmp.ne.s32.totalorder %s60, %s63
    %p69 = scmp.eq.s32.totalorder %s10, 0
    %p70 = por %p68, %p69
    %p71 = scmp.ne.s32.totalorder %s60, %s63
    %p72 = scmp.eq.s32.totalorder %s15, 1
    %p73 = por %p71, %p72
    %p74 = scmp.ne.s32.totalorder %s63, %s64
    %p75 = scmp.eq.s32.totalorder %s15, 0
    %p76 = por %p74, %p75
    %p77 = scmp.ne.s32.totalorder %s63, %s64
    %p78 = scmp.eq.s32.totalorder %s16, 1
    %p79 = por %p77, %p78
    %p81 = scmp.ne.s32.totalorder %s64, %s80
    %p82 = scmp.eq.s32.totalorder %s16, 0
    %p83 = por %p81, %p82
    %s85 = sadd.s32 %s84, 1
    %p88 = scmp.eq.s32.totalorder %s10, 1
    %p89 = scmp.ne.s32.totalorder %s84, %s86
    %p90 = scmp.eq.s32.totalorder %s10, 0
    %p91 = por %p89, %p90
    %p92 = scmp.ne.s32.totalorder %s84, %s86
    %p93 = scmp.eq.s32.totalorder %s15, 1
    %p94 = por %p92, %p93
    %p95 = scmp.ne.s32.totalorder %s86, %s87
    %p96 = scmp.eq.s32.totalorder %s15, 0
    %p97 = por %p95, %p96
    %p98 = scmp.ne.s32.totalorder %s86, %s87
    %p99 = scmp.eq.s32.totalorder %s16, 1
    %p100 = por %p98, %p99
    %p102 = scmp.ne.s32.totalorder %s87, %s101
    %p103 = scmp.eq.s32.totalorder %s16, 0
    %p104 = por %p102, %p103
    %s106 = sadd.s32 %s105, 1
    %p109 = scmp.eq.s32.totalorder %s10, 1
    %p110 = scmp.ne.s32.totalorder %s105, %s107
    %p111 = scmp.eq.s32.totalorder %s10, 0
    %p112 = por %p110, %p111
    %p113 = scmp.ne.s32.totalorder %s105, %s107
    %p114 = scmp.eq.s32.totalorder %s15, 1
    %p115 = por %p113, %p114
    %p116 = scmp.ne.s32.totalorder %s107, %s108
    %p117 = scmp.eq.s32.totalorder %s15, 0
    %p118 = por %p116, %p117
    %p119 = scmp.ne.s32.totalorder %s107, %s108
    %p120 = scmp.eq.s32.totalorder %s16, 1
    %p121 = por %p119, %p120
    %p123 = scmp.ne.s32.totalorder %s108, %s122
    %p124 = scmp.eq.s32.totalorder %s16, 0
    %p125 = por %p123, %p124
    %s126 = ssub.s32 %s17, %s29
    %s127 = ssub.s32 %s18, %s25
    %s128 = sor.u32 %s126, %s127
    %p129 = scmp.eq.s32.totalorder %s128, 0
    %s131 = sadd.s32 %s130, 1
    %s132 = scalar_select %p129, %s130, %s131
    %p135 = pneg %p129
    %p136 = scmp.eq.s32.totalorder %s10, 1
    %p137 = por %p135, %p136
    %p138 = scmp.ne.s32.totalorder %s130, %s133
    %p139 = scmp.eq.s32.totalorder %s10, 0
    %p140 = por %p138, %p139
    %p141 = scmp.ne.s32.totalorder %s130, %s133
    %p142 = scmp.eq.s32.totalorder %s15, 1
    %p143 = por %p141, %p142
    %p144 = scmp.ne.s32.totalorder %s133, %s134
    %p145 = scmp.eq.s32.totalorder %s15, 0
    %p146 = por %p144, %p145
    %p147 = scmp.ne.s32.totalorder %s133, %s134
    %p148 = scmp.eq.s32.totalorder %s16, 1
    %p149 = por %p147, %p148
    %p151 = scmp.ne.s32.totalorder %s134, %s150
    %p152 = scmp.eq.s32.totalorder %s16, 0
    %p153 = por %p151, %p152
    %p154 = scmp.le.s32.totalorder 1, %s10
    %p155 = scmp.lt.s32.totalorder %s10, 3
    %p156 = pnand %p154, %p155
    %p157 = pneg %p156
    // Predicated region
    $region9: #{decoder_forward.9} parent=5 // pred_check
      _
    $region10: #{decoder_forward.9} parent=5 // pred_check_branch
      %159 = sbr.rel (%p156) target = $region12
    $region11: #{decoder_forward.9} parent=5 // pred_region
      %s160 = ssub.s32 %s10, 1
      // Predicated region
      $region13: #{decoder_forward.9} parent=11 // pred_check
        %p161 = pneg %p76
      $region14: #{decoder_forward.9} parent=11 // pred_check_branch
        %163 = sbr.rel (%p161) target = $region16
      $region15: #{decoder_forward.9} parent=11 // pred_region
        %p164 = scmp.lt.s32.totalorder %s19, 0
        %s165 = scalar_select %p164, %s19, 0
        %s166 = smul.addr %s165, 16
        %s167 = smul.addr %s166, 4
        %s168 = scalar_lea.vmem %s1, %s167
      $region16: #{decoder_forward.9} parent=11 // pred_fallthru
        _
      // Predicated region
      $region17: #{decoder_forward.9} parent=11 // pred_check
        %p169 = pneg %p97
      $region18: #{decoder_forward.9} parent=11 // pred_check_branch
        %171 = sbr.rel (%p169) target = $region20
      $region19: #{decoder_forward.9} parent=11 // pred_region
        _
      $region20: #{decoder_forward.9} parent=11 // pred_fallthru
        _
      // Predicated region
      $region21: #{decoder_forward.9} parent=11 // pred_check
        %p172 = pneg %p118
      $region22: #{decoder_forward.9} parent=11 // pred_check_branch
        %174 = sbr.rel (%p172) target = $region24
      $region23: #{decoder_forward.9} parent=11 // pred_region
        _
      $region24: #{decoder_forward.9} parent=11 // pred_fallthru
        _
    $region12: #{decoder_forward.9} parent=5 // pred_fallthru
      _
    %p175 = scmp.lt.s32.totalorder %s10, 2
    // Predicated region
    $region25: #{decoder_forward.9} parent=5 // pred_check
      %p176 = pneg %p175
    $region26: #{decoder_forward.9} parent=5 // pred_check_branch
      %178 = sbr.rel (%p176) target = $region28
    $region27: #{decoder_forward.9} parent=5 // pred_region
      // Predicated region
      $region29: #{decoder_forward.9} parent=27 // pred_check
        %p179 = pneg %p44
      $region30: #{decoder_forward.9} parent=27 // pred_check_branch
        %181 = sbr.rel (%p179) target = $region32
      $region31: #{decoder_forward.9} parent=27 // pred_region
        %s182 = smul.u32 32, %s18
        %p183 = scmp.lt.s32.totalorder %s17, 0
        %s184 = scalar_select %p183, %s17, 0
        %p185 = scmp.lt.s32.totalorder %s182, 63
        %s186 = scalar_select %p185, %s182, 63
        %s187 = smul.addr %s184, 64
        %s188 = sadd.s32 %s186, %s187
        %s189 = smul.addr %s188, 4
        %s190 = scalar_lea.vmem %s0, %s189
        %s191 = smul.u32 32, %s18
      $region32: #{decoder_forward.9} parent=27 // pred_fallthru
        _
    $region28: #{decoder_forward.9} parent=5 // pred_fallthru
      _
    %p192 = scmp.le.s32.totalorder 1, %s10
    %p193 = scmp.lt.s32.totalorder %s10, 3
    %p194 = pnand %p192, %p193
    %p195 = pneg %p194
    // Predicated region
    $region33: #{decoder_forward.9} parent=5 // pred_check
      _
    $region34: #{decoder_forward.9} parent=5 // pred_check_branch
      %197 = sbr.rel (%p194) target = $region36
    $region35: #{decoder_forward.9} parent=5 // pred_region
      %s198 = ssub.s32 %s10, 1
      %s199 = smul.u32 32, %s20
      %p200 = scmp.lt.s32.totalorder %s19, 0
      %s201 = scalar_select %p200, %s19, 0
      %p202 = scmp.lt.s32.totalorder %s199, 63
      %s203 = scalar_select %p202, %s199, 63
      %s204 = smul.addr %s201, 64
      %s205 = sadd.s32 %s203, %s204
      %s206 = smul.addr %s205, 4
      %s207 = scalar_lea.vmem %s0, %s206
      %p208 = pneg %p50
      %p209 = pneg %p47
      %p210 = scmp.lt.s32.totalorder %s19, 0
      %s211 = scalar_select %p210, %s19, 0
      %s212 = smul.addr %s211, 16
      %s213 = smul.addr %s212, 4
      %s214 = scalar_lea.vmem %s1, %s213
      %p215 = pneg %p76
      %p216 = pneg %p73
      %p217 = pneg %p97
      %p218 = pneg %p94
      %p219 = pneg %p118
      %p220 = pneg %p115
      %p221 = pneg %p146
      %p222 = pneg %p143
      %s223 = smul.u32 32, %s20
      %p224 = scmp.lt.s32.totalorder %s19, 0
      %s225 = scalar_select %p224, %s19, 0
      %p226 = scmp.lt.s32.totalorder %s223, 63
      %s227 = scalar_select %p226, %s223, 63
      %s228 = smul.addr %s225, 64
      %s229 = sadd.s32 %s227, %s228
      %s230 = smul.addr %s229, 4
      %s231 = scalar_lea.vmem %s4, %s230
      %s232 = smul.u32 32, %s20
      %p233 = scmp.lt.s32.totalorder %s19, 0
      %s234 = scalar_select %p233, %s19, 0
      %p235 = scmp.lt.s32.totalorder %s232, 63
      %s236 = scalar_select %p235, %s232, 63
      %s237 = smul.addr %s234, 64
      %s238 = sadd.s32 %s236, %s237
      %s239 = smul.addr %s238, 4
      %s240 = scalar_lea.vmem %s0, %s239
      %s241 = smul.u32 32, %s20
      %p242 = scmp.lt.s32.totalorder %s19, 0
      %s243 = scalar_select %p242, %s19, 0
      %s244 = smul.addr %s243, 16
      %s245 = smul.addr %s244, 4
      %s246 = scalar_lea.vmem %s1, %s245
      %s247 = smul.u32 32, %s20
      %p248 = scmp.lt.s32.totalorder %s19, 0
      %s249 = scalar_select %p248, %s19, 0
      %p250 = scmp.lt.s32.totalorder %s247, 63
      %s251 = scalar_select %p250, %s247, 63
      %s252 = smul.addr %s249, 64
      %s253 = sadd.s32 %s251, %s252
      %s254 = smul.addr %s253, 4
      %s255 = scalar_lea.vmem %s4, %s254
      %s256 = smul.u32 32, %s20
      %v258 = vld [vmem:[%s240] sm:$0xf]
      %v259 = vld [vmem:[%s240 + $0x4] sm:$0xf]
      %v260 = vld [vmem:[%s240 + $0x8] sm:$0xf]
      %v261 = vld [vmem:[%s240 + $0xc] sm:$0xf]
      %v262 = vld [vmem:[%s240 + $0x10] sm:$0xf]
      %v263 = vld [vmem:[%s240 + $0x14] sm:$0xf]
      %v264 = vld [vmem:[%s240 + $0x18] sm:$0xf]
      %v265 = vld [vmem:[%s240 + $0x1c] sm:$0xf]
      %v266 = vld [vmem:[%s240 + $0x20] sm:$0xf]
      %v267 = vld [vmem:[%s240 + $0x24] sm:$0xf]
      %v268 = vld [vmem:[%s240 + $0x28] sm:$0xf]
      %v269 = vld [vmem:[%s240 + $0x2c] sm:$0xf]
      %v270 = vld [vmem:[%s240 + $0x30] sm:$0xf]
      %v271 = vld [vmem:[%s240 + $0x34] sm:$0xf]
      %v272 = vld [vmem:[%s240 + $0x38] sm:$0xf]
      %v273 = vld [vmem:[%s240 + $0x3c] sm:$0xf]
      %v274 = vld [vmem:[%s240 + $0x40] sm:$0xf]
      %v275 = vld [vmem:[%s240 + $0x44] sm:$0xf]
      %v276 = vld [vmem:[%s240 + $0x48] sm:$0xf]
      %v277 = vld [vmem:[%s240 + $0x4c] sm:$0xf]
      %v278 = vld [vmem:[%s240 + $0x50] sm:$0xf]
      %v279 = vld [vmem:[%s240 + $0x54] sm:$0xf]
      %v280 = vld [vmem:[%s240 + $0x58] sm:$0xf]
      %v281 = vld [vmem:[%s240 + $0x5c] sm:$0xf]
      %v282 = vld [vmem:[%s240 + $0x60] sm:$0xf]
      %v283 = vld [vmem:[%s240 + $0x64] sm:$0xf]
      %v284 = vld [vmem:[%s240 + $0x68] sm:$0xf]
      %v285 = vld [vmem:[%s240 + $0x6c] sm:$0xf]
      %v286 = vld [vmem:[%s240 + $0x70] sm:$0xf]
      %v287 = vld [vmem:[%s240 + $0x74] sm:$0xf]
      %v288 = vld [vmem:[%s240 + $0x78] sm:$0xf]
      %v289 = vld [vmem:[%s240 + $0x7c] sm:$0xf]
      %v290 = vld [vmem:[%s246] sm:$0xf]
      %v291 = vld [vmem:[%s246 + $0x4] sm:$0xf]
      %v292 = vld [vmem:[%s246 + $0x8] sm:$0xf]
      %v293 = vld [vmem:[%s246 + $0xc] sm:$0xf]
      %v294 = vld [vmem:[%s246 + $0x10] sm:$0xf]
      %v295 = vld [vmem:[%s246 + $0x14] sm:$0xf]
      %v296 = vld [vmem:[%s246 + $0x18] sm:$0xf]
      %v297 = vld [vmem:[%s246 + $0x1c] sm:$0xf]
      %v298 = vld [vmem:[%s246 + $0x20] sm:$0xf]
      %v299 = vld [vmem:[%s246 + $0x24] sm:$0xf]
      %v300 = vld [vmem:[%s246 + $0x28] sm:$0xf]
      %v301 = vld [vmem:[%s246 + $0x2c] sm:$0xf]
      %v302 = vld [vmem:[%s246 + $0x30] sm:$0xf]
      %v303 = vld [vmem:[%s246 + $0x34] sm:$0xf]
      %v304 = vld [vmem:[%s246 + $0x38] sm:$0xf]
      %v305 = vld [vmem:[%s246 + $0x3c] sm:$0xf]
      %v338 = vunpack.c.l.b16 %v258
      %v339 = vunpack.c.l.b16 %v259
      %v340 = vunpack.c.l.b16 %v260
      %v341 = vunpack.c.l.b16 %v261
      %v342 = vunpack.c.l.b16 %v262
      %v343 = vunpack.c.l.b16 %v263
      %v344 = vunpack.c.l.b16 %v264
      %v345 = vunpack.c.l.b16 %v265
      %v346 = vunpack.c.l.b16 %v266
      %v347 = vunpack.c.l.b16 %v267
      %v348 = vunpack.c.l.b16 %v268
      %v349 = vunpack.c.l.b16 %v269
      %v350 = vunpack.c.l.b16 %v270
      %v351 = vunpack.c.l.b16 %v271
      %v352 = vunpack.c.l.b16 %v272
      %v353 = vunpack.c.l.b16 %v273
      %v354 = vunpack.c.l.b16 %v274
      %v355 = vunpack.c.l.b16 %v275
      %v356 = vunpack.c.l.b16 %v276
      %v357 = vunpack.c.l.b16 %v277
      %v358 = vunpack.c.l.b16 %v278
      %v359 = vunpack.c.l.b16 %v279
      %v360 = vunpack.c.l.b16 %v280
      %v361 = vunpack.c.l.b16 %v281
      %v362 = vunpack.c.l.b16 %v282
      %v363 = vunpack.c.l.b16 %v283
      %v364 = vunpack.c.l.b16 %v284
      %v365 = vunpack.c.l.b16 %v285
      %v366 = vunpack.c.l.b16 %v286
      %v367 = vunpack.c.l.b16 %v287
      %v368 = vunpack.c.l.b16 %v288
      %v369 = vunpack.c.l.b16 %v289
      %v370 = vpack.c.b16 %v339, %v338
      %v371 = vpack.c.b16 %v341, %v340
      %v372 = vpack.c.b16 %v343, %v342
      %v373 = vpack.c.b16 %v345, %v344
      %v374 = vpack.c.b16 %v347, %v346
      %v375 = vpack.c.b16 %v349, %v348
      %v376 = vpack.c.b16 %v351, %v350
      %v377 = vpack.c.b16 %v353, %v352
      %v378 = vpack.c.b16 %v355, %v354
      %v379 = vpack.c.b16 %v357, %v356
      %v380 = vpack.c.b16 %v359, %v358
      %v381 = vpack.c.b16 %v361, %v360
      %v382 = vpack.c.b16 %v363, %v362
      %v383 = vpack.c.b16 %v365, %v364
      %v384 = vpack.c.b16 %v367, %v366
      %v385 = vpack.c.b16 %v369, %v368
      %v418 = vunpack.c.l.b16 %v290
      %v419 = vunpack.c.l.b16 %v291
      %v420 = vunpack.c.l.b16 %v292
      %v421 = vunpack.c.l.b16 %v293
      %v422 = vunpack.c.l.b16 %v294
      %v423 = vunpack.c.l.b16 %v295
      %v424 = vunpack.c.l.b16 %v296
      %v425 = vunpack.c.l.b16 %v297
      %v426 = vunpack.c.l.b16 %v298
      %v427 = vunpack.c.l.b16 %v299
      %v428 = vunpack.c.l.b16 %v300
      %v429 = vunpack.c.l.b16 %v301
      %v430 = vunpack.c.l.b16 %v302
      %v431 = vunpack.c.l.b16 %v303
      %v432 = vunpack.c.l.b16 %v304
      %v433 = vunpack.c.l.b16 %v305
      %v434 = vpack.c.b16 %v419, %v418
      %v435 = vpack.c.b16 %v421, %v420
      %v436 = vpack.c.b16 %v423, %v422
      %v437 = vpack.c.b16 %v425, %v424
      %v438 = vpack.c.b16 %v427, %v426
      %v439 = vpack.c.b16 %v429, %v428
      %v440 = vpack.c.b16 %v431, %v430
      %v441 = vpack.c.b16 %v433, %v432
      %450 = vmatprep.subr.bf16.mxu0 0
      %451 = vmatpush1.bf16.msra.mxu0 %v434
      %452 = vmatprep.subr.bf16.mxu0 0
      %453 = vmatpush1.bf16.msra.mxu0 %v435
      %454 = vmatprep.subr.bf16.mxu0 0
      %455 = vmatpush1.bf16.msra.mxu0 %v436
      %456 = vmatprep.subr.bf16.mxu0 0
      %457 = vmatpush1.bf16.msra.mxu0 %v437
      %458 = vmatprep.subr.bf16.mxu0 0
      %459 = vmatpush1.bf16.msra.mxu0 %v438
      %460 = vmatprep.subr.bf16.mxu0 0
      %461 = vmatpush1.bf16.msra.mxu0 %v439
      %462 = vmatprep.subr.bf16.mxu0 0
      %463 = vmatpush1.bf16.msra.mxu0 %v440
      %464 = vmatprep.subr.bf16.mxu0 0
      %465 = vmatpush1.bf16.msra.mxu0 %v441
      %466 = vmatprep.subr.bf16.mxu0 0
      %467 = vmatpush1.bf16.msra.mxu0 0
      %468 = vmatprep.subr.bf16.mxu0 0
      %469 = vmatpush1.bf16.msra.mxu0 0
      %470 = vmatprep.subr.bf16.mxu0 0
      %471 = vmatpush1.bf16.msra.mxu0 0
      %472 = vmatprep.subr.bf16.mxu0 0
      %473 = vmatpush1.bf16.msra.mxu0 0
      %474 = vmatprep.subr.bf16.mxu0 0
      %475 = vmatpush1.bf16.msra.mxu0 0
      %476 = vmatprep.subr.bf16.mxu0 0
      %477 = vmatpush1.bf16.msra.mxu0 0
      %478 = vmatprep.subr.bf16.mxu0 0
      %479 = vmatpush1.bf16.msra.mxu0 0
      %480 = vmatprep.subr.bf16.mxu0 0
      %481 = vmatpush1.bf16.msra.mxu0 0
      %482 = vmatprep.mubr.bf16.mxu0 0
      %483 = vmatmul.mubr.bf16.gmra.mrb[0].mxu0 %v370
      %v484 = vpop.f32.mrb[0].mxu0
      %v485 = vadd.f32 0.0, %v484
      %v486 = vpop.f32.mrb[0].mxu0
      %v487 = vpop.f32.mrb[0].mxu0
      %v488 = vadd.f32 0.0, %v487
      %v489 = vpop.f32.mrb[0].mxu0
      %490 = vmatprep.mubr.bf16.mxu0 0
      %491 = vmatmul.mubr.bf16.gmra.mrb[0].mxu0 %v371
      %v492 = vpop.f32.mrb[0].mxu0
      %v493 = vadd.f32 0.0, %v492
      %v494 = vpop.f32.mrb[0].mxu0
      %v495 = vpop.f32.mrb[0].mxu0
      %v496 = vadd.f32 0.0, %v495
      %v497 = vpop.f32.mrb[0].mxu0
      %498 = vmatprep.mubr.bf16.mxu0 0
      %499 = vmatmul.mubr.bf16.gmra.mrb[0].mxu0 %v372
      %v500 = vpop.f32.mrb[0].mxu0
      %v501 = vadd.f32 0.0, %v500
      %v502 = vpop.f32.mrb[0].mxu0
      %v503 = vpop.f32.mrb[0].mxu0
      %v504 = vadd.f32 0.0, %v503
      %v505 = vpop.f32.mrb[0].mxu0
      %506 = vmatprep.mubr.bf16.mxu0 0
      %507 = vmatmul.mubr.bf16.gmra.mrb[0].mxu0 %v373
      %v508 = vpop.f32.mrb[0].mxu0
      %v509 = vadd.f32 0.0, %v508
      %v510 = vpop.f32.mrb[0].mxu0
      %v511 = vpop.f32.mrb[0].mxu0
      %v512 = vadd.f32 0.0, %v511
      %v513 = vpop.f32.mrb[0].mxu0
      %514 = vmatprep.mubr.bf16.mxu0 0
      %515 = vmatmul.mubr.bf16.gmra.mrb[0].mxu0 %v374
      %v516 = vpop.f32.mrb[0].mxu0
      %v517 = vadd.f32 0.0, %v516
      %v518 = vpop.f32.mrb[0].mxu0
      %v519 = vpop.f32.mrb[0].mxu0
      %v520 = vadd.f32 0.0, %v519
      %v521 = vpop.f32.mrb[0].mxu0
      %522 = vmatprep.mubr.bf16.mxu0 0
      %523 = vmatmul.mubr.bf16.gmra.mrb[0].mxu0 %v375
      %v524 = vpop.f32.mrb[0].mxu0
      %v525 = vadd.f32 0.0, %v524
      %v526 = vpop.f32.mrb[0].mxu0
      %v527 = vpop.f32.mrb[0].mxu0
      %v528 = vadd.f32 0.0, %v527
      %v529 = vpop.f32.mrb[0].mxu0
      %530 = vmatprep.mubr.bf16.mxu0 0
      %531 = vmatmul.mubr.bf16.gmra.mrb[0].mxu0 %v376
      %v532 = vpop.f32.mrb[0].mxu0
      %v533 = vadd.f32 0.0, %v532
      %v534 = vpop.f32.mrb[0].mxu0
      %v535 = vpop.f32.mrb[0].mxu0
      %v536 = vadd.f32 0.0, %v535
      %v537 = vpop.f32.mrb[0].mxu0
      %538 = vmatprep.mubr.bf16.mxu0 0
      %539 = vmatmul.mubr.bf16.gmra.mrb[0].mxu0 %v377
      %v540 = vpop.f32.mrb[0].mxu0
      %v541 = vadd.f32 0.0, %v540
      %v542 = vpop.f32.mrb[0].mxu0
      %v543 = vpop.f32.mrb[0].mxu0
      %v544 = vadd.f32 0.0, %v543
      %v545 = vpop.f32.mrb[0].mxu0
      %546 = vmatprep.mubr.bf16.mxu0 0
      %547 = vmatmul.mubr.bf16.gmra.mrb[0].mxu0 %v378
      %v548 = vpop.f32.mrb[0].mxu0
      %v549 = vadd.f32 0.0, %v548
      %v550 = vpop.f32.mrb[0].mxu0
      %v551 = vpop.f32.mrb[0].mxu0
      %v552 = vadd.f32 0.0, %v551
      %v553 = vpop.f32.mrb[0].mxu0
      %554 = vmatprep.mubr.bf16.mxu0 0
      %555 = vmatmul.mubr.bf16.gmra.mrb[0].mxu0 %v379
      %v556 = vpop.f32.mrb[0].mxu0
      %v557 = vadd.f32 0.0, %v556
      %v558 = vpop.f32.mrb[0].mxu0
      %v559 = vpop.f32.mrb[0].mxu0
      %v560 = vadd.f32 0.0, %v559
      %v561 = vpop.f32.mrb[0].mxu0
      %562 = vmatprep.mubr.bf16.mxu0 0
      %563 = vmatmul.mubr.bf16.gmra.mrb[0].mxu0 %v380
      %v564 = vpop.f32.mrb[0].mxu0
      %v565 = vadd.f32 0.0, %v564
      %v566 = vpop.f32.mrb[0].mxu0
      %v567 = vpop.f32.mrb[0].mxu0
      %v568 = vadd.f32 0.0, %v567
      %v569 = vpop.f32.mrb[0].mxu0
      %570 = vmatprep.mubr.bf16.mxu0 0
      %571 = vmatmul.mubr.bf16.gmra.mrb[0].mxu0 %v381
      %v572 = vpop.f32.mrb[0].mxu0
      %v573 = vadd.f32 0.0, %v572
      %v574 = vpop.f32.mrb[0].mxu0
      %v575 = vpop.f32.mrb[0].mxu0
      %v576 = vadd.f32 0.0, %v575
      %v577 = vpop.f32.mrb[0].mxu0
      %578 = vmatprep.mubr.bf16.mxu0 0
      %579 = vmatmul.mubr.bf16.gmra.mrb[0].mxu0 %v382
      %v580 = vpop.f32.mrb[0].mxu0
      %v581 = vadd.f32 0.0, %v580
      %v582 = vpop.f32.mrb[0].mxu0
      %v583 = vpop.f32.mrb[0].mxu0
      %v584 = vadd.f32 0.0, %v583
      %v585 = vpop.f32.mrb[0].mxu0
      %586 = vmatprep.mubr.bf16.mxu0 0
      %587 = vmatmul.mubr.bf16.gmra.mrb[0].mxu0 %v383
      %v588 = vpop.f32.mrb[0].mxu0
      %v589 = vadd.f32 0.0, %v588
      %v590 = vpop.f32.mrb[0].mxu0
      %v591 = vpop.f32.mrb[0].mxu0
      %v592 = vadd.f32 0.0, %v591
      %v593 = vpop.f32.mrb[0].mxu0
      %594 = vmatprep.mubr.bf16.mxu0 0
      %595 = vmatmul.mubr.bf16.gmra.mrb[0].mxu0 %v384
      %v596 = vpop.f32.mrb[0].mxu0
      %v597 = vadd.f32 0.0, %v596
      %v598 = vpop.f32.mrb[0].mxu0
      %v599 = vpop.f32.mrb[0].mxu0
      %v600 = vadd.f32 0.0, %v599
      %v601 = vpop.f32.mrb[0].mxu0
      %602 = vmatprep.mubr.bf16.mxu0 0
      %603 = vmatmul.mubr.bf16.gmra.mrb[0].mxu0 %v385
      %v604 = vpop.f32.mrb[0].mxu0
      %v605 = vadd.f32 0.0, %v604
      %v606 = vpop.f32.mrb[0].mxu0
      %v607 = vpop.f32.mrb[0].mxu0
      %v608 = vadd.f32 0.0, %v607
      %v609 = vpop.f32.mrb[0].mxu0
      %610 = vdwg.mxu0
      %v611 = vld [vmem:[%s2] sm:$0x1]
      %v613 = vlaneseq
      %v614 = vshrl.u32 %v613, 7
      %v615 = vsub.s32 0, %v614
      %v616 = vrot.slane %v611, %v615
      %v618 = vmul.f32 %v485, %v616
      %v619 = vmul.f32 %v488, %v616
      %v620 = vmul.f32 %v493, %v616
      %v621 = vmul.f32 %v496, %v616
      %v622 = vmul.f32 %v501, %v616
      %v623 = vmul.f32 %v504, %v616
      %v624 = vmul.f32 %v509, %v616
      %v625 = vmul.f32 %v512, %v616
      %v626 = vmul.f32 %v517, %v616
      %v627 = vmul.f32 %v520, %v616
      %v628 = vmul.f32 %v525, %v616
      %v629 = vmul.f32 %v528, %v616
      %v630 = vmul.f32 %v533, %v616
      %v631 = vmul.f32 %v536, %v616
      %v632 = vmul.f32 %v541, %v616
      %v633 = vmul.f32 %v544, %v616
      %v634 = vmul.f32 %v549, %v616
      %v635 = vmul.f32 %v552, %v616
      %v636 = vmul.f32 %v557, %v616
      %v637 = vmul.f32 %v560, %v616
      %v638 = vmul.f32 %v565, %v616
      %v639 = vmul.f32 %v568, %v616
      %v640 = vmul.f32 %v573, %v616
      %v641 = vmul.f32 %v576, %v616
      %v642 = vmul.f32 %v581, %v616
      %v643 = vmul.f32 %v584, %v616
      %v644 = vmul.f32 %v589, %v616
      %v645 = vmul.f32 %v592, %v616
      %v646 = vmul.f32 %v597, %v616
      %v647 = vmul.f32 %v600, %v616
      %v648 = vmul.f32 %v605, %v616
      %v649 = vmul.f32 %v608, %v616
      %v650 = vld [vmem:[%s3] sm:$0x1]
      %v652 = vlaneseq
      %v653 = vshrl.u32 %v652, 7
      %v654 = vsub.s32 0, %v653
      %v655 = vrot.slane %v650, %v654
      %v657 = vadd.f32 %v618, %v655
      %v658 = vadd.f32 %v619, %v655
      %v659 = vadd.f32 %v620, %v655
      %v660 = vadd.f32 %v621, %v655
      %v661 = vadd.f32 %v622, %v655
      %v662 = vadd.f32 %v623, %v655
      %v663 = vadd.f32 %v624, %v655
      %v664 = vadd.f32 %v625, %v655
      %v665 = vadd.f32 %v626, %v655
      %v666 = vadd.f32 %v627, %v655
      %v667 = vadd.f32 %v628, %v655
      %v668 = vadd.f32 %v629, %v655
      %v669 = vadd.f32 %v630, %v655
      %v670 = vadd.f32 %v631, %v655
      %v671 = vadd.f32 %v632, %v655
      %v672 = vadd.f32 %v633, %v655
      %v673 = vadd.f32 %v634, %v655
      %v674 = vadd.f32 %v635, %v655
      %v675 = vadd.f32 %v636, %v655
      %v676 = vadd.f32 %v637, %v655
      %v677 = vadd.f32 %v638, %v655
      %v678 = vadd.f32 %v639, %v655
      %v679 = vadd.f32 %v640, %v655
      %v680 = vadd.f32 %v641, %v655
      %v681 = vadd.f32 %v642, %v655
      %v682 = vadd.f32 %v643, %v655
      %v683 = vadd.f32 %v644, %v655
      %v684 = vadd.f32 %v645, %v655
      %v685 = vadd.f32 %v646, %v655
      %v686 = vadd.f32 %v647, %v655
      %v687 = vadd.f32 %v648, %v655
      %v688 = vadd.f32 %v649, %v655
      %v689 = vpack.c.bf16 %v658, %v657
      %v690 = vpack.c.bf16 %v660, %v659
      %v691 = vpack.c.bf16 %v662, %v661
      %v692 = vpack.c.bf16 %v664, %v663
      %v693 = vpack.c.bf16 %v666, %v665
      %v694 = vpack.c.bf16 %v668, %v667
      %v695 = vpack.c.bf16 %v670, %v669
      %v696 = vpack.c.bf16 %v672, %v671
      %v697 = vpack.c.bf16 %v674, %v673
      %v698 = vpack.c.bf16 %v676, %v675
      %v699 = vpack.c.bf16 %v678, %v677
      %v700 = vpack.c.bf16 %v680, %v679
      %v701 = vpack.c.bf16 %v682, %v681
      %v702 = vpack.c.bf16 %v684, %v683
      %v703 = vpack.c.bf16 %v686, %v685
      %v704 = vpack.c.bf16 %v688, %v687
      %v721 = vunpack.c.l.b16 %v689
      %v722 = vunpack.c.h.b16 %v689
      %v723 = vunpack.c.l.b16 %v690
      %v724 = vunpack.c.h.b16 %v690
      %v725 = vunpack.c.l.b16 %v691
      %v726 = vunpack.c.h.b16 %v691
      %v727 = vunpack.c.l.b16 %v692
      %v728 = vunpack.c.h.b16 %v692
      %v729 = vunpack.c.l.b16 %v693
      %v730 = vunpack.c.h.b16 %v693
      %v731 = vunpack.c.l.b16 %v694
      %v732 = vunpack.c.h.b16 %v694
      %v733 = vunpack.c.l.b16 %v695
      %v734 = vunpack.c.h.b16 %v695
      %v735 = vunpack.c.l.b16 %v696
      %v736 = vunpack.c.h.b16 %v696
      %v737 = vunpack.c.l.b16 %v697
      %v738 = vunpack.c.h.b16 %v697
      %v739 = vunpack.c.l.b16 %v698
      %v740 = vunpack.c.h.b16 %v698
      %v741 = vunpack.c.l.b16 %v699
      %v742 = vunpack.c.h.b16 %v699
      %v743 = vunpack.c.l.b16 %v700
      %v744 = vunpack.c.h.b16 %v700
      %v745 = vunpack.c.l.b16 %v701
      %v746 = vunpack.c.h.b16 %v701
      %v747 = vunpack.c.l.b16 %v702
      %v748 = vunpack.c.h.b16 %v702
      %v749 = vunpack.c.l.b16 %v703
      %v750 = vunpack.c.h.b16 %v703
      %v751 = vunpack.c.l.b16 %v704
      %v752 = vunpack.c.h.b16 %v704
      %v753 = vpack.c.b16 %v721, %v721
      %v754 = vpack.c.b16 %v722, %v722
      %v755 = vpack.c.b16 %v723, %v723
      %v756 = vpack.c.b16 %v724, %v724
      %v757 = vpack.c.b16 %v725, %v725
      %v758 = vpack.c.b16 %v726, %v726
      %v759 = vpack.c.b16 %v727, %v727
      %v760 = vpack.c.b16 %v728, %v728
      %v761 = vpack.c.b16 %v729, %v729
      %v762 = vpack.c.b16 %v730, %v730
      %v763 = vpack.c.b16 %v731, %v731
      %v764 = vpack.c.b16 %v732, %v732
      %v765 = vpack.c.b16 %v733, %v733
      %v766 = vpack.c.b16 %v734, %v734
      %v767 = vpack.c.b16 %v735, %v735
      %v768 = vpack.c.b16 %v736, %v736
      %v769 = vpack.c.b16 %v737, %v737
      %v770 = vpack.c.b16 %v738, %v738
      %v771 = vpack.c.b16 %v739, %v739
      %v772 = vpack.c.b16 %v740, %v740
      %v773 = vpack.c.b16 %v741, %v741
      %v774 = vpack.c.b16 %v742, %v742
      %v775 = vpack.c.b16 %v743, %v743
      %v776 = vpack.c.b16 %v744, %v744
      %v777 = vpack.c.b16 %v745, %v745
      %v778 = vpack.c.b16 %v746, %v746
      %v779 = vpack.c.b16 %v747, %v747
      %v780 = vpack.c.b16 %v748, %v748
      %v781 = vpack.c.b16 %v749, %v749
      %v782 = vpack.c.b16 %v750, %v750
      %v783 = vpack.c.b16 %v751, %v751
      %v784 = vpack.c.b16 %v752, %v752
      %817 = vst [vmem:[%s255] sm:$0xf] %v753
      %818 = vst [vmem:[%s255 + $0x4] sm:$0xf] %v754
      %819 = vst [vmem:[%s255 + $0x8] sm:$0xf] %v755
      %820 = vst [vmem:[%s255 + $0xc] sm:$0xf] %v756
      %821 = vst [vmem:[%s255 + $0x10] sm:$0xf] %v757
      %822 = vst [vmem:[%s255 + $0x14] sm:$0xf] %v758
      %823 = vst [vmem:[%s255 + $0x18] sm:$0xf] %v759
      %824 = vst [vmem:[%s255 + $0x1c] sm:$0xf] %v760
      %825 = vst [vmem:[%s255 + $0x20] sm:$0xf] %v761
      %826 = vst [vmem:[%s255 + $0x24] sm:$0xf] %v762
      %827 = vst [vmem:[%s255 + $0x28] sm:$0xf] %v763
      %828 = vst [vmem:[%s255 + $0x2c] sm:$0xf] %v764
      %829 = vst [vmem:[%s255 + $0x30] sm:$0xf] %v765
      %830 = vst [vmem:[%s255 + $0x34] sm:$0xf] %v766
      %831 = vst [vmem:[%s255 + $0x38] sm:$0xf] %v767
      %832 = vst [vmem:[%s255 + $0x3c] sm:$0xf] %v768
      %833 = vst [vmem:[%s255 + $0x40] sm:$0xf] %v769
      %834 = vst [vmem:[%s255 + $0x44] sm:$0xf] %v770
      %835 = vst [vmem:[%s255 + $0x48] sm:$0xf] %v771
      %836 = vst [vmem:[%s255 + $0x4c] sm:$0xf] %v772
      %837 = vst [vmem:[%s255 + $0x50] sm:$0xf] %v773
      %838 = vst [vmem:[%s255 + $0x54] sm:$0xf] %v774
      %839 = vst [vmem:[%s255 + $0x58] sm:$0xf] %v775
      %840 = vst [vmem:[%s255 + $0x5c] sm:$0xf] %v776
      %841 = vst [vmem:[%s255 + $0x60] sm:$0xf] %v777
      %842 = vst [vmem:[%s255 + $0x64] sm:$0xf] %v778
      %843 = vst [vmem:[%s255 + $0x68] sm:$0xf] %v779
      %844 = vst [vmem:[%s255 + $0x6c] sm:$0xf] %v780
      %845 = vst [vmem:[%s255 + $0x70] sm:$0xf] %v781
      %846 = vst [vmem:[%s255 + $0x74] sm:$0xf] %v782
      %847 = vst [vmem:[%s255 + $0x78] sm:$0xf] %v783
      %848 = vst [vmem:[%s255 + $0x7c] sm:$0xf] %v784
      %s849 = smul.u32 32, %s20
      %p850 = scmp.lt.s32.totalorder %s19, 0
      %s851 = scalar_select %p850, %s19, 0
      %p852 = scmp.lt.s32.totalorder %s849, 63
      %s853 = scalar_select %p852, %s849, 63
      %s854 = smul.addr %s851, 64
      %s855 = sadd.s32 %s853, %s854
      %s856 = smul.addr %s855, 4
      %s857 = scalar_lea.vmem %s4, %s856
      // Predicated region
      $region37: #{decoder_forward.9} parent=35 // pred_check
        %p858 = pneg %p143
      $region38: #{decoder_forward.9} parent=35 // pred_check_branch
        %860 = sbr.rel (%p858) target = $region40
      $region39: #{decoder_forward.9} parent=35 // pred_region
        %s861 = smul.u32 32, %s20
      $region40: #{decoder_forward.9} parent=35 // pred_fallthru
        _
    $region36: #{decoder_forward.9} parent=5 // pred_fallthru
      _
    %p862 = scmp.le.s32.totalorder 2, %s10
    // Predicated region
    $region41: #{decoder_forward.9} parent=5 // pred_check
      %p863 = pneg %p862
    $region42: #{decoder_forward.9} parent=5 // pred_check_branch
      %865 = sbr.rel (%p863) target = $region44
    $region43: #{decoder_forward.9} parent=5 // pred_region
      %s866 = ssub.s32 %s10, 2
      // Predicated region
      $region45: #{decoder_forward.9} parent=43 // pred_check
        %p867 = pneg %p149
      $region46: #{decoder_forward.9} parent=43 // pred_check_branch
        %869 = sbr.rel (%p867) target = $region48
      $region47: #{decoder_forward.9} parent=43 // pred_region
        %s870 = smul.u32 32, %s22
        %p871 = scmp.lt.s32.totalorder %s21, 0
        %s872 = scalar_select %p871, %s21, 0
        %p873 = scmp.lt.s32.totalorder %s870, 63
        %s874 = scalar_select %p873, %s870, 63
        %s875 = smul.addr %s872, 64
        %s876 = sadd.s32 %s874, %s875
        %s877 = smul.addr %s876, 4
        %s878 = scalar_lea.vmem %s4, %s877
      $region48: #{decoder_forward.9} parent=43 // pred_fallthru
        _
    $region44: #{decoder_forward.9} parent=5 // pred_fallthru
      _
  $region6: #{decoder_forward.9} parent=0 // loop_footer
    %s14 = sadd.s32 1, %s10
  $region7: #{decoder_forward.9} parent=0 // loop_footer_branch
    %9 = sbr.rel target = $region3
  $region8: #{decoder_forward.9} parent=0 // loop_exit
    _

// kernel: decoder_forward.10
$region0: #{decoder_forward.10}
  #allocation0 [shape = 'u32[]', space=smem, size = 0x4, offset = 0x4, fixed_abs, tag = 'smem constant byte address 0x4 - core index']
  #allocation1 [shape = 'u32[144,128]{1,0:T(1,128)}', space=vmem, size = 0x12000, scoped, tag = 'internal scratch']
  %s0 = inlined_call_operand.vmem [shape: bf16[1,128,128], index: 0, kind: input, shape index: {}]
  %s1 = inlined_call_operand.vmem [shape: bf16[1,128,128], index: 1, kind: input, shape index: {}]
  %s2 = inlined_call_operand.vmem [shape: f32[1,128], index: 2, kind: input, shape index: {}]
  %s3 = inlined_call_operand.vmem [shape: f32[1,128], index: 3, kind: input, shape index: {}]
  %s4 = inlined_call_operand.vmem [shape: bf16[1,128,128], index: 4, kind: output, shape index: {}]
  %s5 = sld [smem:[#allocation0]]
  $region26: #{decoder_forward.10} parent=0
    _
  %s7 = ssub.s32 1, %s5
  %s8 = scalar_select 0, %s7, %s5
  // Predicated region
  $region2: #{decoder_forward.10} parent=0 // pred_check
    _
  $region3: #{decoder_forward.10} parent=0 // pred_check_branch
    %10 = sbr.rel (0) target = $region5
  $region4: #{decoder_forward.10} parent=0 // pred_region
    _
  $region5: #{decoder_forward.10} parent=0 // pred_fallthru
    _
  // Predicated region
  $region6: #{decoder_forward.10} parent=0 // pred_check
    _
  $region7: #{decoder_forward.10} parent=0 // pred_check_branch
    %12 = sbr.rel (0) target = $region9
  $region8: #{decoder_forward.10} parent=0 // pred_region
    _
  $region9: #{decoder_forward.10} parent=0 // pred_fallthru
    _
  // Predicated region
  $region10: #{decoder_forward.10} parent=0 // pred_check
    _
  $region11: #{decoder_forward.10} parent=0 // pred_check_branch
    %14 = sbr.rel (0) target = $region13
  $region12: #{decoder_forward.10} parent=0 // pred_region
    _
  $region13: #{decoder_forward.10} parent=0 // pred_fallthru
    _
  // Predicated region
  $region14: #{decoder_forward.10} parent=0 // pred_check
    _
  $region15: #{decoder_forward.10} parent=0 // pred_check_branch
    %16 = sbr.rel (0) target = $region17
  $region16: #{decoder_forward.10} parent=0 // pred_region
    _
  $region17: #{decoder_forward.10} parent=0 // pred_fallthru
    _
  %v18 = vld [vmem:[%s0] sm:$0xf]
  %v19 = vld [vmem:[%s0 + $0x4] sm:$0xf]
  %v20 = vld [vmem:[%s0 + $0x8] sm:$0xf]
  %v21 = vld [vmem:[%s0 + $0xc] sm:$0xf]
  %v22 = vld [vmem:[%s0 + $0x10] sm:$0xf]
  %v23 = vld [vmem:[%s0 + $0x14] sm:$0xf]
  %v24 = vld [vmem:[%s0 + $0x18] sm:$0xf]
  %v25 = vld [vmem:[%s0 + $0x1c] sm:$0xf]
  %v26 = vld [vmem:[%s0 + $0x20] sm:$0xf]
  %v27 = vld [vmem:[%s0 + $0x24] sm:$0xf]
  %v28 = vld [vmem:[%s0 + $0x28] sm:$0xf]
  %v29 = vld [vmem:[%s0 + $0x2c] sm:$0xf]
  %v30 = vld [vmem:[%s0 + $0x30] sm:$0xf]
  %v31 = vld [vmem:[%s0 + $0x34] sm:$0xf]
  %v32 = vld [vmem:[%s0 + $0x38] sm:$0xf]
  %v33 = vld [vmem:[%s0 + $0x3c] sm:$0xf]
  %v34 = vld [vmem:[%s1] sm:$0xf]
  %v35 = vld [vmem:[%s1 + $0x4] sm:$0xf]
  %v36 = vld [vmem:[%s1 + $0x8] sm:$0xf]
  %v37 = vld [vmem:[%s1 + $0xc] sm:$0xf]
  %v38 = vld [vmem:[%s1 + $0x10] sm:$0xf]
  %v39 = vld [vmem:[%s1 + $0x14] sm:$0xf]
  %v40 = vld [vmem:[%s1 + $0x18] sm:$0xf]
  %v41 = vld [vmem:[%s1 + $0x1c] sm:$0xf]
  %v42 = vld [vmem:[%s1 + $0x20] sm:$0xf]
  %v43 = vld [vmem:[%s1 + $0x24] sm:$0xf]
  %v44 = vld [vmem:[%s1 + $0x28] sm:$0xf]
  %v45 = vld [vmem:[%s1 + $0x2c] sm:$0xf]
  %v46 = vld [vmem:[%s1 + $0x30] sm:$0xf]
  %v47 = vld [vmem:[%s1 + $0x34] sm:$0xf]
  %v48 = vld [vmem:[%s1 + $0x38] sm:$0xf]
  %v49 = vld [vmem:[%s1 + $0x3c] sm:$0xf]
  %v66 = vunpack.c.l.b16 %v18
  %v67 = vunpack.c.l.b16 %v19
  %v68 = vunpack.c.l.b16 %v20
  %v69 = vunpack.c.l.b16 %v21
  %v70 = vunpack.c.l.b16 %v22
  %v71 = vunpack.c.l.b16 %v23
  %v72 = vunpack.c.l.b16 %v24
  %v73 = vunpack.c.l.b16 %v25
  %v74 = vunpack.c.l.b16 %v26
  %v75 = vunpack.c.l.b16 %v27
  %v76 = vunpack.c.l.b16 %v28
  %v77 = vunpack.c.l.b16 %v29
  %v78 = vunpack.c.l.b16 %v30
  %v79 = vunpack.c.l.b16 %v31
  %v80 = vunpack.c.l.b16 %v32
  %v81 = vunpack.c.l.b16 %v33
  %v82 = vpack.c.b16 %v67, %v66
  %v83 = vpack.c.b16 %v69, %v68
  %v84 = vpack.c.b16 %v71, %v70
  %v85 = vpack.c.b16 %v73, %v72
  %v86 = vpack.c.b16 %v75, %v74
  %v87 = vpack.c.b16 %v77, %v76
  %v88 = vpack.c.b16 %v79, %v78
  %v89 = vpack.c.b16 %v81, %v80
  %v114 = vunpack.c.l.b16 %v34
  %v115 = vunpack.c.l.b16 %v35
  %v116 = vunpack.c.l.b16 %v36
  %v117 = vunpack.c.l.b16 %v37
  %v118 = vunpack.c.l.b16 %v38
  %v119 = vunpack.c.l.b16 %v39
  %v120 = vunpack.c.l.b16 %v40
  %v121 = vunpack.c.l.b16 %v41
  %v122 = vunpack.c.l.b16 %v42
  %v123 = vunpack.c.l.b16 %v43
  %v124 = vunpack.c.l.b16 %v44
  %v125 = vunpack.c.l.b16 %v45
  %v126 = vunpack.c.l.b16 %v46
  %v127 = vunpack.c.l.b16 %v47
  %v128 = vunpack.c.l.b16 %v48
  %v129 = vunpack.c.l.b16 %v49
  %v130 = vpack.c.b16 %v115, %v114
  %v131 = vpack.c.b16 %v117, %v116
  %v132 = vpack.c.b16 %v119, %v118
  %v133 = vpack.c.b16 %v121, %v120
  %v134 = vpack.c.b16 %v123, %v122
  %v135 = vpack.c.b16 %v125, %v124
  %v136 = vpack.c.b16 %v127, %v126
  %v137 = vpack.c.b16 %v129, %v128
  %146 = vmatprep.subr.bf16.mxu0 0
  %147 = vmatpush1.bf16.msra.mxu0 %v130
  %148 = vmatprep.subr.bf16.mxu0 0
  %149 = vmatpush1.bf16.msra.mxu0 %v131
  %150 = vmatprep.subr.bf16.mxu0 0
  %151 = vmatpush1.bf16.msra.mxu0 %v132
  %152 = vmatprep.subr.bf16.mxu0 0
  %153 = vmatpush1.bf16.msra.mxu0 %v133
  %154 = vmatprep.subr.bf16.mxu0 0
  %155 = vmatpush1.bf16.msra.mxu0 %v134
  %156 = vmatprep.subr.bf16.mxu0 0
  %157 = vmatpush1.bf16.msra.mxu0 %v135
  %158 = vmatprep.subr.bf16.mxu0 0
  %159 = vmatpush1.bf16.msra.mxu0 %v136
  %160 = vmatprep.subr.bf16.mxu0 0
  %161 = vmatpush1.bf16.msra.mxu0 %v137
  %162 = vmatprep.subr.bf16.mxu0 0
  %163 = vmatpush1.bf16.msra.mxu0 0
  %164 = vmatprep.subr.bf16.mxu0 0
  %165 = vmatpush1.bf16.msra.mxu0 0
  %166 = vmatprep.subr.bf16.mxu0 0
  %167 = vmatpush1.bf16.msra.mxu0 0
  %168 = vmatprep.subr.bf16.mxu0 0
  %169 = vmatpush1.bf16.msra.mxu0 0
  %170 = vmatprep.subr.bf16.mxu0 0
  %171 = vmatpush1.bf16.msra.mxu0 0
  %172 = vmatprep.subr.bf16.mxu0 0
  %173 = vmatpush1.bf16.msra.mxu0 0
  %174 = vmatprep.subr.bf16.mxu0 0
  %175 = vmatpush1.bf16.msra.mxu0 0
  %176 = vmatprep.subr.bf16.mxu0 0
  %177 = vmatpush1.bf16.msra.mxu0 0
  %178 = vmatprep.mubr.bf16.mxu0 0
  %179 = vmatmul.mubr.bf16.gmra.mrb[0].mxu0 %v82
  %v180 = vpop.f32.mrb[0].mxu0
  %v181 = vadd.f32 0.0, %v180
  %v182 = vpop.f32.mrb[0].mxu0
  %v183 = vpop.f32.mrb[0].mxu0
  %v184 = vadd.f32 0.0, %v183
  %v185 = vpop.f32.mrb[0].mxu0
  %186 = vmatprep.mubr.bf16.mxu0 0
  %187 = vmatmul.mubr.bf16.gmra.mrb[0].mxu0 %v83
  %v188 = vpop.f32.mrb[0].mxu0
  %v189 = vadd.f32 0.0, %v188
  %v190 = vpop.f32.mrb[0].mxu0
  %v191 = vpop.f32.mrb[0].mxu0
  %v192 = vadd.f32 0.0, %v191
  %v193 = vpop.f32.mrb[0].mxu0
  %194 = vmatprep.mubr.bf16.mxu0 0
  %195 = vmatmul.mubr.bf16.gmra.mrb[0].mxu0 %v84
  %v196 = vpop.f32.mrb[0].mxu0
  %v197 = vadd.f32 0.0, %v196
  %v198 = vpop.f32.mrb[0].mxu0
  %v199 = vpop.f32.mrb[0].mxu0
  %v200 = vadd.f32 0.0, %v199
  %v201 = vpop.f32.mrb[0].mxu0
  %202 = vmatprep.mubr.bf16.mxu0 0
  %203 = vmatmul.mubr.bf16.gmra.mrb[0].mxu0 %v85
  %v204 = vpop.f32.mrb[0].mxu0
  %v205 = vadd.f32 0.0, %v204
  %v206 = vpop.f32.mrb[0].mxu0
  %v207 = vpop.f32.mrb[0].mxu0
  %v208 = vadd.f32 0.0, %v207
  %v209 = vpop.f32.mrb[0].mxu0
  %210 = vmatprep.mubr.bf16.mxu0 0
  %211 = vmatmul.mubr.bf16.gmra.mrb[0].mxu0 %v86
  %v212 = vpop.f32.mrb[0].mxu0
  %v213 = vadd.f32 0.0, %v212
  %v214 = vpop.f32.mrb[0].mxu0
  %v215 = vpop.f32.mrb[0].mxu0
  %v216 = vadd.f32 0.0, %v215
  %v217 = vpop.f32.mrb[0].mxu0
  %218 = vmatprep.mubr.bf16.mxu0 0
  %219 = vmatmul.mubr.bf16.gmra.mrb[0].mxu0 %v87
  %v220 = vpop.f32.mrb[0].mxu0
  %v221 = vadd.f32 0.0, %v220
  %v222 = vpop.f32.mrb[0].mxu0
  %v223 = vpop.f32.mrb[0].mxu0
  %v224 = vadd.f32 0.0, %v223
  %v225 = vpop.f32.mrb[0].mxu0
  %226 = vmatprep.mubr.bf16.mxu0 0
  %227 = vmatmul.mubr.bf16.gmra.mrb[0].mxu0 %v88
  %v228 = vpop.f32.mrb[0].mxu0
  %v229 = vadd.f32 0.0, %v228
  %v230 = vpop.f32.mrb[0].mxu0
  %v231 = vpop.f32.mrb[0].mxu0
  %v232 = vadd.f32 0.0, %v231
  %v233 = vpop.f32.mrb[0].mxu0
  %234 = vmatprep.mubr.bf16.mxu0 0
  %235 = vmatmul.mubr.bf16.gmra.mrb[0].mxu0 %v89
  %v236 = vpop.f32.mrb[0].mxu0
  %v237 = vadd.f32 0.0, %v236
  %v238 = vpop.f32.mrb[0].mxu0
  %v239 = vpop.f32.mrb[0].mxu0
  %v240 = vadd.f32 0.0, %v239
  %v241 = vpop.f32.mrb[0].mxu0
  %242 = vdwg.mxu0
  %v243 = vld [vmem:[%s2] sm:$0x1]
  %v245 = vlaneseq
  %v246 = vshrl.u32 %v245, 7
  %v247 = vsub.s32 0, %v246
  %v248 = vrot.slane %v243, %v247
  %v250 = vmul.f32 %v181, %v248
  %v251 = vmul.f32 %v184, %v248
  %v252 = vmul.f32 %v189, %v248
  %v253 = vmul.f32 %v192, %v248
  %v254 = vmul.f32 %v197, %v248
  %v255 = vmul.f32 %v200, %v248
  %v256 = vmul.f32 %v205, %v248
  %v257 = vmul.f32 %v208, %v248
  %v258 = vmul.f32 %v213, %v248
  %v259 = vmul.f32 %v216, %v248
  %v260 = vmul.f32 %v221, %v248
  %v261 = vmul.f32 %v224, %v248
  %v262 = vmul.f32 %v229, %v248
  %v263 = vmul.f32 %v232, %v248
  %v264 = vmul.f32 %v237, %v248
  %v265 = vmul.f32 %v240, %v248
  %v266 = vld [vmem:[%s3] sm:$0x1]
  %v268 = vlaneseq
  %v269 = vshrl.u32 %v268, 7
  %v270 = vsub.s32 0, %v269
  %v271 = vrot.slane %v266, %v270
  %v273 = vadd.f32 %v250, %v271
  %v274 = vadd.f32 %v251, %v271
  %v275 = vadd.f32 %v252, %v271
  %v276 = vadd.f32 %v253, %v271
  %v277 = vadd.f32 %v254, %v271
  %v278 = vadd.f32 %v255, %v271
  %v279 = vadd.f32 %v256, %v271
  %v280 = vadd.f32 %v257, %v271
  %v281 = vadd.f32 %v258, %v271
  %v282 = vadd.f32 %v259, %v271
  %v283 = vadd.f32 %v260, %v271
  %v284 = vadd.f32 %v261, %v271
  %v285 = vadd.f32 %v262, %v271
  %v286 = vadd.f32 %v263, %v271
  %v287 = vadd.f32 %v264, %v271
  %v288 = vadd.f32 %v265, %v271
  %v289 = vmax.f32 %v273, 0.0
  %v290 = vmax.f32 %v274, 0.0
  %v291 = vmax.f32 %v275, 0.0
  %v292 = vmax.f32 %v276, 0.0
  %v293 = vmax.f32 %v277, 0.0
  %v294 = vmax.f32 %v278, 0.0
  %v295 = vmax.f32 %v279, 0.0
  %v296 = vmax.f32 %v280, 0.0
  %v297 = vmax.f32 %v281, 0.0
  %v298 = vmax.f32 %v282, 0.0
  %v299 = vmax.f32 %v283, 0.0
  %v300 = vmax.f32 %v284, 0.0
  %v301 = vmax.f32 %v285, 0.0
  %v302 = vmax.f32 %v286, 0.0
  %v303 = vmax.f32 %v287, 0.0
  %v304 = vmax.f32 %v288, 0.0
  %v305 = vpack.c.bf16 %v290, %v289
  %v306 = vpack.c.bf16 %v292, %v291
  %v307 = vpack.c.bf16 %v294, %v293
  %v308 = vpack.c.bf16 %v296, %v295
  %v309 = vpack.c.bf16 %v298, %v297
  %v310 = vpack.c.bf16 %v300, %v299
  %v311 = vpack.c.bf16 %v302, %v301
  %v312 = vpack.c.bf16 %v304, %v303
  %v321 = vunpack.c.l.b16 %v305
  %v322 = vunpack.c.h.b16 %v305
  %v323 = vunpack.c.l.b16 %v306
  %v324 = vunpack.c.h.b16 %v306
  %v325 = vunpack.c.l.b16 %v307
  %v326 = vunpack.c.h.b16 %v307
  %v327 = vunpack.c.l.b16 %v308
  %v328 = vunpack.c.h.b16 %v308
  %v329 = vunpack.c.l.b16 %v309
  %v330 = vunpack.c.h.b16 %v309
  %v331 = vunpack.c.l.b16 %v310
  %v332 = vunpack.c.h.b16 %v310
  %v333 = vunpack.c.l.b16 %v311
  %v334 = vunpack.c.h.b16 %v311
  %v335 = vunpack.c.l.b16 %v312
  %v336 = vunpack.c.h.b16 %v312
  %v337 = vpack.c.b16 %v321, %v321
  %v338 = vpack.c.b16 %v322, %v322
  %v339 = vpack.c.b16 %v323, %v323
  %v340 = vpack.c.b16 %v324, %v324
  %v341 = vpack.c.b16 %v325, %v325
  %v342 = vpack.c.b16 %v326, %v326
  %v343 = vpack.c.b16 %v327, %v327
  %v344 = vpack.c.b16 %v328, %v328
  %v345 = vpack.c.b16 %v329, %v329
  %v346 = vpack.c.b16 %v330, %v330
  %v347 = vpack.c.b16 %v331, %v331
  %v348 = vpack.c.b16 %v332, %v332
  %v349 = vpack.c.b16 %v333, %v333
  %v350 = vpack.c.b16 %v334, %v334
  %v351 = vpack.c.b16 %v335, %v335
  %v352 = vpack.c.b16 %v336, %v336
  %369 = vst [vmem:[%s4] sm:$0xf] %v337
  %370 = vst [vmem:[%s4 + $0x4] sm:$0xf] %v338
  %371 = vst [vmem:[%s4 + $0x8] sm:$0xf] %v339
  %372 = vst [vmem:[%s4 + $0xc] sm:$0xf] %v340
  %373 = vst [vmem:[%s4 + $0x10] sm:$0xf] %v341
  %374 = vst [vmem:[%s4 + $0x14] sm:$0xf] %v342
  %375 = vst [vmem:[%s4 + $0x18] sm:$0xf] %v343
  %376 = vst [vmem:[%s4 + $0x1c] sm:$0xf] %v344
  %377 = vst [vmem:[%s4 + $0x20] sm:$0xf] %v345
  %378 = vst [vmem:[%s4 + $0x24] sm:$0xf] %v346
  %379 = vst [vmem:[%s4 + $0x28] sm:$0xf] %v347
  %380 = vst [vmem:[%s4 + $0x2c] sm:$0xf] %v348
  %381 = vst [vmem:[%s4 + $0x30] sm:$0xf] %v349
  %382 = vst [vmem:[%s4 + $0x34] sm:$0xf] %v350
  %383 = vst [vmem:[%s4 + $0x38] sm:$0xf] %v351
  %384 = vst [vmem:[%s4 + $0x3c] sm:$0xf] %v352
  // Predicated region
  $region18: #{decoder_forward.10} parent=0 // pred_check
    _
  $region19: #{decoder_forward.10} parent=0 // pred_check_branch
    %386 = sbr.rel (0) target = $region21
  $region20: #{decoder_forward.10} parent=0 // pred_region
    _
  $region21: #{decoder_forward.10} parent=0 // pred_fallthru
    _
  // Predicated region
  $region22: #{decoder_forward.10} parent=0 // pred_check
    _
  $region23: #{decoder_forward.10} parent=0 // pred_check_branch
    %388 = sbr.rel (0) target = $region25
  $region24: #{decoder_forward.10} parent=0 // pred_region
    _
  $region25: #{decoder_forward.10} parent=0 // pred_fallthru
    _

// kernel: decoder_forward.14
$region0: #{decoder_forward.14}
  #allocation0 [shape = 'u32[]', space=smem, size = 0x4, offset = 0x4, fixed_abs, tag = 'smem constant byte address 0x4 - core index']
  #allocation1 [shape = 'u32[144,128]{1,0:T(1,128)}', space=vmem, size = 0x12000, scoped, tag = 'internal scratch']
  %s0 = inlined_call_operand.vmem [shape: bf16[1,128,1152], index: 0, kind: input, shape index: {}]
  %s1 = inlined_call_operand.vmem [shape: bf16[1,1152,128], index: 1, kind: input, shape index: {}]
  %s2 = inlined_call_operand.vmem [shape: f32[1,128], index: 2, kind: input, shape index: {}]
  %s3 = inlined_call_operand.vmem [shape: f32[1,128], index: 3, kind: input, shape index: {}]
  %s4 = inlined_call_operand.vmem [shape: bf16[1,128,128], index: 4, kind: output, shape index: {}]
  %s5 = sld [smem:[#allocation0]]
  $region26: #{decoder_forward.14} parent=0
    _
  %s7 = ssub.s32 1, %s5
  %s8 = scalar_select 0, %s7, %s5
  // Predicated region
  $region2: #{decoder_forward.14} parent=0 // pred_check
    _
  $region3: #{decoder_forward.14} parent=0 // pred_check_branch
    %10 = sbr.rel (0) target = $region5
  $region4: #{decoder_forward.14} parent=0 // pred_region
    _
  $region5: #{decoder_forward.14} parent=0 // pred_fallthru
    _
  // Predicated region
  $region6: #{decoder_forward.14} parent=0 // pred_check
    _
  $region7: #{decoder_forward.14} parent=0 // pred_check_branch
    %12 = sbr.rel (0) target = $region9
  $region8: #{decoder_forward.14} parent=0 // pred_region
    _
  $region9: #{decoder_forward.14} parent=0 // pred_fallthru
    _
  // Predicated region
  $region10: #{decoder_forward.14} parent=0 // pred_check
    _
  $region11: #{decoder_forward.14} parent=0 // pred_check_branch
    %14 = sbr.rel (0) target = $region13
  $region12: #{decoder_forward.14} parent=0 // pred_region
    _
  $region13: #{decoder_forward.14} parent=0 // pred_fallthru
    _
  // Predicated region
  $region14: #{decoder_forward.14} parent=0 // pred_check
    _
  $region15: #{decoder_forward.14} parent=0 // pred_check_branch
    %16 = sbr.rel (0) target = $region17
  $region16: #{decoder_forward.14} parent=0 // pred_region
    _
  $region17: #{decoder_forward.14} parent=0 // pred_fallthru
    _
  %v18 = vld [vmem:[%s0] sm:$0xff]
  %v19 = vld [vmem:[%s0 + $0x8] sm:$0xff]
  %v20 = vld [vmem:[%s0 + $0x10] sm:$0xff]
  %v21 = vld [vmem:[%s0 + $0x18] sm:$0xff]
  %v22 = vld [vmem:[%s0 + $0x20] sm:$0xf]
  %v23 = vld [vmem:[%s0 + $0x24] sm:$0xff]
  %v24 = vld [vmem:[%s0 + $0x2c] sm:$0xff]
  %v25 = vld [vmem:[%s0 + $0x34] sm:$0xff]
  %v26 = vld [vmem:[%s0 + $0x3c] sm:$0xff]
  %v27 = vld [vmem:[%s0 + $0x44] sm:$0xf]
  %v28 = vld [vmem:[%s0 + $0x48] sm:$0xff]
  %v29 = vld [vmem:[%s0 + $0x50] sm:$0xff]
  %v30 = vld [vmem:[%s0 + $0x58] sm:$0xff]
  %v31 = vld [vmem:[%s0 + $0x60] sm:$0xff]
  %v32 = vld [vmem:[%s0 + $0x68] sm:$0xf]
  %v33 = vld [vmem:[%s0 + $0x6c] sm:$0xff]
  %v34 = vld [vmem:[%s0 + $0x74] sm:$0xff]
  %v35 = vld [vmem:[%s0 + $0x7c] sm:$0xff]
  %v36 = vld [vmem:[%s0 + $0x84] sm:$0xff]
  %v37 = vld [vmem:[%s0 + $0x8c] sm:$0xf]
  %v38 = vld [vmem:[%s0 + $0x90] sm:$0xff]
  %v39 = vld [vmem:[%s0 + $0x98] sm:$0xff]
  %v40 = vld [vmem:[%s0 + $0xa0] sm:$0xff]
  %v41 = vld [vmem:[%s0 + $0xa8] sm:$0xff]
  %v42 = vld [vmem:[%s0 + $0xb0] sm:$0xf]
  %v43 = vld [vmem:[%s0 + $0xb4] sm:$0xff]
  %v44 = vld [vmem:[%s0 + $0xbc] sm:$0xff]
  %v45 = vld [vmem:[%s0 + $0xc4] sm:$0xff]
  %v46 = vld [vmem:[%s0 + $0xcc] sm:$0xff]
  %v47 = vld [vmem:[%s0 + $0xd4] sm:$0xf]
  %v48 = vld [vmem:[%s0 + $0xd8] sm:$0xff]
  %v49 = vld [vmem:[%s0 + $0xe0] sm:$0xff]
  %v50 = vld [vmem:[%s0 + $0xe8] sm:$0xff]
  %v51 = vld [vmem:[%s0 + $0xf0] sm:$0xff]
  %v52 = vld [vmem:[%s0 + $0xf8] sm:$0xf]
  %v53 = vld [vmem:[%s0 + $0xfc] sm:$0xff]
  %v54 = vld [vmem:[%s0 + $0x104] sm:$0xff]
  %v55 = vld [vmem:[%s0 + $0x10c] sm:$0xff]
  %v56 = vld [vmem:[%s0 + $0x114] sm:$0xff]
  %v57 = vld [vmem:[%s0 + $0x11c] sm:$0xf]
  %v58 = vld [vmem:[%s0 + $0x120] sm:$0xff]
  %v59 = vld [vmem:[%s0 + $0x128] sm:$0xff]
  %v60 = vld [vmem:[%s0 + $0x130] sm:$0xff]
  %v61 = vld [vmem:[%s0 + $0x138] sm:$0xff]
  %v62 = vld [vmem:[%s0 + $0x140] sm:$0xf]
  %v63 = vld [vmem:[%s0 + $0x144] sm:$0xff]
  %v64 = vld [vmem:[%s0 + $0x14c] sm:$0xff]
  %v65 = vld [vmem:[%s0 + $0x154] sm:$0xff]
  %v66 = vld [vmem:[%s0 + $0x15c] sm:$0xff]
  %v67 = vld [vmem:[%s0 + $0x164] sm:$0xf]
  %v68 = vld [vmem:[%s0 + $0x168] sm:$0xff]
  %v69 = vld [vmem:[%s0 + $0x170] sm:$0xff]
  %v70 = vld [vmem:[%s0 + $0x178] sm:$0xff]
  %v71 = vld [vmem:[%s0 + $0x180] sm:$0xff]
  %v72 = vld [vmem:[%s0 + $0x188] sm:$0xf]
  %v73 = vld [vmem:[%s0 + $0x18c] sm:$0xff]
  %v74 = vld [vmem:[%s0 + $0x194] sm:$0xff]
  %v75 = vld [vmem:[%s0 + $0x19c] sm:$0xff]
  %v76 = vld [vmem:[%s0 + $0x1a4] sm:$0xff]
  %v77 = vld [vmem:[%s0 + $0x1ac] sm:$0xf]
  %v78 = vld [vmem:[%s0 + $0x1b0] sm:$0xff]
  %v79 = vld [vmem:[%s0 + $0x1b8] sm:$0xff]
  %v80 = vld [vmem:[%s0 + $0x1c0] sm:$0xff]
  %v81 = vld [vmem:[%s0 + $0x1c8] sm:$0xff]
  %v82 = vld [vmem:[%s0 + $0x1d0] sm:$0xf]
  %v83 = vld [vmem:[%s0 + $0x1d4] sm:$0xff]
  %v84 = vld [vmem:[%s0 + $0x1dc] sm:$0xff]
  %v85 = vld [vmem:[%s0 + $0x1e4] sm:$0xff]
  %v86 = vld [vmem:[%s0 + $0x1ec] sm:$0xff]
  %v87 = vld [vmem:[%s0 + $0x1f4] sm:$0xf]
  %v88 = vld [vmem:[%s0 + $0x1f8] sm:$0xff]
  %v89 = vld [vmem:[%s0 + $0x200] sm:$0xff]
  %v90 = vld [vmem:[%s0 + $0x208] sm:$0xff]
  %v91 = vld [vmem:[%s0 + $0x210] sm:$0xff]
  %v92 = vld [vmem:[%s0 + $0x218] sm:$0xf]
  %v93 = vld [vmem:[%s0 + $0x21c] sm:$0xff]
  %v94 = vld [vmem:[%s0 + $0x224] sm:$0xff]
  %v95 = vld [vmem:[%s0 + $0x22c] sm:$0xff]
  %v96 = vld [vmem:[%s0 + $0x234] sm:$0xff]
  %v97 = vld [vmem:[%s0 + $0x23c] sm:$0xf]
  %v98 = vld [vmem:[%s1] sm:$0xf]
  %v99 = vld [vmem:[%s1 + $0x4] sm:$0xf]
  %v100 = vld [vmem:[%s1 + $0x8] sm:$0xf]
  %v101 = vld [vmem:[%s1 + $0xc] sm:$0xf]
  %v102 = vld [vmem:[%s1 + $0x10] sm:$0xf]
  %v103 = vld [vmem:[%s1 + $0x14] sm:$0xf]
  %v104 = vld [vmem:[%s1 + $0x18] sm:$0xf]
  %v105 = vld [vmem:[%s1 + $0x1c] sm:$0xf]
  %v106 = vld [vmem:[%s1 + $0x20] sm:$0xf]
  %v107 = vld [vmem:[%s1 + $0x24] sm:$0xf]
  %v108 = vld [vmem:[%s1 + $0x28] sm:$0xf]
  %v109 = vld [vmem:[%s1 + $0x2c] sm:$0xf]
  %v110 = vld [vmem:[%s1 + $0x30] sm:$0xf]
  %v111 = vld [vmem:[%s1 + $0x34] sm:$0xf]
  %v112 = vld [vmem:[%s1 + $0x38] sm:$0xf]
  %v113 = vld [vmem:[%s1 + $0x3c] sm:$0xf]
  %v114 = vld [vmem:[%s1 + $0x40] sm:$0xf]
  %v115 = vld [vmem:[%s1 + $0x44] sm:$0xf]
  %v116 = vld [vmem:[%s1 + $0x48] sm:$0xf]
  %v117 = vld [vmem:[%s1 + $0x4c] sm:$0xf]
  %v118 = vld [vmem:[%s1 + $0x50] sm:$0xf]
  %v119 = vld [vmem:[%s1 + $0x54] sm:$0xf]
  %v120 = vld [vmem:[%s1 + $0x58] sm:$0xf]
  %v121 = vld [vmem:[%s1 + $0x5c] sm:$0xf]
  %v122 = vld [vmem:[%s1 + $0x60] sm:$0xf]
  %v123 = vld [vmem:[%s1 + $0x64] sm:$0xf]
  %v124 = vld [vmem:[%s1 + $0x68] sm:$0xf]
  %v125 = vld [vmem:[%s1 + $0x6c] sm:$0xf]
  %v126 = vld [vmem:[%s1 + $0x70] sm:$0xf]
  %v127 = vld [vmem:[%s1 + $0x74] sm:$0xf]
  %v128 = vld [vmem:[%s1 + $0x78] sm:$0xf]
  %v129 = vld [vmem:[%s1 + $0x7c] sm:$0xf]
  %v130 = vld [vmem:[%s1 + $0x80] sm:$0xf]
  %v131 = vld [vmem:[%s1 + $0x84] sm:$0xf]
  %v132 = vld [vmem:[%s1 + $0x88] sm:$0xf]
  %v133 = vld [vmem:[%s1 + $0x8c] sm:$0xf]
  %v134 = vld [vmem:[%s1 + $0x90] sm:$0xf]
  %v135 = vld [vmem:[%s1 + $0x94] sm:$0xf]
  %v136 = vld [vmem:[%s1 + $0x98] sm:$0xf]
  %v137 = vld [vmem:[%s1 + $0x9c] sm:$0xf]
  %v138 = vld [vmem:[%s1 + $0xa0] sm:$0xf]
  %v139 = vld [vmem:[%s1 + $0xa4] sm:$0xf]
  %v140 = vld [vmem:[%s1 + $0xa8] sm:$0xf]
  %v141 = vld [vmem:[%s1 + $0xac] sm:$0xf]
  %v142 = vld [vmem:[%s1 + $0xb0] sm:$0xf]
  %v143 = vld [vmem:[%s1 + $0xb4] sm:$0xf]
  %v144 = vld [vmem:[%s1 + $0xb8] sm:$0xf]
  %v145 = vld [vmem:[%s1 + $0xbc] sm:$0xf]
  %v146 = vld [vmem:[%s1 + $0xc0] sm:$0xf]
  %v147 = vld [vmem:[%s1 + $0xc4] sm:$0xf]
  %v148 = vld [vmem:[%s1 + $0xc8] sm:$0xf]
  %v149 = vld [vmem:[%s1 + $0xcc] sm:$0xf]
  %v150 = vld [vmem:[%s1 + $0xd0] sm:$0xf]
  %v151 = vld [vmem:[%s1 + $0xd4] sm:$0xf]
  %v152 = vld [vmem:[%s1 + $0xd8] sm:$0xf]
  %v153 = vld [vmem:[%s1 + $0xdc] sm:$0xf]
  %v154 = vld [vmem:[%s1 + $0xe0] sm:$0xf]
  %v155 = vld [vmem:[%s1 + $0xe4] sm:$0xf]
  %v156 = vld [vmem:[%s1 + $0xe8] sm:$0xf]
  %v157 = vld [vmem:[%s1 + $0xec] sm:$0xf]
  %v158 = vld [vmem:[%s1 + $0xf0] sm:$0xf]
  %v159 = vld [vmem:[%s1 + $0xf4] sm:$0xf]
  %v160 = vld [vmem:[%s1 + $0xf8] sm:$0xf]
  %v161 = vld [vmem:[%s1 + $0xfc] sm:$0xf]
  %v162 = vld [vmem:[%s1 + $0x100] sm:$0xf]
  %v163 = vld [vmem:[%s1 + $0x104] sm:$0xf]
  %v164 = vld [vmem:[%s1 + $0x108] sm:$0xf]
  %v165 = vld [vmem:[%s1 + $0x10c] sm:$0xf]
  %v166 = vld [vmem:[%s1 + $0x110] sm:$0xf]
  %v167 = vld [vmem:[%s1 + $0x114] sm:$0xf]
  %v168 = vld [vmem:[%s1 + $0x118] sm:$0xf]
  %v169 = vld [vmem:[%s1 + $0x11c] sm:$0xf]
  %v170 = vld [vmem:[%s1 + $0x120] sm:$0xf]
  %v171 = vld [vmem:[%s1 + $0x124] sm:$0xf]
  %v172 = vld [vmem:[%s1 + $0x128] sm:$0xf]
  %v173 = vld [vmem:[%s1 + $0x12c] sm:$0xf]
  %v174 = vld [vmem:[%s1 + $0x130] sm:$0xf]
  %v175 = vld [vmem:[%s1 + $0x134] sm:$0xf]
  %v176 = vld [vmem:[%s1 + $0x138] sm:$0xf]
  %v177 = vld [vmem:[%s1 + $0x13c] sm:$0xf]
  %v178 = vld [vmem:[%s1 + $0x140] sm:$0xf]
  %v179 = vld [vmem:[%s1 + $0x144] sm:$0xf]
  %v180 = vld [vmem:[%s1 + $0x148] sm:$0xf]
  %v181 = vld [vmem:[%s1 + $0x14c] sm:$0xf]
  %v182 = vld [vmem:[%s1 + $0x150] sm:$0xf]
  %v183 = vld [vmem:[%s1 + $0x154] sm:$0xf]
  %v184 = vld [vmem:[%s1 + $0x158] sm:$0xf]
  %v185 = vld [vmem:[%s1 + $0x15c] sm:$0xf]
  %v186 = vld [vmem:[%s1 + $0x160] sm:$0xf]
  %v187 = vld [vmem:[%s1 + $0x164] sm:$0xf]
  %v188 = vld [vmem:[%s1 + $0x168] sm:$0xf]
  %v189 = vld [vmem:[%s1 + $0x16c] sm:$0xf]
  %v190 = vld [vmem:[%s1 + $0x170] sm:$0xf]
  %v191 = vld [vmem:[%s1 + $0x174] sm:$0xf]
  %v192 = vld [vmem:[%s1 + $0x178] sm:$0xf]
  %v193 = vld [vmem:[%s1 + $0x17c] sm:$0xf]
  %v194 = vld [vmem:[%s1 + $0x180] sm:$0xf]
  %v195 = vld [vmem:[%s1 + $0x184] sm:$0xf]
  %v196 = vld [vmem:[%s1 + $0x188] sm:$0xf]
  %v197 = vld [vmem:[%s1 + $0x18c] sm:$0xf]
  %v198 = vld [vmem:[%s1 + $0x190] sm:$0xf]
  %v199 = vld [vmem:[%s1 + $0x194] sm:$0xf]
  %v200 = vld [vmem:[%s1 + $0x198] sm:$0xf]
  %v201 = vld [vmem:[%s1 + $0x19c] sm:$0xf]
  %v202 = vld [vmem:[%s1 + $0x1a0] sm:$0xf]
  %v203 = vld [vmem:[%s1 + $0x1a4] sm:$0xf]
  %v204 = vld [vmem:[%s1 + $0x1a8] sm:$0xf]
  %v205 = vld [vmem:[%s1 + $0x1ac] sm:$0xf]
  %v206 = vld [vmem:[%s1 + $0x1b0] sm:$0xf]
  %v207 = vld [vmem:[%s1 + $0x1b4] sm:$0xf]
  %v208 = vld [vmem:[%s1 + $0x1b8] sm:$0xf]
  %v209 = vld [vmem:[%s1 + $0x1bc] sm:$0xf]
  %v210 = vld [vmem:[%s1 + $0x1c0] sm:$0xf]
  %v211 = vld [vmem:[%s1 + $0x1c4] sm:$0xf]
  %v212 = vld [vmem:[%s1 + $0x1c8] sm:$0xf]
  %v213 = vld [vmem:[%s1 + $0x1cc] sm:$0xf]
  %v214 = vld [vmem:[%s1 + $0x1d0] sm:$0xf]
  %v215 = vld [vmem:[%s1 + $0x1d4] sm:$0xf]
  %v216 = vld [vmem:[%s1 + $0x1d8] sm:$0xf]
  %v217 = vld [vmem:[%s1 + $0x1dc] sm:$0xf]
  %v218 = vld [vmem:[%s1 + $0x1e0] sm:$0xf]
  %v219 = vld [vmem:[%s1 + $0x1e4] sm:$0xf]
  %v220 = vld [vmem:[%s1 + $0x1e8] sm:$0xf]
  %v221 = vld [vmem:[%s1 + $0x1ec] sm:$0xf]
  %v222 = vld [vmem:[%s1 + $0x1f0] sm:$0xf]
  %v223 = vld [vmem:[%s1 + $0x1f4] sm:$0xf]
  %v224 = vld [vmem:[%s1 + $0x1f8] sm:$0xf]
  %v225 = vld [vmem:[%s1 + $0x1fc] sm:$0xf]
  %v226 = vld [vmem:[%s1 + $0x200] sm:$0xf]
  %v227 = vld [vmem:[%s1 + $0x204] sm:$0xf]
  %v228 = vld [vmem:[%s1 + $0x208] sm:$0xf]
  %v229 = vld [vmem:[%s1 + $0x20c] sm:$0xf]
  %v230 = vld [vmem:[%s1 + $0x210] sm:$0xf]
  %v231 = vld [vmem:[%s1 + $0x214] sm:$0xf]
  %v232 = vld [vmem:[%s1 + $0x218] sm:$0xf]
  %v233 = vld [vmem:[%s1 + $0x21c] sm:$0xf]
  %v234 = vld [vmem:[%s1 + $0x220] sm:$0xf]
  %v235 = vld [vmem:[%s1 + $0x224] sm:$0xf]
  %v236 = vld [vmem:[%s1 + $0x228] sm:$0xf]
  %v237 = vld [vmem:[%s1 + $0x22c] sm:$0xf]
  %v238 = vld [vmem:[%s1 + $0x230] sm:$0xf]
  %v239 = vld [vmem:[%s1 + $0x234] sm:$0xf]
  %v240 = vld [vmem:[%s1 + $0x238] sm:$0xf]
  %v241 = vld [vmem:[%s1 + $0x23c] sm:$0xf]
  %v322 = vunpack.c.l.b16 %v18
  %v323 = vunpack.c.h.b16 %v18
  %v324 = vunpack.c.l.b16 %v19
  %v325 = vunpack.c.h.b16 %v19
  %v326 = vunpack.c.l.b16 %v20
  %v327 = vunpack.c.h.b16 %v20
  %v328 = vunpack.c.l.b16 %v21
  %v329 = vunpack.c.h.b16 %v21
  %v330 = vunpack.c.l.b16 %v22
  %v331 = vunpack.c.l.b16 %v23
  %v332 = vunpack.c.h.b16 %v23
  %v333 = vunpack.c.l.b16 %v24
  %v334 = vunpack.c.h.b16 %v24
  %v335 = vunpack.c.l.b16 %v25
  %v336 = vunpack.c.h.b16 %v25
  %v337 = vunpack.c.l.b16 %v26
  %v338 = vunpack.c.h.b16 %v26
  %v339 = vunpack.c.l.b16 %v27
  %v340 = vunpack.c.l.b16 %v28
  %v341 = vunpack.c.h.b16 %v28
  %v342 = vunpack.c.l.b16 %v29
  %v343 = vunpack.c.h.b16 %v29
  %v344 = vunpack.c.l.b16 %v30
  %v345 = vunpack.c.h.b16 %v30
  %v346 = vunpack.c.l.b16 %v31
  %v347 = vunpack.c.h.b16 %v31
  %v348 = vunpack.c.l.b16 %v32
  %v349 = vunpack.c.l.b16 %v33
  %v350 = vunpack.c.h.b16 %v33
  %v351 = vunpack.c.l.b16 %v34
  %v352 = vunpack.c.h.b16 %v34
  %v353 = vunpack.c.l.b16 %v35
  %v354 = vunpack.c.h.b16 %v35
  %v355 = vunpack.c.l.b16 %v36
  %v356 = vunpack.c.h.b16 %v36
  %v357 = vunpack.c.l.b16 %v37
  %v358 = vunpack.c.l.b16 %v38
  %v359 = vunpack.c.h.b16 %v38
  %v360 = vunpack.c.l.b16 %v39
  %v361 = vunpack.c.h.b16 %v39
  %v362 = vunpack.c.l.b16 %v40
  %v363 = vunpack.c.h.b16 %v40
  %v364 = vunpack.c.l.b16 %v41
  %v365 = vunpack.c.h.b16 %v41
  %v366 = vunpack.c.l.b16 %v42
  %v367 = vunpack.c.l.b16 %v43
  %v368 = vunpack.c.h.b16 %v43
  %v369 = vunpack.c.l.b16 %v44
  %v370 = vunpack.c.h.b16 %v44
  %v371 = vunpack.c.l.b16 %v45
  %v372 = vunpack.c.h.b16 %v45
  %v373 = vunpack.c.l.b16 %v46
  %v374 = vunpack.c.h.b16 %v46
  %v375 = vunpack.c.l.b16 %v47
  %v376 = vunpack.c.l.b16 %v48
  %v377 = vunpack.c.h.b16 %v48
  %v378 = vunpack.c.l.b16 %v49
  %v379 = vunpack.c.h.b16 %v49
  %v380 = vunpack.c.l.b16 %v50
  %v381 = vunpack.c.h.b16 %v50
  %v382 = vunpack.c.l.b16 %v51
  %v383 = vunpack.c.h.b16 %v51
  %v384 = vunpack.c.l.b16 %v52
  %v385 = vunpack.c.l.b16 %v53
  %v386 = vunpack.c.h.b16 %v53
  %v387 = vunpack.c.l.b16 %v54
  %v388 = vunpack.c.h.b16 %v54
  %v389 = vunpack.c.l.b16 %v55
  %v390 = vunpack.c.h.b16 %v55
  %v391 = vunpack.c.l.b16 %v56
  %v392 = vunpack.c.h.b16 %v56
  %v393 = vunpack.c.l.b16 %v57
  %v394 = vunpack.c.l.b16 %v58
  %v395 = vunpack.c.h.b16 %v58
  %v396 = vunpack.c.l.b16 %v59
  %v397 = vunpack.c.h.b16 %v59
  %v398 = vunpack.c.l.b16 %v60
  %v399 = vunpack.c.h.b16 %v60
  %v400 = vunpack.c.l.b16 %v61
  %v401 = vunpack.c.h.b16 %v61
  %v402 = vunpack.c.l.b16 %v62
  %v403 = vunpack.c.l.b16 %v63
  %v404 = vunpack.c.h.b16 %v63
  %v405 = vunpack.c.l.b16 %v64
  %v406 = vunpack.c.h.b16 %v64
  %v407 = vunpack.c.l.b16 %v65
  %v408 = vunpack.c.h.b16 %v65
  %v409 = vunpack.c.l.b16 %v66
  %v410 = vunpack.c.h.b16 %v66
  %v411 = vunpack.c.l.b16 %v67
  %v412 = vunpack.c.l.b16 %v68
  %v413 = vunpack.c.h.b16 %v68
  %v414 = vunpack.c.l.b16 %v69
  %v415 = vunpack.c.h.b16 %v69
  %v416 = vunpack.c.l.b16 %v70
  %v417 = vunpack.c.h.b16 %v70
  %v418 = vunpack.c.l.b16 %v71
  %v419 = vunpack.c.h.b16 %v71
  %v420 = vunpack.c.l.b16 %v72
  %v421 = vunpack.c.l.b16 %v73
  %v422 = vunpack.c.h.b16 %v73
  %v423 = vunpack.c.l.b16 %v74
  %v424 = vunpack.c.h.b16 %v74
  %v425 = vunpack.c.l.b16 %v75
  %v426 = vunpack.c.h.b16 %v75
  %v427 = vunpack.c.l.b16 %v76
  %v428 = vunpack.c.h.b16 %v76
  %v429 = vunpack.c.l.b16 %v77
  %v430 = vunpack.c.l.b16 %v78
  %v431 = vunpack.c.h.b16 %v78
  %v432 = vunpack.c.l.b16 %v79
  %v433 = vunpack.c.h.b16 %v79
  %v434 = vunpack.c.l.b16 %v80
  %v435 = vunpack.c.h.b16 %v80
  %v436 = vunpack.c.l.b16 %v81
  %v437 = vunpack.c.h.b16 %v81
  %v438 = vunpack.c.l.b16 %v82
  %v439 = vunpack.c.l.b16 %v83
  %v440 = vunpack.c.h.b16 %v83
  %v441 = vunpack.c.l.b16 %v84
  %v442 = vunpack.c.h.b16 %v84
  %v443 = vunpack.c.l.b16 %v85
  %v444 = vunpack.c.h.b16 %v85
  %v445 = vunpack.c.l.b16 %v86
  %v446 = vunpack.c.h.b16 %v86
  %v447 = vunpack.c.l.b16 %v87
  %v448 = vunpack.c.l.b16 %v88
  %v449 = vunpack.c.h.b16 %v88
  %v450 = vunpack.c.l.b16 %v89
  %v451 = vunpack.c.h.b16 %v89
  %v452 = vunpack.c.l.b16 %v90
  %v453 = vunpack.c.h.b16 %v90
  %v454 = vunpack.c.l.b16 %v91
  %v455 = vunpack.c.h.b16 %v91
  %v456 = vunpack.c.l.b16 %v92
  %v457 = vunpack.c.l.b16 %v93
  %v458 = vunpack.c.h.b16 %v93
  %v459 = vunpack.c.l.b16 %v94
  %v460 = vunpack.c.h.b16 %v94
  %v461 = vunpack.c.l.b16 %v95
  %v462 = vunpack.c.h.b16 %v95
  %v463 = vunpack.c.l.b16 %v96
  %v464 = vunpack.c.h.b16 %v96
  %v465 = vunpack.c.l.b16 %v97
  %v466 = vpack.c.b16 %v331, %v322
  %v467 = vpack.c.b16 %v332, %v323
  %v468 = vpack.c.b16 %v333, %v324
  %v469 = vpack.c.b16 %v334, %v325
  %v470 = vpack.c.b16 %v335, %v326
  %v471 = vpack.c.b16 %v336, %v327
  %v472 = vpack.c.b16 %v337, %v328
  %v473 = vpack.c.b16 %v338, %v329
  %v474 = vpack.c.b16 %v339, %v330
  %v475 = vpack.c.b16 %v349, %v340
  %v476 = vpack.c.b16 %v350, %v341
  %v477 = vpack.c.b16 %v351, %v342
  %v478 = vpack.c.b16 %v352, %v343
  %v479 = vpack.c.b16 %v353, %v344
  %v480 = vpack.c.b16 %v354, %v345
  %v481 = vpack.c.b16 %v355, %v346
  %v482 = vpack.c.b16 %v356, %v347
  %v483 = vpack.c.b16 %v357, %v348
  %v484 = vpack.c.b16 %v367, %v358
  %v485 = vpack.c.b16 %v368, %v359
  %v486 = vpack.c.b16 %v369, %v360
  %v487 = vpack.c.b16 %v370, %v361
  %v488 = vpack.c.b16 %v371, %v362
  %v489 = vpack.c.b16 %v372, %v363
  %v490 = vpack.c.b16 %v373, %v364
  %v491 = vpack.c.b16 %v374, %v365
  %v492 = vpack.c.b16 %v375, %v366
  %v493 = vpack.c.b16 %v385, %v376
  %v494 = vpack.c.b16 %v386, %v377
  %v495 = vpack.c.b16 %v387, %v378
  %v496 = vpack.c.b16 %v388, %v379
  %v497 = vpack.c.b16 %v389, %v380
  %v498 = vpack.c.b16 %v390, %v381
  %v499 = vpack.c.b16 %v391, %v382
  %v500 = vpack.c.b16 %v392, %v383
  %v501 = vpack.c.b16 %v393, %v384
  %v502 = vpack.c.b16 %v403, %v394
  %v503 = vpack.c.b16 %v404, %v395
  %v504 = vpack.c.b16 %v405, %v396
  %v505 = vpack.c.b16 %v406, %v397
  %v506 = vpack.c.b16 %v407, %v398
  %v507 = vpack.c.b16 %v408, %v399
  %v508 = vpack.c.b16 %v409, %v400
  %v509 = vpack.c.b16 %v410, %v401
  %v510 = vpack.c.b16 %v411, %v402
  %v511 = vpack.c.b16 %v421, %v412
  %v512 = vpack.c.b16 %v422, %v413
  %v513 = vpack.c.b16 %v423, %v414
  %v514 = vpack.c.b16 %v424, %v415
  %v515 = vpack.c.b16 %v425, %v416
  %v516 = vpack.c.b16 %v426, %v417
  %v517 = vpack.c.b16 %v427, %v418
  %v518 = vpack.c.b16 %v428, %v419
  %v519 = vpack.c.b16 %v429, %v420
  %v520 = vpack.c.b16 %v439, %v430
  %v521 = vpack.c.b16 %v440, %v431
  %v522 = vpack.c.b16 %v441, %v432
  %v523 = vpack.c.b16 %v442, %v433
  %v524 = vpack.c.b16 %v443, %v434
  %v525 = vpack.c.b16 %v444, %v435
  %v526 = vpack.c.b16 %v445, %v436
  %v527 = vpack.c.b16 %v446, %v437
  %v528 = vpack.c.b16 %v447, %v438
  %v529 = vpack.c.b16 %v457, %v448
  %v530 = vpack.c.b16 %v458, %v449
  %v531 = vpack.c.b16 %v459, %v450
  %v532 = vpack.c.b16 %v460, %v451
  %v533 = vpack.c.b16 %v461, %v452
  %v534 = vpack.c.b16 %v462, %v453
  %v535 = vpack.c.b16 %v463, %v454
  %v536 = vpack.c.b16 %v464, %v455
  %v537 = vpack.c.b16 %v465, %v456
  %v754 = vunpack.c.l.b16 %v98
  %v755 = vunpack.c.l.b16 %v99
  %v756 = vunpack.c.l.b16 %v100
  %v757 = vunpack.c.l.b16 %v101
  %v758 = vunpack.c.l.b16 %v102
  %v759 = vunpack.c.l.b16 %v103
  %v760 = vunpack.c.l.b16 %v104
  %v761 = vunpack.c.l.b16 %v105
  %v762 = vunpack.c.l.b16 %v106
  %v763 = vunpack.c.l.b16 %v107
  %v764 = vunpack.c.l.b16 %v108
  %v765 = vunpack.c.l.b16 %v109
  %v766 = vunpack.c.l.b16 %v110
  %v767 = vunpack.c.l.b16 %v111
  %v768 = vunpack.c.l.b16 %v112
  %v769 = vunpack.c.l.b16 %v113
  %v770 = vunpack.c.l.b16 %v114
  %v771 = vunpack.c.l.b16 %v115
  %v772 = vunpack.c.l.b16 %v116
  %v773 = vunpack.c.l.b16 %v117
  %v774 = vunpack.c.l.b16 %v118
  %v775 = vunpack.c.l.b16 %v119
  %v776 = vunpack.c.l.b16 %v120
  %v777 = vunpack.c.l.b16 %v121
  %v778 = vunpack.c.l.b16 %v122
  %v779 = vunpack.c.l.b16 %v123
  %v780 = vunpack.c.l.b16 %v124
  %v781 = vunpack.c.l.b16 %v125
  %v782 = vunpack.c.l.b16 %v126
  %v783 = vunpack.c.l.b16 %v127
  %v784 = vunpack.c.l.b16 %v128
  %v785 = vunpack.c.l.b16 %v129
  %v786 = vunpack.c.l.b16 %v130
  %v787 = vunpack.c.l.b16 %v131
  %v788 = vunpack.c.l.b16 %v132
  %v789 = vunpack.c.l.b16 %v133
  %v790 = vunpack.c.l.b16 %v134
  %v791 = vunpack.c.l.b16 %v135
  %v792 = vunpack.c.l.b16 %v136
  %v793 = vunpack.c.l.b16 %v137
  %v794 = vunpack.c.l.b16 %v138
  %v795 = vunpack.c.l.b16 %v139
  %v796 = vunpack.c.l.b16 %v140
  %v797 = vunpack.c.l.b16 %v141
  %v798 = vunpack.c.l.b16 %v142
  %v799 = vunpack.c.l.b16 %v143
  %v800 = vunpack.c.l.b16 %v144
  %v801 = vunpack.c.l.b16 %v145
  %v802 = vunpack.c.l.b16 %v146
  %v803 = vunpack.c.l.b16 %v147
  %v804 = vunpack.c.l.b16 %v148
  %v805 = vunpack.c.l.b16 %v149
  %v806 = vunpack.c.l.b16 %v150
  %v807 = vunpack.c.l.b16 %v151
  %v808 = vunpack.c.l.b16 %v152
  %v809 = vunpack.c.l.b16 %v153
  %v810 = vunpack.c.l.b16 %v154
  %v811 = vunpack.c.l.b16 %v155
  %v812 = vunpack.c.l.b16 %v156
  %v813 = vunpack.c.l.b16 %v157
  %v814 = vunpack.c.l.b16 %v158
  %v815 = vunpack.c.l.b16 %v159
  %v816 = vunpack.c.l.b16 %v160
  %v817 = vunpack.c.l.b16 %v161
  %v818 = vunpack.c.l.b16 %v162
  %v819 = vunpack.c.l.b16 %v163
  %v820 = vunpack.c.l.b16 %v164
  %v821 = vunpack.c.l.b16 %v165
  %v822 = vunpack.c.l.b16 %v166
  %v823 = vunpack.c.l.b16 %v167
  %v824 = vunpack.c.l.b16 %v168
  %v825 = vunpack.c.l.b16 %v169
  %v826 = vunpack.c.l.b16 %v170
  %v827 = vunpack.c.l.b16 %v171
  %v828 = vunpack.c.l.b16 %v172
  %v829 = vunpack.c.l.b16 %v173
  %v830 = vunpack.c.l.b16 %v174
  %v831 = vunpack.c.l.b16 %v175
  %v832 = vunpack.c.l.b16 %v176
  %v833 = vunpack.c.l.b16 %v177
  %v834 = vunpack.c.l.b16 %v178
  %v835 = vunpack.c.l.b16 %v179
  %v836 = vunpack.c.l.b16 %v180
  %v837 = vunpack.c.l.b16 %v181
  %v838 = vunpack.c.l.b16 %v182
  %v839 = vunpack.c.l.b16 %v183
  %v840 = vunpack.c.l.b16 %v184
  %v841 = vunpack.c.l.b16 %v185
  %v842 = vunpack.c.l.b16 %v186
  %v843 = vunpack.c.l.b16 %v187
  %v844 = vunpack.c.l.b16 %v188
  %v845 = vunpack.c.l.b16 %v189
  %v846 = vunpack.c.l.b16 %v190
  %v847 = vunpack.c.l.b16 %v191
  %v848 = vunpack.c.l.b16 %v192
  %v849 = vunpack.c.l.b16 %v193
  %v850 = vunpack.c.l.b16 %v194
  %v851 = vunpack.c.l.b16 %v195
  %v852 = vunpack.c.l.b16 %v196
  %v853 = vunpack.c.l.b16 %v197
  %v854 = vunpack.c.l.b16 %v198
  %v855 = vunpack.c.l.b16 %v199
  %v856 = vunpack.c.l.b16 %v200
  %v857 = vunpack.c.l.b16 %v201
  %v858 = vunpack.c.l.b16 %v202
  %v859 = vunpack.c.l.b16 %v203
  %v860 = vunpack.c.l.b16 %v204
  %v861 = vunpack.c.l.b16 %v205
  %v862 = vunpack.c.l.b16 %v206
  %v863 = vunpack.c.l.b16 %v207
  %v864 = vunpack.c.l.b16 %v208
  %v865 = vunpack.c.l.b16 %v209
  %v866 = vunpack.c.l.b16 %v210
  %v867 = vunpack.c.l.b16 %v211
  %v868 = vunpack.c.l.b16 %v212
  %v869 = vunpack.c.l.b16 %v213
  %v870 = vunpack.c.l.b16 %v214
  %v871 = vunpack.c.l.b16 %v215
  %v872 = vunpack.c.l.b16 %v216
  %v873 = vunpack.c.l.b16 %v217
  %v874 = vunpack.c.l.b16 %v218
  %v875 = vunpack.c.l.b16 %v219
  %v876 = vunpack.c.l.b16 %v220
  %v877 = vunpack.c.l.b16 %v221
  %v878 = vunpack.c.l.b16 %v222
  %v879 = vunpack.c.l.b16 %v223
  %v880 = vunpack.c.l.b16 %v224
  %v881 = vunpack.c.l.b16 %v225
  %v882 = vunpack.c.l.b16 %v226
  %v883 = vunpack.c.l.b16 %v227
  %v884 = vunpack.c.l.b16 %v228
  %v885 = vunpack.c.l.b16 %v229
  %v886 = vunpack.c.l.b16 %v230
  %v887 = vunpack.c.l.b16 %v231
  %v888 = vunpack.c.l.b16 %v232
  %v889 = vunpack.c.l.b16 %v233
  %v890 = vunpack.c.l.b16 %v234
  %v891 = vunpack.c.l.b16 %v235
  %v892 = vunpack.c.l.b16 %v236
  %v893 = vunpack.c.l.b16 %v237
  %v894 = vunpack.c.l.b16 %v238
  %v895 = vunpack.c.l.b16 %v239
  %v896 = vunpack.c.l.b16 %v240
  %v897 = vunpack.c.l.b16 %v241
  %v898 = vpack.c.b16 %v755, %v754
  %v899 = vpack.c.b16 %v757, %v756
  %v900 = vpack.c.b16 %v759, %v758
  %v901 = vpack.c.b16 %v761, %v760
  %v902 = vpack.c.b16 %v763, %v762
  %v903 = vpack.c.b16 %v765, %v764
  %v904 = vpack.c.b16 %v767, %v766
  %v905 = vpack.c.b16 %v769, %v768
  %v906 = vpack.c.b16 %v771, %v770
  %v907 = vpack.c.b16 %v773, %v772
  %v908 = vpack.c.b16 %v775, %v774
  %v909 = vpack.c.b16 %v777, %v776
  %v910 = vpack.c.b16 %v779, %v778
  %v911 = vpack.c.b16 %v781, %v780
  %v912 = vpack.c.b16 %v783, %v782
  %v913 = vpack.c.b16 %v785, %v784
  %v914 = vpack.c.b16 %v787, %v786
  %v915 = vpack.c.b16 %v789, %v788
  %v916 = vpack.c.b16 %v791, %v790
  %v917 = vpack.c.b16 %v793, %v792
  %v918 = vpack.c.b16 %v795, %v794
  %v919 = vpack.c.b16 %v797, %v796
  %v920 = vpack.c.b16 %v799, %v798
  %v921 = vpack.c.b16 %v801, %v800
  %v922 = vpack.c.b16 %v803, %v802
  %v923 = vpack.c.b16 %v805, %v804
  %v924 = vpack.c.b16 %v807, %v806
  %v925 = vpack.c.b16 %v809, %v808
  %v926 = vpack.c.b16 %v811, %v810
  %v927 = vpack.c.b16 %v813, %v812
  %v928 = vpack.c.b16 %v815, %v814
  %v929 = vpack.c.b16 %v817, %v816
  %v930 = vpack.c.b16 %v819, %v818
  %v931 = vpack.c.b16 %v821, %v820
  %v932 = vpack.c.b16 %v823, %v822
  %v933 = vpack.c.b16 %v825, %v824
  %v934 = vpack.c.b16 %v827, %v826
  %v935 = vpack.c.b16 %v829, %v828
  %v936 = vpack.c.b16 %v831, %v830
  %v937 = vpack.c.b16 %v833, %v832
  %v938 = vpack.c.b16 %v835, %v834
  %v939 = vpack.c.b16 %v837, %v836
  %v940 = vpack.c.b16 %v839, %v838
  %v941 = vpack.c.b16 %v841, %v840
  %v942 = vpack.c.b16 %v843, %v842
  %v943 = vpack.c.b16 %v845, %v844
  %v944 = vpack.c.b16 %v847, %v846
  %v945 = vpack.c.b16 %v849, %v848
  %v946 = vpack.c.b16 %v851, %v850
  %v947 = vpack.c.b16 %v853, %v852
  %v948 = vpack.c.b16 %v855, %v854
  %v949 = vpack.c.b16 %v857, %v856
  %v950 = vpack.c.b16 %v859, %v858
  %v951 = vpack.c.b16 %v861, %v860
  %v952 = vpack.c.b16 %v863, %v862
  %v953 = vpack.c.b16 %v865, %v864
  %v954 = vpack.c.b16 %v867, %v866
  %v955 = vpack.c.b16 %v869, %v868
  %v956 = vpack.c.b16 %v871, %v870
  %v957 = vpack.c.b16 %v873, %v872
  %v958 = vpack.c.b16 %v875, %v874
  %v959 = vpack.c.b16 %v877, %v876
  %v960 = vpack.c.b16 %v879, %v878
  %v961 = vpack.c.b16 %v881, %v880
  %v962 = vpack.c.b16 %v883, %v882
  %v963 = vpack.c.b16 %v885, %v884
  %v964 = vpack.c.b16 %v887, %v886
  %v965 = vpack.c.b16 %v889, %v888
  %v966 = vpack.c.b16 %v891, %v890
  %v967 = vpack.c.b16 %v893, %v892
  %v968 = vpack.c.b16 %v895, %v894
  %v969 = vpack.c.b16 %v897, %v896
  %1042 = vmatprep.subr.bf16.mxu0 0
  %1043 = vmatpush1.bf16.msra.mxu0 %v898
  %1044 = vmatprep.subr.bf16.mxu0 0
  %1045 = vmatpush1.bf16.msra.mxu0 %v899
  %1046 = vmatprep.subr.bf16.mxu0 0
  %1047 = vmatpush1.bf16.msra.mxu0 %v900
  %1048 = vmatprep.subr.bf16.mxu0 0
  %1049 = vmatpush1.bf16.msra.mxu0 %v901
  %1050 = vmatprep.subr.bf16.mxu0 0
  %1051 = vmatpush1.bf16.msra.mxu0 %v902
  %1052 = vmatprep.subr.bf16.mxu0 0
  %1053 = vmatpush1.bf16.msra.mxu0 %v903
  %1054 = vmatprep.subr.bf16.mxu0 0
  %1055 = vmatpush1.bf16.msra.mxu0 %v904
  %1056 = vmatprep.subr.bf16.mxu0 0
  %1057 = vmatpush1.bf16.msra.mxu0 %v905
  %1058 = vmatprep.subr.bf16.mxu0 0
  %1059 = vmatpush1.bf16.msra.mxu0 %v906
  %1060 = vmatprep.subr.bf16.mxu0 0
  %1061 = vmatpush1.bf16.msra.mxu0 %v907
  %1062 = vmatprep.subr.bf16.mxu0 0
  %1063 = vmatpush1.bf16.msra.mxu0 %v908
  %1064 = vmatprep.subr.bf16.mxu0 0
  %1065 = vmatpush1.bf16.msra.mxu0 %v909
  %1066 = vmatprep.subr.bf16.mxu0 0
  %1067 = vmatpush1.bf16.msra.mxu0 %v910
  %1068 = vmatprep.subr.bf16.mxu0 0
  %1069 = vmatpush1.bf16.msra.mxu0 %v911
  %1070 = vmatprep.subr.bf16.mxu0 0
  %1071 = vmatpush1.bf16.msra.mxu0 %v912
  %1072 = vmatprep.subr.bf16.mxu0 0
  %1073 = vmatpush1.bf16.msra.mxu0 %v913
  %1074 = vmatprep.mubr.bf16.mxu0 %v467
  %1075 = vmatmul.mubr.bf16.gmra.mrb[0].mxu0 %v466
  %v1076 = vpop.f32.mrb[0].mxu0
  %v1077 = vadd.f32 0.0, %v1076
  %v1078 = vpop.f32.mrb[0].mxu0
  %v1079 = vpop.f32.mrb[0].mxu0
  %v1080 = vadd.f32 0.0, %v1079
  %v1081 = vpop.f32.mrb[0].mxu0
  %1082 = vmatprep.mubr.bf16.mxu0 %v476
  %1083 = vmatmul.mubr.bf16.gmra.mrb[0].mxu0 %v475
  %v1084 = vpop.f32.mrb[0].mxu0
  %v1085 = vadd.f32 0.0, %v1084
  %v1086 = vpop.f32.mrb[0].mxu0
  %v1087 = vpop.f32.mrb[0].mxu0
  %v1088 = vadd.f32 0.0, %v1087
  %v1089 = vpop.f32.mrb[0].mxu0
  %1090 = vmatprep.mubr.bf16.mxu0 %v485
  %1091 = vmatmul.mubr.bf16.gmra.mrb[0].mxu0 %v484
  %v1092 = vpop.f32.mrb[0].mxu0
  %v1093 = vadd.f32 0.0, %v1092
  %v1094 = vpop.f32.mrb[0].mxu0
  %v1095 = vpop.f32.mrb[0].mxu0
  %v1096 = vadd.f32 0.0, %v1095
  %v1097 = vpop.f32.mrb[0].mxu0
  %1098 = vmatprep.mubr.bf16.mxu0 %v494
  %1099 = vmatmul.mubr.bf16.gmra.mrb[0].mxu0 %v493
  %v1100 = vpop.f32.mrb[0].mxu0
  %v1101 = vadd.f32 0.0, %v1100
  %v1102 = vpop.f32.mrb[0].mxu0
  %v1103 = vpop.f32.mrb[0].mxu0
  %v1104 = vadd.f32 0.0, %v1103
  %v1105 = vpop.f32.mrb[0].mxu0
  %1106 = vmatprep.mubr.bf16.mxu0 %v503
  %1107 = vmatmul.mubr.bf16.gmra.mrb[0].mxu0 %v502
  %v1108 = vpop.f32.mrb[0].mxu0
  %v1109 = vadd.f32 0.0, %v1108
  %v1110 = vpop.f32.mrb[0].mxu0
  %v1111 = vpop.f32.mrb[0].mxu0
  %v1112 = vadd.f32 0.0, %v1111
  %v1113 = vpop.f32.mrb[0].mxu0
  %1114 = vmatprep.mubr.bf16.mxu0 %v512
  %1115 = vmatmul.mubr.bf16.gmra.mrb[0].mxu0 %v511
  %v1116 = vpop.f32.mrb[0].mxu0
  %v1117 = vadd.f32 0.0, %v1116
  %v1118 = vpop.f32.mrb[0].mxu0
  %v1119 = vpop.f32.mrb[0].mxu0
  %v1120 = vadd.f32 0.0, %v1119
  %v1121 = vpop.f32.mrb[0].mxu0
  %1122 = vmatprep.mubr.bf16.mxu0 %v521
  %1123 = vmatmul.mubr.bf16.gmra.mrb[0].mxu0 %v520
  %v1124 = vpop.f32.mrb[0].mxu0
  %v1125 = vadd.f32 0.0, %v1124
  %v1126 = vpop.f32.mrb[0].mxu0
  %v1127 = vpop.f32.mrb[0].mxu0
  %v1128 = vadd.f32 0.0, %v1127
  %v1129 = vpop.f32.mrb[0].mxu0
  %1130 = vmatprep.mubr.bf16.mxu0 %v530
  %1131 = vmatmul.mubr.bf16.gmra.mrb[0].mxu0 %v529
  %v1132 = vpop.f32.mrb[0].mxu0
  %v1133 = vadd.f32 0.0, %v1132
  %v1134 = vpop.f32.mrb[0].mxu0
  %v1135 = vpop.f32.mrb[0].mxu0
  %v1136 = vadd.f32 0.0, %v1135
  %v1137 = vpop.f32.mrb[0].mxu0
  %1138 = vdwg.mxu0
  %1139 = vmatprep.subr.bf16.mxu0 0
  %1140 = vmatpush1.bf16.msra.mxu0 %v914
  %1141 = vmatprep.subr.bf16.mxu0 0
  %1142 = vmatpush1.bf16.msra.mxu0 %v915
  %1143 = vmatprep.subr.bf16.mxu0 0
  %1144 = vmatpush1.bf16.msra.mxu0 %v916
  %1145 = vmatprep.subr.bf16.mxu0 0
  %1146 = vmatpush1.bf16.msra.mxu0 %v917
  %1147 = vmatprep.subr.bf16.mxu0 0
  %1148 = vmatpush1.bf16.msra.mxu0 %v918
  %1149 = vmatprep.subr.bf16.mxu0 0
  %1150 = vmatpush1.bf16.msra.mxu0 %v919
  %1151 = vmatprep.subr.bf16.mxu0 0
  %1152 = vmatpush1.bf16.msra.mxu0 %v920
  %1153 = vmatprep.subr.bf16.mxu0 0
  %1154 = vmatpush1.bf16.msra.mxu0 %v921
  %1155 = vmatprep.subr.bf16.mxu0 0
  %1156 = vmatpush1.bf16.msra.mxu0 %v922
  %1157 = vmatprep.subr.bf16.mxu0 0
  %1158 = vmatpush1.bf16.msra.mxu0 %v923
  %1159 = vmatprep.subr.bf16.mxu0 0
  %1160 = vmatpush1.bf16.msra.mxu0 %v924
  %1161 = vmatprep.subr.bf16.mxu0 0
  %1162 = vmatpush1.bf16.msra.mxu0 %v925
  %1163 = vmatprep.subr.bf16.mxu0 0
  %1164 = vmatpush1.bf16.msra.mxu0 %v926
  %1165 = vmatprep.subr.bf16.mxu0 0
  %1166 = vmatpush1.bf16.msra.mxu0 %v927
  %1167 = vmatprep.subr.bf16.mxu0 0
  %1168 = vmatpush1.bf16.msra.mxu0 %v928
  %1169 = vmatprep.subr.bf16.mxu0 0
  %1170 = vmatpush1.bf16.msra.mxu0 %v929
  %1171 = vmatprep.mubr.bf16.mxu0 %v469
  %1172 = vmatmul.mubr.bf16.gmra.mrb[0].mxu0 %v468
  %v1173 = vpop.f32.mrb[0].mxu0
  %v1174 = vadd.f32 %v1077, %v1173
  %v1175 = vpop.f32.mrb[0].mxu0
  %v1176 = vpop.f32.mrb[0].mxu0
  %v1177 = vadd.f32 %v1080, %v1176
  %v1178 = vpop.f32.mrb[0].mxu0
  %1179 = vmatprep.mubr.bf16.mxu0 %v478
  %1180 = vmatmul.mubr.bf16.gmra.mrb[0].mxu0 %v477
  %v1181 = vpop.f32.mrb[0].mxu0
  %v1182 = vadd.f32 %v1085, %v1181
  %v1183 = vpop.f32.mrb[0].mxu0
  %v1184 = vpop.f32.mrb[0].mxu0
  %v1185 = vadd.f32 %v1088, %v1184
  %v1186 = vpop.f32.mrb[0].mxu0
  %1187 = vmatprep.mubr.bf16.mxu0 %v487
  %1188 = vmatmul.mubr.bf16.gmra.mrb[0].mxu0 %v486
  %v1189 = vpop.f32.mrb[0].mxu0
  %v1190 = vadd.f32 %v1093, %v1189
  %v1191 = vpop.f32.mrb[0].mxu0
  %v1192 = vpop.f32.mrb[0].mxu0
  %v1193 = vadd.f32 %v1096, %v1192
  %v1194 = vpop.f32.mrb[0].mxu0
  %1195 = vmatprep.mubr.bf16.mxu0 %v496
  %1196 = vmatmul.mubr.bf16.gmra.mrb[0].mxu0 %v495
  %v1197 = vpop.f32.mrb[0].mxu0
  %v1198 = vadd.f32 %v1101, %v1197
  %v1199 = vpop.f32.mrb[0].mxu0
  %v1200 = vpop.f32.mrb[0].mxu0
  %v1201 = vadd.f32 %v1104, %v1200
  %v1202 = vpop.f32.mrb[0].mxu0
  %1203 = vmatprep.mubr.bf16.mxu0 %v505
  %1204 = vmatmul.mubr.bf16.gmra.mrb[0].mxu0 %v504
  %v1205 = vpop.f32.mrb[0].mxu0
  %v1206 = vadd.f32 %v1109, %v1205
  %v1207 = vpop.f32.mrb[0].mxu0
  %v1208 = vpop.f32.mrb[0].mxu0
  %v1209 = vadd.f32 %v1112, %v1208
  %v1210 = vpop.f32.mrb[0].mxu0
  %1211 = vmatprep.mubr.bf16.mxu0 %v514
  %1212 = vmatmul.mubr.bf16.gmra.mrb[0].mxu0 %v513
  %v1213 = vpop.f32.mrb[0].mxu0
  %v1214 = vadd.f32 %v1117, %v1213
  %v1215 = vpop.f32.mrb[0].mxu0
  %v1216 = vpop.f32.mrb[0].mxu0
  %v1217 = vadd.f32 %v1120, %v1216
  %v1218 = vpop.f32.mrb[0].mxu0
  %1219 = vmatprep.mubr.bf16.mxu0 %v523
  %1220 = vmatmul.mubr.bf16.gmra.mrb[0].mxu0 %v522
  %v1221 = vpop.f32.mrb[0].mxu0
  %v1222 = vadd.f32 %v1125, %v1221
  %v1223 = vpop.f32.mrb[0].mxu0
  %v1224 = vpop.f32.mrb[0].mxu0
  %v1225 = vadd.f32 %v1128, %v1224
  %v1226 = vpop.f32.mrb[0].mxu0
  %1227 = vmatprep.mubr.bf16.mxu0 %v532
  %1228 = vmatmul.mubr.bf16.gmra.mrb[0].mxu0 %v531
  %v1229 = vpop.f32.mrb[0].mxu0
  %v1230 = vadd.f32 %v1133, %v1229
  %v1231 = vpop.f32.mrb[0].mxu0
  %v1232 = vpop.f32.mrb[0].mxu0
  %v1233 = vadd.f32 %v1136, %v1232
  %v1234 = vpop.f32.mrb[0].mxu0
  %1235 = vdwg.mxu0
  %1236 = vmatprep.subr.bf16.mxu0 0
  %1237 = vmatpush1.bf16.msra.mxu0 %v930
  %1238 = vmatprep.subr.bf16.mxu0 0
  %1239 = vmatpush1.bf16.msra.mxu0 %v931
  %1240 = vmatprep.subr.bf16.mxu0 0
  %1241 = vmatpush1.bf16.msra.mxu0 %v932
  %1242 = vmatprep.subr.bf16.mxu0 0
  %1243 = vmatpush1.bf16.msra.mxu0 %v933
  %1244 = vmatprep.subr.bf16.mxu0 0
  %1245 = vmatpush1.bf16.msra.mxu0 %v934
  %1246 = vmatprep.subr.bf16.mxu0 0
  %1247 = vmatpush1.bf16.msra.mxu0 %v935
  %1248 = vmatprep.subr.bf16.mxu0 0
  %1249 = vmatpush1.bf16.msra.mxu0 %v936
  %1250 = vmatprep.subr.bf16.mxu0 0
  %1251 = vmatpush1.bf16.msra.mxu0 %v937
  %1252 = vmatprep.subr.bf16.mxu0 0
  %1253 = vmatpush1.bf16.msra.mxu0 %v938
  %1254 = vmatprep.subr.bf16.mxu0 0
  %1255 = vmatpush1.bf16.msra.mxu0 %v939
  %1256 = vmatprep.subr.bf16.mxu0 0
  %1257 = vmatpush1.bf16.msra.mxu0 %v940
  %1258 = vmatprep.subr.bf16.mxu0 0
  %1259 = vmatpush1.bf16.msra.mxu0 %v941
  %1260 = vmatprep.subr.bf16.mxu0 0
  %1261 = vmatpush1.bf16.msra.mxu0 %v942
  %1262 = vmatprep.subr.bf16.mxu0 0
  %1263 = vmatpush1.bf16.msra.mxu0 %v943
  %1264 = vmatprep.subr.bf16.mxu0 0
  %1265 = vmatpush1.bf16.msra.mxu0 %v944
  %1266 = vmatprep.subr.bf16.mxu0 0
  %1267 = vmatpush1.bf16.msra.mxu0 %v945
  %1268 = vmatprep.mubr.bf16.mxu0 %v471
  %1269 = vmatmul.mubr.bf16.gmra.mrb[0].mxu0 %v470
  %v1270 = vpop.f32.mrb[0].mxu0
  %v1271 = vadd.f32 %v1174, %v1270
  %v1272 = vpop.f32.mrb[0].mxu0
  %v1273 = vpop.f32.mrb[0].mxu0
  %v1274 = vadd.f32 %v1177, %v1273
  %v1275 = vpop.f32.mrb[0].mxu0
  %1276 = vmatprep.mubr.bf16.mxu0 %v480
  %1277 = vmatmul.mubr.bf16.gmra.mrb[0].mxu0 %v479
  %v1278 = vpop.f32.mrb[0].mxu0
  %v1279 = vadd.f32 %v1182, %v1278
  %v1280 = vpop.f32.mrb[0].mxu0
  %v1281 = vpop.f32.mrb[0].mxu0
  %v1282 = vadd.f32 %v1185, %v1281
  %v1283 = vpop.f32.mrb[0].mxu0
  %1284 = vmatprep.mubr.bf16.mxu0 %v489
  %1285 = vmatmul.mubr.bf16.gmra.mrb[0].mxu0 %v488
  %v1286 = vpop.f32.mrb[0].mxu0
  %v1287 = vadd.f32 %v1190, %v1286
  %v1288 = vpop.f32.mrb[0].mxu0
  %v1289 = vpop.f32.mrb[0].mxu0
  %v1290 = vadd.f32 %v1193, %v1289
  %v1291 = vpop.f32.mrb[0].mxu0
  %1292 = vmatprep.mubr.bf16.mxu0 %v498
  %1293 = vmatmul.mubr.bf16.gmra.mrb[0].mxu0 %v497
  %v1294 = vpop.f32.mrb[0].mxu0
  %v1295 = vadd.f32 %v1198, %v1294
  %v1296 = vpop.f32.mrb[0].mxu0
  %v1297 = vpop.f32.mrb[0].mxu0
  %v1298 = vadd.f32 %v1201, %v1297
  %v1299 = vpop.f32.mrb[0].mxu0
  %1300 = vmatprep.mubr.bf16.mxu0 %v507
  %1301 = vmatmul.mubr.bf16.gmra.mrb[0].mxu0 %v506
  %v1302 = vpop.f32.mrb[0].mxu0
  %v1303 = vadd.f32 %v1206, %v1302
  %v1304 = vpop.f32.mrb[0].mxu0
  %v1305 = vpop.f32.mrb[0].mxu0
  %v1306 = vadd.f32 %v1209, %v1305
  %v1307 = vpop.f32.mrb[0].mxu0
  %1308 = vmatprep.mubr.bf16.mxu0 %v516
  %1309 = vmatmul.mubr.bf16.gmra.mrb[0].mxu0 %v515
  %v1310 = vpop.f32.mrb[0].mxu0
  %v1311 = vadd.f32 %v1214, %v1310
  %v1312 = vpop.f32.mrb[0].mxu0
  %v1313 = vpop.f32.mrb[0].mxu0
  %v1314 = vadd.f32 %v1217, %v1313
  %v1315 = vpop.f32.mrb[0].mxu0
  %1316 = vmatprep.mubr.bf16.mxu0 %v525
  %1317 = vmatmul.mubr.bf16.gmra.mrb[0].mxu0 %v524
  %v1318 = vpop.f32.mrb[0].mxu0
  %v1319 = vadd.f32 %v1222, %v1318
  %v1320 = vpop.f32.mrb[0].mxu0
  %v1321 = vpop.f32.mrb[0].mxu0
  %v1322 = vadd.f32 %v1225, %v1321
  %v1323 = vpop.f32.mrb[0].mxu0
  %1324 = vmatprep.mubr.bf16.mxu0 %v534
  %1325 = vmatmul.mubr.bf16.gmra.mrb[0].mxu0 %v533
  %v1326 = vpop.f32.mrb[0].mxu0
  %v1327 = vadd.f32 %v1230, %v1326
  %v1328 = vpop.f32.mrb[0].mxu0
  %v1329 = vpop.f32.mrb[0].mxu0
  %v1330 = vadd.f32 %v1233, %v1329
  %v1331 = vpop.f32.mrb[0].mxu0
  %1332 = vdwg.mxu0
  %1333 = vmatprep.subr.bf16.mxu0 0
  %1334 = vmatpush1.bf16.msra.mxu0 %v946
  %1335 = vmatprep.subr.bf16.mxu0 0
  %1336 = vmatpush1.bf16.msra.mxu0 %v947
  %1337 = vmatprep.subr.bf16.mxu0 0
  %1338 = vmatpush1.bf16.msra.mxu0 %v948
  %1339 = vmatprep.subr.bf16.mxu0 0
  %1340 = vmatpush1.bf16.msra.mxu0 %v949
  %1341 = vmatprep.subr.bf16.mxu0 0
  %1342 = vmatpush1.bf16.msra.mxu0 %v950
  %1343 = vmatprep.subr.bf16.mxu0 0
  %1344 = vmatpush1.bf16.msra.mxu0 %v951
  %1345 = vmatprep.subr.bf16.mxu0 0
  %1346 = vmatpush1.bf16.msra.mxu0 %v952
  %1347 = vmatprep.subr.bf16.mxu0 0
  %1348 = vmatpush1.bf16.msra.mxu0 %v953
  %1349 = vmatprep.subr.bf16.mxu0 0
  %1350 = vmatpush1.bf16.msra.mxu0 %v954
  %1351 = vmatprep.subr.bf16.mxu0 0
  %1352 = vmatpush1.bf16.msra.mxu0 %v955
  %1353 = vmatprep.subr.bf16.mxu0 0
  %1354 = vmatpush1.bf16.msra.mxu0 %v956
  %1355 = vmatprep.subr.bf16.mxu0 0
  %1356 = vmatpush1.bf16.msra.mxu0 %v957
  %1357 = vmatprep.subr.bf16.mxu0 0
  %1358 = vmatpush1.bf16.msra.mxu0 %v958
  %1359 = vmatprep.subr.bf16.mxu0 0
  %1360 = vmatpush1.bf16.msra.mxu0 %v959
  %1361 = vmatprep.subr.bf16.mxu0 0
  %1362 = vmatpush1.bf16.msra.mxu0 %v960
  %1363 = vmatprep.subr.bf16.mxu0 0
  %1364 = vmatpush1.bf16.msra.mxu0 %v961
  %1365 = vmatprep.mubr.bf16.mxu0 %v473
  %1366 = vmatmul.mubr.bf16.gmra.mrb[0].mxu0 %v472
  %v1367 = vpop.f32.mrb[0].mxu0
  %v1368 = vadd.f32 %v1271, %v1367
  %v1369 = vpop.f32.mrb[0].mxu0
  %v1370 = vpop.f32.mrb[0].mxu0
  %v1371 = vadd.f32 %v1274, %v1370
  %v1372 = vpop.f32.mrb[0].mxu0
  %1373 = vmatprep.mubr.bf16.mxu0 %v482
  %1374 = vmatmul.mubr.bf16.gmra.mrb[0].mxu0 %v481
  %v1375 = vpop.f32.mrb[0].mxu0
  %v1376 = vadd.f32 %v1279, %v1375
  %v1377 = vpop.f32.mrb[0].mxu0
  %v1378 = vpop.f32.mrb[0].mxu0
  %v1379 = vadd.f32 %v1282, %v1378
  %v1380 = vpop.f32.mrb[0].mxu0
  %1381 = vmatprep.mubr.bf16.mxu0 %v491
  %1382 = vmatmul.mubr.bf16.gmra.mrb[0].mxu0 %v490
  %v1383 = vpop.f32.mrb[0].mxu0
  %v1384 = vadd.f32 %v1287, %v1383
  %v1385 = vpop.f32.mrb[0].mxu0
  %v1386 = vpop.f32.mrb[0].mxu0
  %v1387 = vadd.f32 %v1290, %v1386
  %v1388 = vpop.f32.mrb[0].mxu0
  %1389 = vmatprep.mubr.bf16.mxu0 %v500
  %1390 = vmatmul.mubr.bf16.gmra.mrb[0].mxu0 %v499
  %v1391 = vpop.f32.mrb[0].mxu0
  %v1392 = vadd.f32 %v1295, %v1391
  %v1393 = vpop.f32.mrb[0].mxu0
  %v1394 = vpop.f32.mrb[0].mxu0
  %v1395 = vadd.f32 %v1298, %v1394
  %v1396 = vpop.f32.mrb[0].mxu0
  %1397 = vmatprep.mubr.bf16.mxu0 %v509
  %1398 = vmatmul.mubr.bf16.gmra.mrb[0].mxu0 %v508
  %v1399 = vpop.f32.mrb[0].mxu0
  %v1400 = vadd.f32 %v1303, %v1399
  %v1401 = vpop.f32.mrb[0].mxu0
  %v1402 = vpop.f32.mrb[0].mxu0
  %v1403 = vadd.f32 %v1306, %v1402
  %v1404 = vpop.f32.mrb[0].mxu0
  %1405 = vmatprep.mubr.bf16.mxu0 %v518
  %1406 = vmatmul.mubr.bf16.gmra.mrb[0].mxu0 %v517
  %v1407 = vpop.f32.mrb[0].mxu0
  %v1408 = vadd.f32 %v1311, %v1407
  %v1409 = vpop.f32.mrb[0].mxu0
  %v1410 = vpop.f32.mrb[0].mxu0
  %v1411 = vadd.f32 %v1314, %v1410
  %v1412 = vpop.f32.mrb[0].mxu0
  %1413 = vmatprep.mubr.bf16.mxu0 %v527
  %1414 = vmatmul.mubr.bf16.gmra.mrb[0].mxu0 %v526
  %v1415 = vpop.f32.mrb[0].mxu0
  %v1416 = vadd.f32 %v1319, %v1415
  %v1417 = vpop.f32.mrb[0].mxu0
  %v1418 = vpop.f32.mrb[0].mxu0
  %v1419 = vadd.f32 %v1322, %v1418
  %v1420 = vpop.f32.mrb[0].mxu0
  %1421 = vmatprep.mubr.bf16.mxu0 %v536
  %1422 = vmatmul.mubr.bf16.gmra.mrb[0].mxu0 %v535
  %v1423 = vpop.f32.mrb[0].mxu0
  %v1424 = vadd.f32 %v1327, %v1423
  %v1425 = vpop.f32.mrb[0].mxu0
  %v1426 = vpop.f32.mrb[0].mxu0
  %v1427 = vadd.f32 %v1330, %v1426
  %v1428 = vpop.f32.mrb[0].mxu0
  %1429 = vdwg.mxu0
  %1430 = vmatprep.subr.bf16.mxu0 0
  %1431 = vmatpush1.bf16.msra.mxu0 %v962
  %1432 = vmatprep.subr.bf16.mxu0 0
  %1433 = vmatpush1.bf16.msra.mxu0 %v963
  %1434 = vmatprep.subr.bf16.mxu0 0
  %1435 = vmatpush1.bf16.msra.mxu0 %v964
  %1436 = vmatprep.subr.bf16.mxu0 0
  %1437 = vmatpush1.bf16.msra.mxu0 %v965
  %1438 = vmatprep.subr.bf16.mxu0 0
  %1439 = vmatpush1.bf16.msra.mxu0 %v966
  %1440 = vmatprep.subr.bf16.mxu0 0
  %1441 = vmatpush1.bf16.msra.mxu0 %v967
  %1442 = vmatprep.subr.bf16.mxu0 0
  %1443 = vmatpush1.bf16.msra.mxu0 %v968
  %1444 = vmatprep.subr.bf16.mxu0 0
  %1445 = vmatpush1.bf16.msra.mxu0 %v969
  %1446 = vmatprep.subr.bf16.mxu0 0
  %1447 = vmatpush1.bf16.msra.mxu0 0
  %1448 = vmatprep.subr.bf16.mxu0 0
  %1449 = vmatpush1.bf16.msra.mxu0 0
  %1450 = vmatprep.subr.bf16.mxu0 0
  %1451 = vmatpush1.bf16.msra.mxu0 0
  %1452 = vmatprep.subr.bf16.mxu0 0
  %1453 = vmatpush1.bf16.msra.mxu0 0
  %1454 = vmatprep.subr.bf16.mxu0 0
  %1455 = vmatpush1.bf16.msra.mxu0 0
  %1456 = vmatprep.subr.bf16.mxu0 0
  %1457 = vmatpush1.bf16.msra.mxu0 0
  %1458 = vmatprep.subr.bf16.mxu0 0
  %1459 = vmatpush1.bf16.msra.mxu0 0
  %1460 = vmatprep.subr.bf16.mxu0 0
  %1461 = vmatpush1.bf16.msra.mxu0 0
  %1462 = vmatprep.mubr.bf16.mxu0 0
  %1463 = vmatmul.mubr.bf16.gmra.mrb[0].mxu0 %v474
  %v1464 = vpop.f32.mrb[0].mxu0
  %v1465 = vadd.f32 %v1368, %v1464
  %v1466 = vpop.f32.mrb[0].mxu0
  %v1467 = vpop.f32.mrb[0].mxu0
  %v1468 = vadd.f32 %v1371, %v1467
  %v1469 = vpop.f32.mrb[0].mxu0
  %1470 = vmatprep.mubr.bf16.mxu0 0
  %1471 = vmatmul.mubr.bf16.gmra.mrb[0].mxu0 %v483
  %v1472 = vpop.f32.mrb[0].mxu0
  %v1473 = vadd.f32 %v1376, %v1472
  %v1474 = vpop.f32.mrb[0].mxu0
  %v1475 = vpop.f32.mrb[0].mxu0
  %v1476 = vadd.f32 %v1379, %v1475
  %v1477 = vpop.f32.mrb[0].mxu0
  %1478 = vmatprep.mubr.bf16.mxu0 0
  %1479 = vmatmul.mubr.bf16.gmra.mrb[0].mxu0 %v492
  %v1480 = vpop.f32.mrb[0].mxu0
  %v1481 = vadd.f32 %v1384, %v1480
  %v1482 = vpop.f32.mrb[0].mxu0
  %v1483 = vpop.f32.mrb[0].mxu0
  %v1484 = vadd.f32 %v1387, %v1483
  %v1485 = vpop.f32.mrb[0].mxu0
  %1486 = vmatprep.mubr.bf16.mxu0 0
  %1487 = vmatmul.mubr.bf16.gmra.mrb[0].mxu0 %v501
  %v1488 = vpop.f32.mrb[0].mxu0
  %v1489 = vadd.f32 %v1392, %v1488
  %v1490 = vpop.f32.mrb[0].mxu0
  %v1491 = vpop.f32.mrb[0].mxu0
  %v1492 = vadd.f32 %v1395, %v1491
  %v1493 = vpop.f32.mrb[0].mxu0
  %1494 = vmatprep.mubr.bf16.mxu0 0
  %1495 = vmatmul.mubr.bf16.gmra.mrb[0].mxu0 %v510
  %v1496 = vpop.f32.mrb[0].mxu0
  %v1497 = vadd.f32 %v1400, %v1496
  %v1498 = vpop.f32.mrb[0].mxu0
  %v1499 = vpop.f32.mrb[0].mxu0
  %v1500 = vadd.f32 %v1403, %v1499
  %v1501 = vpop.f32.mrb[0].mxu0
  %1502 = vmatprep.mubr.bf16.mxu0 0
  %1503 = vmatmul.mubr.bf16.gmra.mrb[0].mxu0 %v519
  %v1504 = vpop.f32.mrb[0].mxu0
  %v1505 = vadd.f32 %v1408, %v1504
  %v1506 = vpop.f32.mrb[0].mxu0
  %v1507 = vpop.f32.mrb[0].mxu0
  %v1508 = vadd.f32 %v1411, %v1507
  %v1509 = vpop.f32.mrb[0].mxu0
  %1510 = vmatprep.mubr.bf16.mxu0 0
  %1511 = vmatmul.mubr.bf16.gmra.mrb[0].mxu0 %v528
  %v1512 = vpop.f32.mrb[0].mxu0
  %v1513 = vadd.f32 %v1416, %v1512
  %v1514 = vpop.f32.mrb[0].mxu0
  %v1515 = vpop.f32.mrb[0].mxu0
  %v1516 = vadd.f32 %v1419, %v1515
  %v1517 = vpop.f32.mrb[0].mxu0
  %1518 = vmatprep.mubr.bf16.mxu0 0
  %1519 = vmatmul.mubr.bf16.gmra.mrb[0].mxu0 %v537
  %v1520 = vpop.f32.mrb[0].mxu0
  %v1521 = vadd.f32 %v1424, %v1520
  %v1522 = vpop.f32.mrb[0].mxu0
  %v1523 = vpop.f32.mrb[0].mxu0
  %v1524 = vadd.f32 %v1427, %v1523
  %v1525 = vpop.f32.mrb[0].mxu0
  %1526 = vdwg.mxu0
  %v1527 = vld [vmem:[%s2] sm:$0x1]
  %v1529 = vlaneseq
  %v1530 = vshrl.u32 %v1529, 7
  %v1531 = vsub.s32 0, %v1530
  %v1532 = vrot.slane %v1527, %v1531
  %v1534 = vmul.f32 %v1465, %v1532
  %v1535 = vmul.f32 %v1468, %v1532
  %v1536 = vmul.f32 %v1473, %v1532
  %v1537 = vmul.f32 %v1476, %v1532
  %v1538 = vmul.f32 %v1481, %v1532
  %v1539 = vmul.f32 %v1484, %v1532
  %v1540 = vmul.f32 %v1489, %v1532
  %v1541 = vmul.f32 %v1492, %v1532
  %v1542 = vmul.f32 %v1497, %v1532
  %v1543 = vmul.f32 %v1500, %v1532
  %v1544 = vmul.f32 %v1505, %v1532
  %v1545 = vmul.f32 %v1508, %v1532
  %v1546 = vmul.f32 %v1513, %v1532
  %v1547 = vmul.f32 %v1516, %v1532
  %v1548 = vmul.f32 %v1521, %v1532
  %v1549 = vmul.f32 %v1524, %v1532
  %v1550 = vld [vmem:[%s3] sm:$0x1]
  %v1552 = vlaneseq
  %v1553 = vshrl.u32 %v1552, 7
  %v1554 = vsub.s32 0, %v1553
  %v1555 = vrot.slane %v1550, %v1554
  %v1557 = vadd.f32 %v1534, %v1555
  %v1558 = vadd.f32 %v1535, %v1555
  %v1559 = vadd.f32 %v1536, %v1555
  %v1560 = vadd.f32 %v1537, %v1555
  %v1561 = vadd.f32 %v1538, %v1555
  %v1562 = vadd.f32 %v1539, %v1555
  %v1563 = vadd.f32 %v1540, %v1555
  %v1564 = vadd.f32 %v1541, %v1555
  %v1565 = vadd.f32 %v1542, %v1555
  %v1566 = vadd.f32 %v1543, %v1555
  %v1567 = vadd.f32 %v1544, %v1555
  %v1568 = vadd.f32 %v1545, %v1555
  %v1569 = vadd.f32 %v1546, %v1555
  %v1570 = vadd.f32 %v1547, %v1555
  %v1571 = vadd.f32 %v1548, %v1555
  %v1572 = vadd.f32 %v1549, %v1555
  %v1573 = vmax.f32 %v1557, 0.0
  %v1574 = vmax.f32 %v1558, 0.0
  %v1575 = vmax.f32 %v1559, 0.0
  %v1576 = vmax.f32 %v1560, 0.0
  %v1577 = vmax.f32 %v1561, 0.0
  %v1578 = vmax.f32 %v1562, 0.0
  %v1579 = vmax.f32 %v1563, 0.0
  %v1580 = vmax.f32 %v1564, 0.0
  %v1581 = vmax.f32 %v1565, 0.0
  %v1582 = vmax.f32 %v1566, 0.0
  %v1583 = vmax.f32 %v1567, 0.0
  %v1584 = vmax.f32 %v1568, 0.0
  %v1585 = vmax.f32 %v1569, 0.0
  %v1586 = vmax.f32 %v1570, 0.0
  %v1587 = vmax.f32 %v1571, 0.0
  %v1588 = vmax.f32 %v1572, 0.0
  %v1589 = vpack.c.bf16 %v1574, %v1573
  %v1590 = vpack.c.bf16 %v1576, %v1575
  %v1591 = vpack.c.bf16 %v1578, %v1577
  %v1592 = vpack.c.bf16 %v1580, %v1579
  %v1593 = vpack.c.bf16 %v1582, %v1581
  %v1594 = vpack.c.bf16 %v1584, %v1583
  %v1595 = vpack.c.bf16 %v1586, %v1585
  %v1596 = vpack.c.bf16 %v1588, %v1587
  %v1605 = vunpack.c.l.b16 %v1589
  %v1606 = vunpack.c.h.b16 %v1589
  %v1607 = vunpack.c.l.b16 %v1590
  %v1608 = vunpack.c.h.b16 %v1590
  %v1609 = vunpack.c.l.b16 %v1591
  %v1610 = vunpack.c.h.b16 %v1591
  %v1611 = vunpack.c.l.b16 %v1592
  %v1612 = vunpack.c.h.b16 %v1592
  %v1613 = vunpack.c.l.b16 %v1593
  %v1614 = vunpack.c.h.b16 %v1593
  %v1615 = vunpack.c.l.b16 %v1594
  %v1616 = vunpack.c.h.b16 %v1594
  %v1617 = vunpack.c.l.b16 %v1595
  %v1618 = vunpack.c.h.b16 %v1595
  %v1619 = vunpack.c.l.b16 %v1596
  %v1620 = vunpack.c.h.b16 %v1596
  %v1621 = vpack.c.b16 %v1605, %v1605
  %v1622 = vpack.c.b16 %v1606, %v1606
  %v1623 = vpack.c.b16 %v1607, %v1607
  %v1624 = vpack.c.b16 %v1608, %v1608
  %v1625 = vpack.c.b16 %v1609, %v1609
  %v1626 = vpack.c.b16 %v1610, %v1610
  %v1627 = vpack.c.b16 %v1611, %v1611
  %v1628 = vpack.c.b16 %v1612, %v1612
  %v1629 = vpack.c.b16 %v1613, %v1613
  %v1630 = vpack.c.b16 %v1614, %v1614
  %v1631 = vpack.c.b16 %v1615, %v1615
  %v1632 = vpack.c.b16 %v1616, %v1616
  %v1633 = vpack.c.b16 %v1617, %v1617
  %v1634 = vpack.c.b16 %v1618, %v1618
  %v1635 = vpack.c.b16 %v1619, %v1619
  %v1636 = vpack.c.b16 %v1620, %v1620
  %1653 = vst [vmem:[%s4] sm:$0xf] %v1621
  %1654 = vst [vmem:[%s4 + $0x4] sm:$0xf] %v1622
  %1655 = vst [vmem:[%s4 + $0x8] sm:$0xf] %v1623
  %1656 = vst [vmem:[%s4 + $0xc] sm:$0xf] %v1624
  %1657 = vst [vmem:[%s4 + $0x10] sm:$0xf] %v1625
  %1658 = vst [vmem:[%s4 + $0x14] sm:$0xf] %v1626
  %1659 = vst [vmem:[%s4 + $0x18] sm:$0xf] %v1627
  %1660 = vst [vmem:[%s4 + $0x1c] sm:$0xf] %v1628
  %1661 = vst [vmem:[%s4 + $0x20] sm:$0xf] %v1629
  %1662 = vst [vmem:[%s4 + $0x24] sm:$0xf] %v1630
  %1663 = vst [vmem:[%s4 + $0x28] sm:$0xf] %v1631
  %1664 = vst [vmem:[%s4 + $0x2c] sm:$0xf] %v1632
  %1665 = vst [vmem:[%s4 + $0x30] sm:$0xf] %v1633
  %1666 = vst [vmem:[%s4 + $0x34] sm:$0xf] %v1634
  %1667 = vst [vmem:[%s4 + $0x38] sm:$0xf] %v1635
  %1668 = vst [vmem:[%s4 + $0x3c] sm:$0xf] %v1636
  // Predicated region
  $region18: #{decoder_forward.14} parent=0 // pred_check
    _
  $region19: #{decoder_forward.14} parent=0 // pred_check_branch
    %1670 = sbr.rel (0) target = $region21
  $region20: #{decoder_forward.14} parent=0 // pred_region
    _
  $region21: #{decoder_forward.14} parent=0 // pred_fallthru
    _
  // Predicated region
  $region22: #{decoder_forward.14} parent=0 // pred_check
    _
  $region23: #{decoder_forward.14} parent=0 // pred_check_branch
    %1672 = sbr.rel (0) target = $region25
  $region24: #{decoder_forward.14} parent=0 // pred_region
    _
  $region25: #{decoder_forward.14} parent=0 // pred_fallthru
    _

// kernel: decoder_forward.11
$region0: #{decoder_forward.11}
  #allocation0 [shape = 'u32[]', space=smem, size = 0x4, offset = 0x4, fixed_abs, tag = 'smem constant byte address 0x4 - core index']
  #allocation1 [shape = 'u32[144,128]{1,0:T(1,128)}', space=vmem, size = 0x12000, scoped, tag = 'internal scratch']
  %s0 = inlined_call_operand.vmem [shape: bf16[1,32,640], index: 0, kind: input, shape index: {}]
  %s1 = inlined_call_operand.vmem [shape: bf16[1,640,128], index: 1, kind: input, shape index: {}]
  %s2 = inlined_call_operand.vmem [shape: f32[1,128], index: 2, kind: input, shape index: {}]
  %s3 = inlined_call_operand.vmem [shape: f32[1,128], index: 3, kind: input, shape index: {}]
  %s4 = inlined_call_operand.vmem [shape: bf16[1,32,128], index: 4, kind: output, shape index: {}]
  %s5 = sld [smem:[#allocation0]]
  $region26: #{decoder_forward.11} parent=0
    _
  %s7 = ssub.s32 1, %s5
  %s8 = scalar_select 0, %s7, %s5
  // Predicated region
  $region2: #{decoder_forward.11} parent=0 // pred_check
    _
  $region3: #{decoder_forward.11} parent=0 // pred_check_branch
    %10 = sbr.rel (0) target = $region5
  $region4: #{decoder_forward.11} parent=0 // pred_region
    _
  $region5: #{decoder_forward.11} parent=0 // pred_fallthru
    _
  // Predicated region
  $region6: #{decoder_forward.11} parent=0 // pred_check
    _
  $region7: #{decoder_forward.11} parent=0 // pred_check_branch
    %12 = sbr.rel (0) target = $region9
  $region8: #{decoder_forward.11} parent=0 // pred_region
    _
  $region9: #{decoder_forward.11} parent=0 // pred_fallthru
    _
  // Predicated region
  $region10: #{decoder_forward.11} parent=0 // pred_check
    _
  $region11: #{decoder_forward.11} parent=0 // pred_check_branch
    %14 = sbr.rel (0) target = $region13
  $region12: #{decoder_forward.11} parent=0 // pred_region
    _
  $region13: #{decoder_forward.11} parent=0 // pred_fallthru
    _
  // Predicated region
  $region14: #{decoder_forward.11} parent=0 // pred_check
    _
  $region15: #{decoder_forward.11} parent=0 // pred_check_branch
    %16 = sbr.rel (0) target = $region17
  $region16: #{decoder_forward.11} parent=0 // pred_region
    _
  $region17: #{decoder_forward.11} parent=0 // pred_fallthru
    _
  %v18 = vld [vmem:[%s0] sm:$0xff]
  %v19 = vld [vmem:[%s0 + $0x8] sm:$0xff]
  %v20 = vld [vmem:[%s0 + $0x10] sm:$0xf]
  %v21 = vld [vmem:[%s0 + $0x14] sm:$0xff]
  %v22 = vld [vmem:[%s0 + $0x1c] sm:$0xff]
  %v23 = vld [vmem:[%s0 + $0x24] sm:$0xf]
  %v24 = vld [vmem:[%s0 + $0x28] sm:$0xff]
  %v25 = vld [vmem:[%s0 + $0x30] sm:$0xff]
  %v26 = vld [vmem:[%s0 + $0x38] sm:$0xf]
  %v27 = vld [vmem:[%s0 + $0x3c] sm:$0xff]
  %v28 = vld [vmem:[%s0 + $0x44] sm:$0xff]
  %v29 = vld [vmem:[%s0 + $0x4c] sm:$0xf]
  %v30 = vld [vmem:[%s1] sm:$0xf]
  %v31 = vld [vmem:[%s1 + $0x4] sm:$0xf]
  %v32 = vld [vmem:[%s1 + $0x8] sm:$0xf]
  %v33 = vld [vmem:[%s1 + $0xc] sm:$0xf]
  %v34 = vld [vmem:[%s1 + $0x10] sm:$0xf]
  %v35 = vld [vmem:[%s1 + $0x14] sm:$0xf]
  %v36 = vld [vmem:[%s1 + $0x18] sm:$0xf]
  %v37 = vld [vmem:[%s1 + $0x1c] sm:$0xf]
  %v38 = vld [vmem:[%s1 + $0x20] sm:$0xf]
  %v39 = vld [vmem:[%s1 + $0x24] sm:$0xf]
  %v40 = vld [vmem:[%s1 + $0x28] sm:$0xf]
  %v41 = vld [vmem:[%s1 + $0x2c] sm:$0xf]
  %v42 = vld [vmem:[%s1 + $0x30] sm:$0xf]
  %v43 = vld [vmem:[%s1 + $0x34] sm:$0xf]
  %v44 = vld [vmem:[%s1 + $0x38] sm:$0xf]
  %v45 = vld [vmem:[%s1 + $0x3c] sm:$0xf]
  %v46 = vld [vmem:[%s1 + $0x40] sm:$0xf]
  %v47 = vld [vmem:[%s1 + $0x44] sm:$0xf]
  %v48 = vld [vmem:[%s1 + $0x48] sm:$0xf]
  %v49 = vld [vmem:[%s1 + $0x4c] sm:$0xf]
  %v50 = vld [vmem:[%s1 + $0x50] sm:$0xf]
  %v51 = vld [vmem:[%s1 + $0x54] sm:$0xf]
  %v52 = vld [vmem:[%s1 + $0x58] sm:$0xf]
  %v53 = vld [vmem:[%s1 + $0x5c] sm:$0xf]
  %v54 = vld [vmem:[%s1 + $0x60] sm:$0xf]
  %v55 = vld [vmem:[%s1 + $0x64] sm:$0xf]
  %v56 = vld [vmem:[%s1 + $0x68] sm:$0xf]
  %v57 = vld [vmem:[%s1 + $0x6c] sm:$0xf]
  %v58 = vld [vmem:[%s1 + $0x70] sm:$0xf]
  %v59 = vld [vmem:[%s1 + $0x74] sm:$0xf]
  %v60 = vld [vmem:[%s1 + $0x78] sm:$0xf]
  %v61 = vld [vmem:[%s1 + $0x7c] sm:$0xf]
  %v62 = vld [vmem:[%s1 + $0x80] sm:$0xf]
  %v63 = vld [vmem:[%s1 + $0x84] sm:$0xf]
  %v64 = vld [vmem:[%s1 + $0x88] sm:$0xf]
  %v65 = vld [vmem:[%s1 + $0x8c] sm:$0xf]
  %v66 = vld [vmem:[%s1 + $0x90] sm:$0xf]
  %v67 = vld [vmem:[%s1 + $0x94] sm:$0xf]
  %v68 = vld [vmem:[%s1 + $0x98] sm:$0xf]
  %v69 = vld [vmem:[%s1 + $0x9c] sm:$0xf]
  %v70 = vld [vmem:[%s1 + $0xa0] sm:$0xf]
  %v71 = vld [vmem:[%s1 + $0xa4] sm:$0xf]
  %v72 = vld [vmem:[%s1 + $0xa8] sm:$0xf]
  %v73 = vld [vmem:[%s1 + $0xac] sm:$0xf]
  %v74 = vld [vmem:[%s1 + $0xb0] sm:$0xf]
  %v75 = vld [vmem:[%s1 + $0xb4] sm:$0xf]
  %v76 = vld [vmem:[%s1 + $0xb8] sm:$0xf]
  %v77 = vld [vmem:[%s1 + $0xbc] sm:$0xf]
  %v78 = vld [vmem:[%s1 + $0xc0] sm:$0xf]
  %v79 = vld [vmem:[%s1 + $0xc4] sm:$0xf]
  %v80 = vld [vmem:[%s1 + $0xc8] sm:$0xf]
  %v81 = vld [vmem:[%s1 + $0xcc] sm:$0xf]
  %v82 = vld [vmem:[%s1 + $0xd0] sm:$0xf]
  %v83 = vld [vmem:[%s1 + $0xd4] sm:$0xf]
  %v84 = vld [vmem:[%s1 + $0xd8] sm:$0xf]
  %v85 = vld [vmem:[%s1 + $0xdc] sm:$0xf]
  %v86 = vld [vmem:[%s1 + $0xe0] sm:$0xf]
  %v87 = vld [vmem:[%s1 + $0xe4] sm:$0xf]
  %v88 = vld [vmem:[%s1 + $0xe8] sm:$0xf]
  %v89 = vld [vmem:[%s1 + $0xec] sm:$0xf]
  %v90 = vld [vmem:[%s1 + $0xf0] sm:$0xf]
  %v91 = vld [vmem:[%s1 + $0xf4] sm:$0xf]
  %v92 = vld [vmem:[%s1 + $0xf8] sm:$0xf]
  %v93 = vld [vmem:[%s1 + $0xfc] sm:$0xf]
  %v94 = vld [vmem:[%s1 + $0x100] sm:$0xf]
  %v95 = vld [vmem:[%s1 + $0x104] sm:$0xf]
  %v96 = vld [vmem:[%s1 + $0x108] sm:$0xf]
  %v97 = vld [vmem:[%s1 + $0x10c] sm:$0xf]
  %v98 = vld [vmem:[%s1 + $0x110] sm:$0xf]
  %v99 = vld [vmem:[%s1 + $0x114] sm:$0xf]
  %v100 = vld [vmem:[%s1 + $0x118] sm:$0xf]
  %v101 = vld [vmem:[%s1 + $0x11c] sm:$0xf]
  %v102 = vld [vmem:[%s1 + $0x120] sm:$0xf]
  %v103 = vld [vmem:[%s1 + $0x124] sm:$0xf]
  %v104 = vld [vmem:[%s1 + $0x128] sm:$0xf]
  %v105 = vld [vmem:[%s1 + $0x12c] sm:$0xf]
  %v106 = vld [vmem:[%s1 + $0x130] sm:$0xf]
  %v107 = vld [vmem:[%s1 + $0x134] sm:$0xf]
  %v108 = vld [vmem:[%s1 + $0x138] sm:$0xf]
  %v109 = vld [vmem:[%s1 + $0x13c] sm:$0xf]
  %v122 = vunpack.c.l.b16 %v18
  %v123 = vunpack.c.h.b16 %v18
  %v124 = vunpack.c.l.b16 %v19
  %v125 = vunpack.c.h.b16 %v19
  %v126 = vunpack.c.l.b16 %v20
  %v127 = vunpack.c.l.b16 %v21
  %v128 = vunpack.c.h.b16 %v21
  %v129 = vunpack.c.l.b16 %v22
  %v130 = vunpack.c.h.b16 %v22
  %v131 = vunpack.c.l.b16 %v23
  %v132 = vunpack.c.l.b16 %v24
  %v133 = vunpack.c.h.b16 %v24
  %v134 = vunpack.c.l.b16 %v25
  %v135 = vunpack.c.h.b16 %v25
  %v136 = vunpack.c.l.b16 %v26
  %v137 = vunpack.c.l.b16 %v27
  %v138 = vunpack.c.h.b16 %v27
  %v139 = vunpack.c.l.b16 %v28
  %v140 = vunpack.c.h.b16 %v28
  %v141 = vunpack.c.l.b16 %v29
  %v142 = vpack.c.b16 %v127, %v122
  %v143 = vpack.c.b16 %v128, %v123
  %v144 = vpack.c.b16 %v129, %v124
  %v145 = vpack.c.b16 %v130, %v125
  %v146 = vpack.c.b16 %v131, %v126
  %v147 = vpack.c.b16 %v137, %v132
  %v148 = vpack.c.b16 %v138, %v133
  %v149 = vpack.c.b16 %v139, %v134
  %v150 = vpack.c.b16 %v140, %v135
  %v151 = vpack.c.b16 %v141, %v136
  %v242 = vunpack.c.l.b16 %v30
  %v243 = vunpack.c.l.b16 %v31
  %v244 = vunpack.c.l.b16 %v32
  %v245 = vunpack.c.l.b16 %v33
  %v246 = vunpack.c.l.b16 %v34
  %v247 = vunpack.c.l.b16 %v35
  %v248 = vunpack.c.l.b16 %v36
  %v249 = vunpack.c.l.b16 %v37
  %v250 = vunpack.c.l.b16 %v38
  %v251 = vunpack.c.l.b16 %v39
  %v252 = vunpack.c.l.b16 %v40
  %v253 = vunpack.c.l.b16 %v41
  %v254 = vunpack.c.l.b16 %v42
  %v255 = vunpack.c.l.b16 %v43
  %v256 = vunpack.c.l.b16 %v44
  %v257 = vunpack.c.l.b16 %v45
  %v258 = vunpack.c.l.b16 %v46
  %v259 = vunpack.c.l.b16 %v47
  %v260 = vunpack.c.l.b16 %v48
  %v261 = vunpack.c.l.b16 %v49
  %v262 = vunpack.c.l.b16 %v50
  %v263 = vunpack.c.l.b16 %v51
  %v264 = vunpack.c.l.b16 %v52
  %v265 = vunpack.c.l.b16 %v53
  %v266 = vunpack.c.l.b16 %v54
  %v267 = vunpack.c.l.b16 %v55
  %v268 = vunpack.c.l.b16 %v56
  %v269 = vunpack.c.l.b16 %v57
  %v270 = vunpack.c.l.b16 %v58
  %v271 = vunpack.c.l.b16 %v59
  %v272 = vunpack.c.l.b16 %v60
  %v273 = vunpack.c.l.b16 %v61
  %v274 = vunpack.c.l.b16 %v62
  %v275 = vunpack.c.l.b16 %v63
  %v276 = vunpack.c.l.b16 %v64
  %v277 = vunpack.c.l.b16 %v65
  %v278 = vunpack.c.l.b16 %v66
  %v279 = vunpack.c.l.b16 %v67
  %v280 = vunpack.c.l.b16 %v68
  %v281 = vunpack.c.l.b16 %v69
  %v282 = vunpack.c.l.b16 %v70
  %v283 = vunpack.c.l.b16 %v71
  %v284 = vunpack.c.l.b16 %v72
  %v285 = vunpack.c.l.b16 %v73
  %v286 = vunpack.c.l.b16 %v74
  %v287 = vunpack.c.l.b16 %v75
  %v288 = vunpack.c.l.b16 %v76
  %v289 = vunpack.c.l.b16 %v77
  %v290 = vunpack.c.l.b16 %v78
  %v291 = vunpack.c.l.b16 %v79
  %v292 = vunpack.c.l.b16 %v80
  %v293 = vunpack.c.l.b16 %v81
  %v294 = vunpack.c.l.b16 %v82
  %v295 = vunpack.c.l.b16 %v83
  %v296 = vunpack.c.l.b16 %v84
  %v297 = vunpack.c.l.b16 %v85
  %v298 = vunpack.c.l.b16 %v86
  %v299 = vunpack.c.l.b16 %v87
  %v300 = vunpack.c.l.b16 %v88
  %v301 = vunpack.c.l.b16 %v89
  %v302 = vunpack.c.l.b16 %v90
  %v303 = vunpack.c.l.b16 %v91
  %v304 = vunpack.c.l.b16 %v92
  %v305 = vunpack.c.l.b16 %v93
  %v306 = vunpack.c.l.b16 %v94
  %v307 = vunpack.c.l.b16 %v95
  %v308 = vunpack.c.l.b16 %v96
  %v309 = vunpack.c.l.b16 %v97
  %v310 = vunpack.c.l.b16 %v98
  %v311 = vunpack.c.l.b16 %v99
  %v312 = vunpack.c.l.b16 %v100
  %v313 = vunpack.c.l.b16 %v101
  %v314 = vunpack.c.l.b16 %v102
  %v315 = vunpack.c.l.b16 %v103
  %v316 = vunpack.c.l.b16 %v104
  %v317 = vunpack.c.l.b16 %v105
  %v318 = vunpack.c.l.b16 %v106
  %v319 = vunpack.c.l.b16 %v107
  %v320 = vunpack.c.l.b16 %v108
  %v321 = vunpack.c.l.b16 %v109
  %v322 = vpack.c.b16 %v243, %v242
  %v323 = vpack.c.b16 %v245, %v244
  %v324 = vpack.c.b16 %v247, %v246
  %v325 = vpack.c.b16 %v249, %v248
  %v326 = vpack.c.b16 %v251, %v250
  %v327 = vpack.c.b16 %v253, %v252
  %v328 = vpack.c.b16 %v255, %v254
  %v329 = vpack.c.b16 %v257, %v256
  %v330 = vpack.c.b16 %v259, %v258
  %v331 = vpack.c.b16 %v261, %v260
  %v332 = vpack.c.b16 %v263, %v262
  %v333 = vpack.c.b16 %v265, %v264
  %v334 = vpack.c.b16 %v267, %v266
  %v335 = vpack.c.b16 %v269, %v268
  %v336 = vpack.c.b16 %v271, %v270
  %v337 = vpack.c.b16 %v273, %v272
  %v338 = vpack.c.b16 %v275, %v274
  %v339 = vpack.c.b16 %v277, %v276
  %v340 = vpack.c.b16 %v279, %v278
  %v341 = vpack.c.b16 %v281, %v280
  %v342 = vpack.c.b16 %v283, %v282
  %v343 = vpack.c.b16 %v285, %v284
  %v344 = vpack.c.b16 %v287, %v286
  %v345 = vpack.c.b16 %v289, %v288
  %v346 = vpack.c.b16 %v291, %v290
  %v347 = vpack.c.b16 %v293, %v292
  %v348 = vpack.c.b16 %v295, %v294
  %v349 = vpack.c.b16 %v297, %v296
  %v350 = vpack.c.b16 %v299, %v298
  %v351 = vpack.c.b16 %v301, %v300
  %v352 = vpack.c.b16 %v303, %v302
  %v353 = vpack.c.b16 %v305, %v304
  %v354 = vpack.c.b16 %v307, %v306
  %v355 = vpack.c.b16 %v309, %v308
  %v356 = vpack.c.b16 %v311, %v310
  %v357 = vpack.c.b16 %v313, %v312
  %v358 = vpack.c.b16 %v315, %v314
  %v359 = vpack.c.b16 %v317, %v316
  %v360 = vpack.c.b16 %v319, %v318
  %v361 = vpack.c.b16 %v321, %v320
  %402 = vmatprep.subr.bf16.mxu0 0
  %403 = vmatpush1.bf16.msra.mxu0 %v322
  %404 = vmatprep.subr.bf16.mxu0 0
  %405 = vmatpush1.bf16.msra.mxu0 %v323
  %406 = vmatprep.subr.bf16.mxu0 0
  %407 = vmatpush1.bf16.msra.mxu0 %v324
  %408 = vmatprep.subr.bf16.mxu0 0
  %409 = vmatpush1.bf16.msra.mxu0 %v325
  %410 = vmatprep.subr.bf16.mxu0 0
  %411 = vmatpush1.bf16.msra.mxu0 %v326
  %412 = vmatprep.subr.bf16.mxu0 0
  %413 = vmatpush1.bf16.msra.mxu0 %v327
  %414 = vmatprep.subr.bf16.mxu0 0
  %415 = vmatpush1.bf16.msra.mxu0 %v328
  %416 = vmatprep.subr.bf16.mxu0 0
  %417 = vmatpush1.bf16.msra.mxu0 %v329
  %418 = vmatprep.subr.bf16.mxu0 0
  %419 = vmatpush1.bf16.msra.mxu0 %v330
  %420 = vmatprep.subr.bf16.mxu0 0
  %421 = vmatpush1.bf16.msra.mxu0 %v331
  %422 = vmatprep.subr.bf16.mxu0 0
  %423 = vmatpush1.bf16.msra.mxu0 %v332
  %424 = vmatprep.subr.bf16.mxu0 0
  %425 = vmatpush1.bf16.msra.mxu0 %v333
  %426 = vmatprep.subr.bf16.mxu0 0
  %427 = vmatpush1.bf16.msra.mxu0 %v334
  %428 = vmatprep.subr.bf16.mxu0 0
  %429 = vmatpush1.bf16.msra.mxu0 %v335
  %430 = vmatprep.subr.bf16.mxu0 0
  %431 = vmatpush1.bf16.msra.mxu0 %v336
  %432 = vmatprep.subr.bf16.mxu0 0
  %433 = vmatpush1.bf16.msra.mxu0 %v337
  %434 = vmatprep.mubr.bf16.mxu0 %v143
  %435 = vmatmul.mubr.bf16.gmra.mrb[0].mxu0 %v142
  %v436 = vpop.f32.mrb[0].mxu0
  %v437 = vadd.f32 0.0, %v436
  %v438 = vpop.f32.mrb[0].mxu0
  %v439 = vpop.f32.mrb[0].mxu0
  %v440 = vadd.f32 0.0, %v439
  %v441 = vpop.f32.mrb[0].mxu0
  %442 = vmatprep.mubr.bf16.mxu0 %v148
  %443 = vmatmul.mubr.bf16.gmra.mrb[0].mxu0 %v147
  %v444 = vpop.f32.mrb[0].mxu0
  %v445 = vadd.f32 0.0, %v444
  %v446 = vpop.f32.mrb[0].mxu0
  %v447 = vpop.f32.mrb[0].mxu0
  %v448 = vadd.f32 0.0, %v447
  %v449 = vpop.f32.mrb[0].mxu0
  %450 = vdwg.mxu0
  %451 = vmatprep.subr.bf16.mxu0 0
  %452 = vmatpush1.bf16.msra.mxu0 %v338
  %453 = vmatprep.subr.bf16.mxu0 0
  %454 = vmatpush1.bf16.msra.mxu0 %v339
  %455 = vmatprep.subr.bf16.mxu0 0
  %456 = vmatpush1.bf16.msra.mxu0 %v340
  %457 = vmatprep.subr.bf16.mxu0 0
  %458 = vmatpush1.bf16.msra.mxu0 %v341
  %459 = vmatprep.subr.bf16.mxu0 0
  %460 = vmatpush1.bf16.msra.mxu0 %v342
  %461 = vmatprep.subr.bf16.mxu0 0
  %462 = vmatpush1.bf16.msra.mxu0 %v343
  %463 = vmatprep.subr.bf16.mxu0 0
  %464 = vmatpush1.bf16.msra.mxu0 %v344
  %465 = vmatprep.subr.bf16.mxu0 0
  %466 = vmatpush1.bf16.msra.mxu0 %v345
  %467 = vmatprep.subr.bf16.mxu0 0
  %468 = vmatpush1.bf16.msra.mxu0 %v346
  %469 = vmatprep.subr.bf16.mxu0 0
  %470 = vmatpush1.bf16.msra.mxu0 %v347
  %471 = vmatprep.subr.bf16.mxu0 0
  %472 = vmatpush1.bf16.msra.mxu0 %v348
  %473 = vmatprep.subr.bf16.mxu0 0
  %474 = vmatpush1.bf16.msra.mxu0 %v349
  %475 = vmatprep.subr.bf16.mxu0 0
  %476 = vmatpush1.bf16.msra.mxu0 %v350
  %477 = vmatprep.subr.bf16.mxu0 0
  %478 = vmatpush1.bf16.msra.mxu0 %v351
  %479 = vmatprep.subr.bf16.mxu0 0
  %480 = vmatpush1.bf16.msra.mxu0 %v352
  %481 = vmatprep.subr.bf16.mxu0 0
  %482 = vmatpush1.bf16.msra.mxu0 %v353
  %483 = vmatprep.mubr.bf16.mxu0 %v145
  %484 = vmatmul.mubr.bf16.gmra.mrb[0].mxu0 %v144
  %v485 = vpop.f32.mrb[0].mxu0
  %v486 = vadd.f32 %v437, %v485
  %v487 = vpop.f32.mrb[0].mxu0
  %v488 = vpop.f32.mrb[0].mxu0
  %v489 = vadd.f32 %v440, %v488
  %v490 = vpop.f32.mrb[0].mxu0
  %491 = vmatprep.mubr.bf16.mxu0 %v150
  %492 = vmatmul.mubr.bf16.gmra.mrb[0].mxu0 %v149
  %v493 = vpop.f32.mrb[0].mxu0
  %v494 = vadd.f32 %v445, %v493
  %v495 = vpop.f32.mrb[0].mxu0
  %v496 = vpop.f32.mrb[0].mxu0
  %v497 = vadd.f32 %v448, %v496
  %v498 = vpop.f32.mrb[0].mxu0
  %499 = vdwg.mxu0
  %500 = vmatprep.subr.bf16.mxu0 0
  %501 = vmatpush1.bf16.msra.mxu0 %v354
  %502 = vmatprep.subr.bf16.mxu0 0
  %503 = vmatpush1.bf16.msra.mxu0 %v355
  %504 = vmatprep.subr.bf16.mxu0 0
  %505 = vmatpush1.bf16.msra.mxu0 %v356
  %506 = vmatprep.subr.bf16.mxu0 0
  %507 = vmatpush1.bf16.msra.mxu0 %v357
  %508 = vmatprep.subr.bf16.mxu0 0
  %509 = vmatpush1.bf16.msra.mxu0 %v358
  %510 = vmatprep.subr.bf16.mxu0 0
  %511 = vmatpush1.bf16.msra.mxu0 %v359
  %512 = vmatprep.subr.bf16.mxu0 0
  %513 = vmatpush1.bf16.msra.mxu0 %v360
  %514 = vmatprep.subr.bf16.mxu0 0
  %515 = vmatpush1.bf16.msra.mxu0 %v361
  %516 = vmatprep.subr.bf16.mxu0 0
  %517 = vmatpush1.bf16.msra.mxu0 0
  %518 = vmatprep.subr.bf16.mxu0 0
  %519 = vmatpush1.bf16.msra.mxu0 0
  %520 = vmatprep.subr.bf16.mxu0 0
  %521 = vmatpush1.bf16.msra.mxu0 0
  %522 = vmatprep.subr.bf16.mxu0 0
  %523 = vmatpush1.bf16.msra.mxu0 0
  %524 = vmatprep.subr.bf16.mxu0 0
  %525 = vmatpush1.bf16.msra.mxu0 0
  %526 = vmatprep.subr.bf16.mxu0 0
  %527 = vmatpush1.bf16.msra.mxu0 0
  %528 = vmatprep.subr.bf16.mxu0 0
  %529 = vmatpush1.bf16.msra.mxu0 0
  %530 = vmatprep.subr.bf16.mxu0 0
  %531 = vmatpush1.bf16.msra.mxu0 0
  %532 = vmatprep.mubr.bf16.mxu0 0
  %533 = vmatmul.mubr.bf16.gmra.mrb[0].mxu0 %v146
  %v534 = vpop.f32.mrb[0].mxu0
  %v535 = vadd.f32 %v486, %v534
  %v536 = vpop.f32.mrb[0].mxu0
  %v537 = vpop.f32.mrb[0].mxu0
  %v538 = vadd.f32 %v489, %v537
  %v539 = vpop.f32.mrb[0].mxu0
  %540 = vmatprep.mubr.bf16.mxu0 0
  %541 = vmatmul.mubr.bf16.gmra.mrb[0].mxu0 %v151
  %v542 = vpop.f32.mrb[0].mxu0
  %v543 = vadd.f32 %v494, %v542
  %v544 = vpop.f32.mrb[0].mxu0
  %v545 = vpop.f32.mrb[0].mxu0
  %v546 = vadd.f32 %v497, %v545
  %v547 = vpop.f32.mrb[0].mxu0
  %548 = vdwg.mxu0
  %v549 = vld [vmem:[%s2] sm:$0x1]
  %v551 = vlaneseq
  %v552 = vshrl.u32 %v551, 7
  %v553 = vsub.s32 0, %v552
  %v554 = vrot.slane %v549, %v553
  %v556 = vmul.f32 %v535, %v554
  %v557 = vmul.f32 %v538, %v554
  %v558 = vmul.f32 %v543, %v554
  %v559 = vmul.f32 %v546, %v554
  %v560 = vld [vmem:[%s3] sm:$0x1]
  %v562 = vlaneseq
  %v563 = vshrl.u32 %v562, 7
  %v564 = vsub.s32 0, %v563
  %v565 = vrot.slane %v560, %v564
  %v567 = vadd.f32 %v556, %v565
  %v568 = vadd.f32 %v557, %v565
  %v569 = vadd.f32 %v558, %v565
  %v570 = vadd.f32 %v559, %v565
  %v571 = vmax.f32 %v567, 0.0
  %v572 = vmax.f32 %v568, 0.0
  %v573 = vmax.f32 %v569, 0.0
  %v574 = vmax.f32 %v570, 0.0
  %v575 = vpack.c.bf16 %v572, %v571
  %v576 = vpack.c.bf16 %v574, %v573
  %v579 = vunpack.c.l.b16 %v575
  %v580 = vunpack.c.h.b16 %v575
  %v581 = vunpack.c.l.b16 %v576
  %v582 = vunpack.c.h.b16 %v576
  %v583 = vpack.c.b16 %v579, %v579
  %v584 = vpack.c.b16 %v580, %v580
  %v585 = vpack.c.b16 %v581, %v581
  %v586 = vpack.c.b16 %v582, %v582
  %591 = vst [vmem:[%s4] sm:$0xf] %v583
  %592 = vst [vmem:[%s4 + $0x4] sm:$0xf] %v584
  %593 = vst [vmem:[%s4 + $0x8] sm:$0xf] %v585
  %594 = vst [vmem:[%s4 + $0xc] sm:$0xf] %v586
  // Predicated region
  $region18: #{decoder_forward.11} parent=0 // pred_check
    _
  $region19: #{decoder_forward.11} parent=0 // pred_check_branch
    %596 = sbr.rel (0) target = $region21
  $region20: #{decoder_forward.11} parent=0 // pred_region
    _
  $region21: #{decoder_forward.11} parent=0 // pred_fallthru
    _
  // Predicated region
  $region22: #{decoder_forward.11} parent=0 // pred_check
    _
  $region23: #{decoder_forward.11} parent=0 // pred_check_branch
    %598 = sbr.rel (0) target = $region25
  $region24: #{decoder_forward.11} parent=0 // pred_region
    _
  $region25: #{decoder_forward.11} parent=0 // pred_fallthru
    _

// kernel: squeeze.42
$region0: #{squeeze.42}
  %s0 = inlined_call_operand.vmem [shape: bf16[1,32,256], index: 0, kind: input, shape index: {}]
  %s1 = inlined_call_operand.vmem [shape: bf16[2,4,4,256], index: 1, kind: output, shape index: {}]
  $region1: #{squeeze.42} parent=0
    #allocation0 [shape = 'u8[65536]{0}', space=vmem, size = 0x10000, scoped, tag = 'scoped mem for output reshape']
    #allocation1 [shape = 'u8[32768]{0}', space=vmem, size = 0x8000, scoped, tag = 'scoped mem for input reshape']
    %s3 = smul.u32 4, 2
    %s4 = sshllo.u32 0, %s3
    %s5 = smul.addr 4, 7
    %s6 = scalar_lea.vmem %s0, %s5
    %s7 = sshrl.u32 %s4, 1
    %s8 = sor.u32 %s4, %s7
    %s9 = sand.u32 %s8, 85
    %s10 = sshrl.u32 %s9, 1
    %s11 = sor.u32 %s9, %s10
    %s12 = sand.u32 51, %s11
    %s13 = sshrl.u32 %s12, 2
    %s14 = sor.u32 %s12, %s13
    %s15 = sand.u32 15, %s14
    %v16 = vld [vmem:[%s6] sm:%s15]
    %v17 = vunpack.c.l.bf16 %v16
    %v18 = vunpack.c.h.bf16 %v16
    %s19 = scalar_lea.vmem [#allocation1], 56
    %20 = vst [vmem:[%s19] sm:%s4] %v17
    %s21 = smul.addr 4, 6
    %s22 = scalar_lea.vmem %s0, %s21
    %s23 = sshrl.u32 %s4, 1
    %s24 = sor.u32 %s4, %s23
    %s25 = sand.u32 %s24, 85
    %s26 = sshrl.u32 %s25, 1
    %s27 = sor.u32 %s25, %s26
    %s28 = sand.u32 51, %s27
    %s29 = sshrl.u32 %s28, 2
    %s30 = sor.u32 %s28, %s29
    %s31 = sand.u32 15, %s30
    %v32 = vld [vmem:[%s22] sm:%s31]
    %v33 = vunpack.c.l.bf16 %v32
    %v34 = vunpack.c.h.bf16 %v32
    %s35 = scalar_lea.vmem [#allocation1], 48
    %36 = vst [vmem:[%s35] sm:%s4] %v33
    %s37 = smul.addr 4, 5
    %s38 = scalar_lea.vmem %s0, %s37
    %s39 = sshrl.u32 %s4, 1
    %s40 = sor.u32 %s4, %s39
    %s41 = sand.u32 %s40, 85
    %s42 = sshrl.u32 %s41, 1
    %s43 = sor.u32 %s41, %s42
    %s44 = sand.u32 51, %s43
    %s45 = sshrl.u32 %s44, 2
    %s46 = sor.u32 %s44, %s45
    %s47 = sand.u32 15, %s46
    %v48 = vld [vmem:[%s38] sm:%s47]
    %v49 = vunpack.c.l.bf16 %v48
    %v50 = vunpack.c.h.bf16 %v48
    %s51 = scalar_lea.vmem [#allocation1], 40
    %52 = vst [vmem:[%s51] sm:%s4] %v49
    %s53 = smul.addr 4, 4
    %s54 = scalar_lea.vmem %s0, %s53
    %s55 = sshrl.u32 %s4, 1
    %s56 = sor.u32 %s4, %s55
    %s57 = sand.u32 %s56, 85
    %s58 = sshrl.u32 %s57, 1
    %s59 = sor.u32 %s57, %s58
    %s60 = sand.u32 51, %s59
    %s61 = sshrl.u32 %s60, 2
    %s62 = sor.u32 %s60, %s61
    %s63 = sand.u32 15, %s62
    %v64 = vld [vmem:[%s54] sm:%s63]
    %v65 = vunpack.c.l.bf16 %v64
    %v66 = vunpack.c.h.bf16 %v64
    %s67 = scalar_lea.vmem [#allocation1], 32
    %68 = vst [vmem:[%s67] sm:%s4] %v65
    %s69 = smul.addr 4, 3
    %s70 = scalar_lea.vmem %s0, %s69
    %s71 = sshrl.u32 %s4, 1
    %s72 = sor.u32 %s4, %s71
    %s73 = sand.u32 %s72, 85
    %s74 = sshrl.u32 %s73, 1
    %s75 = sor.u32 %s73, %s74
    %s76 = sand.u32 51, %s75
    %s77 = sshrl.u32 %s76, 2
    %s78 = sor.u32 %s76, %s77
    %s79 = sand.u32 15, %s78
    %v80 = vld [vmem:[%s70] sm:%s79]
    %v81 = vunpack.c.l.bf16 %v80
    %v82 = vunpack.c.h.bf16 %v80
    %s83 = scalar_lea.vmem [#allocation1], 24
    %84 = vst [vmem:[%s83] sm:%s4] %v81
    %s85 = smul.addr 4, 2
    %s86 = scalar_lea.vmem %s0, %s85
    %s87 = sshrl.u32 %s4, 1
    %s88 = sor.u32 %s4, %s87
    %s89 = sand.u32 %s88, 85
    %s90 = sshrl.u32 %s89, 1
    %s91 = sor.u32 %s89, %s90
    %s92 = sand.u32 51, %s91
    %s93 = sshrl.u32 %s92, 2
    %s94 = sor.u32 %s92, %s93
    %s95 = sand.u32 15, %s94
    %v96 = vld [vmem:[%s86] sm:%s95]
    %v97 = vunpack.c.l.bf16 %v96
    %v98 = vunpack.c.h.bf16 %v96
    %s99 = scalar_lea.vmem [#allocation1], 16
    %100 = vst [vmem:[%s99] sm:%s4] %v97
    %s101 = scalar_lea.vmem %s0, 4
    %s102 = sshrl.u32 %s4, 1
    %s103 = sor.u32 %s4, %s102
    %s104 = sand.u32 %s103, 85
    %s105 = sshrl.u32 %s104, 1
    %s106 = sor.u32 %s104, %s105
    %s107 = sand.u32 51, %s106
    %s108 = sshrl.u32 %s107, 2
    %s109 = sor.u32 %s107, %s108
    %s110 = sand.u32 15, %s109
    %v111 = vld [vmem:[%s101] sm:%s110]
    %v112 = vunpack.c.l.bf16 %v111
    %v113 = vunpack.c.h.bf16 %v111
    %s114 = scalar_lea.vmem [#allocation1], 8
    %115 = vst [vmem:[%s114] sm:%s4] %v112
    %s116 = sshrl.u32 %s4, 1
    %s117 = sor.u32 %s4, %s116
    %s118 = sand.u32 %s117, 85
    %s119 = sshrl.u32 %s118, 1
    %s120 = sor.u32 %s118, %s119
    %s121 = sand.u32 51, %s120
    %s122 = sshrl.u32 %s121, 2
    %s123 = sor.u32 %s121, %s122
    %s124 = sand.u32 15, %s123
    %v125 = vld [vmem:[%s0] sm:%s124]
    %v126 = vunpack.c.l.bf16 %v125
    %v127 = vunpack.c.h.bf16 %v125
    %128 = vst [vmem:[#allocation1] sm:%s4] %v126
    %v129 = vld [vmem:[#allocation1] sm:$0xff]
    %130 = vst [vmem:[#allocation0] sm:$0xf] %v129
    %s131 = scalar_lea.vmem [#allocation0], 12
    %132 = vst [vmem:[%s131] sm:$0xf0] %v129
    %s133 = scalar_lea.vmem [#allocation1], 8
    %v134 = vld [vmem:[%s133] sm:$0xff]
    %s135 = scalar_lea.vmem [#allocation0], 8
    %136 = vst [vmem:[%s135] sm:$0xf] %v134
    %s137 = scalar_lea.vmem [#allocation0], 20
    %138 = vst [vmem:[%s137] sm:$0xf0] %v134
    %s139 = scalar_lea.vmem [#allocation1], 16
    %v140 = vld [vmem:[%s139] sm:$0xff]
    %s141 = scalar_lea.vmem [#allocation0], 32
    %142 = vst [vmem:[%s141] sm:$0xf] %v140
    %s143 = scalar_lea.vmem [#allocation0], 44
    %144 = vst [vmem:[%s143] sm:$0xf0] %v140
    %s145 = scalar_lea.vmem [#allocation1], 24
    %v146 = vld [vmem:[%s145] sm:$0xff]
    %s147 = scalar_lea.vmem [#allocation0], 40
    %148 = vst [vmem:[%s147] sm:$0xf] %v146
    %s149 = scalar_lea.vmem [#allocation0], 52
    %150 = vst [vmem:[%s149] sm:$0xf0] %v146
    %s151 = scalar_lea.vmem [#allocation1], 32
    %v152 = vld [vmem:[%s151] sm:$0xff]
    %s153 = scalar_lea.vmem [#allocation0], 64
    %154 = vst [vmem:[%s153] sm:$0xf] %v152
    %s155 = scalar_lea.vmem [#allocation0], 76
    %156 = vst [vmem:[%s155] sm:$0xf0] %v152
    %s157 = scalar_lea.vmem [#allocation1], 40
    %v158 = vld [vmem:[%s157] sm:$0xff]
    %s159 = scalar_lea.vmem [#allocation0], 72
    %160 = vst [vmem:[%s159] sm:$0xf] %v158
    %s161 = scalar_lea.vmem [#allocation0], 84
    %162 = vst [vmem:[%s161] sm:$0xf0] %v158
    %s163 = scalar_lea.vmem [#allocation1], 48
    %v164 = vld [vmem:[%s163] sm:$0xff]
    %s165 = scalar_lea.vmem [#allocation0], 96
    %166 = vst [vmem:[%s165] sm:$0xf] %v164
    %s167 = scalar_lea.vmem [#allocation0], 108
    %168 = vst [vmem:[%s167] sm:$0xf0] %v164
    %s169 = scalar_lea.vmem [#allocation1], 56
    %v170 = vld [vmem:[%s169] sm:$0xff]
    %s171 = scalar_lea.vmem [#allocation0], 104
    %172 = vst [vmem:[%s171] sm:$0xf] %v170
    %s173 = scalar_lea.vmem [#allocation0], 116
    %174 = vst [vmem:[%s173] sm:$0xf0] %v170
    %s176 = smul.u32 2, 2
    %s177 = sshllo.u32 0, %s176
    %s178 = sshrl.u32 %s176, 1
    %v179 = vld [vmem:[#allocation0] sm:%s177]
    %v180 = vpack.c.bf16 0.0, %v179
    %s181 = sshllo.u32 0, %s178
    %182 = vst [vmem:[%s1] sm:%s181] %v180
    %s183 = scalar_lea.vmem [#allocation0], 8
    %v184 = vld [vmem:[%s183] sm:%s177]
    %v185 = vpack.c.bf16 0.0, %v184
    %s186 = sshllo.u32 0, %s178
    %s187 = scalar_lea.vmem %s1, 2
    %188 = vst [vmem:[%s187] sm:%s186] %v185
    %s189 = scalar_lea.vmem [#allocation0], 16
    %v190 = vld [vmem:[%s189] sm:%s177]
    %v191 = vpack.c.bf16 0.0, %v190
    %s192 = sshllo.u32 0, %s178
    %s193 = smul.addr 2, 2
    %s194 = scalar_lea.vmem %s1, %s193
    %195 = vst [vmem:[%s194] sm:%s192] %v191
    %s196 = scalar_lea.vmem [#allocation0], 24
    %v197 = vld [vmem:[%s196] sm:%s177]
    %v198 = vpack.c.bf16 0.0, %v197
    %s199 = sshllo.u32 0, %s178
    %s200 = smul.addr 2, 3
    %s201 = scalar_lea.vmem %s1, %s200
    %202 = vst [vmem:[%s201] sm:%s199] %v198
    %s203 = scalar_lea.vmem [#allocation0], 32
    %v204 = vld [vmem:[%s203] sm:%s177]
    %v205 = vpack.c.bf16 0.0, %v204
    %s206 = sshllo.u32 0, %s178
    %s207 = smul.addr 2, 4
    %s208 = scalar_lea.vmem %s1, %s207
    %209 = vst [vmem:[%s208] sm:%s206] %v205
    %s210 = scalar_lea.vmem [#allocation0], 40
    %v211 = vld [vmem:[%s210] sm:%s177]
    %v212 = vpack.c.bf16 0.0, %v211
    %s213 = sshllo.u32 0, %s178
    %s214 = smul.addr 2, 5
    %s215 = scalar_lea.vmem %s1, %s214
    %216 = vst [vmem:[%s215] sm:%s213] %v212
    %s217 = scalar_lea.vmem [#allocation0], 48
    %v218 = vld [vmem:[%s217] sm:%s177]
    %v219 = vpack.c.bf16 0.0, %v218
    %s220 = sshllo.u32 0, %s178
    %s221 = smul.addr 2, 6
    %s222 = scalar_lea.vmem %s1, %s221
    %223 = vst [vmem:[%s222] sm:%s220] %v219
    %s224 = scalar_lea.vmem [#allocation0], 56
    %v225 = vld [vmem:[%s224] sm:%s177]
    %v226 = vpack.c.bf16 0.0, %v225
    %s227 = sshllo.u32 0, %s178
    %s228 = smul.addr 2, 7
    %s229 = scalar_lea.vmem %s1, %s228
    %230 = vst [vmem:[%s229] sm:%s227] %v226
    %s231 = scalar_lea.vmem [#allocation0], 64
    %v232 = vld [vmem:[%s231] sm:%s177]
    %v233 = vpack.c.bf16 0.0, %v232
    %s234 = sshllo.u32 0, %s178
    %s235 = smul.addr 2, 8
    %s236 = scalar_lea.vmem %s1, %s235
    %237 = vst [vmem:[%s236] sm:%s234] %v233
    %s238 = scalar_lea.vmem [#allocation0], 72
    %v239 = vld [vmem:[%s238] sm:%s177]
    %v240 = vpack.c.bf16 0.0, %v239
    %s241 = sshllo.u32 0, %s178
    %s242 = smul.addr 2, 9
    %s243 = scalar_lea.vmem %s1, %s242
    %244 = vst [vmem:[%s243] sm:%s241] %v240
    %s245 = scalar_lea.vmem [#allocation0], 80
    %v246 = vld [vmem:[%s245] sm:%s177]
    %v247 = vpack.c.bf16 0.0, %v246
    %s248 = sshllo.u32 0, %s178
    %s249 = smul.addr 2, 10
    %s250 = scalar_lea.vmem %s1, %s249
    %251 = vst [vmem:[%s250] sm:%s248] %v247
    %s252 = scalar_lea.vmem [#allocation0], 88
    %v253 = vld [vmem:[%s252] sm:%s177]
    %v254 = vpack.c.bf16 0.0, %v253
    %s255 = sshllo.u32 0, %s178
    %s256 = smul.addr 2, 11
    %s257 = scalar_lea.vmem %s1, %s256
    %258 = vst [vmem:[%s257] sm:%s255] %v254
    %s259 = scalar_lea.vmem [#allocation0], 96
    %v260 = vld [vmem:[%s259] sm:%s177]
    %v261 = vpack.c.bf16 0.0, %v260
    %s262 = sshllo.u32 0, %s178
    %s263 = smul.addr 2, 12
    %s264 = scalar_lea.vmem %s1, %s263
    %265 = vst [vmem:[%s264] sm:%s262] %v261
    %s266 = scalar_lea.vmem [#allocation0], 104
    %v267 = vld [vmem:[%s266] sm:%s177]
    %v268 = vpack.c.bf16 0.0, %v267
    %s269 = sshllo.u32 0, %s178
    %s270 = smul.addr 2, 13
    %s271 = scalar_lea.vmem %s1, %s270
    %272 = vst [vmem:[%s271] sm:%s269] %v268
    %s273 = scalar_lea.vmem [#allocation0], 112
    %v274 = vld [vmem:[%s273] sm:%s177]
    %v275 = vpack.c.bf16 0.0, %v274
    %s276 = sshllo.u32 0, %s178
    %s277 = smul.addr 2, 14
    %s278 = scalar_lea.vmem %s1, %s277
    %279 = vst [vmem:[%s278] sm:%s276] %v275
    %s280 = scalar_lea.vmem [#allocation0], 120
    %v281 = vld [vmem:[%s280] sm:%s177]
    %v282 = vpack.c.bf16 0.0, %v281
    %s283 = sshllo.u32 0, %s178
    %s284 = smul.addr 2, 15
    %s285 = scalar_lea.vmem %s1, %s284
    %286 = vst [vmem:[%s285] sm:%s283] %v282

// kernel: decoder_forward.13
$region0: #{decoder_forward.13}
  #allocation0 [shape = 'u32[]', space=smem, size = 0x4, offset = 0x4, fixed_abs, tag = 'smem constant byte address 0x4 - core index']
  #allocation1 [shape = 'u32[144,128]{1,0:T(1,128)}', space=vmem, size = 0x12000, scoped, tag = 'internal scratch']
  %s0 = inlined_call_operand.vmem [shape: bf16[4,32,1024], index: 0, kind: input, shape index: {}]
  %s1 = inlined_call_operand.vmem [shape: bf16[4,1024,128], index: 1, kind: input, shape index: {}]
  %s2 = inlined_call_operand.vmem [shape: f32[1,128], index: 2, kind: input, shape index: {}]
  %s3 = inlined_call_operand.vmem [shape: f32[1,128], index: 3, kind: input, shape index: {}]
  %s4 = inlined_call_operand.vmem [shape: bf16[4,32,128], index: 4, kind: output, shape index: {}]
  %s5 = sld [smem:[#allocation0]]
  $region49: #{decoder_forward.13} parent=0
    _
  %s7 = ssub.s32 1, %s5
  %s8 = scalar_select 0, %s7, %s5
  loop: start=0, step=1, limit=6
  $region2: #{decoder_forward.13} parent=0 // loop_pre_header
    _
  $region3: #{decoder_forward.13} parent=0 // loop_header
    %s10 = sphi 0, %s14
    %p11 = scmp.ge.s32.totalorder %s10, 6
    %s17 = sphi 0, %s29
    %s18 = sphi 0, %s25
    %s19 = sphi 0, %s17
    %s20 = sphi 0, %s18
    %s21 = sphi 0, %s19
    %s22 = sphi 0, %s20
    %s34 = sphi 0, %s36
    %s37 = sphi 0, %s34
    %s38 = sphi 0, %s37
    %s54 = sphi 0, %s38
    %s60 = sphi 0, %s62
    %s63 = sphi 0, %s60
    %s64 = sphi 0, %s63
    %s80 = sphi 0, %s64
    %s84 = sphi 0, %s84
    %s86 = sphi 0, %s84
    %s87 = sphi 0, %s86
    %s101 = sphi 0, %s87
    %s105 = sphi 0, %s105
    %s107 = sphi 0, %s105
    %s108 = sphi 0, %s107
    %s122 = sphi 0, %s108
    %s130 = sphi 0, %s132
    %s133 = sphi 0, %s130
    %s134 = sphi 0, %s133
    %s150 = sphi 0, %s134
  $region4: #{decoder_forward.13} parent=0 // loop_header_branch
    %13 = sbr.rel (%p11) target = $region8
  $region5: #{decoder_forward.13} parent=0 // loop_body
    %s15 = ssub.s32 %s10, 1
    %s16 = ssub.s32 %s10, 2
    %s23 = sadd.s32 1, %s18
    %p24 = scmp.ge.s32.totalorder %s23, 1
    %s25 = scalar_select %p24, 0, %s23
    %s26 = sadd.s32 1, %s17
    %s27 = scalar_select %p24, %s26, %s17
    %p28 = scmp.ge.s32.totalorder %s27, 4
    %s29 = scalar_select %p28, 0, %s27
    %s30 = ssub.s32 %s17, %s29
    %s31 = ssub.s32 %s18, %s25
    %s32 = sor.u32 %s30, %s31
    %p33 = scmp.eq.s32.totalorder %s32, 0
    %s35 = sadd.s32 %s34, 1
    %s36 = scalar_select %p33, %s34, %s35
    %p39 = pneg %p33
    %p40 = scmp.eq.s32.totalorder %s10, 3
    %p41 = por %p39, %p40
    %p42 = scmp.ne.s32.totalorder %s34, %s37
    %p43 = scmp.eq.s32.totalorder %s10, 0
    %p44 = por %p42, %p43
    %p45 = scmp.ne.s32.totalorder %s34, %s37
    %p46 = scmp.eq.s32.totalorder %s15, 3
    %p47 = por %p45, %p46
    %p48 = scmp.ne.s32.totalorder %s37, %s38
    %p49 = scmp.eq.s32.totalorder %s15, 0
    %p50 = por %p48, %p49
    %p51 = scmp.ne.s32.totalorder %s37, %s38
    %p52 = scmp.eq.s32.totalorder %s16, 3
    %p53 = por %p51, %p52
    %p55 = scmp.ne.s32.totalorder %s38, %s54
    %p56 = scmp.eq.s32.totalorder %s16, 0
    %p57 = por %p55, %p56
    %s58 = ssub.s32 %s17, %s29
    %p59 = scmp.eq.s32.totalorder %s58, 0
    %s61 = sadd.s32 %s60, 1
    %s62 = scalar_select %p59, %s60, %s61
    %p65 = pneg %p59
    %p66 = scmp.eq.s32.totalorder %s10, 3
    %p67 = por %p65, %p66
    %p68 = scmp.ne.s32.totalorder %s60, %s63
    %p69 = scmp.eq.s32.totalorder %s10, 0
    %p70 = por %p68, %p69
    %p71 = scmp.ne.s32.totalorder %s60, %s63
    %p72 = scmp.eq.s32.totalorder %s15, 3
    %p73 = por %p71, %p72
    %p74 = scmp.ne.s32.totalorder %s63, %s64
    %p75 = scmp.eq.s32.totalorder %s15, 0
    %p76 = por %p74, %p75
    %p77 = scmp.ne.s32.totalorder %s63, %s64
    %p78 = scmp.eq.s32.totalorder %s16, 3
    %p79 = por %p77, %p78
    %p81 = scmp.ne.s32.totalorder %s64, %s80
    %p82 = scmp.eq.s32.totalorder %s16, 0
    %p83 = por %p81, %p82
    %s85 = sadd.s32 %s84, 1
    %p88 = scmp.eq.s32.totalorder %s10, 3
    %p89 = scmp.ne.s32.totalorder %s84, %s86
    %p90 = scmp.eq.s32.totalorder %s10, 0
    %p91 = por %p89, %p90
    %p92 = scmp.ne.s32.totalorder %s84, %s86
    %p93 = scmp.eq.s32.totalorder %s15, 3
    %p94 = por %p92, %p93
    %p95 = scmp.ne.s32.totalorder %s86, %s87
    %p96 = scmp.eq.s32.totalorder %s15, 0
    %p97 = por %p95, %p96
    %p98 = scmp.ne.s32.totalorder %s86, %s87
    %p99 = scmp.eq.s32.totalorder %s16, 3
    %p100 = por %p98, %p99
    %p102 = scmp.ne.s32.totalorder %s87, %s101
    %p103 = scmp.eq.s32.totalorder %s16, 0
    %p104 = por %p102, %p103
    %s106 = sadd.s32 %s105, 1
    %p109 = scmp.eq.s32.totalorder %s10, 3
    %p110 = scmp.ne.s32.totalorder %s105, %s107
    %p111 = scmp.eq.s32.totalorder %s10, 0
    %p112 = por %p110, %p111
    %p113 = scmp.ne.s32.totalorder %s105, %s107
    %p114 = scmp.eq.s32.totalorder %s15, 3
    %p115 = por %p113, %p114
    %p116 = scmp.ne.s32.totalorder %s107, %s108
    %p117 = scmp.eq.s32.totalorder %s15, 0
    %p118 = por %p116, %p117
    %p119 = scmp.ne.s32.totalorder %s107, %s108
    %p120 = scmp.eq.s32.totalorder %s16, 3
    %p121 = por %p119, %p120
    %p123 = scmp.ne.s32.totalorder %s108, %s122
    %p124 = scmp.eq.s32.totalorder %s16, 0
    %p125 = por %p123, %p124
    %s126 = ssub.s32 %s17, %s29
    %s127 = ssub.s32 %s18, %s25
    %s128 = sor.u32 %s126, %s127
    %p129 = scmp.eq.s32.totalorder %s128, 0
    %s131 = sadd.s32 %s130, 1
    %s132 = scalar_select %p129, %s130, %s131
    %p135 = pneg %p129
    %p136 = scmp.eq.s32.totalorder %s10, 3
    %p137 = por %p135, %p136
    %p138 = scmp.ne.s32.totalorder %s130, %s133
    %p139 = scmp.eq.s32.totalorder %s10, 0
    %p140 = por %p138, %p139
    %p141 = scmp.ne.s32.totalorder %s130, %s133
    %p142 = scmp.eq.s32.totalorder %s15, 3
    %p143 = por %p141, %p142
    %p144 = scmp.ne.s32.totalorder %s133, %s134
    %p145 = scmp.eq.s32.totalorder %s15, 0
    %p146 = por %p144, %p145
    %p147 = scmp.ne.s32.totalorder %s133, %s134
    %p148 = scmp.eq.s32.totalorder %s16, 3
    %p149 = por %p147, %p148
    %p151 = scmp.ne.s32.totalorder %s134, %s150
    %p152 = scmp.eq.s32.totalorder %s16, 0
    %p153 = por %p151, %p152
    %p154 = scmp.le.s32.totalorder 1, %s10
    %p155 = scmp.lt.s32.totalorder %s10, 5
    %p156 = pnand %p154, %p155
    %p157 = pneg %p156
    // Predicated region
    $region9: #{decoder_forward.13} parent=5 // pred_check
      _
    $region10: #{decoder_forward.13} parent=5 // pred_check_branch
      %159 = sbr.rel (%p156) target = $region12
    $region11: #{decoder_forward.13} parent=5 // pred_region
      %s160 = ssub.s32 %s10, 1
      // Predicated region
      $region13: #{decoder_forward.13} parent=11 // pred_check
        %p161 = pneg %p97
      $region14: #{decoder_forward.13} parent=11 // pred_check_branch
        %163 = sbr.rel (%p161) target = $region16
      $region15: #{decoder_forward.13} parent=11 // pred_region
        _
      $region16: #{decoder_forward.13} parent=11 // pred_fallthru
        _
      // Predicated region
      $region17: #{decoder_forward.13} parent=11 // pred_check
        %p164 = pneg %p118
      $region18: #{decoder_forward.13} parent=11 // pred_check_branch
        %166 = sbr.rel (%p164) target = $region20
      $region19: #{decoder_forward.13} parent=11 // pred_region
        _
      $region20: #{decoder_forward.13} parent=11 // pred_fallthru
        _
    $region12: #{decoder_forward.13} parent=5 // pred_fallthru
      _
    %p167 = scmp.lt.s32.totalorder %s10, 4
    // Predicated region
    $region21: #{decoder_forward.13} parent=5 // pred_check
      %p168 = pneg %p167
    $region22: #{decoder_forward.13} parent=5 // pred_check_branch
      %170 = sbr.rel (%p168) target = $region24
    $region23: #{decoder_forward.13} parent=5 // pred_region
      // Predicated region
      $region25: #{decoder_forward.13} parent=23 // pred_check
        %p171 = pneg %p44
      $region26: #{decoder_forward.13} parent=23 // pred_check_branch
        %173 = sbr.rel (%p171) target = $region28
      $region27: #{decoder_forward.13} parent=23 // pred_region
        %s174 = smul.u32 4, %s18
        %p175 = scmp.lt.s32.totalorder %s17, 3
        %s176 = scalar_select %p175, %s17, 3
        %p177 = scmp.lt.s32.totalorder %s174, 3
        %s178 = scalar_select %p177, %s174, 3
        %s179 = smul.addr %s178, 8
        %s180 = smul.addr %s176, 32
        %s181 = sadd.s32 %s179, %s180
        %s182 = smul.addr %s181, 4
        %s183 = scalar_lea.vmem %s0, %s182
        %s184 = smul.u32 4, %s18
      $region28: #{decoder_forward.13} parent=23 // pred_fallthru
        _
      // Predicated region
      $region29: #{decoder_forward.13} parent=23 // pred_check
        %p185 = pneg %p70
      $region30: #{decoder_forward.13} parent=23 // pred_check_branch
        %187 = sbr.rel (%p185) target = $region32
      $region31: #{decoder_forward.13} parent=23 // pred_region
        %p188 = scmp.lt.s32.totalorder %s17, 3
        %s189 = scalar_select %p188, %s17, 3
        %s190 = smul.addr %s189, 128
        %s191 = smul.addr %s190, 4
        %s192 = scalar_lea.vmem %s1, %s191
      $region32: #{decoder_forward.13} parent=23 // pred_fallthru
        _
    $region24: #{decoder_forward.13} parent=5 // pred_fallthru
      _
    %p193 = scmp.le.s32.totalorder 1, %s10
    %p194 = scmp.lt.s32.totalorder %s10, 5
    %p195 = pnand %p193, %p194
    %p196 = pneg %p195
    // Predicated region
    $region33: #{decoder_forward.13} parent=5 // pred_check
      _
    $region34: #{decoder_forward.13} parent=5 // pred_check_branch
      %198 = sbr.rel (%p195) target = $region36
    $region35: #{decoder_forward.13} parent=5 // pred_region
      %s199 = ssub.s32 %s10, 1
      %s200 = smul.u32 4, %s20
      %p201 = scmp.lt.s32.totalorder %s19, 3
      %s202 = scalar_select %p201, %s19, 3
      %p203 = scmp.lt.s32.totalorder %s200, 3
      %s204 = scalar_select %p203, %s200, 3
      %s205 = smul.addr %s204, 8
      %s206 = smul.addr %s202, 32
      %s207 = sadd.s32 %s205, %s206
      %s208 = smul.addr %s207, 4
      %s209 = scalar_lea.vmem %s0, %s208
      %p210 = pneg %p50
      %p211 = pneg %p47
      %p212 = scmp.lt.s32.totalorder %s19, 3
      %s213 = scalar_select %p212, %s19, 3
      %s214 = smul.addr %s213, 128
      %s215 = smul.addr %s214, 4
      %s216 = scalar_lea.vmem %s1, %s215
      %p217 = pneg %p76
      %p218 = pneg %p73
      %p219 = pneg %p97
      %p220 = pneg %p94
      %p221 = pneg %p118
      %p222 = pneg %p115
      %p223 = pneg %p146
      %p224 = pneg %p143
      %s225 = smul.u32 4, %s20
      %p226 = scmp.lt.s32.totalorder %s19, 3
      %s227 = scalar_select %p226, %s19, 3
      %p228 = scmp.lt.s32.totalorder %s225, 3
      %s229 = scalar_select %p228, %s225, 3
      %s230 = smul.addr %s227, 4
      %s231 = sadd.s32 %s229, %s230
      %s232 = smul.addr %s231, 4
      %s233 = scalar_lea.vmem %s4, %s232
      %s234 = smul.u32 4, %s20
      %p235 = scmp.lt.s32.totalorder %s19, 3
      %s236 = scalar_select %p235, %s19, 3
      %p237 = scmp.lt.s32.totalorder %s234, 3
      %s238 = scalar_select %p237, %s234, 3
      %s239 = smul.addr %s238, 8
      %s240 = smul.addr %s236, 32
      %s241 = sadd.s32 %s239, %s240
      %s242 = smul.addr %s241, 4
      %s243 = scalar_lea.vmem %s0, %s242
      %s244 = smul.u32 4, %s20
      %p245 = scmp.lt.s32.totalorder %s19, 3
      %s246 = scalar_select %p245, %s19, 3
      %s247 = smul.addr %s246, 128
      %s248 = smul.addr %s247, 4
      %s249 = scalar_lea.vmem %s1, %s248
      %s250 = smul.u32 4, %s20
      %p251 = scmp.lt.s32.totalorder %s19, 3
      %s252 = scalar_select %p251, %s19, 3
      %p253 = scmp.lt.s32.totalorder %s250, 3
      %s254 = scalar_select %p253, %s250, 3
      %s255 = smul.addr %s252, 4
      %s256 = sadd.s32 %s254, %s255
      %s257 = smul.addr %s256, 4
      %s258 = scalar_lea.vmem %s4, %s257
      %s259 = smul.u32 4, %s20
      %v261 = vld [vmem:[%s243] sm:$0xff]
      %v262 = vld [vmem:[%s243 + $0x8] sm:$0xff]
      %v263 = vld [vmem:[%s243 + $0x10] sm:$0xff]
      %v264 = vld [vmem:[%s243 + $0x18] sm:$0xff]
      %v265 = vld [vmem:[%s243 + $0x20] sm:$0xff]
      %v266 = vld [vmem:[%s243 + $0x28] sm:$0xff]
      %v267 = vld [vmem:[%s243 + $0x30] sm:$0xff]
      %v268 = vld [vmem:[%s243 + $0x38] sm:$0xff]
      %v269 = vld [vmem:[%s243 + $0x40] sm:$0xff]
      %v270 = vld [vmem:[%s243 + $0x48] sm:$0xff]
      %v271 = vld [vmem:[%s243 + $0x50] sm:$0xff]
      %v272 = vld [vmem:[%s243 + $0x58] sm:$0xff]
      %v273 = vld [vmem:[%s243 + $0x60] sm:$0xff]
      %v274 = vld [vmem:[%s243 + $0x68] sm:$0xff]
      %v275 = vld [vmem:[%s243 + $0x70] sm:$0xff]
      %v276 = vld [vmem:[%s243 + $0x78] sm:$0xff]
      %v277 = vld [vmem:[%s249] sm:$0xf]
      %v278 = vld [vmem:[%s249 + $0x4] sm:$0xf]
      %v279 = vld [vmem:[%s249 + $0x8] sm:$0xf]
      %v280 = vld [vmem:[%s249 + $0xc] sm:$0xf]
      %v281 = vld [vmem:[%s249 + $0x10] sm:$0xf]
      %v282 = vld [vmem:[%s249 + $0x14] sm:$0xf]
      %v283 = vld [vmem:[%s249 + $0x18] sm:$0xf]
      %v284 = vld [vmem:[%s249 + $0x1c] sm:$0xf]
      %v285 = vld [vmem:[%s249 + $0x20] sm:$0xf]
      %v286 = vld [vmem:[%s249 + $0x24] sm:$0xf]
      %v287 = vld [vmem:[%s249 + $0x28] sm:$0xf]
      %v288 = vld [vmem:[%s249 + $0x2c] sm:$0xf]
      %v289 = vld [vmem:[%s249 + $0x30] sm:$0xf]
      %v290 = vld [vmem:[%s249 + $0x34] sm:$0xf]
      %v291 = vld [vmem:[%s249 + $0x38] sm:$0xf]
      %v292 = vld [vmem:[%s249 + $0x3c] sm:$0xf]
      %v293 = vld [vmem:[%s249 + $0x40] sm:$0xf]
      %v294 = vld [vmem:[%s249 + $0x44] sm:$0xf]
      %v295 = vld [vmem:[%s249 + $0x48] sm:$0xf]
      %v296 = vld [vmem:[%s249 + $0x4c] sm:$0xf]
      %v297 = vld [vmem:[%s249 + $0x50] sm:$0xf]
      %v298 = vld [vmem:[%s249 + $0x54] sm:$0xf]
      %v299 = vld [vmem:[%s249 + $0x58] sm:$0xf]
      %v300 = vld [vmem:[%s249 + $0x5c] sm:$0xf]
      %v301 = vld [vmem:[%s249 + $0x60] sm:$0xf]
      %v302 = vld [vmem:[%s249 + $0x64] sm:$0xf]
      %v303 = vld [vmem:[%s249 + $0x68] sm:$0xf]
      %v304 = vld [vmem:[%s249 + $0x6c] sm:$0xf]
      %v305 = vld [vmem:[%s249 + $0x70] sm:$0xf]
      %v306 = vld [vmem:[%s249 + $0x74] sm:$0xf]
      %v307 = vld [vmem:[%s249 + $0x78] sm:$0xf]
      %v308 = vld [vmem:[%s249 + $0x7c] sm:$0xf]
      %v309 = vld [vmem:[%s249 + $0x80] sm:$0xf]
      %v310 = vld [vmem:[%s249 + $0x84] sm:$0xf]
      %v311 = vld [vmem:[%s249 + $0x88] sm:$0xf]
      %v312 = vld [vmem:[%s249 + $0x8c] sm:$0xf]
      %v313 = vld [vmem:[%s249 + $0x90] sm:$0xf]
      %v314 = vld [vmem:[%s249 + $0x94] sm:$0xf]
      %v315 = vld [vmem:[%s249 + $0x98] sm:$0xf]
      %v316 = vld [vmem:[%s249 + $0x9c] sm:$0xf]
      %v317 = vld [vmem:[%s249 + $0xa0] sm:$0xf]
      %v318 = vld [vmem:[%s249 + $0xa4] sm:$0xf]
      %v319 = vld [vmem:[%s249 + $0xa8] sm:$0xf]
      %v320 = vld [vmem:[%s249 + $0xac] sm:$0xf]
      %v321 = vld [vmem:[%s249 + $0xb0] sm:$0xf]
      %v322 = vld [vmem:[%s249 + $0xb4] sm:$0xf]
      %v323 = vld [vmem:[%s249 + $0xb8] sm:$0xf]
      %v324 = vld [vmem:[%s249 + $0xbc] sm:$0xf]
      %v325 = vld [vmem:[%s249 + $0xc0] sm:$0xf]
      %v326 = vld [vmem:[%s249 + $0xc4] sm:$0xf]
      %v327 = vld [vmem:[%s249 + $0xc8] sm:$0xf]
      %v328 = vld [vmem:[%s249 + $0xcc] sm:$0xf]
      %v329 = vld [vmem:[%s249 + $0xd0] sm:$0xf]
      %v330 = vld [vmem:[%s249 + $0xd4] sm:$0xf]
      %v331 = vld [vmem:[%s249 + $0xd8] sm:$0xf]
      %v332 = vld [vmem:[%s249 + $0xdc] sm:$0xf]
      %v333 = vld [vmem:[%s249 + $0xe0] sm:$0xf]
      %v334 = vld [vmem:[%s249 + $0xe4] sm:$0xf]
      %v335 = vld [vmem:[%s249 + $0xe8] sm:$0xf]
      %v336 = vld [vmem:[%s249 + $0xec] sm:$0xf]
      %v337 = vld [vmem:[%s249 + $0xf0] sm:$0xf]
      %v338 = vld [vmem:[%s249 + $0xf4] sm:$0xf]
      %v339 = vld [vmem:[%s249 + $0xf8] sm:$0xf]
      %v340 = vld [vmem:[%s249 + $0xfc] sm:$0xf]
      %v341 = vld [vmem:[%s249 + $0x100] sm:$0xf]
      %v342 = vld [vmem:[%s249 + $0x104] sm:$0xf]
      %v343 = vld [vmem:[%s249 + $0x108] sm:$0xf]
      %v344 = vld [vmem:[%s249 + $0x10c] sm:$0xf]
      %v345 = vld [vmem:[%s249 + $0x110] sm:$0xf]
      %v346 = vld [vmem:[%s249 + $0x114] sm:$0xf]
      %v347 = vld [vmem:[%s249 + $0x118] sm:$0xf]
      %v348 = vld [vmem:[%s249 + $0x11c] sm:$0xf]
      %v349 = vld [vmem:[%s249 + $0x120] sm:$0xf]
      %v350 = vld [vmem:[%s249 + $0x124] sm:$0xf]
      %v351 = vld [vmem:[%s249 + $0x128] sm:$0xf]
      %v352 = vld [vmem:[%s249 + $0x12c] sm:$0xf]
      %v353 = vld [vmem:[%s249 + $0x130] sm:$0xf]
      %v354 = vld [vmem:[%s249 + $0x134] sm:$0xf]
      %v355 = vld [vmem:[%s249 + $0x138] sm:$0xf]
      %v356 = vld [vmem:[%s249 + $0x13c] sm:$0xf]
      %v357 = vld [vmem:[%s249 + $0x140] sm:$0xf]
      %v358 = vld [vmem:[%s249 + $0x144] sm:$0xf]
      %v359 = vld [vmem:[%s249 + $0x148] sm:$0xf]
      %v360 = vld [vmem:[%s249 + $0x14c] sm:$0xf]
      %v361 = vld [vmem:[%s249 + $0x150] sm:$0xf]
      %v362 = vld [vmem:[%s249 + $0x154] sm:$0xf]
      %v363 = vld [vmem:[%s249 + $0x158] sm:$0xf]
      %v364 = vld [vmem:[%s249 + $0x15c] sm:$0xf]
      %v365 = vld [vmem:[%s249 + $0x160] sm:$0xf]
      %v366 = vld [vmem:[%s249 + $0x164] sm:$0xf]
      %v367 = vld [vmem:[%s249 + $0x168] sm:$0xf]
      %v368 = vld [vmem:[%s249 + $0x16c] sm:$0xf]
      %v369 = vld [vmem:[%s249 + $0x170] sm:$0xf]
      %v370 = vld [vmem:[%s249 + $0x174] sm:$0xf]
      %v371 = vld [vmem:[%s249 + $0x178] sm:$0xf]
      %v372 = vld [vmem:[%s249 + $0x17c] sm:$0xf]
      %v373 = vld [vmem:[%s249 + $0x180] sm:$0xf]
      %v374 = vld [vmem:[%s249 + $0x184] sm:$0xf]
      %v375 = vld [vmem:[%s249 + $0x188] sm:$0xf]
      %v376 = vld [vmem:[%s249 + $0x18c] sm:$0xf]
      %v377 = vld [vmem:[%s249 + $0x190] sm:$0xf]
      %v378 = vld [vmem:[%s249 + $0x194] sm:$0xf]
      %v379 = vld [vmem:[%s249 + $0x198] sm:$0xf]
      %v380 = vld [vmem:[%s249 + $0x19c] sm:$0xf]
      %v381 = vld [vmem:[%s249 + $0x1a0] sm:$0xf]
      %v382 = vld [vmem:[%s249 + $0x1a4] sm:$0xf]
      %v383 = vld [vmem:[%s249 + $0x1a8] sm:$0xf]
      %v384 = vld [vmem:[%s249 + $0x1ac] sm:$0xf]
      %v385 = vld [vmem:[%s249 + $0x1b0] sm:$0xf]
      %v386 = vld [vmem:[%s249 + $0x1b4] sm:$0xf]
      %v387 = vld [vmem:[%s249 + $0x1b8] sm:$0xf]
      %v388 = vld [vmem:[%s249 + $0x1bc] sm:$0xf]
      %v389 = vld [vmem:[%s249 + $0x1c0] sm:$0xf]
      %v390 = vld [vmem:[%s249 + $0x1c4] sm:$0xf]
      %v391 = vld [vmem:[%s249 + $0x1c8] sm:$0xf]
      %v392 = vld [vmem:[%s249 + $0x1cc] sm:$0xf]
      %v393 = vld [vmem:[%s249 + $0x1d0] sm:$0xf]
      %v394 = vld [vmem:[%s249 + $0x1d4] sm:$0xf]
      %v395 = vld [vmem:[%s249 + $0x1d8] sm:$0xf]
      %v396 = vld [vmem:[%s249 + $0x1dc] sm:$0xf]
      %v397 = vld [vmem:[%s249 + $0x1e0] sm:$0xf]
      %v398 = vld [vmem:[%s249 + $0x1e4] sm:$0xf]
      %v399 = vld [vmem:[%s249 + $0x1e8] sm:$0xf]
      %v400 = vld [vmem:[%s249 + $0x1ec] sm:$0xf]
      %v401 = vld [vmem:[%s249 + $0x1f0] sm:$0xf]
      %v402 = vld [vmem:[%s249 + $0x1f4] sm:$0xf]
      %v403 = vld [vmem:[%s249 + $0x1f8] sm:$0xf]
      %v404 = vld [vmem:[%s249 + $0x1fc] sm:$0xf]
      %v421 = vunpack.c.l.b16 %v261
      %v422 = vunpack.c.h.b16 %v261
      %v423 = vunpack.c.l.b16 %v262
      %v424 = vunpack.c.h.b16 %v262
      %v425 = vunpack.c.l.b16 %v263
      %v426 = vunpack.c.h.b16 %v263
      %v427 = vunpack.c.l.b16 %v264
      %v428 = vunpack.c.h.b16 %v264
      %v429 = vunpack.c.l.b16 %v265
      %v430 = vunpack.c.h.b16 %v265
      %v431 = vunpack.c.l.b16 %v266
      %v432 = vunpack.c.h.b16 %v266
      %v433 = vunpack.c.l.b16 %v267
      %v434 = vunpack.c.h.b16 %v267
      %v435 = vunpack.c.l.b16 %v268
      %v436 = vunpack.c.h.b16 %v268
      %v437 = vunpack.c.l.b16 %v269
      %v438 = vunpack.c.h.b16 %v269
      %v439 = vunpack.c.l.b16 %v270
      %v440 = vunpack.c.h.b16 %v270
      %v441 = vunpack.c.l.b16 %v271
      %v442 = vunpack.c.h.b16 %v271
      %v443 = vunpack.c.l.b16 %v272
      %v444 = vunpack.c.h.b16 %v272
      %v445 = vunpack.c.l.b16 %v273
      %v446 = vunpack.c.h.b16 %v273
      %v447 = vunpack.c.l.b16 %v274
      %v448 = vunpack.c.h.b16 %v274
      %v449 = vunpack.c.l.b16 %v275
      %v450 = vunpack.c.h.b16 %v275
      %v451 = vunpack.c.l.b16 %v276
      %v452 = vunpack.c.h.b16 %v276
      %v453 = vpack.c.b16 %v429, %v421
      %v454 = vpack.c.b16 %v430, %v422
      %v455 = vpack.c.b16 %v431, %v423
      %v456 = vpack.c.b16 %v432, %v424
      %v457 = vpack.c.b16 %v433, %v425
      %v458 = vpack.c.b16 %v434, %v426
      %v459 = vpack.c.b16 %v435, %v427
      %v460 = vpack.c.b16 %v436, %v428
      %v461 = vpack.c.b16 %v445, %v437
      %v462 = vpack.c.b16 %v446, %v438
      %v463 = vpack.c.b16 %v447, %v439
      %v464 = vpack.c.b16 %v448, %v440
      %v465 = vpack.c.b16 %v449, %v441
      %v466 = vpack.c.b16 %v450, %v442
      %v467 = vpack.c.b16 %v451, %v443
      %v468 = vpack.c.b16 %v452, %v444
      %v613 = vunpack.c.l.b16 %v277
      %v614 = vunpack.c.l.b16 %v278
      %v615 = vunpack.c.l.b16 %v279
      %v616 = vunpack.c.l.b16 %v280
      %v617 = vunpack.c.l.b16 %v281
      %v618 = vunpack.c.l.b16 %v282
      %v619 = vunpack.c.l.b16 %v283
      %v620 = vunpack.c.l.b16 %v284
      %v621 = vunpack.c.l.b16 %v285
      %v622 = vunpack.c.l.b16 %v286
      %v623 = vunpack.c.l.b16 %v287
      %v624 = vunpack.c.l.b16 %v288
      %v625 = vunpack.c.l.b16 %v289
      %v626 = vunpack.c.l.b16 %v290
      %v627 = vunpack.c.l.b16 %v291
      %v628 = vunpack.c.l.b16 %v292
      %v629 = vunpack.c.l.b16 %v293
      %v630 = vunpack.c.l.b16 %v294
      %v631 = vunpack.c.l.b16 %v295
      %v632 = vunpack.c.l.b16 %v296
      %v633 = vunpack.c.l.b16 %v297
      %v634 = vunpack.c.l.b16 %v298
      %v635 = vunpack.c.l.b16 %v299
      %v636 = vunpack.c.l.b16 %v300
      %v637 = vunpack.c.l.b16 %v301
      %v638 = vunpack.c.l.b16 %v302
      %v639 = vunpack.c.l.b16 %v303
      %v640 = vunpack.c.l.b16 %v304
      %v641 = vunpack.c.l.b16 %v305
      %v642 = vunpack.c.l.b16 %v306
      %v643 = vunpack.c.l.b16 %v307
      %v644 = vunpack.c.l.b16 %v308
      %v645 = vunpack.c.l.b16 %v309
      %v646 = vunpack.c.l.b16 %v310
      %v647 = vunpack.c.l.b16 %v311
      %v648 = vunpack.c.l.b16 %v312
      %v649 = vunpack.c.l.b16 %v313
      %v650 = vunpack.c.l.b16 %v314
      %v651 = vunpack.c.l.b16 %v315
      %v652 = vunpack.c.l.b16 %v316
      %v653 = vunpack.c.l.b16 %v317
      %v654 = vunpack.c.l.b16 %v318
      %v655 = vunpack.c.l.b16 %v319
      %v656 = vunpack.c.l.b16 %v320
      %v657 = vunpack.c.l.b16 %v321
      %v658 = vunpack.c.l.b16 %v322
      %v659 = vunpack.c.l.b16 %v323
      %v660 = vunpack.c.l.b16 %v324
      %v661 = vunpack.c.l.b16 %v325
      %v662 = vunpack.c.l.b16 %v326
      %v663 = vunpack.c.l.b16 %v327
      %v664 = vunpack.c.l.b16 %v328
      %v665 = vunpack.c.l.b16 %v329
      %v666 = vunpack.c.l.b16 %v330
      %v667 = vunpack.c.l.b16 %v331
      %v668 = vunpack.c.l.b16 %v332
      %v669 = vunpack.c.l.b16 %v333
      %v670 = vunpack.c.l.b16 %v334
      %v671 = vunpack.c.l.b16 %v335
      %v672 = vunpack.c.l.b16 %v336
      %v673 = vunpack.c.l.b16 %v337
      %v674 = vunpack.c.l.b16 %v338
      %v675 = vunpack.c.l.b16 %v339
      %v676 = vunpack.c.l.b16 %v340
      %v677 = vunpack.c.l.b16 %v341
      %v678 = vunpack.c.l.b16 %v342
      %v679 = vunpack.c.l.b16 %v343
      %v680 = vunpack.c.l.b16 %v344
      %v681 = vunpack.c.l.b16 %v345
      %v682 = vunpack.c.l.b16 %v346
      %v683 = vunpack.c.l.b16 %v347
      %v684 = vunpack.c.l.b16 %v348
      %v685 = vunpack.c.l.b16 %v349
      %v686 = vunpack.c.l.b16 %v350
      %v687 = vunpack.c.l.b16 %v351
      %v688 = vunpack.c.l.b16 %v352
      %v689 = vunpack.c.l.b16 %v353
      %v690 = vunpack.c.l.b16 %v354
      %v691 = vunpack.c.l.b16 %v355
      %v692 = vunpack.c.l.b16 %v356
      %v693 = vunpack.c.l.b16 %v357
      %v694 = vunpack.c.l.b16 %v358
      %v695 = vunpack.c.l.b16 %v359
      %v696 = vunpack.c.l.b16 %v360
      %v697 = vunpack.c.l.b16 %v361
      %v698 = vunpack.c.l.b16 %v362
      %v699 = vunpack.c.l.b16 %v363
      %v700 = vunpack.c.l.b16 %v364
      %v701 = vunpack.c.l.b16 %v365
      %v702 = vunpack.c.l.b16 %v366
      %v703 = vunpack.c.l.b16 %v367
      %v704 = vunpack.c.l.b16 %v368
      %v705 = vunpack.c.l.b16 %v369
      %v706 = vunpack.c.l.b16 %v370
      %v707 = vunpack.c.l.b16 %v371
      %v708 = vunpack.c.l.b16 %v372
      %v709 = vunpack.c.l.b16 %v373
      %v710 = vunpack.c.l.b16 %v374
      %v711 = vunpack.c.l.b16 %v375
      %v712 = vunpack.c.l.b16 %v376
      %v713 = vunpack.c.l.b16 %v377
      %v714 = vunpack.c.l.b16 %v378
      %v715 = vunpack.c.l.b16 %v379
      %v716 = vunpack.c.l.b16 %v380
      %v717 = vunpack.c.l.b16 %v381
      %v718 = vunpack.c.l.b16 %v382
      %v719 = vunpack.c.l.b16 %v383
      %v720 = vunpack.c.l.b16 %v384
      %v721 = vunpack.c.l.b16 %v385
      %v722 = vunpack.c.l.b16 %v386
      %v723 = vunpack.c.l.b16 %v387
      %v724 = vunpack.c.l.b16 %v388
      %v725 = vunpack.c.l.b16 %v389
      %v726 = vunpack.c.l.b16 %v390
      %v727 = vunpack.c.l.b16 %v391
      %v728 = vunpack.c.l.b16 %v392
      %v729 = vunpack.c.l.b16 %v393
      %v730 = vunpack.c.l.b16 %v394
      %v731 = vunpack.c.l.b16 %v395
      %v732 = vunpack.c.l.b16 %v396
      %v733 = vunpack.c.l.b16 %v397
      %v734 = vunpack.c.l.b16 %v398
      %v735 = vunpack.c.l.b16 %v399
      %v736 = vunpack.c.l.b16 %v400
      %v737 = vunpack.c.l.b16 %v401
      %v738 = vunpack.c.l.b16 %v402
      %v739 = vunpack.c.l.b16 %v403
      %v740 = vunpack.c.l.b16 %v404
      %v741 = vpack.c.b16 %v614, %v613
      %v742 = vpack.c.b16 %v616, %v615
      %v743 = vpack.c.b16 %v618, %v617
      %v744 = vpack.c.b16 %v620, %v619
      %v745 = vpack.c.b16 %v622, %v621
      %v746 = vpack.c.b16 %v624, %v623
      %v747 = vpack.c.b16 %v626, %v625
      %v748 = vpack.c.b16 %v628, %v627
      %v749 = vpack.c.b16 %v630, %v629
      %v750 = vpack.c.b16 %v632, %v631
      %v751 = vpack.c.b16 %v634, %v633
      %v752 = vpack.c.b16 %v636, %v635
      %v753 = vpack.c.b16 %v638, %v637
      %v754 = vpack.c.b16 %v640, %v639
      %v755 = vpack.c.b16 %v642, %v641
      %v756 = vpack.c.b16 %v644, %v643
      %v757 = vpack.c.b16 %v646, %v645
      %v758 = vpack.c.b16 %v648, %v647
      %v759 = vpack.c.b16 %v650, %v649
      %v760 = vpack.c.b16 %v652, %v651
      %v761 = vpack.c.b16 %v654, %v653
      %v762 = vpack.c.b16 %v656, %v655
      %v763 = vpack.c.b16 %v658, %v657
      %v764 = vpack.c.b16 %v660, %v659
      %v765 = vpack.c.b16 %v662, %v661
      %v766 = vpack.c.b16 %v664, %v663
      %v767 = vpack.c.b16 %v666, %v665
      %v768 = vpack.c.b16 %v668, %v667
      %v769 = vpack.c.b16 %v670, %v669
      %v770 = vpack.c.b16 %v672, %v671
      %v771 = vpack.c.b16 %v674, %v673
      %v772 = vpack.c.b16 %v676, %v675
      %v773 = vpack.c.b16 %v678, %v677
      %v774 = vpack.c.b16 %v680, %v679
      %v775 = vpack.c.b16 %v682, %v681
      %v776 = vpack.c.b16 %v684, %v683
      %v777 = vpack.c.b16 %v686, %v685
      %v778 = vpack.c.b16 %v688, %v687
      %v779 = vpack.c.b16 %v690, %v689
      %v780 = vpack.c.b16 %v692, %v691
      %v781 = vpack.c.b16 %v694, %v693
      %v782 = vpack.c.b16 %v696, %v695
      %v783 = vpack.c.b16 %v698, %v697
      %v784 = vpack.c.b16 %v700, %v699
      %v785 = vpack.c.b16 %v702, %v701
      %v786 = vpack.c.b16 %v704, %v703
      %v787 = vpack.c.b16 %v706, %v705
      %v788 = vpack.c.b16 %v708, %v707
      %v789 = vpack.c.b16 %v710, %v709
      %v790 = vpack.c.b16 %v712, %v711
      %v791 = vpack.c.b16 %v714, %v713
      %v792 = vpack.c.b16 %v716, %v715
      %v793 = vpack.c.b16 %v718, %v717
      %v794 = vpack.c.b16 %v720, %v719
      %v795 = vpack.c.b16 %v722, %v721
      %v796 = vpack.c.b16 %v724, %v723
      %v797 = vpack.c.b16 %v726, %v725
      %v798 = vpack.c.b16 %v728, %v727
      %v799 = vpack.c.b16 %v730, %v729
      %v800 = vpack.c.b16 %v732, %v731
      %v801 = vpack.c.b16 %v734, %v733
      %v802 = vpack.c.b16 %v736, %v735
      %v803 = vpack.c.b16 %v738, %v737
      %v804 = vpack.c.b16 %v740, %v739
      %869 = vmatprep.subr.bf16.mxu0 0
      %870 = vmatpush1.bf16.msra.mxu0 %v741
      %871 = vmatprep.subr.bf16.mxu0 0
      %872 = vmatpush1.bf16.msra.mxu0 %v742
      %873 = vmatprep.subr.bf16.mxu0 0
      %874 = vmatpush1.bf16.msra.mxu0 %v743
      %875 = vmatprep.subr.bf16.mxu0 0
      %876 = vmatpush1.bf16.msra.mxu0 %v744
      %877 = vmatprep.subr.bf16.mxu0 0
      %878 = vmatpush1.bf16.msra.mxu0 %v745
      %879 = vmatprep.subr.bf16.mxu0 0
      %880 = vmatpush1.bf16.msra.mxu0 %v746
      %881 = vmatprep.subr.bf16.mxu0 0
      %882 = vmatpush1.bf16.msra.mxu0 %v747
      %883 = vmatprep.subr.bf16.mxu0 0
      %884 = vmatpush1.bf16.msra.mxu0 %v748
      %885 = vmatprep.subr.bf16.mxu0 0
      %886 = vmatpush1.bf16.msra.mxu0 %v749
      %887 = vmatprep.subr.bf16.mxu0 0
      %888 = vmatpush1.bf16.msra.mxu0 %v750
      %889 = vmatprep.subr.bf16.mxu0 0
      %890 = vmatpush1.bf16.msra.mxu0 %v751
      %891 = vmatprep.subr.bf16.mxu0 0
      %892 = vmatpush1.bf16.msra.mxu0 %v752
      %893 = vmatprep.subr.bf16.mxu0 0
      %894 = vmatpush1.bf16.msra.mxu0 %v753
      %895 = vmatprep.subr.bf16.mxu0 0
      %896 = vmatpush1.bf16.msra.mxu0 %v754
      %897 = vmatprep.subr.bf16.mxu0 0
      %898 = vmatpush1.bf16.msra.mxu0 %v755
      %899 = vmatprep.subr.bf16.mxu0 0
      %900 = vmatpush1.bf16.msra.mxu0 %v756
      %901 = vmatprep.mubr.bf16.mxu0 %v454
      %902 = vmatmul.mubr.bf16.gmra.mrb[0].mxu0 %v453
      %v903 = vpop.f32.mrb[0].mxu0
      %v904 = vadd.f32 0.0, %v903
      %v905 = vpop.f32.mrb[0].mxu0
      %v906 = vpop.f32.mrb[0].mxu0
      %v907 = vadd.f32 0.0, %v906
      %v908 = vpop.f32.mrb[0].mxu0
      %909 = vmatprep.mubr.bf16.mxu0 %v462
      %910 = vmatmul.mubr.bf16.gmra.mrb[0].mxu0 %v461
      %v911 = vpop.f32.mrb[0].mxu0
      %v912 = vadd.f32 0.0, %v911
      %v913 = vpop.f32.mrb[0].mxu0
      %v914 = vpop.f32.mrb[0].mxu0
      %v915 = vadd.f32 0.0, %v914
      %v916 = vpop.f32.mrb[0].mxu0
      %917 = vdwg.mxu0
      %918 = vmatprep.subr.bf16.mxu0 0
      %919 = vmatpush1.bf16.msra.mxu0 %v757
      %920 = vmatprep.subr.bf16.mxu0 0
      %921 = vmatpush1.bf16.msra.mxu0 %v758
      %922 = vmatprep.subr.bf16.mxu0 0
      %923 = vmatpush1.bf16.msra.mxu0 %v759
      %924 = vmatprep.subr.bf16.mxu0 0
      %925 = vmatpush1.bf16.msra.mxu0 %v760
      %926 = vmatprep.subr.bf16.mxu0 0
      %927 = vmatpush1.bf16.msra.mxu0 %v761
      %928 = vmatprep.subr.bf16.mxu0 0
      %929 = vmatpush1.bf16.msra.mxu0 %v762
      %930 = vmatprep.subr.bf16.mxu0 0
      %931 = vmatpush1.bf16.msra.mxu0 %v763
      %932 = vmatprep.subr.bf16.mxu0 0
      %933 = vmatpush1.bf16.msra.mxu0 %v764
      %934 = vmatprep.subr.bf16.mxu0 0
      %935 = vmatpush1.bf16.msra.mxu0 %v765
      %936 = vmatprep.subr.bf16.mxu0 0
      %937 = vmatpush1.bf16.msra.mxu0 %v766
      %938 = vmatprep.subr.bf16.mxu0 0
      %939 = vmatpush1.bf16.msra.mxu0 %v767
      %940 = vmatprep.subr.bf16.mxu0 0
      %941 = vmatpush1.bf16.msra.mxu0 %v768
      %942 = vmatprep.subr.bf16.mxu0 0
      %943 = vmatpush1.bf16.msra.mxu0 %v769
      %944 = vmatprep.subr.bf16.mxu0 0
      %945 = vmatpush1.bf16.msra.mxu0 %v770
      %946 = vmatprep.subr.bf16.mxu0 0
      %947 = vmatpush1.bf16.msra.mxu0 %v771
      %948 = vmatprep.subr.bf16.mxu0 0
      %949 = vmatpush1.bf16.msra.mxu0 %v772
      %950 = vmatprep.mubr.bf16.mxu0 %v456
      %951 = vmatmul.mubr.bf16.gmra.mrb[0].mxu0 %v455
      %v952 = vpop.f32.mrb[0].mxu0
      %v953 = vadd.f32 %v904, %v952
      %v954 = vpop.f32.mrb[0].mxu0
      %v955 = vpop.f32.mrb[0].mxu0
      %v956 = vadd.f32 %v907, %v955
      %v957 = vpop.f32.mrb[0].mxu0
      %958 = vmatprep.mubr.bf16.mxu0 %v464
      %959 = vmatmul.mubr.bf16.gmra.mrb[0].mxu0 %v463
      %v960 = vpop.f32.mrb[0].mxu0
      %v961 = vadd.f32 %v912, %v960
      %v962 = vpop.f32.mrb[0].mxu0
      %v963 = vpop.f32.mrb[0].mxu0
      %v964 = vadd.f32 %v915, %v963
      %v965 = vpop.f32.mrb[0].mxu0
      %966 = vdwg.mxu0
      %967 = vmatprep.subr.bf16.mxu0 0
      %968 = vmatpush1.bf16.msra.mxu0 %v773
      %969 = vmatprep.subr.bf16.mxu0 0
      %970 = vmatpush1.bf16.msra.mxu0 %v774
      %971 = vmatprep.subr.bf16.mxu0 0
      %972 = vmatpush1.bf16.msra.mxu0 %v775
      %973 = vmatprep.subr.bf16.mxu0 0
      %974 = vmatpush1.bf16.msra.mxu0 %v776
      %975 = vmatprep.subr.bf16.mxu0 0
      %976 = vmatpush1.bf16.msra.mxu0 %v777
      %977 = vmatprep.subr.bf16.mxu0 0
      %978 = vmatpush1.bf16.msra.mxu0 %v778
      %979 = vmatprep.subr.bf16.mxu0 0
      %980 = vmatpush1.bf16.msra.mxu0 %v779
      %981 = vmatprep.subr.bf16.mxu0 0
      %982 = vmatpush1.bf16.msra.mxu0 %v780
      %983 = vmatprep.subr.bf16.mxu0 0
      %984 = vmatpush1.bf16.msra.mxu0 %v781
      %985 = vmatprep.subr.bf16.mxu0 0
      %986 = vmatpush1.bf16.msra.mxu0 %v782
      %987 = vmatprep.subr.bf16.mxu0 0
      %988 = vmatpush1.bf16.msra.mxu0 %v783
      %989 = vmatprep.subr.bf16.mxu0 0
      %990 = vmatpush1.bf16.msra.mxu0 %v784
      %991 = vmatprep.subr.bf16.mxu0 0
      %992 = vmatpush1.bf16.msra.mxu0 %v785
      %993 = vmatprep.subr.bf16.mxu0 0
      %994 = vmatpush1.bf16.msra.mxu0 %v786
      %995 = vmatprep.subr.bf16.mxu0 0
      %996 = vmatpush1.bf16.msra.mxu0 %v787
      %997 = vmatprep.subr.bf16.mxu0 0
      %998 = vmatpush1.bf16.msra.mxu0 %v788
      %999 = vmatprep.mubr.bf16.mxu0 %v458
      %1000 = vmatmul.mubr.bf16.gmra.mrb[0].mxu0 %v457
      %v1001 = vpop.f32.mrb[0].mxu0
      %v1002 = vadd.f32 %v953, %v1001
      %v1003 = vpop.f32.mrb[0].mxu0
      %v1004 = vpop.f32.mrb[0].mxu0
      %v1005 = vadd.f32 %v956, %v1004
      %v1006 = vpop.f32.mrb[0].mxu0
      %1007 = vmatprep.mubr.bf16.mxu0 %v466
      %1008 = vmatmul.mubr.bf16.gmra.mrb[0].mxu0 %v465
      %v1009 = vpop.f32.mrb[0].mxu0
      %v1010 = vadd.f32 %v961, %v1009
      %v1011 = vpop.f32.mrb[0].mxu0
      %v1012 = vpop.f32.mrb[0].mxu0
      %v1013 = vadd.f32 %v964, %v1012
      %v1014 = vpop.f32.mrb[0].mxu0
      %1015 = vdwg.mxu0
      %1016 = vmatprep.subr.bf16.mxu0 0
      %1017 = vmatpush1.bf16.msra.mxu0 %v789
      %1018 = vmatprep.subr.bf16.mxu0 0
      %1019 = vmatpush1.bf16.msra.mxu0 %v790
      %1020 = vmatprep.subr.bf16.mxu0 0
      %1021 = vmatpush1.bf16.msra.mxu0 %v791
      %1022 = vmatprep.subr.bf16.mxu0 0
      %1023 = vmatpush1.bf16.msra.mxu0 %v792
      %1024 = vmatprep.subr.bf16.mxu0 0
      %1025 = vmatpush1.bf16.msra.mxu0 %v793
      %1026 = vmatprep.subr.bf16.mxu0 0
      %1027 = vmatpush1.bf16.msra.mxu0 %v794
      %1028 = vmatprep.subr.bf16.mxu0 0
      %1029 = vmatpush1.bf16.msra.mxu0 %v795
      %1030 = vmatprep.subr.bf16.mxu0 0
      %1031 = vmatpush1.bf16.msra.mxu0 %v796
      %1032 = vmatprep.subr.bf16.mxu0 0
      %1033 = vmatpush1.bf16.msra.mxu0 %v797
      %1034 = vmatprep.subr.bf16.mxu0 0
      %1035 = vmatpush1.bf16.msra.mxu0 %v798
      %1036 = vmatprep.subr.bf16.mxu0 0
      %1037 = vmatpush1.bf16.msra.mxu0 %v799
      %1038 = vmatprep.subr.bf16.mxu0 0
      %1039 = vmatpush1.bf16.msra.mxu0 %v800
      %1040 = vmatprep.subr.bf16.mxu0 0
      %1041 = vmatpush1.bf16.msra.mxu0 %v801
      %1042 = vmatprep.subr.bf16.mxu0 0
      %1043 = vmatpush1.bf16.msra.mxu0 %v802
      %1044 = vmatprep.subr.bf16.mxu0 0
      %1045 = vmatpush1.bf16.msra.mxu0 %v803
      %1046 = vmatprep.subr.bf16.mxu0 0
      %1047 = vmatpush1.bf16.msra.mxu0 %v804
      %1048 = vmatprep.mubr.bf16.mxu0 %v460
      %1049 = vmatmul.mubr.bf16.gmra.mrb[0].mxu0 %v459
      %v1050 = vpop.f32.mrb[0].mxu0
      %v1051 = vadd.f32 %v1002, %v1050
      %v1052 = vpop.f32.mrb[0].mxu0
      %v1053 = vpop.f32.mrb[0].mxu0
      %v1054 = vadd.f32 %v1005, %v1053
      %v1055 = vpop.f32.mrb[0].mxu0
      %1056 = vmatprep.mubr.bf16.mxu0 %v468
      %1057 = vmatmul.mubr.bf16.gmra.mrb[0].mxu0 %v467
      %v1058 = vpop.f32.mrb[0].mxu0
      %v1059 = vadd.f32 %v1010, %v1058
      %v1060 = vpop.f32.mrb[0].mxu0
      %v1061 = vpop.f32.mrb[0].mxu0
      %v1062 = vadd.f32 %v1013, %v1061
      %v1063 = vpop.f32.mrb[0].mxu0
      %1064 = vdwg.mxu0
      %v1065 = vld [vmem:[%s2] sm:$0x1]
      %v1067 = vlaneseq
      %v1068 = vshrl.u32 %v1067, 7
      %v1069 = vsub.s32 0, %v1068
      %v1070 = vrot.slane %v1065, %v1069
      %v1072 = vmul.f32 %v1051, %v1070
      %v1073 = vmul.f32 %v1054, %v1070
      %v1074 = vmul.f32 %v1059, %v1070
      %v1075 = vmul.f32 %v1062, %v1070
      %v1076 = vld [vmem:[%s3] sm:$0x1]
      %v1078 = vlaneseq
      %v1079 = vshrl.u32 %v1078, 7
      %v1080 = vsub.s32 0, %v1079
      %v1081 = vrot.slane %v1076, %v1080
      %v1083 = vadd.f32 %v1072, %v1081
      %v1084 = vadd.f32 %v1073, %v1081
      %v1085 = vadd.f32 %v1074, %v1081
      %v1086 = vadd.f32 %v1075, %v1081
      %v1087 = vmax.f32 %v1083, 0.0
      %v1088 = vmax.f32 %v1084, 0.0
      %v1089 = vmax.f32 %v1085, 0.0
      %v1090 = vmax.f32 %v1086, 0.0
      %v1091 = vpack.c.bf16 %v1088, %v1087
      %v1092 = vpack.c.bf16 %v1090, %v1089
      %v1095 = vunpack.c.l.b16 %v1091
      %v1096 = vunpack.c.h.b16 %v1091
      %v1097 = vunpack.c.l.b16 %v1092
      %v1098 = vunpack.c.h.b16 %v1092
      %v1099 = vpack.c.b16 %v1095, %v1095
      %v1100 = vpack.c.b16 %v1096, %v1096
      %v1101 = vpack.c.b16 %v1097, %v1097
      %v1102 = vpack.c.b16 %v1098, %v1098
      %1107 = vst [vmem:[%s258] sm:$0xf] %v1099
      %1108 = vst [vmem:[%s258 + $0x4] sm:$0xf] %v1100
      %1109 = vst [vmem:[%s258 + $0x8] sm:$0xf] %v1101
      %1110 = vst [vmem:[%s258 + $0xc] sm:$0xf] %v1102
      %s1111 = smul.u32 4, %s20
      %p1112 = scmp.lt.s32.totalorder %s19, 3
      %s1113 = scalar_select %p1112, %s19, 3
      %p1114 = scmp.lt.s32.totalorder %s1111, 3
      %s1115 = scalar_select %p1114, %s1111, 3
      %s1116 = smul.addr %s1113, 4
      %s1117 = sadd.s32 %s1115, %s1116
      %s1118 = smul.addr %s1117, 4
      %s1119 = scalar_lea.vmem %s4, %s1118
      // Predicated region
      $region37: #{decoder_forward.13} parent=35 // pred_check
        %p1120 = pneg %p143
      $region38: #{decoder_forward.13} parent=35 // pred_check_branch
        %1122 = sbr.rel (%p1120) target = $region40
      $region39: #{decoder_forward.13} parent=35 // pred_region
        %s1123 = smul.u32 4, %s20
      $region40: #{decoder_forward.13} parent=35 // pred_fallthru
        _
    $region36: #{decoder_forward.13} parent=5 // pred_fallthru
      _
    %p1124 = scmp.le.s32.totalorder 2, %s10
    // Predicated region
    $region41: #{decoder_forward.13} parent=5 // pred_check
      %p1125 = pneg %p1124
    $region42: #{decoder_forward.13} parent=5 // pred_check_branch
      %1127 = sbr.rel (%p1125) target = $region44
    $region43: #{decoder_forward.13} parent=5 // pred_region
      %s1128 = ssub.s32 %s10, 2
      // Predicated region
      $region45: #{decoder_forward.13} parent=43 // pred_check
        %p1129 = pneg %p149
      $region46: #{decoder_forward.13} parent=43 // pred_check_branch
        %1131 = sbr.rel (%p1129) target = $region48
      $region47: #{decoder_forward.13} parent=43 // pred_region
        %s1132 = smul.u32 4, %s22
        %p1133 = scmp.lt.s32.totalorder %s21, 3
        %s1134 = scalar_select %p1133, %s21, 3
        %p1135 = scmp.lt.s32.totalorder %s1132, 3
        %s1136 = scalar_select %p1135, %s1132, 3
        %s1137 = smul.addr %s1134, 4
        %s1138 = sadd.s32 %s1136, %s1137
        %s1139 = smul.addr %s1138, 4
        %s1140 = scalar_lea.vmem %s4, %s1139
      $region48: #{decoder_forward.13} parent=43 // pred_fallthru
        _
    $region44: #{decoder_forward.13} parent=5 // pred_fallthru
      _
  $region6: #{decoder_forward.13} parent=0 // loop_footer
    %s14 = sadd.s32 1, %s10
  $region7: #{decoder_forward.13} parent=0 // loop_footer_branch
    %9 = sbr.rel target = $region3
  $region8: #{decoder_forward.13} parent=0 // loop_exit
    _

// kernel: decoder_forward.12
$region0: #{decoder_forward.12}
  #allocation0 [shape = 'u32[]', space=smem, size = 0x4, offset = 0x4, fixed_abs, tag = 'smem constant byte address 0x4 - core index']
  #allocation1 [shape = 'u32[144,128]{1,0:T(1,128)}', space=vmem, size = 0x12000, scoped, tag = 'internal scratch']
  %s0 = inlined_call_operand.vmem [shape: bf16[1,32,2304], index: 0, kind: input, shape index: {}]
  %s1 = inlined_call_operand.vmem [shape: bf16[1,2304,256], index: 1, kind: input, shape index: {}]
  %s2 = inlined_call_operand.vmem [shape: f32[1,256], index: 2, kind: input, shape index: {}]
  %s3 = inlined_call_operand.vmem [shape: f32[1,256], index: 3, kind: input, shape index: {}]
  %s4 = inlined_call_operand.vmem [shape: bf16[1,32,256], index: 4, kind: output, shape index: {}]
  %s5 = sld [smem:[#allocation0]]
  $region26: #{decoder_forward.12} parent=0
    _
  %s7 = ssub.s32 1, %s5
  %s8 = scalar_select 0, %s7, %s5
  // Predicated region
  $region2: #{decoder_forward.12} parent=0 // pred_check
    _
  $region3: #{decoder_forward.12} parent=0 // pred_check_branch
    %10 = sbr.rel (0) target = $region5
  $region4: #{decoder_forward.12} parent=0 // pred_region
    _
  $region5: #{decoder_forward.12} parent=0 // pred_fallthru
    _
  // Predicated region
  $region6: #{decoder_forward.12} parent=0 // pred_check
    _
  $region7: #{decoder_forward.12} parent=0 // pred_check_branch
    %12 = sbr.rel (0) target = $region9
  $region8: #{decoder_forward.12} parent=0 // pred_region
    _
  $region9: #{decoder_forward.12} parent=0 // pred_fallthru
    _
  // Predicated region
  $region10: #{decoder_forward.12} parent=0 // pred_check
    _
  $region11: #{decoder_forward.12} parent=0 // pred_check_branch
    %14 = sbr.rel (0) target = $region13
  $region12: #{decoder_forward.12} parent=0 // pred_region
    _
  $region13: #{decoder_forward.12} parent=0 // pred_fallthru
    _
  // Predicated region
  $region14: #{decoder_forward.12} parent=0 // pred_check
    _
  $region15: #{decoder_forward.12} parent=0 // pred_check_branch
    %16 = sbr.rel (0) target = $region17
  $region16: #{decoder_forward.12} parent=0 // pred_region
    _
  $region17: #{decoder_forward.12} parent=0 // pred_fallthru
    _
  %v17 = vld [vmem:[%s0] sm:$0xff]
  %v18 = vld [vmem:[%s0 + $0x8] sm:$0xff]
  %v19 = vld [vmem:[%s0 + $0x10] sm:$0xff]
  %v20 = vld [vmem:[%s0 + $0x18] sm:$0xff]
  %v21 = vld [vmem:[%s0 + $0x20] sm:$0xff]
  %v22 = vld [vmem:[%s0 + $0x28] sm:$0xff]
  %v23 = vld [vmem:[%s0 + $0x30] sm:$0xff]
  %v24 = vld [vmem:[%s0 + $0x38] sm:$0xff]
  %v25 = vld [vmem:[%s0 + $0x40] sm:$0xff]
  %v26 = vld [vmem:[%s0 + $0x48] sm:$0xff]
  %v27 = vld [vmem:[%s0 + $0x50] sm:$0xff]
  %v28 = vld [vmem:[%s0 + $0x58] sm:$0xff]
  %v29 = vld [vmem:[%s0 + $0x60] sm:$0xff]
  %v30 = vld [vmem:[%s0 + $0x68] sm:$0xff]
  %v31 = vld [vmem:[%s0 + $0x70] sm:$0xff]
  %v32 = vld [vmem:[%s0 + $0x78] sm:$0xff]
  %v33 = vld [vmem:[%s0 + $0x80] sm:$0xff]
  %v34 = vld [vmem:[%s0 + $0x88] sm:$0xff]
  %v35 = vld [vmem:[%s0 + $0x90] sm:$0xff]
  %v36 = vld [vmem:[%s0 + $0x98] sm:$0xff]
  %v37 = vld [vmem:[%s0 + $0xa0] sm:$0xff]
  %v38 = vld [vmem:[%s0 + $0xa8] sm:$0xff]
  %v39 = vld [vmem:[%s0 + $0xb0] sm:$0xff]
  %v40 = vld [vmem:[%s0 + $0xb8] sm:$0xff]
  %v41 = vld [vmem:[%s0 + $0xc0] sm:$0xff]
  %v42 = vld [vmem:[%s0 + $0xc8] sm:$0xff]
  %v43 = vld [vmem:[%s0 + $0xd0] sm:$0xff]
  %v44 = vld [vmem:[%s0 + $0xd8] sm:$0xff]
  %v45 = vld [vmem:[%s0 + $0xe0] sm:$0xff]
  %v46 = vld [vmem:[%s0 + $0xe8] sm:$0xff]
  %v47 = vld [vmem:[%s0 + $0xf0] sm:$0xff]
  %v48 = vld [vmem:[%s0 + $0xf8] sm:$0xff]
  %v49 = vld [vmem:[%s0 + $0x100] sm:$0xff]
  %v50 = vld [vmem:[%s0 + $0x108] sm:$0xff]
  %v51 = vld [vmem:[%s0 + $0x110] sm:$0xff]
  %v52 = vld [vmem:[%s0 + $0x118] sm:$0xff]
  %v53 = vld [vmem:[%s1] sm:$0xff]
  %v54 = vld [vmem:[%s1 + $0x8] sm:$0xff]
  %v55 = vld [vmem:[%s1 + $0x10] sm:$0xff]
  %v56 = vld [vmem:[%s1 + $0x18] sm:$0xff]
  %v57 = vld [vmem:[%s1 + $0x20] sm:$0xff]
  %v58 = vld [vmem:[%s1 + $0x28] sm:$0xff]
  %v59 = vld [vmem:[%s1 + $0x30] sm:$0xff]
  %v60 = vld [vmem:[%s1 + $0x38] sm:$0xff]
  %v61 = vld [vmem:[%s1 + $0x40] sm:$0xff]
  %v62 = vld [vmem:[%s1 + $0x48] sm:$0xff]
  %v63 = vld [vmem:[%s1 + $0x50] sm:$0xff]
  %v64 = vld [vmem:[%s1 + $0x58] sm:$0xff]
  %v65 = vld [vmem:[%s1 + $0x60] sm:$0xff]
  %v66 = vld [vmem:[%s1 + $0x68] sm:$0xff]
  %v67 = vld [vmem:[%s1 + $0x70] sm:$0xff]
  %v68 = vld [vmem:[%s1 + $0x78] sm:$0xff]
  %v69 = vld [vmem:[%s1 + $0x80] sm:$0xff]
  %v70 = vld [vmem:[%s1 + $0x88] sm:$0xff]
  %v71 = vld [vmem:[%s1 + $0x90] sm:$0xff]
  %v72 = vld [vmem:[%s1 + $0x98] sm:$0xff]
  %v73 = vld [vmem:[%s1 + $0xa0] sm:$0xff]
  %v74 = vld [vmem:[%s1 + $0xa8] sm:$0xff]
  %v75 = vld [vmem:[%s1 + $0xb0] sm:$0xff]
  %v76 = vld [vmem:[%s1 + $0xb8] sm:$0xff]
  %v77 = vld [vmem:[%s1 + $0xc0] sm:$0xff]
  %v78 = vld [vmem:[%s1 + $0xc8] sm:$0xff]
  %v79 = vld [vmem:[%s1 + $0xd0] sm:$0xff]
  %v80 = vld [vmem:[%s1 + $0xd8] sm:$0xff]
  %v81 = vld [vmem:[%s1 + $0xe0] sm:$0xff]
  %v82 = vld [vmem:[%s1 + $0xe8] sm:$0xff]
  %v83 = vld [vmem:[%s1 + $0xf0] sm:$0xff]
  %v84 = vld [vmem:[%s1 + $0xf8] sm:$0xff]
  %v85 = vld [vmem:[%s1 + $0x100] sm:$0xff]
  %v86 = vld [vmem:[%s1 + $0x108] sm:$0xff]
  %v87 = vld [vmem:[%s1 + $0x110] sm:$0xff]
  %v88 = vld [vmem:[%s1 + $0x118] sm:$0xff]
  %v89 = vld [vmem:[%s1 + $0x120] sm:$0xff]
  %v90 = vld [vmem:[%s1 + $0x128] sm:$0xff]
  %v91 = vld [vmem:[%s1 + $0x130] sm:$0xff]
  %v92 = vld [vmem:[%s1 + $0x138] sm:$0xff]
  %v93 = vld [vmem:[%s1 + $0x140] sm:$0xff]
  %v94 = vld [vmem:[%s1 + $0x148] sm:$0xff]
  %v95 = vld [vmem:[%s1 + $0x150] sm:$0xff]
  %v96 = vld [vmem:[%s1 + $0x158] sm:$0xff]
  %v97 = vld [vmem:[%s1 + $0x160] sm:$0xff]
  %v98 = vld [vmem:[%s1 + $0x168] sm:$0xff]
  %v99 = vld [vmem:[%s1 + $0x170] sm:$0xff]
  %v100 = vld [vmem:[%s1 + $0x178] sm:$0xff]
  %v101 = vld [vmem:[%s1 + $0x180] sm:$0xff]
  %v102 = vld [vmem:[%s1 + $0x188] sm:$0xff]
  %v103 = vld [vmem:[%s1 + $0x190] sm:$0xff]
  %v104 = vld [vmem:[%s1 + $0x198] sm:$0xff]
  %v105 = vld [vmem:[%s1 + $0x1a0] sm:$0xff]
  %v106 = vld [vmem:[%s1 + $0x1a8] sm:$0xff]
  %v107 = vld [vmem:[%s1 + $0x1b0] sm:$0xff]
  %v108 = vld [vmem:[%s1 + $0x1b8] sm:$0xff]
  %v109 = vld [vmem:[%s1 + $0x1c0] sm:$0xff]
  %v110 = vld [vmem:[%s1 + $0x1c8] sm:$0xff]
  %v111 = vld [vmem:[%s1 + $0x1d0] sm:$0xff]
  %v112 = vld [vmem:[%s1 + $0x1d8] sm:$0xff]
  %v113 = vld [vmem:[%s1 + $0x1e0] sm:$0xff]
  %v114 = vld [vmem:[%s1 + $0x1e8] sm:$0xff]
  %v115 = vld [vmem:[%s1 + $0x1f0] sm:$0xff]
  %v116 = vld [vmem:[%s1 + $0x1f8] sm:$0xff]
  %v117 = vld [vmem:[%s1 + $0x200] sm:$0xff]
  %v118 = vld [vmem:[%s1 + $0x208] sm:$0xff]
  %v119 = vld [vmem:[%s1 + $0x210] sm:$0xff]
  %v120 = vld [vmem:[%s1 + $0x218] sm:$0xff]
  %v121 = vld [vmem:[%s1 + $0x220] sm:$0xff]
  %v122 = vld [vmem:[%s1 + $0x228] sm:$0xff]
  %v123 = vld [vmem:[%s1 + $0x230] sm:$0xff]
  %v124 = vld [vmem:[%s1 + $0x238] sm:$0xff]
  %v125 = vld [vmem:[%s1 + $0x240] sm:$0xff]
  %v126 = vld [vmem:[%s1 + $0x248] sm:$0xff]
  %v127 = vld [vmem:[%s1 + $0x250] sm:$0xff]
  %v128 = vld [vmem:[%s1 + $0x258] sm:$0xff]
  %v129 = vld [vmem:[%s1 + $0x260] sm:$0xff]
  %v130 = vld [vmem:[%s1 + $0x268] sm:$0xff]
  %v131 = vld [vmem:[%s1 + $0x270] sm:$0xff]
  %v132 = vld [vmem:[%s1 + $0x278] sm:$0xff]
  %v133 = vld [vmem:[%s1 + $0x280] sm:$0xff]
  %v134 = vld [vmem:[%s1 + $0x288] sm:$0xff]
  %v135 = vld [vmem:[%s1 + $0x290] sm:$0xff]
  %v136 = vld [vmem:[%s1 + $0x298] sm:$0xff]
  %v137 = vld [vmem:[%s1 + $0x2a0] sm:$0xff]
  %v138 = vld [vmem:[%s1 + $0x2a8] sm:$0xff]
  %v139 = vld [vmem:[%s1 + $0x2b0] sm:$0xff]
  %v140 = vld [vmem:[%s1 + $0x2b8] sm:$0xff]
  %v141 = vld [vmem:[%s1 + $0x2c0] sm:$0xff]
  %v142 = vld [vmem:[%s1 + $0x2c8] sm:$0xff]
  %v143 = vld [vmem:[%s1 + $0x2d0] sm:$0xff]
  %v144 = vld [vmem:[%s1 + $0x2d8] sm:$0xff]
  %v145 = vld [vmem:[%s1 + $0x2e0] sm:$0xff]
  %v146 = vld [vmem:[%s1 + $0x2e8] sm:$0xff]
  %v147 = vld [vmem:[%s1 + $0x2f0] sm:$0xff]
  %v148 = vld [vmem:[%s1 + $0x2f8] sm:$0xff]
  %v149 = vld [vmem:[%s1 + $0x300] sm:$0xff]
  %v150 = vld [vmem:[%s1 + $0x308] sm:$0xff]
  %v151 = vld [vmem:[%s1 + $0x310] sm:$0xff]
  %v152 = vld [vmem:[%s1 + $0x318] sm:$0xff]
  %v153 = vld [vmem:[%s1 + $0x320] sm:$0xff]
  %v154 = vld [vmem:[%s1 + $0x328] sm:$0xff]
  %v155 = vld [vmem:[%s1 + $0x330] sm:$0xff]
  %v156 = vld [vmem:[%s1 + $0x338] sm:$0xff]
  %v157 = vld [vmem:[%s1 + $0x340] sm:$0xff]
  %v158 = vld [vmem:[%s1 + $0x348] sm:$0xff]
  %v159 = vld [vmem:[%s1 + $0x350] sm:$0xff]
  %v160 = vld [vmem:[%s1 + $0x358] sm:$0xff]
  %v161 = vld [vmem:[%s1 + $0x360] sm:$0xff]
  %v162 = vld [vmem:[%s1 + $0x368] sm:$0xff]
  %v163 = vld [vmem:[%s1 + $0x370] sm:$0xff]
  %v164 = vld [vmem:[%s1 + $0x378] sm:$0xff]
  %v165 = vld [vmem:[%s1 + $0x380] sm:$0xff]
  %v166 = vld [vmem:[%s1 + $0x388] sm:$0xff]
  %v167 = vld [vmem:[%s1 + $0x390] sm:$0xff]
  %v168 = vld [vmem:[%s1 + $0x398] sm:$0xff]
  %v169 = vld [vmem:[%s1 + $0x3a0] sm:$0xff]
  %v170 = vld [vmem:[%s1 + $0x3a8] sm:$0xff]
  %v171 = vld [vmem:[%s1 + $0x3b0] sm:$0xff]
  %v172 = vld [vmem:[%s1 + $0x3b8] sm:$0xff]
  %v173 = vld [vmem:[%s1 + $0x3c0] sm:$0xff]
  %v174 = vld [vmem:[%s1 + $0x3c8] sm:$0xff]
  %v175 = vld [vmem:[%s1 + $0x3d0] sm:$0xff]
  %v176 = vld [vmem:[%s1 + $0x3d8] sm:$0xff]
  %v177 = vld [vmem:[%s1 + $0x3e0] sm:$0xff]
  %v178 = vld [vmem:[%s1 + $0x3e8] sm:$0xff]
  %v179 = vld [vmem:[%s1 + $0x3f0] sm:$0xff]
  %v180 = vld [vmem:[%s1 + $0x3f8] sm:$0xff]
  %v181 = vld [vmem:[%s1 + $0x400] sm:$0xff]
  %v182 = vld [vmem:[%s1 + $0x408] sm:$0xff]
  %v183 = vld [vmem:[%s1 + $0x410] sm:$0xff]
  %v184 = vld [vmem:[%s1 + $0x418] sm:$0xff]
  %v185 = vld [vmem:[%s1 + $0x420] sm:$0xff]
  %v186 = vld [vmem:[%s1 + $0x428] sm:$0xff]
  %v187 = vld [vmem:[%s1 + $0x430] sm:$0xff]
  %v188 = vld [vmem:[%s1 + $0x438] sm:$0xff]
  %v189 = vld [vmem:[%s1 + $0x440] sm:$0xff]
  %v190 = vld [vmem:[%s1 + $0x448] sm:$0xff]
  %v191 = vld [vmem:[%s1 + $0x450] sm:$0xff]
  %v192 = vld [vmem:[%s1 + $0x458] sm:$0xff]
  %v193 = vld [vmem:[%s1 + $0x460] sm:$0xff]
  %v194 = vld [vmem:[%s1 + $0x468] sm:$0xff]
  %v195 = vld [vmem:[%s1 + $0x470] sm:$0xff]
  %v196 = vld [vmem:[%s1 + $0x478] sm:$0xff]
  %v197 = vld [vmem:[%s1 + $0x480] sm:$0xff]
  %v198 = vld [vmem:[%s1 + $0x488] sm:$0xff]
  %v199 = vld [vmem:[%s1 + $0x490] sm:$0xff]
  %v200 = vld [vmem:[%s1 + $0x498] sm:$0xff]
  %v201 = vld [vmem:[%s1 + $0x4a0] sm:$0xff]
  %v202 = vld [vmem:[%s1 + $0x4a8] sm:$0xff]
  %v203 = vld [vmem:[%s1 + $0x4b0] sm:$0xff]
  %v204 = vld [vmem:[%s1 + $0x4b8] sm:$0xff]
  %v205 = vld [vmem:[%s1 + $0x4c0] sm:$0xff]
  %v206 = vld [vmem:[%s1 + $0x4c8] sm:$0xff]
  %v207 = vld [vmem:[%s1 + $0x4d0] sm:$0xff]
  %v208 = vld [vmem:[%s1 + $0x4d8] sm:$0xff]
  %v209 = vld [vmem:[%s1 + $0x4e0] sm:$0xff]
  %v210 = vld [vmem:[%s1 + $0x4e8] sm:$0xff]
  %v211 = vld [vmem:[%s1 + $0x4f0] sm:$0xff]
  %v212 = vld [vmem:[%s1 + $0x4f8] sm:$0xff]
  %v213 = vld [vmem:[%s1 + $0x500] sm:$0xff]
  %v214 = vld [vmem:[%s1 + $0x508] sm:$0xff]
  %v215 = vld [vmem:[%s1 + $0x510] sm:$0xff]
  %v216 = vld [vmem:[%s1 + $0x518] sm:$0xff]
  %v217 = vld [vmem:[%s1 + $0x520] sm:$0xff]
  %v218 = vld [vmem:[%s1 + $0x528] sm:$0xff]
  %v219 = vld [vmem:[%s1 + $0x530] sm:$0xff]
  %v220 = vld [vmem:[%s1 + $0x538] sm:$0xff]
  %v221 = vld [vmem:[%s1 + $0x540] sm:$0xff]
  %v222 = vld [vmem:[%s1 + $0x548] sm:$0xff]
  %v223 = vld [vmem:[%s1 + $0x550] sm:$0xff]
  %v224 = vld [vmem:[%s1 + $0x558] sm:$0xff]
  %v225 = vld [vmem:[%s1 + $0x560] sm:$0xff]
  %v226 = vld [vmem:[%s1 + $0x568] sm:$0xff]
  %v227 = vld [vmem:[%s1 + $0x570] sm:$0xff]
  %v228 = vld [vmem:[%s1 + $0x578] sm:$0xff]
  %v229 = vld [vmem:[%s1 + $0x580] sm:$0xff]
  %v230 = vld [vmem:[%s1 + $0x588] sm:$0xff]
  %v231 = vld [vmem:[%s1 + $0x590] sm:$0xff]
  %v232 = vld [vmem:[%s1 + $0x598] sm:$0xff]
  %v233 = vld [vmem:[%s1 + $0x5a0] sm:$0xff]
  %v234 = vld [vmem:[%s1 + $0x5a8] sm:$0xff]
  %v235 = vld [vmem:[%s1 + $0x5b0] sm:$0xff]
  %v236 = vld [vmem:[%s1 + $0x5b8] sm:$0xff]
  %v237 = vld [vmem:[%s1 + $0x5c0] sm:$0xff]
  %v238 = vld [vmem:[%s1 + $0x5c8] sm:$0xff]
  %v239 = vld [vmem:[%s1 + $0x5d0] sm:$0xff]
  %v240 = vld [vmem:[%s1 + $0x5d8] sm:$0xff]
  %v241 = vld [vmem:[%s1 + $0x5e0] sm:$0xff]
  %v242 = vld [vmem:[%s1 + $0x5e8] sm:$0xff]
  %v243 = vld [vmem:[%s1 + $0x5f0] sm:$0xff]
  %v244 = vld [vmem:[%s1 + $0x5f8] sm:$0xff]
  %v245 = vld [vmem:[%s1 + $0x600] sm:$0xff]
  %v246 = vld [vmem:[%s1 + $0x608] sm:$0xff]
  %v247 = vld [vmem:[%s1 + $0x610] sm:$0xff]
  %v248 = vld [vmem:[%s1 + $0x618] sm:$0xff]
  %v249 = vld [vmem:[%s1 + $0x620] sm:$0xff]
  %v250 = vld [vmem:[%s1 + $0x628] sm:$0xff]
  %v251 = vld [vmem:[%s1 + $0x630] sm:$0xff]
  %v252 = vld [vmem:[%s1 + $0x638] sm:$0xff]
  %v253 = vld [vmem:[%s1 + $0x640] sm:$0xff]
  %v254 = vld [vmem:[%s1 + $0x648] sm:$0xff]
  %v255 = vld [vmem:[%s1 + $0x650] sm:$0xff]
  %v256 = vld [vmem:[%s1 + $0x658] sm:$0xff]
  %v257 = vld [vmem:[%s1 + $0x660] sm:$0xff]
  %v258 = vld [vmem:[%s1 + $0x668] sm:$0xff]
  %v259 = vld [vmem:[%s1 + $0x670] sm:$0xff]
  %v260 = vld [vmem:[%s1 + $0x678] sm:$0xff]
  %v261 = vld [vmem:[%s1 + $0x680] sm:$0xff]
  %v262 = vld [vmem:[%s1 + $0x688] sm:$0xff]
  %v263 = vld [vmem:[%s1 + $0x690] sm:$0xff]
  %v264 = vld [vmem:[%s1 + $0x698] sm:$0xff]
  %v265 = vld [vmem:[%s1 + $0x6a0] sm:$0xff]
  %v266 = vld [vmem:[%s1 + $0x6a8] sm:$0xff]
  %v267 = vld [vmem:[%s1 + $0x6b0] sm:$0xff]
  %v268 = vld [vmem:[%s1 + $0x6b8] sm:$0xff]
  %v269 = vld [vmem:[%s1 + $0x6c0] sm:$0xff]
  %v270 = vld [vmem:[%s1 + $0x6c8] sm:$0xff]
  %v271 = vld [vmem:[%s1 + $0x6d0] sm:$0xff]
  %v272 = vld [vmem:[%s1 + $0x6d8] sm:$0xff]
  %v273 = vld [vmem:[%s1 + $0x6e0] sm:$0xff]
  %v274 = vld [vmem:[%s1 + $0x6e8] sm:$0xff]
  %v275 = vld [vmem:[%s1 + $0x6f0] sm:$0xff]
  %v276 = vld [vmem:[%s1 + $0x6f8] sm:$0xff]
  %v277 = vld [vmem:[%s1 + $0x700] sm:$0xff]
  %v278 = vld [vmem:[%s1 + $0x708] sm:$0xff]
  %v279 = vld [vmem:[%s1 + $0x710] sm:$0xff]
  %v280 = vld [vmem:[%s1 + $0x718] sm:$0xff]
  %v281 = vld [vmem:[%s1 + $0x720] sm:$0xff]
  %v282 = vld [vmem:[%s1 + $0x728] sm:$0xff]
  %v283 = vld [vmem:[%s1 + $0x730] sm:$0xff]
  %v284 = vld [vmem:[%s1 + $0x738] sm:$0xff]
  %v285 = vld [vmem:[%s1 + $0x740] sm:$0xff]
  %v286 = vld [vmem:[%s1 + $0x748] sm:$0xff]
  %v287 = vld [vmem:[%s1 + $0x750] sm:$0xff]
  %v288 = vld [vmem:[%s1 + $0x758] sm:$0xff]
  %v289 = vld [vmem:[%s1 + $0x760] sm:$0xff]
  %v290 = vld [vmem:[%s1 + $0x768] sm:$0xff]
  %v291 = vld [vmem:[%s1 + $0x770] sm:$0xff]
  %v292 = vld [vmem:[%s1 + $0x778] sm:$0xff]
  %v293 = vld [vmem:[%s1 + $0x780] sm:$0xff]
  %v294 = vld [vmem:[%s1 + $0x788] sm:$0xff]
  %v295 = vld [vmem:[%s1 + $0x790] sm:$0xff]
  %v296 = vld [vmem:[%s1 + $0x798] sm:$0xff]
  %v297 = vld [vmem:[%s1 + $0x7a0] sm:$0xff]
  %v298 = vld [vmem:[%s1 + $0x7a8] sm:$0xff]
  %v299 = vld [vmem:[%s1 + $0x7b0] sm:$0xff]
  %v300 = vld [vmem:[%s1 + $0x7b8] sm:$0xff]
  %v301 = vld [vmem:[%s1 + $0x7c0] sm:$0xff]
  %v302 = vld [vmem:[%s1 + $0x7c8] sm:$0xff]
  %v303 = vld [vmem:[%s1 + $0x7d0] sm:$0xff]
  %v304 = vld [vmem:[%s1 + $0x7d8] sm:$0xff]
  %v305 = vld [vmem:[%s1 + $0x7e0] sm:$0xff]
  %v306 = vld [vmem:[%s1 + $0x7e8] sm:$0xff]
  %v307 = vld [vmem:[%s1 + $0x7f0] sm:$0xff]
  %v308 = vld [vmem:[%s1 + $0x7f8] sm:$0xff]
  %v309 = vld [vmem:[%s1 + $0x800] sm:$0xff]
  %v310 = vld [vmem:[%s1 + $0x808] sm:$0xff]
  %v311 = vld [vmem:[%s1 + $0x810] sm:$0xff]
  %v312 = vld [vmem:[%s1 + $0x818] sm:$0xff]
  %v313 = vld [vmem:[%s1 + $0x820] sm:$0xff]
  %v314 = vld [vmem:[%s1 + $0x828] sm:$0xff]
  %v315 = vld [vmem:[%s1 + $0x830] sm:$0xff]
  %v316 = vld [vmem:[%s1 + $0x838] sm:$0xff]
  %v317 = vld [vmem:[%s1 + $0x840] sm:$0xff]
  %v318 = vld [vmem:[%s1 + $0x848] sm:$0xff]
  %v319 = vld [vmem:[%s1 + $0x850] sm:$0xff]
  %v320 = vld [vmem:[%s1 + $0x858] sm:$0xff]
  %v321 = vld [vmem:[%s1 + $0x860] sm:$0xff]
  %v322 = vld [vmem:[%s1 + $0x868] sm:$0xff]
  %v323 = vld [vmem:[%s1 + $0x870] sm:$0xff]
  %v324 = vld [vmem:[%s1 + $0x878] sm:$0xff]
  %v325 = vld [vmem:[%s1 + $0x880] sm:$0xff]
  %v326 = vld [vmem:[%s1 + $0x888] sm:$0xff]
  %v327 = vld [vmem:[%s1 + $0x890] sm:$0xff]
  %v328 = vld [vmem:[%s1 + $0x898] sm:$0xff]
  %v329 = vld [vmem:[%s1 + $0x8a0] sm:$0xff]
  %v330 = vld [vmem:[%s1 + $0x8a8] sm:$0xff]
  %v331 = vld [vmem:[%s1 + $0x8b0] sm:$0xff]
  %v332 = vld [vmem:[%s1 + $0x8b8] sm:$0xff]
  %v333 = vld [vmem:[%s1 + $0x8c0] sm:$0xff]
  %v334 = vld [vmem:[%s1 + $0x8c8] sm:$0xff]
  %v335 = vld [vmem:[%s1 + $0x8d0] sm:$0xff]
  %v336 = vld [vmem:[%s1 + $0x8d8] sm:$0xff]
  %v337 = vld [vmem:[%s1 + $0x8e0] sm:$0xff]
  %v338 = vld [vmem:[%s1 + $0x8e8] sm:$0xff]
  %v339 = vld [vmem:[%s1 + $0x8f0] sm:$0xff]
  %v340 = vld [vmem:[%s1 + $0x8f8] sm:$0xff]
  %v377 = vunpack.c.l.b16 %v17
  %v378 = vunpack.c.h.b16 %v17
  %v379 = vunpack.c.l.b16 %v18
  %v380 = vunpack.c.h.b16 %v18
  %v381 = vunpack.c.l.b16 %v19
  %v382 = vunpack.c.h.b16 %v19
  %v383 = vunpack.c.l.b16 %v20
  %v384 = vunpack.c.h.b16 %v20
  %v385 = vunpack.c.l.b16 %v21
  %v386 = vunpack.c.h.b16 %v21
  %v387 = vunpack.c.l.b16 %v22
  %v388 = vunpack.c.h.b16 %v22
  %v389 = vunpack.c.l.b16 %v23
  %v390 = vunpack.c.h.b16 %v23
  %v391 = vunpack.c.l.b16 %v24
  %v392 = vunpack.c.h.b16 %v24
  %v393 = vunpack.c.l.b16 %v25
  %v394 = vunpack.c.h.b16 %v25
  %v395 = vunpack.c.l.b16 %v26
  %v396 = vunpack.c.h.b16 %v26
  %v397 = vunpack.c.l.b16 %v27
  %v398 = vunpack.c.h.b16 %v27
  %v399 = vunpack.c.l.b16 %v28
  %v400 = vunpack.c.h.b16 %v28
  %v401 = vunpack.c.l.b16 %v29
  %v402 = vunpack.c.h.b16 %v29
  %v403 = vunpack.c.l.b16 %v30
  %v404 = vunpack.c.h.b16 %v30
  %v405 = vunpack.c.l.b16 %v31
  %v406 = vunpack.c.h.b16 %v31
  %v407 = vunpack.c.l.b16 %v32
  %v408 = vunpack.c.h.b16 %v32
  %v409 = vunpack.c.l.b16 %v33
  %v410 = vunpack.c.h.b16 %v33
  %v411 = vunpack.c.l.b16 %v34
  %v412 = vunpack.c.h.b16 %v34
  %v413 = vunpack.c.l.b16 %v35
  %v414 = vunpack.c.h.b16 %v35
  %v415 = vunpack.c.l.b16 %v36
  %v416 = vunpack.c.h.b16 %v36
  %v417 = vunpack.c.l.b16 %v37
  %v418 = vunpack.c.h.b16 %v37
  %v419 = vunpack.c.l.b16 %v38
  %v420 = vunpack.c.h.b16 %v38
  %v421 = vunpack.c.l.b16 %v39
  %v422 = vunpack.c.h.b16 %v39
  %v423 = vunpack.c.l.b16 %v40
  %v424 = vunpack.c.h.b16 %v40
  %v425 = vunpack.c.l.b16 %v41
  %v426 = vunpack.c.h.b16 %v41
  %v427 = vunpack.c.l.b16 %v42
  %v428 = vunpack.c.h.b16 %v42
  %v429 = vunpack.c.l.b16 %v43
  %v430 = vunpack.c.h.b16 %v43
  %v431 = vunpack.c.l.b16 %v44
  %v432 = vunpack.c.h.b16 %v44
  %v433 = vunpack.c.l.b16 %v45
  %v434 = vunpack.c.h.b16 %v45
  %v435 = vunpack.c.l.b16 %v46
  %v436 = vunpack.c.h.b16 %v46
  %v437 = vunpack.c.l.b16 %v47
  %v438 = vunpack.c.h.b16 %v47
  %v439 = vunpack.c.l.b16 %v48
  %v440 = vunpack.c.h.b16 %v48
  %v441 = vunpack.c.l.b16 %v49
  %v442 = vunpack.c.h.b16 %v49
  %v443 = vunpack.c.l.b16 %v50
  %v444 = vunpack.c.h.b16 %v50
  %v445 = vunpack.c.l.b16 %v51
  %v446 = vunpack.c.h.b16 %v51
  %v447 = vunpack.c.l.b16 %v52
  %v448 = vunpack.c.h.b16 %v52
  %v449 = vpack.c.b16 %v395, %v377
  %v450 = vpack.c.b16 %v396, %v378
  %v451 = vpack.c.b16 %v397, %v379
  %v452 = vpack.c.b16 %v398, %v380
  %v453 = vpack.c.b16 %v399, %v381
  %v454 = vpack.c.b16 %v400, %v382
  %v455 = vpack.c.b16 %v401, %v383
  %v456 = vpack.c.b16 %v402, %v384
  %v457 = vpack.c.b16 %v403, %v385
  %v458 = vpack.c.b16 %v404, %v386
  %v459 = vpack.c.b16 %v405, %v387
  %v460 = vpack.c.b16 %v406, %v388
  %v461 = vpack.c.b16 %v407, %v389
  %v462 = vpack.c.b16 %v408, %v390
  %v463 = vpack.c.b16 %v409, %v391
  %v464 = vpack.c.b16 %v410, %v392
  %v465 = vpack.c.b16 %v411, %v393
  %v466 = vpack.c.b16 %v412, %v394
  %v467 = vpack.c.b16 %v431, %v413
  %v468 = vpack.c.b16 %v432, %v414
  %v469 = vpack.c.b16 %v433, %v415
  %v470 = vpack.c.b16 %v434, %v416
  %v471 = vpack.c.b16 %v435, %v417
  %v472 = vpack.c.b16 %v436, %v418
  %v473 = vpack.c.b16 %v437, %v419
  %v474 = vpack.c.b16 %v438, %v420
  %v475 = vpack.c.b16 %v439, %v421
  %v476 = vpack.c.b16 %v440, %v422
  %v477 = vpack.c.b16 %v441, %v423
  %v478 = vpack.c.b16 %v442, %v424
  %v479 = vpack.c.b16 %v443, %v425
  %v480 = vpack.c.b16 %v444, %v426
  %v481 = vpack.c.b16 %v445, %v427
  %v482 = vpack.c.b16 %v446, %v428
  %v483 = vpack.c.b16 %v447, %v429
  %v484 = vpack.c.b16 %v448, %v430
  %v809 = vunpack.c.l.b16 %v53
  %v810 = vunpack.c.h.b16 %v53
  %v811 = vunpack.c.l.b16 %v54
  %v812 = vunpack.c.h.b16 %v54
  %v813 = vunpack.c.l.b16 %v55
  %v814 = vunpack.c.h.b16 %v55
  %v815 = vunpack.c.l.b16 %v56
  %v816 = vunpack.c.h.b16 %v56
  %v817 = vunpack.c.l.b16 %v57
  %v818 = vunpack.c.h.b16 %v57
  %v819 = vunpack.c.l.b16 %v58
  %v820 = vunpack.c.h.b16 %v58
  %v821 = vunpack.c.l.b16 %v59
  %v822 = vunpack.c.h.b16 %v59
  %v823 = vunpack.c.l.b16 %v60
  %v824 = vunpack.c.h.b16 %v60
  %v825 = vunpack.c.l.b16 %v61
  %v826 = vunpack.c.h.b16 %v61
  %v827 = vunpack.c.l.b16 %v62
  %v828 = vunpack.c.h.b16 %v62
  %v829 = vunpack.c.l.b16 %v63
  %v830 = vunpack.c.h.b16 %v63
  %v831 = vunpack.c.l.b16 %v64
  %v832 = vunpack.c.h.b16 %v64
  %v833 = vunpack.c.l.b16 %v65
  %v834 = vunpack.c.h.b16 %v65
  %v835 = vunpack.c.l.b16 %v66
  %v836 = vunpack.c.h.b16 %v66
  %v837 = vunpack.c.l.b16 %v67
  %v838 = vunpack.c.h.b16 %v67
  %v839 = vunpack.c.l.b16 %v68
  %v840 = vunpack.c.h.b16 %v68
  %v841 = vunpack.c.l.b16 %v69
  %v842 = vunpack.c.h.b16 %v69
  %v843 = vunpack.c.l.b16 %v70
  %v844 = vunpack.c.h.b16 %v70
  %v845 = vunpack.c.l.b16 %v71
  %v846 = vunpack.c.h.b16 %v71
  %v847 = vunpack.c.l.b16 %v72
  %v848 = vunpack.c.h.b16 %v72
  %v849 = vunpack.c.l.b16 %v73
  %v850 = vunpack.c.h.b16 %v73
  %v851 = vunpack.c.l.b16 %v74
  %v852 = vunpack.c.h.b16 %v74
  %v853 = vunpack.c.l.b16 %v75
  %v854 = vunpack.c.h.b16 %v75
  %v855 = vunpack.c.l.b16 %v76
  %v856 = vunpack.c.h.b16 %v76
  %v857 = vunpack.c.l.b16 %v77
  %v858 = vunpack.c.h.b16 %v77
  %v859 = vunpack.c.l.b16 %v78
  %v860 = vunpack.c.h.b16 %v78
  %v861 = vunpack.c.l.b16 %v79
  %v862 = vunpack.c.h.b16 %v79
  %v863 = vunpack.c.l.b16 %v80
  %v864 = vunpack.c.h.b16 %v80
  %v865 = vunpack.c.l.b16 %v81
  %v866 = vunpack.c.h.b16 %v81
  %v867 = vunpack.c.l.b16 %v82
  %v868 = vunpack.c.h.b16 %v82
  %v869 = vunpack.c.l.b16 %v83
  %v870 = vunpack.c.h.b16 %v83
  %v871 = vunpack.c.l.b16 %v84
  %v872 = vunpack.c.h.b16 %v84
  %v873 = vunpack.c.l.b16 %v85
  %v874 = vunpack.c.h.b16 %v85
  %v875 = vunpack.c.l.b16 %v86
  %v876 = vunpack.c.h.b16 %v86
  %v877 = vunpack.c.l.b16 %v87
  %v878 = vunpack.c.h.b16 %v87
  %v879 = vunpack.c.l.b16 %v88
  %v880 = vunpack.c.h.b16 %v88
  %v881 = vunpack.c.l.b16 %v89
  %v882 = vunpack.c.h.b16 %v89
  %v883 = vunpack.c.l.b16 %v90
  %v884 = vunpack.c.h.b16 %v90
  %v885 = vunpack.c.l.b16 %v91
  %v886 = vunpack.c.h.b16 %v91
  %v887 = vunpack.c.l.b16 %v92
  %v888 = vunpack.c.h.b16 %v92
  %v889 = vunpack.c.l.b16 %v93
  %v890 = vunpack.c.h.b16 %v93
  %v891 = vunpack.c.l.b16 %v94
  %v892 = vunpack.c.h.b16 %v94
  %v893 = vunpack.c.l.b16 %v95
  %v894 = vunpack.c.h.b16 %v95
  %v895 = vunpack.c.l.b16 %v96
  %v896 = vunpack.c.h.b16 %v96
  %v897 = vunpack.c.l.b16 %v97
  %v898 = vunpack.c.h.b16 %v97
  %v899 = vunpack.c.l.b16 %v98
  %v900 = vunpack.c.h.b16 %v98
  %v901 = vunpack.c.l.b16 %v99
  %v902 = vunpack.c.h.b16 %v99
  %v903 = vunpack.c.l.b16 %v100
  %v904 = vunpack.c.h.b16 %v100
  %v905 = vunpack.c.l.b16 %v101
  %v906 = vunpack.c.h.b16 %v101
  %v907 = vunpack.c.l.b16 %v102
  %v908 = vunpack.c.h.b16 %v102
  %v909 = vunpack.c.l.b16 %v103
  %v910 = vunpack.c.h.b16 %v103
  %v911 = vunpack.c.l.b16 %v104
  %v912 = vunpack.c.h.b16 %v104
  %v913 = vunpack.c.l.b16 %v105
  %v914 = vunpack.c.h.b16 %v105
  %v915 = vunpack.c.l.b16 %v106
  %v916 = vunpack.c.h.b16 %v106
  %v917 = vunpack.c.l.b16 %v107
  %v918 = vunpack.c.h.b16 %v107
  %v919 = vunpack.c.l.b16 %v108
  %v920 = vunpack.c.h.b16 %v108
  %v921 = vunpack.c.l.b16 %v109
  %v922 = vunpack.c.h.b16 %v109
  %v923 = vunpack.c.l.b16 %v110
  %v924 = vunpack.c.h.b16 %v110
  %v925 = vunpack.c.l.b16 %v111
  %v926 = vunpack.c.h.b16 %v111
  %v927 = vunpack.c.l.b16 %v112
  %v928 = vunpack.c.h.b16 %v112
  %v929 = vunpack.c.l.b16 %v113
  %v930 = vunpack.c.h.b16 %v113
  %v931 = vunpack.c.l.b16 %v114
  %v932 = vunpack.c.h.b16 %v114
  %v933 = vunpack.c.l.b16 %v115
  %v934 = vunpack.c.h.b16 %v115
  %v935 = vunpack.c.l.b16 %v116
  %v936 = vunpack.c.h.b16 %v116
  %v937 = vunpack.c.l.b16 %v117
  %v938 = vunpack.c.h.b16 %v117
  %v939 = vunpack.c.l.b16 %v118
  %v940 = vunpack.c.h.b16 %v118
  %v941 = vunpack.c.l.b16 %v119
  %v942 = vunpack.c.h.b16 %v119
  %v943 = vunpack.c.l.b16 %v120
  %v944 = vunpack.c.h.b16 %v120
  %v945 = vunpack.c.l.b16 %v121
  %v946 = vunpack.c.h.b16 %v121
  %v947 = vunpack.c.l.b16 %v122
  %v948 = vunpack.c.h.b16 %v122
  %v949 = vunpack.c.l.b16 %v123
  %v950 = vunpack.c.h.b16 %v123
  %v951 = vunpack.c.l.b16 %v124
  %v952 = vunpack.c.h.b16 %v124
  %v953 = vunpack.c.l.b16 %v125
  %v954 = vunpack.c.h.b16 %v125
  %v955 = vunpack.c.l.b16 %v126
  %v956 = vunpack.c.h.b16 %v126
  %v957 = vunpack.c.l.b16 %v127
  %v958 = vunpack.c.h.b16 %v127
  %v959 = vunpack.c.l.b16 %v128
  %v960 = vunpack.c.h.b16 %v128
  %v961 = vunpack.c.l.b16 %v129
  %v962 = vunpack.c.h.b16 %v129
  %v963 = vunpack.c.l.b16 %v130
  %v964 = vunpack.c.h.b16 %v130
  %v965 = vunpack.c.l.b16 %v131
  %v966 = vunpack.c.h.b16 %v131
  %v967 = vunpack.c.l.b16 %v132
  %v968 = vunpack.c.h.b16 %v132
  %v969 = vunpack.c.l.b16 %v133
  %v970 = vunpack.c.h.b16 %v133
  %v971 = vunpack.c.l.b16 %v134
  %v972 = vunpack.c.h.b16 %v134
  %v973 = vunpack.c.l.b16 %v135
  %v974 = vunpack.c.h.b16 %v135
  %v975 = vunpack.c.l.b16 %v136
  %v976 = vunpack.c.h.b16 %v136
  %v977 = vunpack.c.l.b16 %v137
  %v978 = vunpack.c.h.b16 %v137
  %v979 = vunpack.c.l.b16 %v138
  %v980 = vunpack.c.h.b16 %v138
  %v981 = vunpack.c.l.b16 %v139
  %v982 = vunpack.c.h.b16 %v139
  %v983 = vunpack.c.l.b16 %v140
  %v984 = vunpack.c.h.b16 %v140
  %v985 = vunpack.c.l.b16 %v141
  %v986 = vunpack.c.h.b16 %v141
  %v987 = vunpack.c.l.b16 %v142
  %v988 = vunpack.c.h.b16 %v142
  %v989 = vunpack.c.l.b16 %v143
  %v990 = vunpack.c.h.b16 %v143
  %v991 = vunpack.c.l.b16 %v144
  %v992 = vunpack.c.h.b16 %v144
  %v993 = vunpack.c.l.b16 %v145
  %v994 = vunpack.c.h.b16 %v145
  %v995 = vunpack.c.l.b16 %v146
  %v996 = vunpack.c.h.b16 %v146
  %v997 = vunpack.c.l.b16 %v147
  %v998 = vunpack.c.h.b16 %v147
  %v999 = vunpack.c.l.b16 %v148
  %v1000 = vunpack.c.h.b16 %v148
  %v1001 = vunpack.c.l.b16 %v149
  %v1002 = vunpack.c.h.b16 %v149
  %v1003 = vunpack.c.l.b16 %v150
  %v1004 = vunpack.c.h.b16 %v150
  %v1005 = vunpack.c.l.b16 %v151
  %v1006 = vunpack.c.h.b16 %v151
  %v1007 = vunpack.c.l.b16 %v152
  %v1008 = vunpack.c.h.b16 %v152
  %v1009 = vunpack.c.l.b16 %v153
  %v1010 = vunpack.c.h.b16 %v153
  %v1011 = vunpack.c.l.b16 %v154
  %v1012 = vunpack.c.h.b16 %v154
  %v1013 = vunpack.c.l.b16 %v155
  %v1014 = vunpack.c.h.b16 %v155
  %v1015 = vunpack.c.l.b16 %v156
  %v1016 = vunpack.c.h.b16 %v156
  %v1017 = vunpack.c.l.b16 %v157
  %v1018 = vunpack.c.h.b16 %v157
  %v1019 = vunpack.c.l.b16 %v158
  %v1020 = vunpack.c.h.b16 %v158
  %v1021 = vunpack.c.l.b16 %v159
  %v1022 = vunpack.c.h.b16 %v159
  %v1023 = vunpack.c.l.b16 %v160
  %v1024 = vunpack.c.h.b16 %v160
  %v1025 = vunpack.c.l.b16 %v161
  %v1026 = vunpack.c.h.b16 %v161
  %v1027 = vunpack.c.l.b16 %v162
  %v1028 = vunpack.c.h.b16 %v162
  %v1029 = vunpack.c.l.b16 %v163
  %v1030 = vunpack.c.h.b16 %v163
  %v1031 = vunpack.c.l.b16 %v164
  %v1032 = vunpack.c.h.b16 %v164
  %v1033 = vunpack.c.l.b16 %v165
  %v1034 = vunpack.c.h.b16 %v165
  %v1035 = vunpack.c.l.b16 %v166
  %v1036 = vunpack.c.h.b16 %v166
  %v1037 = vunpack.c.l.b16 %v167
  %v1038 = vunpack.c.h.b16 %v167
  %v1039 = vunpack.c.l.b16 %v168
  %v1040 = vunpack.c.h.b16 %v168
  %v1041 = vunpack.c.l.b16 %v169
  %v1042 = vunpack.c.h.b16 %v169
  %v1043 = vunpack.c.l.b16 %v170
  %v1044 = vunpack.c.h.b16 %v170
  %v1045 = vunpack.c.l.b16 %v171
  %v1046 = vunpack.c.h.b16 %v171
  %v1047 = vunpack.c.l.b16 %v172
  %v1048 = vunpack.c.h.b16 %v172
  %v1049 = vunpack.c.l.b16 %v173
  %v1050 = vunpack.c.h.b16 %v173
  %v1051 = vunpack.c.l.b16 %v174
  %v1052 = vunpack.c.h.b16 %v174
  %v1053 = vunpack.c.l.b16 %v175
  %v1054 = vunpack.c.h.b16 %v175
  %v1055 = vunpack.c.l.b16 %v176
  %v1056 = vunpack.c.h.b16 %v176
  %v1057 = vunpack.c.l.b16 %v177
  %v1058 = vunpack.c.h.b16 %v177
  %v1059 = vunpack.c.l.b16 %v178
  %v1060 = vunpack.c.h.b16 %v178
  %v1061 = vunpack.c.l.b16 %v179
  %v1062 = vunpack.c.h.b16 %v179
  %v1063 = vunpack.c.l.b16 %v180
  %v1064 = vunpack.c.h.b16 %v180
  %v1065 = vunpack.c.l.b16 %v181
  %v1066 = vunpack.c.h.b16 %v181
  %v1067 = vunpack.c.l.b16 %v182
  %v1068 = vunpack.c.h.b16 %v182
  %v1069 = vunpack.c.l.b16 %v183
  %v1070 = vunpack.c.h.b16 %v183
  %v1071 = vunpack.c.l.b16 %v184
  %v1072 = vunpack.c.h.b16 %v184
  %v1073 = vunpack.c.l.b16 %v185
  %v1074 = vunpack.c.h.b16 %v185
  %v1075 = vunpack.c.l.b16 %v186
  %v1076 = vunpack.c.h.b16 %v186
  %v1077 = vunpack.c.l.b16 %v187
  %v1078 = vunpack.c.h.b16 %v187
  %v1079 = vunpack.c.l.b16 %v188
  %v1080 = vunpack.c.h.b16 %v188
  %v1081 = vunpack.c.l.b16 %v189
  %v1082 = vunpack.c.h.b16 %v189
  %v1083 = vunpack.c.l.b16 %v190
  %v1084 = vunpack.c.h.b16 %v190
  %v1085 = vunpack.c.l.b16 %v191
  %v1086 = vunpack.c.h.b16 %v191
  %v1087 = vunpack.c.l.b16 %v192
  %v1088 = vunpack.c.h.b16 %v192
  %v1089 = vunpack.c.l.b16 %v193
  %v1090 = vunpack.c.h.b16 %v193
  %v1091 = vunpack.c.l.b16 %v194
  %v1092 = vunpack.c.h.b16 %v194
  %v1093 = vunpack.c.l.b16 %v195
  %v1094 = vunpack.c.h.b16 %v195
  %v1095 = vunpack.c.l.b16 %v196
  %v1096 = vunpack.c.h.b16 %v196
  %v1097 = vunpack.c.l.b16 %v197
  %v1098 = vunpack.c.h.b16 %v197
  %v1099 = vunpack.c.l.b16 %v198
  %v1100 = vunpack.c.h.b16 %v198
  %v1101 = vunpack.c.l.b16 %v199
  %v1102 = vunpack.c.h.b16 %v199
  %v1103 = vunpack.c.l.b16 %v200
  %v1104 = vunpack.c.h.b16 %v200
  %v1105 = vunpack.c.l.b16 %v201
  %v1106 = vunpack.c.h.b16 %v201
  %v1107 = vunpack.c.l.b16 %v202
  %v1108 = vunpack.c.h.b16 %v202
  %v1109 = vunpack.c.l.b16 %v203
  %v1110 = vunpack.c.h.b16 %v203
  %v1111 = vunpack.c.l.b16 %v204
  %v1112 = vunpack.c.h.b16 %v204
  %v1113 = vunpack.c.l.b16 %v205
  %v1114 = vunpack.c.h.b16 %v205
  %v1115 = vunpack.c.l.b16 %v206
  %v1116 = vunpack.c.h.b16 %v206
  %v1117 = vunpack.c.l.b16 %v207
  %v1118 = vunpack.c.h.b16 %v207
  %v1119 = vunpack.c.l.b16 %v208
  %v1120 = vunpack.c.h.b16 %v208
  %v1121 = vunpack.c.l.b16 %v209
  %v1122 = vunpack.c.h.b16 %v209
  %v1123 = vunpack.c.l.b16 %v210
  %v1124 = vunpack.c.h.b16 %v210
  %v1125 = vunpack.c.l.b16 %v211
  %v1126 = vunpack.c.h.b16 %v211
  %v1127 = vunpack.c.l.b16 %v212
  %v1128 = vunpack.c.h.b16 %v212
  %v1129 = vunpack.c.l.b16 %v213
  %v1130 = vunpack.c.h.b16 %v213
  %v1131 = vunpack.c.l.b16 %v214
  %v1132 = vunpack.c.h.b16 %v214
  %v1133 = vunpack.c.l.b16 %v215
  %v1134 = vunpack.c.h.b16 %v215
  %v1135 = vunpack.c.l.b16 %v216
  %v1136 = vunpack.c.h.b16 %v216
  %v1137 = vunpack.c.l.b16 %v217
  %v1138 = vunpack.c.h.b16 %v217
  %v1139 = vunpack.c.l.b16 %v218
  %v1140 = vunpack.c.h.b16 %v218
  %v1141 = vunpack.c.l.b16 %v219
  %v1142 = vunpack.c.h.b16 %v219
  %v1143 = vunpack.c.l.b16 %v220
  %v1144 = vunpack.c.h.b16 %v220
  %v1145 = vunpack.c.l.b16 %v221
  %v1146 = vunpack.c.h.b16 %v221
  %v1147 = vunpack.c.l.b16 %v222
  %v1148 = vunpack.c.h.b16 %v222
  %v1149 = vunpack.c.l.b16 %v223
  %v1150 = vunpack.c.h.b16 %v223
  %v1151 = vunpack.c.l.b16 %v224
  %v1152 = vunpack.c.h.b16 %v224
  %v1153 = vunpack.c.l.b16 %v225
  %v1154 = vunpack.c.h.b16 %v225
  %v1155 = vunpack.c.l.b16 %v226
  %v1156 = vunpack.c.h.b16 %v226
  %v1157 = vunpack.c.l.b16 %v227
  %v1158 = vunpack.c.h.b16 %v227
  %v1159 = vunpack.c.l.b16 %v228
  %v1160 = vunpack.c.h.b16 %v228
  %v1161 = vunpack.c.l.b16 %v229
  %v1162 = vunpack.c.h.b16 %v229
  %v1163 = vunpack.c.l.b16 %v230
  %v1164 = vunpack.c.h.b16 %v230
  %v1165 = vunpack.c.l.b16 %v231
  %v1166 = vunpack.c.h.b16 %v231
  %v1167 = vunpack.c.l.b16 %v232
  %v1168 = vunpack.c.h.b16 %v232
  %v1169 = vunpack.c.l.b16 %v233
  %v1170 = vunpack.c.h.b16 %v233
  %v1171 = vunpack.c.l.b16 %v234
  %v1172 = vunpack.c.h.b16 %v234
  %v1173 = vunpack.c.l.b16 %v235
  %v1174 = vunpack.c.h.b16 %v235
  %v1175 = vunpack.c.l.b16 %v236
  %v1176 = vunpack.c.h.b16 %v236
  %v1177 = vunpack.c.l.b16 %v237
  %v1178 = vunpack.c.h.b16 %v237
  %v1179 = vunpack.c.l.b16 %v238
  %v1180 = vunpack.c.h.b16 %v238
  %v1181 = vunpack.c.l.b16 %v239
  %v1182 = vunpack.c.h.b16 %v239
  %v1183 = vunpack.c.l.b16 %v240
  %v1184 = vunpack.c.h.b16 %v240
  %v1185 = vunpack.c.l.b16 %v241
  %v1186 = vunpack.c.h.b16 %v241
  %v1187 = vunpack.c.l.b16 %v242
  %v1188 = vunpack.c.h.b16 %v242
  %v1189 = vunpack.c.l.b16 %v243
  %v1190 = vunpack.c.h.b16 %v243
  %v1191 = vunpack.c.l.b16 %v244
  %v1192 = vunpack.c.h.b16 %v244
  %v1193 = vunpack.c.l.b16 %v245
  %v1194 = vunpack.c.h.b16 %v245
  %v1195 = vunpack.c.l.b16 %v246
  %v1196 = vunpack.c.h.b16 %v246
  %v1197 = vunpack.c.l.b16 %v247
  %v1198 = vunpack.c.h.b16 %v247
  %v1199 = vunpack.c.l.b16 %v248
  %v1200 = vunpack.c.h.b16 %v248
  %v1201 = vunpack.c.l.b16 %v249
  %v1202 = vunpack.c.h.b16 %v249
  %v1203 = vunpack.c.l.b16 %v250
  %v1204 = vunpack.c.h.b16 %v250
  %v1205 = vunpack.c.l.b16 %v251
  %v1206 = vunpack.c.h.b16 %v251
  %v1207 = vunpack.c.l.b16 %v252
  %v1208 = vunpack.c.h.b16 %v252
  %v1209 = vunpack.c.l.b16 %v253
  %v1210 = vunpack.c.h.b16 %v253
  %v1211 = vunpack.c.l.b16 %v254
  %v1212 = vunpack.c.h.b16 %v254
  %v1213 = vunpack.c.l.b16 %v255
  %v1214 = vunpack.c.h.b16 %v255
  %v1215 = vunpack.c.l.b16 %v256
  %v1216 = vunpack.c.h.b16 %v256
  %v1217 = vunpack.c.l.b16 %v257
  %v1218 = vunpack.c.h.b16 %v257
  %v1219 = vunpack.c.l.b16 %v258
  %v1220 = vunpack.c.h.b16 %v258
  %v1221 = vunpack.c.l.b16 %v259
  %v1222 = vunpack.c.h.b16 %v259
  %v1223 = vunpack.c.l.b16 %v260
  %v1224 = vunpack.c.h.b16 %v260
  %v1225 = vunpack.c.l.b16 %v261
  %v1226 = vunpack.c.h.b16 %v261
  %v1227 = vunpack.c.l.b16 %v262
  %v1228 = vunpack.c.h.b16 %v262
  %v1229 = vunpack.c.l.b16 %v263
  %v1230 = vunpack.c.h.b16 %v263
  %v1231 = vunpack.c.l.b16 %v264
  %v1232 = vunpack.c.h.b16 %v264
  %v1233 = vunpack.c.l.b16 %v265
  %v1234 = vunpack.c.h.b16 %v265
  %v1235 = vunpack.c.l.b16 %v266
  %v1236 = vunpack.c.h.b16 %v266
  %v1237 = vunpack.c.l.b16 %v267
  %v1238 = vunpack.c.h.b16 %v267
  %v1239 = vunpack.c.l.b16 %v268
  %v1240 = vunpack.c.h.b16 %v268
  %v1241 = vunpack.c.l.b16 %v269
  %v1242 = vunpack.c.h.b16 %v269
  %v1243 = vunpack.c.l.b16 %v270
  %v1244 = vunpack.c.h.b16 %v270
  %v1245 = vunpack.c.l.b16 %v271
  %v1246 = vunpack.c.h.b16 %v271
  %v1247 = vunpack.c.l.b16 %v272
  %v1248 = vunpack.c.h.b16 %v272
  %v1249 = vunpack.c.l.b16 %v273
  %v1250 = vunpack.c.h.b16 %v273
  %v1251 = vunpack.c.l.b16 %v274
  %v1252 = vunpack.c.h.b16 %v274
  %v1253 = vunpack.c.l.b16 %v275
  %v1254 = vunpack.c.h.b16 %v275
  %v1255 = vunpack.c.l.b16 %v276
  %v1256 = vunpack.c.h.b16 %v276
  %v1257 = vunpack.c.l.b16 %v277
  %v1258 = vunpack.c.h.b16 %v277
  %v1259 = vunpack.c.l.b16 %v278
  %v1260 = vunpack.c.h.b16 %v278
  %v1261 = vunpack.c.l.b16 %v279
  %v1262 = vunpack.c.h.b16 %v279
  %v1263 = vunpack.c.l.b16 %v280
  %v1264 = vunpack.c.h.b16 %v280
  %v1265 = vunpack.c.l.b16 %v281
  %v1266 = vunpack.c.h.b16 %v281
  %v1267 = vunpack.c.l.b16 %v282
  %v1268 = vunpack.c.h.b16 %v282
  %v1269 = vunpack.c.l.b16 %v283
  %v1270 = vunpack.c.h.b16 %v283
  %v1271 = vunpack.c.l.b16 %v284
  %v1272 = vunpack.c.h.b16 %v284
  %v1273 = vunpack.c.l.b16 %v285
  %v1274 = vunpack.c.h.b16 %v285
  %v1275 = vunpack.c.l.b16 %v286
  %v1276 = vunpack.c.h.b16 %v286
  %v1277 = vunpack.c.l.b16 %v287
  %v1278 = vunpack.c.h.b16 %v287
  %v1279 = vunpack.c.l.b16 %v288
  %v1280 = vunpack.c.h.b16 %v288
  %v1281 = vunpack.c.l.b16 %v289
  %v1282 = vunpack.c.h.b16 %v289
  %v1283 = vunpack.c.l.b16 %v290
  %v1284 = vunpack.c.h.b16 %v290
  %v1285 = vunpack.c.l.b16 %v291
  %v1286 = vunpack.c.h.b16 %v291
  %v1287 = vunpack.c.l.b16 %v292
  %v1288 = vunpack.c.h.b16 %v292
  %v1289 = vunpack.c.l.b16 %v293
  %v1290 = vunpack.c.h.b16 %v293
  %v1291 = vunpack.c.l.b16 %v294
  %v1292 = vunpack.c.h.b16 %v294
  %v1293 = vunpack.c.l.b16 %v295
  %v1294 = vunpack.c.h.b16 %v295
  %v1295 = vunpack.c.l.b16 %v296
  %v1296 = vunpack.c.h.b16 %v296
  %v1297 = vunpack.c.l.b16 %v297
  %v1298 = vunpack.c.h.b16 %v297
  %v1299 = vunpack.c.l.b16 %v298
  %v1300 = vunpack.c.h.b16 %v298
  %v1301 = vunpack.c.l.b16 %v299
  %v1302 = vunpack.c.h.b16 %v299
  %v1303 = vunpack.c.l.b16 %v300
  %v1304 = vunpack.c.h.b16 %v300
  %v1305 = vunpack.c.l.b16 %v301
  %v1306 = vunpack.c.h.b16 %v301
  %v1307 = vunpack.c.l.b16 %v302
  %v1308 = vunpack.c.h.b16 %v302
  %v1309 = vunpack.c.l.b16 %v303
  %v1310 = vunpack.c.h.b16 %v303
  %v1311 = vunpack.c.l.b16 %v304
  %v1312 = vunpack.c.h.b16 %v304
  %v1313 = vunpack.c.l.b16 %v305
  %v1314 = vunpack.c.h.b16 %v305
  %v1315 = vunpack.c.l.b16 %v306
  %v1316 = vunpack.c.h.b16 %v306
  %v1317 = vunpack.c.l.b16 %v307
  %v1318 = vunpack.c.h.b16 %v307
  %v1319 = vunpack.c.l.b16 %v308
  %v1320 = vunpack.c.h.b16 %v308
  %v1321 = vunpack.c.l.b16 %v309
  %v1322 = vunpack.c.h.b16 %v309
  %v1323 = vunpack.c.l.b16 %v310
  %v1324 = vunpack.c.h.b16 %v310
  %v1325 = vunpack.c.l.b16 %v311
  %v1326 = vunpack.c.h.b16 %v311
  %v1327 = vunpack.c.l.b16 %v312
  %v1328 = vunpack.c.h.b16 %v312
  %v1329 = vunpack.c.l.b16 %v313
  %v1330 = vunpack.c.h.b16 %v313
  %v1331 = vunpack.c.l.b16 %v314
  %v1332 = vunpack.c.h.b16 %v314
  %v1333 = vunpack.c.l.b16 %v315
  %v1334 = vunpack.c.h.b16 %v315
  %v1335 = vunpack.c.l.b16 %v316
  %v1336 = vunpack.c.h.b16 %v316
  %v1337 = vunpack.c.l.b16 %v317
  %v1338 = vunpack.c.h.b16 %v317
  %v1339 = vunpack.c.l.b16 %v318
  %v1340 = vunpack.c.h.b16 %v318
  %v1341 = vunpack.c.l.b16 %v319
  %v1342 = vunpack.c.h.b16 %v319
  %v1343 = vunpack.c.l.b16 %v320
  %v1344 = vunpack.c.h.b16 %v320
  %v1345 = vunpack.c.l.b16 %v321
  %v1346 = vunpack.c.h.b16 %v321
  %v1347 = vunpack.c.l.b16 %v322
  %v1348 = vunpack.c.h.b16 %v322
  %v1349 = vunpack.c.l.b16 %v323
  %v1350 = vunpack.c.h.b16 %v323
  %v1351 = vunpack.c.l.b16 %v324
  %v1352 = vunpack.c.h.b16 %v324
  %v1353 = vunpack.c.l.b16 %v325
  %v1354 = vunpack.c.h.b16 %v325
  %v1355 = vunpack.c.l.b16 %v326
  %v1356 = vunpack.c.h.b16 %v326
  %v1357 = vunpack.c.l.b16 %v327
  %v1358 = vunpack.c.h.b16 %v327
  %v1359 = vunpack.c.l.b16 %v328
  %v1360 = vunpack.c.h.b16 %v328
  %v1361 = vunpack.c.l.b16 %v329
  %v1362 = vunpack.c.h.b16 %v329
  %v1363 = vunpack.c.l.b16 %v330
  %v1364 = vunpack.c.h.b16 %v330
  %v1365 = vunpack.c.l.b16 %v331
  %v1366 = vunpack.c.h.b16 %v331
  %v1367 = vunpack.c.l.b16 %v332
  %v1368 = vunpack.c.h.b16 %v332
  %v1369 = vunpack.c.l.b16 %v333
  %v1370 = vunpack.c.h.b16 %v333
  %v1371 = vunpack.c.l.b16 %v334
  %v1372 = vunpack.c.h.b16 %v334
  %v1373 = vunpack.c.l.b16 %v335
  %v1374 = vunpack.c.h.b16 %v335
  %v1375 = vunpack.c.l.b16 %v336
  %v1376 = vunpack.c.h.b16 %v336
  %v1377 = vunpack.c.l.b16 %v337
  %v1378 = vunpack.c.h.b16 %v337
  %v1379 = vunpack.c.l.b16 %v338
  %v1380 = vunpack.c.h.b16 %v338
  %v1381 = vunpack.c.l.b16 %v339
  %v1382 = vunpack.c.h.b16 %v339
  %v1383 = vunpack.c.l.b16 %v340
  %v1384 = vunpack.c.h.b16 %v340
  %v1385 = vpack.c.b16 %v811, %v809
  %v1386 = vpack.c.b16 %v812, %v810
  %v1387 = vpack.c.b16 %v815, %v813
  %v1388 = vpack.c.b16 %v816, %v814
  %v1389 = vpack.c.b16 %v819, %v817
  %v1390 = vpack.c.b16 %v820, %v818
  %v1391 = vpack.c.b16 %v823, %v821
  %v1392 = vpack.c.b16 %v824, %v822
  %v1393 = vpack.c.b16 %v827, %v825
  %v1394 = vpack.c.b16 %v828, %v826
  %v1395 = vpack.c.b16 %v831, %v829
  %v1396 = vpack.c.b16 %v832, %v830
  %v1397 = vpack.c.b16 %v835, %v833
  %v1398 = vpack.c.b16 %v836, %v834
  %v1399 = vpack.c.b16 %v839, %v837
  %v1400 = vpack.c.b16 %v840, %v838
  %v1401 = vpack.c.b16 %v843, %v841
  %v1402 = vpack.c.b16 %v844, %v842
  %v1403 = vpack.c.b16 %v847, %v845
  %v1404 = vpack.c.b16 %v848, %v846
  %v1405 = vpack.c.b16 %v851, %v849
  %v1406 = vpack.c.b16 %v852, %v850
  %v1407 = vpack.c.b16 %v855, %v853
  %v1408 = vpack.c.b16 %v856, %v854
  %v1409 = vpack.c.b16 %v859, %v857
  %v1410 = vpack.c.b16 %v860, %v858
  %v1411 = vpack.c.b16 %v863, %v861
  %v1412 = vpack.c.b16 %v864, %v862
  %v1413 = vpack.c.b16 %v867, %v865
  %v1414 = vpack.c.b16 %v868, %v866
  %v1415 = vpack.c.b16 %v871, %v869
  %v1416 = vpack.c.b16 %v872, %v870
  %v1417 = vpack.c.b16 %v875, %v873
  %v1418 = vpack.c.b16 %v876, %v874
  %v1419 = vpack.c.b16 %v879, %v877
  %v1420 = vpack.c.b16 %v880, %v878
  %v1421 = vpack.c.b16 %v883, %v881
  %v1422 = vpack.c.b16 %v884, %v882
  %v1423 = vpack.c.b16 %v887, %v885
  %v1424 = vpack.c.b16 %v888, %v886
  %v1425 = vpack.c.b16 %v891, %v889
  %v1426 = vpack.c.b16 %v892, %v890
  %v1427 = vpack.c.b16 %v895, %v893
  %v1428 = vpack.c.b16 %v896, %v894
  %v1429 = vpack.c.b16 %v899, %v897
  %v1430 = vpack.c.b16 %v900, %v898
  %v1431 = vpack.c.b16 %v903, %v901
  %v1432 = vpack.c.b16 %v904, %v902
  %v1433 = vpack.c.b16 %v907, %v905
  %v1434 = vpack.c.b16 %v908, %v906
  %v1435 = vpack.c.b16 %v911, %v909
  %v1436 = vpack.c.b16 %v912, %v910
  %v1437 = vpack.c.b16 %v915, %v913
  %v1438 = vpack.c.b16 %v916, %v914
  %v1439 = vpack.c.b16 %v919, %v917
  %v1440 = vpack.c.b16 %v920, %v918
  %v1441 = vpack.c.b16 %v923, %v921
  %v1442 = vpack.c.b16 %v924, %v922
  %v1443 = vpack.c.b16 %v927, %v925
  %v1444 = vpack.c.b16 %v928, %v926
  %v1445 = vpack.c.b16 %v931, %v929
  %v1446 = vpack.c.b16 %v932, %v930
  %v1447 = vpack.c.b16 %v935, %v933
  %v1448 = vpack.c.b16 %v936, %v934
  %v1449 = vpack.c.b16 %v939, %v937
  %v1450 = vpack.c.b16 %v940, %v938
  %v1451 = vpack.c.b16 %v943, %v941
  %v1452 = vpack.c.b16 %v944, %v942
  %v1453 = vpack.c.b16 %v947, %v945
  %v1454 = vpack.c.b16 %v948, %v946
  %v1455 = vpack.c.b16 %v951, %v949
  %v1456 = vpack.c.b16 %v952, %v950
  %v1457 = vpack.c.b16 %v955, %v953
  %v1458 = vpack.c.b16 %v956, %v954
  %v1459 = vpack.c.b16 %v959, %v957
  %v1460 = vpack.c.b16 %v960, %v958
  %v1461 = vpack.c.b16 %v963, %v961
  %v1462 = vpack.c.b16 %v964, %v962
  %v1463 = vpack.c.b16 %v967, %v965
  %v1464 = vpack.c.b16 %v968, %v966
  %v1465 = vpack.c.b16 %v971, %v969
  %v1466 = vpack.c.b16 %v972, %v970
  %v1467 = vpack.c.b16 %v975, %v973
  %v1468 = vpack.c.b16 %v976, %v974
  %v1469 = vpack.c.b16 %v979, %v977
  %v1470 = vpack.c.b16 %v980, %v978
  %v1471 = vpack.c.b16 %v983, %v981
  %v1472 = vpack.c.b16 %v984, %v982
  %v1473 = vpack.c.b16 %v987, %v985
  %v1474 = vpack.c.b16 %v988, %v986
  %v1475 = vpack.c.b16 %v991, %v989
  %v1476 = vpack.c.b16 %v992, %v990
  %v1477 = vpack.c.b16 %v995, %v993
  %v1478 = vpack.c.b16 %v996, %v994
  %v1479 = vpack.c.b16 %v999, %v997
  %v1480 = vpack.c.b16 %v1000, %v998
  %v1481 = vpack.c.b16 %v1003, %v1001
  %v1482 = vpack.c.b16 %v1004, %v1002
  %v1483 = vpack.c.b16 %v1007, %v1005
  %v1484 = vpack.c.b16 %v1008, %v1006
  %v1485 = vpack.c.b16 %v1011, %v1009
  %v1486 = vpack.c.b16 %v1012, %v1010
  %v1487 = vpack.c.b16 %v1015, %v1013
  %v1488 = vpack.c.b16 %v1016, %v1014
  %v1489 = vpack.c.b16 %v1019, %v1017
  %v1490 = vpack.c.b16 %v1020, %v1018
  %v1491 = vpack.c.b16 %v1023, %v1021
  %v1492 = vpack.c.b16 %v1024, %v1022
  %v1493 = vpack.c.b16 %v1027, %v1025
  %v1494 = vpack.c.b16 %v1028, %v1026
  %v1495 = vpack.c.b16 %v1031, %v1029
  %v1496 = vpack.c.b16 %v1032, %v1030
  %v1497 = vpack.c.b16 %v1035, %v1033
  %v1498 = vpack.c.b16 %v1036, %v1034
  %v1499 = vpack.c.b16 %v1039, %v1037
  %v1500 = vpack.c.b16 %v1040, %v1038
  %v1501 = vpack.c.b16 %v1043, %v1041
  %v1502 = vpack.c.b16 %v1044, %v1042
  %v1503 = vpack.c.b16 %v1047, %v1045
  %v1504 = vpack.c.b16 %v1048, %v1046
  %v1505 = vpack.c.b16 %v1051, %v1049
  %v1506 = vpack.c.b16 %v1052, %v1050
  %v1507 = vpack.c.b16 %v1055, %v1053
  %v1508 = vpack.c.b16 %v1056, %v1054
  %v1509 = vpack.c.b16 %v1059, %v1057
  %v1510 = vpack.c.b16 %v1060, %v1058
  %v1511 = vpack.c.b16 %v1063, %v1061
  %v1512 = vpack.c.b16 %v1064, %v1062
  %v1513 = vpack.c.b16 %v1067, %v1065
  %v1514 = vpack.c.b16 %v1068, %v1066
  %v1515 = vpack.c.b16 %v1071, %v1069
  %v1516 = vpack.c.b16 %v1072, %v1070
  %v1517 = vpack.c.b16 %v1075, %v1073
  %v1518 = vpack.c.b16 %v1076, %v1074
  %v1519 = vpack.c.b16 %v1079, %v1077
  %v1520 = vpack.c.b16 %v1080, %v1078
  %v1521 = vpack.c.b16 %v1083, %v1081
  %v1522 = vpack.c.b16 %v1084, %v1082
  %v1523 = vpack.c.b16 %v1087, %v1085
  %v1524 = vpack.c.b16 %v1088, %v1086
  %v1525 = vpack.c.b16 %v1091, %v1089
  %v1526 = vpack.c.b16 %v1092, %v1090
  %v1527 = vpack.c.b16 %v1095, %v1093
  %v1528 = vpack.c.b16 %v1096, %v1094
  %v1529 = vpack.c.b16 %v1099, %v1097
  %v1530 = vpack.c.b16 %v1100, %v1098
  %v1531 = vpack.c.b16 %v1103, %v1101
  %v1532 = vpack.c.b16 %v1104, %v1102
  %v1533 = vpack.c.b16 %v1107, %v1105
  %v1534 = vpack.c.b16 %v1108, %v1106
  %v1535 = vpack.c.b16 %v1111, %v1109
  %v1536 = vpack.c.b16 %v1112, %v1110
  %v1537 = vpack.c.b16 %v1115, %v1113
  %v1538 = vpack.c.b16 %v1116, %v1114
  %v1539 = vpack.c.b16 %v1119, %v1117
  %v1540 = vpack.c.b16 %v1120, %v1118
  %v1541 = vpack.c.b16 %v1123, %v1121
  %v1542 = vpack.c.b16 %v1124, %v1122
  %v1543 = vpack.c.b16 %v1127, %v1125
  %v1544 = vpack.c.b16 %v1128, %v1126
  %v1545 = vpack.c.b16 %v1131, %v1129
  %v1546 = vpack.c.b16 %v1132, %v1130
  %v1547 = vpack.c.b16 %v1135, %v1133
  %v1548 = vpack.c.b16 %v1136, %v1134
  %v1549 = vpack.c.b16 %v1139, %v1137
  %v1550 = vpack.c.b16 %v1140, %v1138
  %v1551 = vpack.c.b16 %v1143, %v1141
  %v1552 = vpack.c.b16 %v1144, %v1142
  %v1553 = vpack.c.b16 %v1147, %v1145
  %v1554 = vpack.c.b16 %v1148, %v1146
  %v1555 = vpack.c.b16 %v1151, %v1149
  %v1556 = vpack.c.b16 %v1152, %v1150
  %v1557 = vpack.c.b16 %v1155, %v1153
  %v1558 = vpack.c.b16 %v1156, %v1154
  %v1559 = vpack.c.b16 %v1159, %v1157
  %v1560 = vpack.c.b16 %v1160, %v1158
  %v1561 = vpack.c.b16 %v1163, %v1161
  %v1562 = vpack.c.b16 %v1164, %v1162
  %v1563 = vpack.c.b16 %v1167, %v1165
  %v1564 = vpack.c.b16 %v1168, %v1166
  %v1565 = vpack.c.b16 %v1171, %v1169
  %v1566 = vpack.c.b16 %v1172, %v1170
  %v1567 = vpack.c.b16 %v1175, %v1173
  %v1568 = vpack.c.b16 %v1176, %v1174
  %v1569 = vpack.c.b16 %v1179, %v1177
  %v1570 = vpack.c.b16 %v1180, %v1178
  %v1571 = vpack.c.b16 %v1183, %v1181
  %v1572 = vpack.c.b16 %v1184, %v1182
  %v1573 = vpack.c.b16 %v1187, %v1185
  %v1574 = vpack.c.b16 %v1188, %v1186
  %v1575 = vpack.c.b16 %v1191, %v1189
  %v1576 = vpack.c.b16 %v1192, %v1190
  %v1577 = vpack.c.b16 %v1195, %v1193
  %v1578 = vpack.c.b16 %v1196, %v1194
  %v1579 = vpack.c.b16 %v1199, %v1197
  %v1580 = vpack.c.b16 %v1200, %v1198
  %v1581 = vpack.c.b16 %v1203, %v1201
  %v1582 = vpack.c.b16 %v1204, %v1202
  %v1583 = vpack.c.b16 %v1207, %v1205
  %v1584 = vpack.c.b16 %v1208, %v1206
  %v1585 = vpack.c.b16 %v1211, %v1209
  %v1586 = vpack.c.b16 %v1212, %v1210
  %v1587 = vpack.c.b16 %v1215, %v1213
  %v1588 = vpack.c.b16 %v1216, %v1214
  %v1589 = vpack.c.b16 %v1219, %v1217
  %v1590 = vpack.c.b16 %v1220, %v1218
  %v1591 = vpack.c.b16 %v1223, %v1221
  %v1592 = vpack.c.b16 %v1224, %v1222
  %v1593 = vpack.c.b16 %v1227, %v1225
  %v1594 = vpack.c.b16 %v1228, %v1226
  %v1595 = vpack.c.b16 %v1231, %v1229
  %v1596 = vpack.c.b16 %v1232, %v1230
  %v1597 = vpack.c.b16 %v1235, %v1233
  %v1598 = vpack.c.b16 %v1236, %v1234
  %v1599 = vpack.c.b16 %v1239, %v1237
  %v1600 = vpack.c.b16 %v1240, %v1238
  %v1601 = vpack.c.b16 %v1243, %v1241
  %v1602 = vpack.c.b16 %v1244, %v1242
  %v1603 = vpack.c.b16 %v1247, %v1245
  %v1604 = vpack.c.b16 %v1248, %v1246
  %v1605 = vpack.c.b16 %v1251, %v1249
  %v1606 = vpack.c.b16 %v1252, %v1250
  %v1607 = vpack.c.b16 %v1255, %v1253
  %v1608 = vpack.c.b16 %v1256, %v1254
  %v1609 = vpack.c.b16 %v1259, %v1257
  %v1610 = vpack.c.b16 %v1260, %v1258
  %v1611 = vpack.c.b16 %v1263, %v1261
  %v1612 = vpack.c.b16 %v1264, %v1262
  %v1613 = vpack.c.b16 %v1267, %v1265
  %v1614 = vpack.c.b16 %v1268, %v1266
  %v1615 = vpack.c.b16 %v1271, %v1269
  %v1616 = vpack.c.b16 %v1272, %v1270
  %v1617 = vpack.c.b16 %v1275, %v1273
  %v1618 = vpack.c.b16 %v1276, %v1274
  %v1619 = vpack.c.b16 %v1279, %v1277
  %v1620 = vpack.c.b16 %v1280, %v1278
  %v1621 = vpack.c.b16 %v1283, %v1281
  %v1622 = vpack.c.b16 %v1284, %v1282
  %v1623 = vpack.c.b16 %v1287, %v1285
  %v1624 = vpack.c.b16 %v1288, %v1286
  %v1625 = vpack.c.b16 %v1291, %v1289
  %v1626 = vpack.c.b16 %v1292, %v1290
  %v1627 = vpack.c.b16 %v1295, %v1293
  %v1628 = vpack.c.b16 %v1296, %v1294
  %v1629 = vpack.c.b16 %v1299, %v1297
  %v1630 = vpack.c.b16 %v1300, %v1298
  %v1631 = vpack.c.b16 %v1303, %v1301
  %v1632 = vpack.c.b16 %v1304, %v1302
  %v1633 = vpack.c.b16 %v1307, %v1305
  %v1634 = vpack.c.b16 %v1308, %v1306
  %v1635 = vpack.c.b16 %v1311, %v1309
  %v1636 = vpack.c.b16 %v1312, %v1310
  %v1637 = vpack.c.b16 %v1315, %v1313
  %v1638 = vpack.c.b16 %v1316, %v1314
  %v1639 = vpack.c.b16 %v1319, %v1317
  %v1640 = vpack.c.b16 %v1320, %v1318
  %v1641 = vpack.c.b16 %v1323, %v1321
  %v1642 = vpack.c.b16 %v1324, %v1322
  %v1643 = vpack.c.b16 %v1327, %v1325
  %v1644 = vpack.c.b16 %v1328, %v1326
  %v1645 = vpack.c.b16 %v1331, %v1329
  %v1646 = vpack.c.b16 %v1332, %v1330
  %v1647 = vpack.c.b16 %v1335, %v1333
  %v1648 = vpack.c.b16 %v1336, %v1334
  %v1649 = vpack.c.b16 %v1339, %v1337
  %v1650 = vpack.c.b16 %v1340, %v1338
  %v1651 = vpack.c.b16 %v1343, %v1341
  %v1652 = vpack.c.b16 %v1344, %v1342
  %v1653 = vpack.c.b16 %v1347, %v1345
  %v1654 = vpack.c.b16 %v1348, %v1346
  %v1655 = vpack.c.b16 %v1351, %v1349
  %v1656 = vpack.c.b16 %v1352, %v1350
  %v1657 = vpack.c.b16 %v1355, %v1353
  %v1658 = vpack.c.b16 %v1356, %v1354
  %v1659 = vpack.c.b16 %v1359, %v1357
  %v1660 = vpack.c.b16 %v1360, %v1358
  %v1661 = vpack.c.b16 %v1363, %v1361
  %v1662 = vpack.c.b16 %v1364, %v1362
  %v1663 = vpack.c.b16 %v1367, %v1365
  %v1664 = vpack.c.b16 %v1368, %v1366
  %v1665 = vpack.c.b16 %v1371, %v1369
  %v1666 = vpack.c.b16 %v1372, %v1370
  %v1667 = vpack.c.b16 %v1375, %v1373
  %v1668 = vpack.c.b16 %v1376, %v1374
  %v1669 = vpack.c.b16 %v1379, %v1377
  %v1670 = vpack.c.b16 %v1380, %v1378
  %v1671 = vpack.c.b16 %v1383, %v1381
  %v1672 = vpack.c.b16 %v1384, %v1382
  %1961 = vmatprep.subr.bf16.mxu0 %v1386
  %1962 = vmatpush1.bf16.msra.mxu0 %v1385
  %1963 = vmatprep.subr.bf16.mxu0 %v1388
  %1964 = vmatpush1.bf16.msra.mxu0 %v1387
  %1965 = vmatprep.subr.bf16.mxu0 %v1390
  %1966 = vmatpush1.bf16.msra.mxu0 %v1389
  %1967 = vmatprep.subr.bf16.mxu0 %v1392
  %1968 = vmatpush1.bf16.msra.mxu0 %v1391
  %1969 = vmatprep.subr.bf16.mxu0 %v1394
  %1970 = vmatpush1.bf16.msra.mxu0 %v1393
  %1971 = vmatprep.subr.bf16.mxu0 %v1396
  %1972 = vmatpush1.bf16.msra.mxu0 %v1395
  %1973 = vmatprep.subr.bf16.mxu0 %v1398
  %1974 = vmatpush1.bf16.msra.mxu0 %v1397
  %1975 = vmatprep.subr.bf16.mxu0 %v1400
  %1976 = vmatpush1.bf16.msra.mxu0 %v1399
  %1977 = vmatprep.subr.bf16.mxu0 %v1402
  %1978 = vmatpush1.bf16.msra.mxu0 %v1401
  %1979 = vmatprep.subr.bf16.mxu0 %v1404
  %1980 = vmatpush1.bf16.msra.mxu0 %v1403
  %1981 = vmatprep.subr.bf16.mxu0 %v1406
  %1982 = vmatpush1.bf16.msra.mxu0 %v1405
  %1983 = vmatprep.subr.bf16.mxu0 %v1408
  %1984 = vmatpush1.bf16.msra.mxu0 %v1407
  %1985 = vmatprep.subr.bf16.mxu0 %v1410
  %1986 = vmatpush1.bf16.msra.mxu0 %v1409
  %1987 = vmatprep.subr.bf16.mxu0 %v1412
  %1988 = vmatpush1.bf16.msra.mxu0 %v1411
  %1989 = vmatprep.subr.bf16.mxu0 %v1414
  %1990 = vmatpush1.bf16.msra.mxu0 %v1413
  %1991 = vmatprep.subr.bf16.mxu0 %v1416
  %1992 = vmatpush1.bf16.msra.mxu0 %v1415
  %1993 = vmatprep.mubr.bf16.mxu0 %v450
  %1994 = vmatmul.mubr.bf16.gmra.mrb[0].mxu0 %v449
  %v1995 = vpop.f32.mrb[0].mxu0
  %v1996 = vadd.f32 0.0, %v1995
  %v1997 = vpop.f32.mrb[0].mxu0
  %v1998 = vadd.f32 0.0, %v1997
  %v1999 = vpop.f32.mrb[0].mxu0
  %v2000 = vadd.f32 0.0, %v1999
  %v2001 = vpop.f32.mrb[0].mxu0
  %v2002 = vadd.f32 0.0, %v2001
  %2003 = vmatprep.mubr.bf16.mxu0 %v468
  %2004 = vmatmul.mubr.bf16.gmra.mrb[0].mxu0 %v467
  %v2005 = vpop.f32.mrb[0].mxu0
  %v2006 = vadd.f32 0.0, %v2005
  %v2007 = vpop.f32.mrb[0].mxu0
  %v2008 = vadd.f32 0.0, %v2007
  %v2009 = vpop.f32.mrb[0].mxu0
  %v2010 = vadd.f32 0.0, %v2009
  %v2011 = vpop.f32.mrb[0].mxu0
  %v2012 = vadd.f32 0.0, %v2011
  %2013 = vdwg.mxu0
  %2014 = vmatprep.subr.bf16.mxu0 %v1418
  %2015 = vmatpush1.bf16.msra.mxu0 %v1417
  %2016 = vmatprep.subr.bf16.mxu0 %v1420
  %2017 = vmatpush1.bf16.msra.mxu0 %v1419
  %2018 = vmatprep.subr.bf16.mxu0 %v1422
  %2019 = vmatpush1.bf16.msra.mxu0 %v1421
  %2020 = vmatprep.subr.bf16.mxu0 %v1424
  %2021 = vmatpush1.bf16.msra.mxu0 %v1423
  %2022 = vmatprep.subr.bf16.mxu0 %v1426
  %2023 = vmatpush1.bf16.msra.mxu0 %v1425
  %2024 = vmatprep.subr.bf16.mxu0 %v1428
  %2025 = vmatpush1.bf16.msra.mxu0 %v1427
  %2026 = vmatprep.subr.bf16.mxu0 %v1430
  %2027 = vmatpush1.bf16.msra.mxu0 %v1429
  %2028 = vmatprep.subr.bf16.mxu0 %v1432
  %2029 = vmatpush1.bf16.msra.mxu0 %v1431
  %2030 = vmatprep.subr.bf16.mxu0 %v1434
  %2031 = vmatpush1.bf16.msra.mxu0 %v1433
  %2032 = vmatprep.subr.bf16.mxu0 %v1436
  %2033 = vmatpush1.bf16.msra.mxu0 %v1435
  %2034 = vmatprep.subr.bf16.mxu0 %v1438
  %2035 = vmatpush1.bf16.msra.mxu0 %v1437
  %2036 = vmatprep.subr.bf16.mxu0 %v1440
  %2037 = vmatpush1.bf16.msra.mxu0 %v1439
  %2038 = vmatprep.subr.bf16.mxu0 %v1442
  %2039 = vmatpush1.bf16.msra.mxu0 %v1441
  %2040 = vmatprep.subr.bf16.mxu0 %v1444
  %2041 = vmatpush1.bf16.msra.mxu0 %v1443
  %2042 = vmatprep.subr.bf16.mxu0 %v1446
  %2043 = vmatpush1.bf16.msra.mxu0 %v1445
  %2044 = vmatprep.subr.bf16.mxu0 %v1448
  %2045 = vmatpush1.bf16.msra.mxu0 %v1447
  %2046 = vmatprep.mubr.bf16.mxu0 %v452
  %2047 = vmatmul.mubr.bf16.gmra.mrb[0].mxu0 %v451
  %v2048 = vpop.f32.mrb[0].mxu0
  %v2049 = vadd.f32 %v1996, %v2048
  %v2050 = vpop.f32.mrb[0].mxu0
  %v2051 = vadd.f32 %v1998, %v2050
  %v2052 = vpop.f32.mrb[0].mxu0
  %v2053 = vadd.f32 %v2000, %v2052
  %v2054 = vpop.f32.mrb[0].mxu0
  %v2055 = vadd.f32 %v2002, %v2054
  %2056 = vmatprep.mubr.bf16.mxu0 %v470
  %2057 = vmatmul.mubr.bf16.gmra.mrb[0].mxu0 %v469
  %v2058 = vpop.f32.mrb[0].mxu0
  %v2059 = vadd.f32 %v2006, %v2058
  %v2060 = vpop.f32.mrb[0].mxu0
  %v2061 = vadd.f32 %v2008, %v2060
  %v2062 = vpop.f32.mrb[0].mxu0
  %v2063 = vadd.f32 %v2010, %v2062
  %v2064 = vpop.f32.mrb[0].mxu0
  %v2065 = vadd.f32 %v2012, %v2064
  %2066 = vdwg.mxu0
  %2067 = vmatprep.subr.bf16.mxu0 %v1450
  %2068 = vmatpush1.bf16.msra.mxu0 %v1449
  %2069 = vmatprep.subr.bf16.mxu0 %v1452
  %2070 = vmatpush1.bf16.msra.mxu0 %v1451
  %2071 = vmatprep.subr.bf16.mxu0 %v1454
  %2072 = vmatpush1.bf16.msra.mxu0 %v1453
  %2073 = vmatprep.subr.bf16.mxu0 %v1456
  %2074 = vmatpush1.bf16.msra.mxu0 %v1455
  %2075 = vmatprep.subr.bf16.mxu0 %v1458
  %2076 = vmatpush1.bf16.msra.mxu0 %v1457
  %2077 = vmatprep.subr.bf16.mxu0 %v1460
  %2078 = vmatpush1.bf16.msra.mxu0 %v1459
  %2079 = vmatprep.subr.bf16.mxu0 %v1462
  %2080 = vmatpush1.bf16.msra.mxu0 %v1461
  %2081 = vmatprep.subr.bf16.mxu0 %v1464
  %2082 = vmatpush1.bf16.msra.mxu0 %v1463
  %2083 = vmatprep.subr.bf16.mxu0 %v1466
  %2084 = vmatpush1.bf16.msra.mxu0 %v1465
  %2085 = vmatprep.subr.bf16.mxu0 %v1468
  %2086 = vmatpush1.bf16.msra.mxu0 %v1467
  %2087 = vmatprep.subr.bf16.mxu0 %v1470
  %2088 = vmatpush1.bf16.msra.mxu0 %v1469
  %2089 = vmatprep.subr.bf16.mxu0 %v1472
  %2090 = vmatpush1.bf16.msra.mxu0 %v1471
  %2091 = vmatprep.subr.bf16.mxu0 %v1474
  %2092 = vmatpush1.bf16.msra.mxu0 %v1473
  %2093 = vmatprep.subr.bf16.mxu0 %v1476
  %2094 = vmatpush1.bf16.msra.mxu0 %v1475
  %2095 = vmatprep.subr.bf16.mxu0 %v1478
  %2096 = vmatpush1.bf16.msra.mxu0 %v1477
  %2097 = vmatprep.subr.bf16.mxu0 %v1480
  %2098 = vmatpush1.bf16.msra.mxu0 %v1479
  %2099 = vmatprep.mubr.bf16.mxu0 %v454
  %2100 = vmatmul.mubr.bf16.gmra.mrb[0].mxu0 %v453
  %v2101 = vpop.f32.mrb[0].mxu0
  %v2102 = vadd.f32 %v2049, %v2101
  %v2103 = vpop.f32.mrb[0].mxu0
  %v2104 = vadd.f32 %v2051, %v2103
  %v2105 = vpop.f32.mrb[0].mxu0
  %v2106 = vadd.f32 %v2053, %v2105
  %v2107 = vpop.f32.mrb[0].mxu0
  %v2108 = vadd.f32 %v2055, %v2107
  %2109 = vmatprep.mubr.bf16.mxu0 %v472
  %2110 = vmatmul.mubr.bf16.gmra.mrb[0].mxu0 %v471
  %v2111 = vpop.f32.mrb[0].mxu0
  %v2112 = vadd.f32 %v2059, %v2111
  %v2113 = vpop.f32.mrb[0].mxu0
  %v2114 = vadd.f32 %v2061, %v2113
  %v2115 = vpop.f32.mrb[0].mxu0
  %v2116 = vadd.f32 %v2063, %v2115
  %v2117 = vpop.f32.mrb[0].mxu0
  %v2118 = vadd.f32 %v2065, %v2117
  %2119 = vdwg.mxu0
  %2120 = vmatprep.subr.bf16.mxu0 %v1482
  %2121 = vmatpush1.bf16.msra.mxu0 %v1481
  %2122 = vmatprep.subr.bf16.mxu0 %v1484
  %2123 = vmatpush1.bf16.msra.mxu0 %v1483
  %2124 = vmatprep.subr.bf16.mxu0 %v1486
  %2125 = vmatpush1.bf16.msra.mxu0 %v1485
  %2126 = vmatprep.subr.bf16.mxu0 %v1488
  %2127 = vmatpush1.bf16.msra.mxu0 %v1487
  %2128 = vmatprep.subr.bf16.mxu0 %v1490
  %2129 = vmatpush1.bf16.msra.mxu0 %v1489
  %2130 = vmatprep.subr.bf16.mxu0 %v1492
  %2131 = vmatpush1.bf16.msra.mxu0 %v1491
  %2132 = vmatprep.subr.bf16.mxu0 %v1494
  %2133 = vmatpush1.bf16.msra.mxu0 %v1493
  %2134 = vmatprep.subr.bf16.mxu0 %v1496
  %2135 = vmatpush1.bf16.msra.mxu0 %v1495
  %2136 = vmatprep.subr.bf16.mxu0 %v1498
  %2137 = vmatpush1.bf16.msra.mxu0 %v1497
  %2138 = vmatprep.subr.bf16.mxu0 %v1500
  %2139 = vmatpush1.bf16.msra.mxu0 %v1499
  %2140 = vmatprep.subr.bf16.mxu0 %v1502
  %2141 = vmatpush1.bf16.msra.mxu0 %v1501
  %2142 = vmatprep.subr.bf16.mxu0 %v1504
  %2143 = vmatpush1.bf16.msra.mxu0 %v1503
  %2144 = vmatprep.subr.bf16.mxu0 %v1506
  %2145 = vmatpush1.bf16.msra.mxu0 %v1505
  %2146 = vmatprep.subr.bf16.mxu0 %v1508
  %2147 = vmatpush1.bf16.msra.mxu0 %v1507
  %2148 = vmatprep.subr.bf16.mxu0 %v1510
  %2149 = vmatpush1.bf16.msra.mxu0 %v1509
  %2150 = vmatprep.subr.bf16.mxu0 %v1512
  %2151 = vmatpush1.bf16.msra.mxu0 %v1511
  %2152 = vmatprep.mubr.bf16.mxu0 %v456
  %2153 = vmatmul.mubr.bf16.gmra.mrb[0].mxu0 %v455
  %v2154 = vpop.f32.mrb[0].mxu0
  %v2155 = vadd.f32 %v2102, %v2154
  %v2156 = vpop.f32.mrb[0].mxu0
  %v2157 = vadd.f32 %v2104, %v2156
  %v2158 = vpop.f32.mrb[0].mxu0
  %v2159 = vadd.f32 %v2106, %v2158
  %v2160 = vpop.f32.mrb[0].mxu0
  %v2161 = vadd.f32 %v2108, %v2160
  %2162 = vmatprep.mubr.bf16.mxu0 %v474
  %2163 = vmatmul.mubr.bf16.gmra.mrb[0].mxu0 %v473
  %v2164 = vpop.f32.mrb[0].mxu0
  %v2165 = vadd.f32 %v2112, %v2164
  %v2166 = vpop.f32.mrb[0].mxu0
  %v2167 = vadd.f32 %v2114, %v2166
  %v2168 = vpop.f32.mrb[0].mxu0
  %v2169 = vadd.f32 %v2116, %v2168
  %v2170 = vpop.f32.mrb[0].mxu0
  %v2171 = vadd.f32 %v2118, %v2170
  %2172 = vdwg.mxu0
  %2173 = vmatprep.subr.bf16.mxu0 %v1514
  %2174 = vmatpush1.bf16.msra.mxu0 %v1513
  %2175 = vmatprep.subr.bf16.mxu0 %v1516
  %2176 = vmatpush1.bf16.msra.mxu0 %v1515
  %2177 = vmatprep.subr.bf16.mxu0 %v1518
  %2178 = vmatpush1.bf16.msra.mxu0 %v1517
  %2179 = vmatprep.subr.bf16.mxu0 %v1520
  %2180 = vmatpush1.bf16.msra.mxu0 %v1519
  %2181 = vmatprep.subr.bf16.mxu0 %v1522
  %2182 = vmatpush1.bf16.msra.mxu0 %v1521
  %2183 = vmatprep.subr.bf16.mxu0 %v1524
  %2184 = vmatpush1.bf16.msra.mxu0 %v1523
  %2185 = vmatprep.subr.bf16.mxu0 %v1526
  %2186 = vmatpush1.bf16.msra.mxu0 %v1525
  %2187 = vmatprep.subr.bf16.mxu0 %v1528
  %2188 = vmatpush1.bf16.msra.mxu0 %v1527
  %2189 = vmatprep.subr.bf16.mxu0 %v1530
  %2190 = vmatpush1.bf16.msra.mxu0 %v1529
  %2191 = vmatprep.subr.bf16.mxu0 %v1532
  %2192 = vmatpush1.bf16.msra.mxu0 %v1531
  %2193 = vmatprep.subr.bf16.mxu0 %v1534
  %2194 = vmatpush1.bf16.msra.mxu0 %v1533
  %2195 = vmatprep.subr.bf16.mxu0 %v1536
  %2196 = vmatpush1.bf16.msra.mxu0 %v1535
  %2197 = vmatprep.subr.bf16.mxu0 %v1538
  %2198 = vmatpush1.bf16.msra.mxu0 %v1537
  %2199 = vmatprep.subr.bf16.mxu0 %v1540
  %2200 = vmatpush1.bf16.msra.mxu0 %v1539
  %2201 = vmatprep.subr.bf16.mxu0 %v1542
  %2202 = vmatpush1.bf16.msra.mxu0 %v1541
  %2203 = vmatprep.subr.bf16.mxu0 %v1544
  %2204 = vmatpush1.bf16.msra.mxu0 %v1543
  %2205 = vmatprep.mubr.bf16.mxu0 %v458
  %2206 = vmatmul.mubr.bf16.gmra.mrb[0].mxu0 %v457
  %v2207 = vpop.f32.mrb[0].mxu0
  %v2208 = vadd.f32 %v2155, %v2207
  %v2209 = vpop.f32.mrb[0].mxu0
  %v2210 = vadd.f32 %v2157, %v2209
  %v2211 = vpop.f32.mrb[0].mxu0
  %v2212 = vadd.f32 %v2159, %v2211
  %v2213 = vpop.f32.mrb[0].mxu0
  %v2214 = vadd.f32 %v2161, %v2213
  %2215 = vmatprep.mubr.bf16.mxu0 %v476
  %2216 = vmatmul.mubr.bf16.gmra.mrb[0].mxu0 %v475
  %v2217 = vpop.f32.mrb[0].mxu0
  %v2218 = vadd.f32 %v2165, %v2217
  %v2219 = vpop.f32.mrb[0].mxu0
  %v2220 = vadd.f32 %v2167, %v2219
  %v2221 = vpop.f32.mrb[0].mxu0
  %v2222 = vadd.f32 %v2169, %v2221
  %v2223 = vpop.f32.mrb[0].mxu0
  %v2224 = vadd.f32 %v2171, %v2223
  %2225 = vdwg.mxu0
  %2226 = vmatprep.subr.bf16.mxu0 %v1546
  %2227 = vmatpush1.bf16.msra.mxu0 %v1545
  %2228 = vmatprep.subr.bf16.mxu0 %v1548
  %2229 = vmatpush1.bf16.msra.mxu0 %v1547
  %2230 = vmatprep.subr.bf16.mxu0 %v1550
  %2231 = vmatpush1.bf16.msra.mxu0 %v1549
  %2232 = vmatprep.subr.bf16.mxu0 %v1552
  %2233 = vmatpush1.bf16.msra.mxu0 %v1551
  %2234 = vmatprep.subr.bf16.mxu0 %v1554
  %2235 = vmatpush1.bf16.msra.mxu0 %v1553
  %2236 = vmatprep.subr.bf16.mxu0 %v1556
  %2237 = vmatpush1.bf16.msra.mxu0 %v1555
  %2238 = vmatprep.subr.bf16.mxu0 %v1558
  %2239 = vmatpush1.bf16.msra.mxu0 %v1557
  %2240 = vmatprep.subr.bf16.mxu0 %v1560
  %2241 = vmatpush1.bf16.msra.mxu0 %v1559
  %2242 = vmatprep.subr.bf16.mxu0 %v1562
  %2243 = vmatpush1.bf16.msra.mxu0 %v1561
  %2244 = vmatprep.subr.bf16.mxu0 %v1564
  %2245 = vmatpush1.bf16.msra.mxu0 %v1563
  %2246 = vmatprep.subr.bf16.mxu0 %v1566
  %2247 = vmatpush1.bf16.msra.mxu0 %v1565
  %2248 = vmatprep.subr.bf16.mxu0 %v1568
  %2249 = vmatpush1.bf16.msra.mxu0 %v1567
  %2250 = vmatprep.subr.bf16.mxu0 %v1570
  %2251 = vmatpush1.bf16.msra.mxu0 %v1569
  %2252 = vmatprep.subr.bf16.mxu0 %v1572
  %2253 = vmatpush1.bf16.msra.mxu0 %v1571
  %2254 = vmatprep.subr.bf16.mxu0 %v1574
  %2255 = vmatpush1.bf16.msra.mxu0 %v1573
  %2256 = vmatprep.subr.bf16.mxu0 %v1576
  %2257 = vmatpush1.bf16.msra.mxu0 %v1575
  %2258 = vmatprep.mubr.bf16.mxu0 %v460
  %2259 = vmatmul.mubr.bf16.gmra.mrb[0].mxu0 %v459
  %v2260 = vpop.f32.mrb[0].mxu0
  %v2261 = vadd.f32 %v2208, %v2260
  %v2262 = vpop.f32.mrb[0].mxu0
  %v2263 = vadd.f32 %v2210, %v2262
  %v2264 = vpop.f32.mrb[0].mxu0
  %v2265 = vadd.f32 %v2212, %v2264
  %v2266 = vpop.f32.mrb[0].mxu0
  %v2267 = vadd.f32 %v2214, %v2266
  %2268 = vmatprep.mubr.bf16.mxu0 %v478
  %2269 = vmatmul.mubr.bf16.gmra.mrb[0].mxu0 %v477
  %v2270 = vpop.f32.mrb[0].mxu0
  %v2271 = vadd.f32 %v2218, %v2270
  %v2272 = vpop.f32.mrb[0].mxu0
  %v2273 = vadd.f32 %v2220, %v2272
  %v2274 = vpop.f32.mrb[0].mxu0
  %v2275 = vadd.f32 %v2222, %v2274
  %v2276 = vpop.f32.mrb[0].mxu0
  %v2277 = vadd.f32 %v2224, %v2276
  %2278 = vdwg.mxu0
  %2279 = vmatprep.subr.bf16.mxu0 %v1578
  %2280 = vmatpush1.bf16.msra.mxu0 %v1577
  %2281 = vmatprep.subr.bf16.mxu0 %v1580
  %2282 = vmatpush1.bf16.msra.mxu0 %v1579
  %2283 = vmatprep.subr.bf16.mxu0 %v1582
  %2284 = vmatpush1.bf16.msra.mxu0 %v1581
  %2285 = vmatprep.subr.bf16.mxu0 %v1584
  %2286 = vmatpush1.bf16.msra.mxu0 %v1583
  %2287 = vmatprep.subr.bf16.mxu0 %v1586
  %2288 = vmatpush1.bf16.msra.mxu0 %v1585
  %2289 = vmatprep.subr.bf16.mxu0 %v1588
  %2290 = vmatpush1.bf16.msra.mxu0 %v1587
  %2291 = vmatprep.subr.bf16.mxu0 %v1590
  %2292 = vmatpush1.bf16.msra.mxu0 %v1589
  %2293 = vmatprep.subr.bf16.mxu0 %v1592
  %2294 = vmatpush1.bf16.msra.mxu0 %v1591
  %2295 = vmatprep.subr.bf16.mxu0 %v1594
  %2296 = vmatpush1.bf16.msra.mxu0 %v1593
  %2297 = vmatprep.subr.bf16.mxu0 %v1596
  %2298 = vmatpush1.bf16.msra.mxu0 %v1595
  %2299 = vmatprep.subr.bf16.mxu0 %v1598
  %2300 = vmatpush1.bf16.msra.mxu0 %v1597
  %2301 = vmatprep.subr.bf16.mxu0 %v1600
  %2302 = vmatpush1.bf16.msra.mxu0 %v1599
  %2303 = vmatprep.subr.bf16.mxu0 %v1602
  %2304 = vmatpush1.bf16.msra.mxu0 %v1601
  %2305 = vmatprep.subr.bf16.mxu0 %v1604
  %2306 = vmatpush1.bf16.msra.mxu0 %v1603
  %2307 = vmatprep.subr.bf16.mxu0 %v1606
  %2308 = vmatpush1.bf16.msra.mxu0 %v1605
  %2309 = vmatprep.subr.bf16.mxu0 %v1608
  %2310 = vmatpush1.bf16.msra.mxu0 %v1607
  %2311 = vmatprep.mubr.bf16.mxu0 %v462
  %2312 = vmatmul.mubr.bf16.gmra.mrb[0].mxu0 %v461
  %v2313 = vpop.f32.mrb[0].mxu0
  %v2314 = vadd.f32 %v2261, %v2313
  %v2315 = vpop.f32.mrb[0].mxu0
  %v2316 = vadd.f32 %v2263, %v2315
  %v2317 = vpop.f32.mrb[0].mxu0
  %v2318 = vadd.f32 %v2265, %v2317
  %v2319 = vpop.f32.mrb[0].mxu0
  %v2320 = vadd.f32 %v2267, %v2319
  %2321 = vmatprep.mubr.bf16.mxu0 %v480
  %2322 = vmatmul.mubr.bf16.gmra.mrb[0].mxu0 %v479
  %v2323 = vpop.f32.mrb[0].mxu0
  %v2324 = vadd.f32 %v2271, %v2323
  %v2325 = vpop.f32.mrb[0].mxu0
  %v2326 = vadd.f32 %v2273, %v2325
  %v2327 = vpop.f32.mrb[0].mxu0
  %v2328 = vadd.f32 %v2275, %v2327
  %v2329 = vpop.f32.mrb[0].mxu0
  %v2330 = vadd.f32 %v2277, %v2329
  %2331 = vdwg.mxu0
  %2332 = vmatprep.subr.bf16.mxu0 %v1610
  %2333 = vmatpush1.bf16.msra.mxu0 %v1609
  %2334 = vmatprep.subr.bf16.mxu0 %v1612
  %2335 = vmatpush1.bf16.msra.mxu0 %v1611
  %2336 = vmatprep.subr.bf16.mxu0 %v1614
  %2337 = vmatpush1.bf16.msra.mxu0 %v1613
  %2338 = vmatprep.subr.bf16.mxu0 %v1616
  %2339 = vmatpush1.bf16.msra.mxu0 %v1615
  %2340 = vmatprep.subr.bf16.mxu0 %v1618
  %2341 = vmatpush1.bf16.msra.mxu0 %v1617
  %2342 = vmatprep.subr.bf16.mxu0 %v1620
  %2343 = vmatpush1.bf16.msra.mxu0 %v1619
  %2344 = vmatprep.subr.bf16.mxu0 %v1622
  %2345 = vmatpush1.bf16.msra.mxu0 %v1621
  %2346 = vmatprep.subr.bf16.mxu0 %v1624
  %2347 = vmatpush1.bf16.msra.mxu0 %v1623
  %2348 = vmatprep.subr.bf16.mxu0 %v1626
  %2349 = vmatpush1.bf16.msra.mxu0 %v1625
  %2350 = vmatprep.subr.bf16.mxu0 %v1628
  %2351 = vmatpush1.bf16.msra.mxu0 %v1627
  %2352 = vmatprep.subr.bf16.mxu0 %v1630
  %2353 = vmatpush1.bf16.msra.mxu0 %v1629
  %2354 = vmatprep.subr.bf16.mxu0 %v1632
  %2355 = vmatpush1.bf16.msra.mxu0 %v1631
  %2356 = vmatprep.subr.bf16.mxu0 %v1634
  %2357 = vmatpush1.bf16.msra.mxu0 %v1633
  %2358 = vmatprep.subr.bf16.mxu0 %v1636
  %2359 = vmatpush1.bf16.msra.mxu0 %v1635
  %2360 = vmatprep.subr.bf16.mxu0 %v1638
  %2361 = vmatpush1.bf16.msra.mxu0 %v1637
  %2362 = vmatprep.subr.bf16.mxu0 %v1640
  %2363 = vmatpush1.bf16.msra.mxu0 %v1639
  %2364 = vmatprep.mubr.bf16.mxu0 %v464
  %2365 = vmatmul.mubr.bf16.gmra.mrb[0].mxu0 %v463
  %v2366 = vpop.f32.mrb[0].mxu0
  %v2367 = vadd.f32 %v2314, %v2366
  %v2368 = vpop.f32.mrb[0].mxu0
  %v2369 = vadd.f32 %v2316, %v2368
  %v2370 = vpop.f32.mrb[0].mxu0
  %v2371 = vadd.f32 %v2318, %v2370
  %v2372 = vpop.f32.mrb[0].mxu0
  %v2373 = vadd.f32 %v2320, %v2372
  %2374 = vmatprep.mubr.bf16.mxu0 %v482
  %2375 = vmatmul.mubr.bf16.gmra.mrb[0].mxu0 %v481
  %v2376 = vpop.f32.mrb[0].mxu0
  %v2377 = vadd.f32 %v2324, %v2376
  %v2378 = vpop.f32.mrb[0].mxu0
  %v2379 = vadd.f32 %v2326, %v2378
  %v2380 = vpop.f32.mrb[0].mxu0
  %v2381 = vadd.f32 %v2328, %v2380
  %v2382 = vpop.f32.mrb[0].mxu0
  %v2383 = vadd.f32 %v2330, %v2382
  %2384 = vdwg.mxu0
  %2385 = vmatprep.subr.bf16.mxu0 %v1642
  %2386 = vmatpush1.bf16.msra.mxu0 %v1641
  %2387 = vmatprep.subr.bf16.mxu0 %v1644
  %2388 = vmatpush1.bf16.msra.mxu0 %v1643
  %2389 = vmatprep.subr.bf16.mxu0 %v1646
  %2390 = vmatpush1.bf16.msra.mxu0 %v1645
  %2391 = vmatprep.subr.bf16.mxu0 %v1648
  %2392 = vmatpush1.bf16.msra.mxu0 %v1647
  %2393 = vmatprep.subr.bf16.mxu0 %v1650
  %2394 = vmatpush1.bf16.msra.mxu0 %v1649
  %2395 = vmatprep.subr.bf16.mxu0 %v1652
  %2396 = vmatpush1.bf16.msra.mxu0 %v1651
  %2397 = vmatprep.subr.bf16.mxu0 %v1654
  %2398 = vmatpush1.bf16.msra.mxu0 %v1653
  %2399 = vmatprep.subr.bf16.mxu0 %v1656
  %2400 = vmatpush1.bf16.msra.mxu0 %v1655
  %2401 = vmatprep.subr.bf16.mxu0 %v1658
  %2402 = vmatpush1.bf16.msra.mxu0 %v1657
  %2403 = vmatprep.subr.bf16.mxu0 %v1660
  %2404 = vmatpush1.bf16.msra.mxu0 %v1659
  %2405 = vmatprep.subr.bf16.mxu0 %v1662
  %2406 = vmatpush1.bf16.msra.mxu0 %v1661
  %2407 = vmatprep.subr.bf16.mxu0 %v1664
  %2408 = vmatpush1.bf16.msra.mxu0 %v1663
  %2409 = vmatprep.subr.bf16.mxu0 %v1666
  %2410 = vmatpush1.bf16.msra.mxu0 %v1665
  %2411 = vmatprep.subr.bf16.mxu0 %v1668
  %2412 = vmatpush1.bf16.msra.mxu0 %v1667
  %2413 = vmatprep.subr.bf16.mxu0 %v1670
  %2414 = vmatpush1.bf16.msra.mxu0 %v1669
  %2415 = vmatprep.subr.bf16.mxu0 %v1672
  %2416 = vmatpush1.bf16.msra.mxu0 %v1671
  %2417 = vmatprep.mubr.bf16.mxu0 %v466
  %2418 = vmatmul.mubr.bf16.gmra.mrb[0].mxu0 %v465
  %v2419 = vpop.f32.mrb[0].mxu0
  %v2420 = vadd.f32 %v2367, %v2419
  %v2421 = vpop.f32.mrb[0].mxu0
  %v2422 = vadd.f32 %v2369, %v2421
  %v2423 = vpop.f32.mrb[0].mxu0
  %v2424 = vadd.f32 %v2371, %v2423
  %v2425 = vpop.f32.mrb[0].mxu0
  %v2426 = vadd.f32 %v2373, %v2425
  %2427 = vmatprep.mubr.bf16.mxu0 %v484
  %2428 = vmatmul.mubr.bf16.gmra.mrb[0].mxu0 %v483
  %v2429 = vpop.f32.mrb[0].mxu0
  %v2430 = vadd.f32 %v2377, %v2429
  %v2431 = vpop.f32.mrb[0].mxu0
  %v2432 = vadd.f32 %v2379, %v2431
  %v2433 = vpop.f32.mrb[0].mxu0
  %v2434 = vadd.f32 %v2381, %v2433
  %v2435 = vpop.f32.mrb[0].mxu0
  %v2436 = vadd.f32 %v2383, %v2435
  %2437 = vdwg.mxu0
  %v2438 = vld [vmem:[%s2] sm:$0x3]
  %v2440 = vlaneseq
  %v2441 = vshrl.u32 %v2440, 7
  %v2442 = vsub.s32 0, %v2441
  %v2443 = vrot.slane %v2438, %v2442
  %v2444 = vlaneseq
  %v2445 = vshrl.u32 %v2444, 7
  %v2446 = vsub.s32 1, %v2445
  %v2447 = vrot.slane %v2438, %v2446
  %v2450 = vmul.f32 %v2420, %v2443
  %v2451 = vmul.f32 %v2422, %v2447
  %v2452 = vmul.f32 %v2424, %v2443
  %v2453 = vmul.f32 %v2426, %v2447
  %v2454 = vmul.f32 %v2430, %v2443
  %v2455 = vmul.f32 %v2432, %v2447
  %v2456 = vmul.f32 %v2434, %v2443
  %v2457 = vmul.f32 %v2436, %v2447
  %v2458 = vld [vmem:[%s3] sm:$0x3]
  %v2460 = vlaneseq
  %v2461 = vshrl.u32 %v2460, 7
  %v2462 = vsub.s32 0, %v2461
  %v2463 = vrot.slane %v2458, %v2462
  %v2464 = vlaneseq
  %v2465 = vshrl.u32 %v2464, 7
  %v2466 = vsub.s32 1, %v2465
  %v2467 = vrot.slane %v2458, %v2466
  %v2470 = vadd.f32 %v2450, %v2463
  %v2471 = vadd.f32 %v2451, %v2467
  %v2472 = vadd.f32 %v2452, %v2463
  %v2473 = vadd.f32 %v2453, %v2467
  %v2474 = vadd.f32 %v2454, %v2463
  %v2475 = vadd.f32 %v2455, %v2467
  %v2476 = vadd.f32 %v2456, %v2463
  %v2477 = vadd.f32 %v2457, %v2467
  %v2478 = vmax.f32 %v2470, 0.0
  %v2479 = vmax.f32 %v2471, 0.0
  %v2480 = vmax.f32 %v2472, 0.0
  %v2481 = vmax.f32 %v2473, 0.0
  %v2482 = vmax.f32 %v2474, 0.0
  %v2483 = vmax.f32 %v2475, 0.0
  %v2484 = vmax.f32 %v2476, 0.0
  %v2485 = vmax.f32 %v2477, 0.0
  %v2486 = vpack.c.bf16 %v2480, %v2478
  %v2487 = vpack.c.bf16 %v2481, %v2479
  %v2488 = vpack.c.bf16 %v2484, %v2482
  %v2489 = vpack.c.bf16 %v2485, %v2483
  %v2494 = vunpack.c.l.b16 %v2486
  %v2495 = vunpack.c.l.b16 %v2487
  %v2496 = vunpack.c.h.b16 %v2486
  %v2497 = vunpack.c.h.b16 %v2487
  %v2498 = vunpack.c.l.b16 %v2488
  %v2499 = vunpack.c.l.b16 %v2489
  %v2500 = vunpack.c.h.b16 %v2488
  %v2501 = vunpack.c.h.b16 %v2489
  %v2502 = vpack.c.b16 %v2495, %v2494
  %v2503 = vpack.c.b16 %v2497, %v2496
  %v2504 = vpack.c.b16 %v2499, %v2498
  %v2505 = vpack.c.b16 %v2501, %v2500
  %2510 = vst [vmem:[%s4] sm:$0xff] %v2502
  %2511 = vst [vmem:[%s4 + $0x8] sm:$0xff] %v2503
  %2512 = vst [vmem:[%s4 + $0x10] sm:$0xff] %v2504
  %2513 = vst [vmem:[%s4 + $0x18] sm:$0xff] %v2505
  // Predicated region
  $region18: #{decoder_forward.12} parent=0 // pred_check
    _
  $region19: #{decoder_forward.12} parent=0 // pred_check_branch
    %2515 = sbr.rel (0) target = $region21
  $region20: #{decoder_forward.12} parent=0 // pred_region
    _
  $region21: #{decoder_forward.12} parent=0 // pred_fallthru
    _
  // Predicated region
  $region22: #{decoder_forward.12} parent=0 // pred_check
    _
  $region23: #{decoder_forward.12} parent=0 // pred_check_branch
    %2517 = sbr.rel (0) target = $region25
  $region24: #{decoder_forward.12} parent=0 // pred_region
    _
  $region25: #{decoder_forward.12} parent=0 // pred_fallthru
    _

// kernel: decoder_forward.15
$region0: #{decoder_forward.15}
  #allocation0 [shape = 'u32[]', space=smem, size = 0x4, offset = 0x4, fixed_abs, tag = 'smem constant byte address 0x4 - core index']
  #allocation1 [shape = 'u32[144,128]{1,0:T(1,128)}', space=vmem, size = 0x12000, scoped, tag = 'internal scratch']
  %s0 = inlined_call_operand.vmem [shape: bf16[4,128,1024], index: 0, kind: input, shape index: {}]
  %s1 = inlined_call_operand.vmem [shape: bf16[4,1024,128], index: 1, kind: input, shape index: {}]
  %s2 = inlined_call_operand.vmem [shape: f32[1,128], index: 2, kind: input, shape index: {}]
  %s3 = inlined_call_operand.vmem [shape: f32[1,128], index: 3, kind: input, shape index: {}]
  %s4 = inlined_call_operand.vmem [shape: bf16[4,128,128], index: 4, kind: output, shape index: {}]
  %s5 = sld [smem:[#allocation0]]
  $region49: #{decoder_forward.15} parent=0
    _
  %s7 = ssub.s32 1, %s5
  %s8 = scalar_select 0, %s7, %s5
  loop: start=0, step=1, limit=6
  $region2: #{decoder_forward.15} parent=0 // loop_pre_header
    _
  $region3: #{decoder_forward.15} parent=0 // loop_header
    %s10 = sphi 0, %s14
    %p11 = scmp.ge.s32.totalorder %s10, 6
    %s17 = sphi 0, %s29
    %s18 = sphi 0, %s25
    %s19 = sphi 0, %s17
    %s20 = sphi 0, %s18
    %s21 = sphi 0, %s19
    %s22 = sphi 0, %s20
    %s34 = sphi 0, %s36
    %s37 = sphi 0, %s34
    %s38 = sphi 0, %s37
    %s54 = sphi 0, %s38
    %s60 = sphi 0, %s62
    %s63 = sphi 0, %s60
    %s64 = sphi 0, %s63
    %s80 = sphi 0, %s64
    %s84 = sphi 0, %s84
    %s86 = sphi 0, %s84
    %s87 = sphi 0, %s86
    %s101 = sphi 0, %s87
    %s105 = sphi 0, %s105
    %s107 = sphi 0, %s105
    %s108 = sphi 0, %s107
    %s122 = sphi 0, %s108
    %s130 = sphi 0, %s132
    %s133 = sphi 0, %s130
    %s134 = sphi 0, %s133
    %s150 = sphi 0, %s134
  $region4: #{decoder_forward.15} parent=0 // loop_header_branch
    %13 = sbr.rel (%p11) target = $region8
  $region5: #{decoder_forward.15} parent=0 // loop_body
    %s15 = ssub.s32 %s10, 1
    %s16 = ssub.s32 %s10, 2
    %s23 = sadd.s32 1, %s18
    %p24 = scmp.ge.s32.totalorder %s23, 1
    %s25 = scalar_select %p24, 0, %s23
    %s26 = sadd.s32 1, %s17
    %s27 = scalar_select %p24, %s26, %s17
    %p28 = scmp.ge.s32.totalorder %s27, 4
    %s29 = scalar_select %p28, 0, %s27
    %s30 = ssub.s32 %s17, %s29
    %s31 = ssub.s32 %s18, %s25
    %s32 = sor.u32 %s30, %s31
    %p33 = scmp.eq.s32.totalorder %s32, 0
    %s35 = sadd.s32 %s34, 1
    %s36 = scalar_select %p33, %s34, %s35
    %p39 = pneg %p33
    %p40 = scmp.eq.s32.totalorder %s10, 3
    %p41 = por %p39, %p40
    %p42 = scmp.ne.s32.totalorder %s34, %s37
    %p43 = scmp.eq.s32.totalorder %s10, 0
    %p44 = por %p42, %p43
    %p45 = scmp.ne.s32.totalorder %s34, %s37
    %p46 = scmp.eq.s32.totalorder %s15, 3
    %p47 = por %p45, %p46
    %p48 = scmp.ne.s32.totalorder %s37, %s38
    %p49 = scmp.eq.s32.totalorder %s15, 0
    %p50 = por %p48, %p49
    %p51 = scmp.ne.s32.totalorder %s37, %s38
    %p52 = scmp.eq.s32.totalorder %s16, 3
    %p53 = por %p51, %p52
    %p55 = scmp.ne.s32.totalorder %s38, %s54
    %p56 = scmp.eq.s32.totalorder %s16, 0
    %p57 = por %p55, %p56
    %s58 = ssub.s32 %s17, %s29
    %p59 = scmp.eq.s32.totalorder %s58, 0
    %s61 = sadd.s32 %s60, 1
    %s62 = scalar_select %p59, %s60, %s61
    %p65 = pneg %p59
    %p66 = scmp.eq.s32.totalorder %s10, 3
    %p67 = por %p65, %p66
    %p68 = scmp.ne.s32.totalorder %s60, %s63
    %p69 = scmp.eq.s32.totalorder %s10, 0
    %p70 = por %p68, %p69
    %p71 = scmp.ne.s32.totalorder %s60, %s63
    %p72 = scmp.eq.s32.totalorder %s15, 3
    %p73 = por %p71, %p72
    %p74 = scmp.ne.s32.totalorder %s63, %s64
    %p75 = scmp.eq.s32.totalorder %s15, 0
    %p76 = por %p74, %p75
    %p77 = scmp.ne.s32.totalorder %s63, %s64
    %p78 = scmp.eq.s32.totalorder %s16, 3
    %p79 = por %p77, %p78
    %p81 = scmp.ne.s32.totalorder %s64, %s80
    %p82 = scmp.eq.s32.totalorder %s16, 0
    %p83 = por %p81, %p82
    %s85 = sadd.s32 %s84, 1
    %p88 = scmp.eq.s32.totalorder %s10, 3
    %p89 = scmp.ne.s32.totalorder %s84, %s86
    %p90 = scmp.eq.s32.totalorder %s10, 0
    %p91 = por %p89, %p90
    %p92 = scmp.ne.s32.totalorder %s84, %s86
    %p93 = scmp.eq.s32.totalorder %s15, 3
    %p94 = por %p92, %p93
    %p95 = scmp.ne.s32.totalorder %s86, %s87
    %p96 = scmp.eq.s32.totalorder %s15, 0
    %p97 = por %p95, %p96
    %p98 = scmp.ne.s32.totalorder %s86, %s87
    %p99 = scmp.eq.s32.totalorder %s16, 3
    %p100 = por %p98, %p99
    %p102 = scmp.ne.s32.totalorder %s87, %s101
    %p103 = scmp.eq.s32.totalorder %s16, 0
    %p104 = por %p102, %p103
    %s106 = sadd.s32 %s105, 1
    %p109 = scmp.eq.s32.totalorder %s10, 3
    %p110 = scmp.ne.s32.totalorder %s105, %s107
    %p111 = scmp.eq.s32.totalorder %s10, 0
    %p112 = por %p110, %p111
    %p113 = scmp.ne.s32.totalorder %s105, %s107
    %p114 = scmp.eq.s32.totalorder %s15, 3
    %p115 = por %p113, %p114
    %p116 = scmp.ne.s32.totalorder %s107, %s108
    %p117 = scmp.eq.s32.totalorder %s15, 0
    %p118 = por %p116, %p117
    %p119 = scmp.ne.s32.totalorder %s107, %s108
    %p120 = scmp.eq.s32.totalorder %s16, 3
    %p121 = por %p119, %p120
    %p123 = scmp.ne.s32.totalorder %s108, %s122
    %p124 = scmp.eq.s32.totalorder %s16, 0
    %p125 = por %p123, %p124
    %s126 = ssub.s32 %s17, %s29
    %s127 = ssub.s32 %s18, %s25
    %s128 = sor.u32 %s126, %s127
    %p129 = scmp.eq.s32.totalorder %s128, 0
    %s131 = sadd.s32 %s130, 1
    %s132 = scalar_select %p129, %s130, %s131
    %p135 = pneg %p129
    %p136 = scmp.eq.s32.totalorder %s10, 3
    %p137 = por %p135, %p136
    %p138 = scmp.ne.s32.totalorder %s130, %s133
    %p139 = scmp.eq.s32.totalorder %s10, 0
    %p140 = por %p138, %p139
    %p141 = scmp.ne.s32.totalorder %s130, %s133
    %p142 = scmp.eq.s32.totalorder %s15, 3
    %p143 = por %p141, %p142
    %p144 = scmp.ne.s32.totalorder %s133, %s134
    %p145 = scmp.eq.s32.totalorder %s15, 0
    %p146 = por %p144, %p145
    %p147 = scmp.ne.s32.totalorder %s133, %s134
    %p148 = scmp.eq.s32.totalorder %s16, 3
    %p149 = por %p147, %p148
    %p151 = scmp.ne.s32.totalorder %s134, %s150
    %p152 = scmp.eq.s32.totalorder %s16, 0
    %p153 = por %p151, %p152
    %p154 = scmp.le.s32.totalorder 1, %s10
    %p155 = scmp.lt.s32.totalorder %s10, 5
    %p156 = pnand %p154, %p155
    %p157 = pneg %p156
    // Predicated region
    $region9: #{decoder_forward.15} parent=5 // pred_check
      _
    $region10: #{decoder_forward.15} parent=5 // pred_check_branch
      %159 = sbr.rel (%p156) target = $region12
    $region11: #{decoder_forward.15} parent=5 // pred_region
      %s160 = ssub.s32 %s10, 1
      // Predicated region
      $region13: #{decoder_forward.15} parent=11 // pred_check
        %p161 = pneg %p97
      $region14: #{decoder_forward.15} parent=11 // pred_check_branch
        %163 = sbr.rel (%p161) target = $region16
      $region15: #{decoder_forward.15} parent=11 // pred_region
        _
      $region16: #{decoder_forward.15} parent=11 // pred_fallthru
        _
      // Predicated region
      $region17: #{decoder_forward.15} parent=11 // pred_check
        %p164 = pneg %p118
      $region18: #{decoder_forward.15} parent=11 // pred_check_branch
        %166 = sbr.rel (%p164) target = $region20
      $region19: #{decoder_forward.15} parent=11 // pred_region
        _
      $region20: #{decoder_forward.15} parent=11 // pred_fallthru
        _
    $region12: #{decoder_forward.15} parent=5 // pred_fallthru
      _
    %p167 = scmp.lt.s32.totalorder %s10, 4
    // Predicated region
    $region21: #{decoder_forward.15} parent=5 // pred_check
      %p168 = pneg %p167
    $region22: #{decoder_forward.15} parent=5 // pred_check_branch
      %170 = sbr.rel (%p168) target = $region24
    $region23: #{decoder_forward.15} parent=5 // pred_region
      // Predicated region
      $region25: #{decoder_forward.15} parent=23 // pred_check
        %p171 = pneg %p44
      $region26: #{decoder_forward.15} parent=23 // pred_check_branch
        %173 = sbr.rel (%p171) target = $region28
      $region27: #{decoder_forward.15} parent=23 // pred_region
        %s174 = smul.u32 16, %s18
        %p175 = scmp.lt.s32.totalorder %s17, 3
        %s176 = scalar_select %p175, %s17, 3
        %p177 = scmp.lt.s32.totalorder %s174, 15
        %s178 = scalar_select %p177, %s174, 15
        %s179 = smul.addr %s178, 8
        %s180 = smul.addr %s176, 128
        %s181 = sadd.s32 %s179, %s180
        %s182 = smul.addr %s181, 4
        %s183 = scalar_lea.vmem %s0, %s182
        %s184 = smul.u32 16, %s18
      $region28: #{decoder_forward.15} parent=23 // pred_fallthru
        _
      // Predicated region
      $region29: #{decoder_forward.15} parent=23 // pred_check
        %p185 = pneg %p70
      $region30: #{decoder_forward.15} parent=23 // pred_check_branch
        %187 = sbr.rel (%p185) target = $region32
      $region31: #{decoder_forward.15} parent=23 // pred_region
        %p188 = scmp.lt.s32.totalorder %s17, 3
        %s189 = scalar_select %p188, %s17, 3
        %s190 = smul.addr %s189, 128
        %s191 = smul.addr %s190, 4
        %s192 = scalar_lea.vmem %s1, %s191
      $region32: #{decoder_forward.15} parent=23 // pred_fallthru
        _
    $region24: #{decoder_forward.15} parent=5 // pred_fallthru
      _
    %p193 = scmp.le.s32.totalorder 1, %s10
    %p194 = scmp.lt.s32.totalorder %s10, 5
    %p195 = pnand %p193, %p194
    %p196 = pneg %p195
    // Predicated region
    $region33: #{decoder_forward.15} parent=5 // pred_check
      _
    $region34: #{decoder_forward.15} parent=5 // pred_check_branch
      %198 = sbr.rel (%p195) target = $region36
    $region35: #{decoder_forward.15} parent=5 // pred_region
      %s199 = ssub.s32 %s10, 1
      %s200 = smul.u32 16, %s20
      %p201 = scmp.lt.s32.totalorder %s19, 3
      %s202 = scalar_select %p201, %s19, 3
      %p203 = scmp.lt.s32.totalorder %s200, 15
      %s204 = scalar_select %p203, %s200, 15
      %s205 = smul.addr %s204, 8
      %s206 = smul.addr %s202, 128
      %s207 = sadd.s32 %s205, %s206
      %s208 = smul.addr %s207, 4
      %s209 = scalar_lea.vmem %s0, %s208
      %p210 = pneg %p50
      %p211 = pneg %p47
      %p212 = scmp.lt.s32.totalorder %s19, 3
      %s213 = scalar_select %p212, %s19, 3
      %s214 = smul.addr %s213, 128
      %s215 = smul.addr %s214, 4
      %s216 = scalar_lea.vmem %s1, %s215
      %p217 = pneg %p76
      %p218 = pneg %p73
      %p219 = pneg %p97
      %p220 = pneg %p94
      %p221 = pneg %p118
      %p222 = pneg %p115
      %p223 = pneg %p146
      %p224 = pneg %p143
      %s225 = smul.u32 16, %s20
      %p226 = scmp.lt.s32.totalorder %s19, 3
      %s227 = scalar_select %p226, %s19, 3
      %p228 = scmp.lt.s32.totalorder %s225, 15
      %s229 = scalar_select %p228, %s225, 15
      %s230 = smul.addr %s227, 16
      %s231 = sadd.s32 %s229, %s230
      %s232 = smul.addr %s231, 4
      %s233 = scalar_lea.vmem %s4, %s232
      %s234 = smul.u32 16, %s20
      %p235 = scmp.lt.s32.totalorder %s19, 3
      %s236 = scalar_select %p235, %s19, 3
      %p237 = scmp.lt.s32.totalorder %s234, 15
      %s238 = scalar_select %p237, %s234, 15
      %s239 = smul.addr %s238, 8
      %s240 = smul.addr %s236, 128
      %s241 = sadd.s32 %s239, %s240
      %s242 = smul.addr %s241, 4
      %s243 = scalar_lea.vmem %s0, %s242
      %s244 = smul.u32 16, %s20
      %p245 = scmp.lt.s32.totalorder %s19, 3
      %s246 = scalar_select %p245, %s19, 3
      %s247 = smul.addr %s246, 128
      %s248 = smul.addr %s247, 4
      %s249 = scalar_lea.vmem %s1, %s248
      %s250 = smul.u32 16, %s20
      %p251 = scmp.lt.s32.totalorder %s19, 3
      %s252 = scalar_select %p251, %s19, 3
      %p253 = scmp.lt.s32.totalorder %s250, 15
      %s254 = scalar_select %p253, %s250, 15
      %s255 = smul.addr %s252, 16
      %s256 = sadd.s32 %s254, %s255
      %s257 = smul.addr %s256, 4
      %s258 = scalar_lea.vmem %s4, %s257
      %s259 = smul.u32 16, %s20
      %v261 = vld [vmem:[%s243] sm:$0xff]
      %v262 = vld [vmem:[%s243 + $0x8] sm:$0xff]
      %v263 = vld [vmem:[%s243 + $0x10] sm:$0xff]
      %v264 = vld [vmem:[%s243 + $0x18] sm:$0xff]
      %v265 = vld [vmem:[%s243 + $0x20] sm:$0xff]
      %v266 = vld [vmem:[%s243 + $0x28] sm:$0xff]
      %v267 = vld [vmem:[%s243 + $0x30] sm:$0xff]
      %v268 = vld [vmem:[%s243 + $0x38] sm:$0xff]
      %v269 = vld [vmem:[%s243 + $0x40] sm:$0xff]
      %v270 = vld [vmem:[%s243 + $0x48] sm:$0xff]
      %v271 = vld [vmem:[%s243 + $0x50] sm:$0xff]
      %v272 = vld [vmem:[%s243 + $0x58] sm:$0xff]
      %v273 = vld [vmem:[%s243 + $0x60] sm:$0xff]
      %v274 = vld [vmem:[%s243 + $0x68] sm:$0xff]
      %v275 = vld [vmem:[%s243 + $0x70] sm:$0xff]
      %v276 = vld [vmem:[%s243 + $0x78] sm:$0xff]
      %v277 = vld [vmem:[%s243 + $0x80] sm:$0xff]
      %v278 = vld [vmem:[%s243 + $0x88] sm:$0xff]
      %v279 = vld [vmem:[%s243 + $0x90] sm:$0xff]
      %v280 = vld [vmem:[%s243 + $0x98] sm:$0xff]
      %v281 = vld [vmem:[%s243 + $0xa0] sm:$0xff]
      %v282 = vld [vmem:[%s243 + $0xa8] sm:$0xff]
      %v283 = vld [vmem:[%s243 + $0xb0] sm:$0xff]
      %v284 = vld [vmem:[%s243 + $0xb8] sm:$0xff]
      %v285 = vld [vmem:[%s243 + $0xc0] sm:$0xff]
      %v286 = vld [vmem:[%s243 + $0xc8] sm:$0xff]
      %v287 = vld [vmem:[%s243 + $0xd0] sm:$0xff]
      %v288 = vld [vmem:[%s243 + $0xd8] sm:$0xff]
      %v289 = vld [vmem:[%s243 + $0xe0] sm:$0xff]
      %v290 = vld [vmem:[%s243 + $0xe8] sm:$0xff]
      %v291 = vld [vmem:[%s243 + $0xf0] sm:$0xff]
      %v292 = vld [vmem:[%s243 + $0xf8] sm:$0xff]
      %v293 = vld [vmem:[%s243 + $0x100] sm:$0xff]
      %v294 = vld [vmem:[%s243 + $0x108] sm:$0xff]
      %v295 = vld [vmem:[%s243 + $0x110] sm:$0xff]
      %v296 = vld [vmem:[%s243 + $0x118] sm:$0xff]
      %v297 = vld [vmem:[%s243 + $0x120] sm:$0xff]
      %v298 = vld [vmem:[%s243 + $0x128] sm:$0xff]
      %v299 = vld [vmem:[%s243 + $0x130] sm:$0xff]
      %v300 = vld [vmem:[%s243 + $0x138] sm:$0xff]
      %v301 = vld [vmem:[%s243 + $0x140] sm:$0xff]
      %v302 = vld [vmem:[%s243 + $0x148] sm:$0xff]
      %v303 = vld [vmem:[%s243 + $0x150] sm:$0xff]
      %v304 = vld [vmem:[%s243 + $0x158] sm:$0xff]
      %v305 = vld [vmem:[%s243 + $0x160] sm:$0xff]
      %v306 = vld [vmem:[%s243 + $0x168] sm:$0xff]
      %v307 = vld [vmem:[%s243 + $0x170] sm:$0xff]
      %v308 = vld [vmem:[%s243 + $0x178] sm:$0xff]
      %v309 = vld [vmem:[%s243 + $0x180] sm:$0xff]
      %v310 = vld [vmem:[%s243 + $0x188] sm:$0xff]
      %v311 = vld [vmem:[%s243 + $0x190] sm:$0xff]
      %v312 = vld [vmem:[%s243 + $0x198] sm:$0xff]
      %v313 = vld [vmem:[%s243 + $0x1a0] sm:$0xff]
      %v314 = vld [vmem:[%s243 + $0x1a8] sm:$0xff]
      %v315 = vld [vmem:[%s243 + $0x1b0] sm:$0xff]
      %v316 = vld [vmem:[%s243 + $0x1b8] sm:$0xff]
      %v317 = vld [vmem:[%s243 + $0x1c0] sm:$0xff]
      %v318 = vld [vmem:[%s243 + $0x1c8] sm:$0xff]
      %v319 = vld [vmem:[%s243 + $0x1d0] sm:$0xff]
      %v320 = vld [vmem:[%s243 + $0x1d8] sm:$0xff]
      %v321 = vld [vmem:[%s243 + $0x1e0] sm:$0xff]
      %v322 = vld [vmem:[%s243 + $0x1e8] sm:$0xff]
      %v323 = vld [vmem:[%s243 + $0x1f0] sm:$0xff]
      %v324 = vld [vmem:[%s243 + $0x1f8] sm:$0xff]
      %v325 = vld [vmem:[%s249] sm:$0xf]
      %v326 = vld [vmem:[%s249 + $0x4] sm:$0xf]
      %v327 = vld [vmem:[%s249 + $0x8] sm:$0xf]
      %v328 = vld [vmem:[%s249 + $0xc] sm:$0xf]
      %v329 = vld [vmem:[%s249 + $0x10] sm:$0xf]
      %v330 = vld [vmem:[%s249 + $0x14] sm:$0xf]
      %v331 = vld [vmem:[%s249 + $0x18] sm:$0xf]
      %v332 = vld [vmem:[%s249 + $0x1c] sm:$0xf]
      %v333 = vld [vmem:[%s249 + $0x20] sm:$0xf]
      %v334 = vld [vmem:[%s249 + $0x24] sm:$0xf]
      %v335 = vld [vmem:[%s249 + $0x28] sm:$0xf]
      %v336 = vld [vmem:[%s249 + $0x2c] sm:$0xf]
      %v337 = vld [vmem:[%s249 + $0x30] sm:$0xf]
      %v338 = vld [vmem:[%s249 + $0x34] sm:$0xf]
      %v339 = vld [vmem:[%s249 + $0x38] sm:$0xf]
      %v340 = vld [vmem:[%s249 + $0x3c] sm:$0xf]
      %v341 = vld [vmem:[%s249 + $0x40] sm:$0xf]
      %v342 = vld [vmem:[%s249 + $0x44] sm:$0xf]
      %v343 = vld [vmem:[%s249 + $0x48] sm:$0xf]
      %v344 = vld [vmem:[%s249 + $0x4c] sm:$0xf]
      %v345 = vld [vmem:[%s249 + $0x50] sm:$0xf]
      %v346 = vld [vmem:[%s249 + $0x54] sm:$0xf]
      %v347 = vld [vmem:[%s249 + $0x58] sm:$0xf]
      %v348 = vld [vmem:[%s249 + $0x5c] sm:$0xf]
      %v349 = vld [vmem:[%s249 + $0x60] sm:$0xf]
      %v350 = vld [vmem:[%s249 + $0x64] sm:$0xf]
      %v351 = vld [vmem:[%s249 + $0x68] sm:$0xf]
      %v352 = vld [vmem:[%s249 + $0x6c] sm:$0xf]
      %v353 = vld [vmem:[%s249 + $0x70] sm:$0xf]
      %v354 = vld [vmem:[%s249 + $0x74] sm:$0xf]
      %v355 = vld [vmem:[%s249 + $0x78] sm:$0xf]
      %v356 = vld [vmem:[%s249 + $0x7c] sm:$0xf]
      %v357 = vld [vmem:[%s249 + $0x80] sm:$0xf]
      %v358 = vld [vmem:[%s249 + $0x84] sm:$0xf]
      %v359 = vld [vmem:[%s249 + $0x88] sm:$0xf]
      %v360 = vld [vmem:[%s249 + $0x8c] sm:$0xf]
      %v361 = vld [vmem:[%s249 + $0x90] sm:$0xf]
      %v362 = vld [vmem:[%s249 + $0x94] sm:$0xf]
      %v363 = vld [vmem:[%s249 + $0x98] sm:$0xf]
      %v364 = vld [vmem:[%s249 + $0x9c] sm:$0xf]
      %v365 = vld [vmem:[%s249 + $0xa0] sm:$0xf]
      %v366 = vld [vmem:[%s249 + $0xa4] sm:$0xf]
      %v367 = vld [vmem:[%s249 + $0xa8] sm:$0xf]
      %v368 = vld [vmem:[%s249 + $0xac] sm:$0xf]
      %v369 = vld [vmem:[%s249 + $0xb0] sm:$0xf]
      %v370 = vld [vmem:[%s249 + $0xb4] sm:$0xf]
      %v371 = vld [vmem:[%s249 + $0xb8] sm:$0xf]
      %v372 = vld [vmem:[%s249 + $0xbc] sm:$0xf]
      %v373 = vld [vmem:[%s249 + $0xc0] sm:$0xf]
      %v374 = vld [vmem:[%s249 + $0xc4] sm:$0xf]
      %v375 = vld [vmem:[%s249 + $0xc8] sm:$0xf]
      %v376 = vld [vmem:[%s249 + $0xcc] sm:$0xf]
      %v377 = vld [vmem:[%s249 + $0xd0] sm:$0xf]
      %v378 = vld [vmem:[%s249 + $0xd4] sm:$0xf]
      %v379 = vld [vmem:[%s249 + $0xd8] sm:$0xf]
      %v380 = vld [vmem:[%s249 + $0xdc] sm:$0xf]
      %v381 = vld [vmem:[%s249 + $0xe0] sm:$0xf]
      %v382 = vld [vmem:[%s249 + $0xe4] sm:$0xf]
      %v383 = vld [vmem:[%s249 + $0xe8] sm:$0xf]
      %v384 = vld [vmem:[%s249 + $0xec] sm:$0xf]
      %v385 = vld [vmem:[%s249 + $0xf0] sm:$0xf]
      %v386 = vld [vmem:[%s249 + $0xf4] sm:$0xf]
      %v387 = vld [vmem:[%s249 + $0xf8] sm:$0xf]
      %v388 = vld [vmem:[%s249 + $0xfc] sm:$0xf]
      %v389 = vld [vmem:[%s249 + $0x100] sm:$0xf]
      %v390 = vld [vmem:[%s249 + $0x104] sm:$0xf]
      %v391 = vld [vmem:[%s249 + $0x108] sm:$0xf]
      %v392 = vld [vmem:[%s249 + $0x10c] sm:$0xf]
      %v393 = vld [vmem:[%s249 + $0x110] sm:$0xf]
      %v394 = vld [vmem:[%s249 + $0x114] sm:$0xf]
      %v395 = vld [vmem:[%s249 + $0x118] sm:$0xf]
      %v396 = vld [vmem:[%s249 + $0x11c] sm:$0xf]
      %v397 = vld [vmem:[%s249 + $0x120] sm:$0xf]
      %v398 = vld [vmem:[%s249 + $0x124] sm:$0xf]
      %v399 = vld [vmem:[%s249 + $0x128] sm:$0xf]
      %v400 = vld [vmem:[%s249 + $0x12c] sm:$0xf]
      %v401 = vld [vmem:[%s249 + $0x130] sm:$0xf]
      %v402 = vld [vmem:[%s249 + $0x134] sm:$0xf]
      %v403 = vld [vmem:[%s249 + $0x138] sm:$0xf]
      %v404 = vld [vmem:[%s249 + $0x13c] sm:$0xf]
      %v405 = vld [vmem:[%s249 + $0x140] sm:$0xf]
      %v406 = vld [vmem:[%s249 + $0x144] sm:$0xf]
      %v407 = vld [vmem:[%s249 + $0x148] sm:$0xf]
      %v408 = vld [vmem:[%s249 + $0x14c] sm:$0xf]
      %v409 = vld [vmem:[%s249 + $0x150] sm:$0xf]
      %v410 = vld [vmem:[%s249 + $0x154] sm:$0xf]
      %v411 = vld [vmem:[%s249 + $0x158] sm:$0xf]
      %v412 = vld [vmem:[%s249 + $0x15c] sm:$0xf]
      %v413 = vld [vmem:[%s249 + $0x160] sm:$0xf]
      %v414 = vld [vmem:[%s249 + $0x164] sm:$0xf]
      %v415 = vld [vmem:[%s249 + $0x168] sm:$0xf]
      %v416 = vld [vmem:[%s249 + $0x16c] sm:$0xf]
      %v417 = vld [vmem:[%s249 + $0x170] sm:$0xf]
      %v418 = vld [vmem:[%s249 + $0x174] sm:$0xf]
      %v419 = vld [vmem:[%s249 + $0x178] sm:$0xf]
      %v420 = vld [vmem:[%s249 + $0x17c] sm:$0xf]
      %v421 = vld [vmem:[%s249 + $0x180] sm:$0xf]
      %v422 = vld [vmem:[%s249 + $0x184] sm:$0xf]
      %v423 = vld [vmem:[%s249 + $0x188] sm:$0xf]
      %v424 = vld [vmem:[%s249 + $0x18c] sm:$0xf]
      %v425 = vld [vmem:[%s249 + $0x190] sm:$0xf]
      %v426 = vld [vmem:[%s249 + $0x194] sm:$0xf]
      %v427 = vld [vmem:[%s249 + $0x198] sm:$0xf]
      %v428 = vld [vmem:[%s249 + $0x19c] sm:$0xf]
      %v429 = vld [vmem:[%s249 + $0x1a0] sm:$0xf]
      %v430 = vld [vmem:[%s249 + $0x1a4] sm:$0xf]
      %v431 = vld [vmem:[%s249 + $0x1a8] sm:$0xf]
      %v432 = vld [vmem:[%s249 + $0x1ac] sm:$0xf]
      %v433 = vld [vmem:[%s249 + $0x1b0] sm:$0xf]
      %v434 = vld [vmem:[%s249 + $0x1b4] sm:$0xf]
      %v435 = vld [vmem:[%s249 + $0x1b8] sm:$0xf]
      %v436 = vld [vmem:[%s249 + $0x1bc] sm:$0xf]
      %v437 = vld [vmem:[%s249 + $0x1c0] sm:$0xf]
      %v438 = vld [vmem:[%s249 + $0x1c4] sm:$0xf]
      %v439 = vld [vmem:[%s249 + $0x1c8] sm:$0xf]
      %v440 = vld [vmem:[%s249 + $0x1cc] sm:$0xf]
      %v441 = vld [vmem:[%s249 + $0x1d0] sm:$0xf]
      %v442 = vld [vmem:[%s249 + $0x1d4] sm:$0xf]
      %v443 = vld [vmem:[%s249 + $0x1d8] sm:$0xf]
      %v444 = vld [vmem:[%s249 + $0x1dc] sm:$0xf]
      %v445 = vld [vmem:[%s249 + $0x1e0] sm:$0xf]
      %v446 = vld [vmem:[%s249 + $0x1e4] sm:$0xf]
      %v447 = vld [vmem:[%s249 + $0x1e8] sm:$0xf]
      %v448 = vld [vmem:[%s249 + $0x1ec] sm:$0xf]
      %v449 = vld [vmem:[%s249 + $0x1f0] sm:$0xf]
      %v450 = vld [vmem:[%s249 + $0x1f4] sm:$0xf]
      %v451 = vld [vmem:[%s249 + $0x1f8] sm:$0xf]
      %v452 = vld [vmem:[%s249 + $0x1fc] sm:$0xf]
      %v517 = vunpack.c.l.b16 %v261
      %v518 = vunpack.c.h.b16 %v261
      %v519 = vunpack.c.l.b16 %v262
      %v520 = vunpack.c.h.b16 %v262
      %v521 = vunpack.c.l.b16 %v263
      %v522 = vunpack.c.h.b16 %v263
      %v523 = vunpack.c.l.b16 %v264
      %v524 = vunpack.c.h.b16 %v264
      %v525 = vunpack.c.l.b16 %v265
      %v526 = vunpack.c.h.b16 %v265
      %v527 = vunpack.c.l.b16 %v266
      %v528 = vunpack.c.h.b16 %v266
      %v529 = vunpack.c.l.b16 %v267
      %v530 = vunpack.c.h.b16 %v267
      %v531 = vunpack.c.l.b16 %v268
      %v532 = vunpack.c.h.b16 %v268
      %v533 = vunpack.c.l.b16 %v269
      %v534 = vunpack.c.h.b16 %v269
      %v535 = vunpack.c.l.b16 %v270
      %v536 = vunpack.c.h.b16 %v270
      %v537 = vunpack.c.l.b16 %v271
      %v538 = vunpack.c.h.b16 %v271
      %v539 = vunpack.c.l.b16 %v272
      %v540 = vunpack.c.h.b16 %v272
      %v541 = vunpack.c.l.b16 %v273
      %v542 = vunpack.c.h.b16 %v273
      %v543 = vunpack.c.l.b16 %v274
      %v544 = vunpack.c.h.b16 %v274
      %v545 = vunpack.c.l.b16 %v275
      %v546 = vunpack.c.h.b16 %v275
      %v547 = vunpack.c.l.b16 %v276
      %v548 = vunpack.c.h.b16 %v276
      %v549 = vunpack.c.l.b16 %v277
      %v550 = vunpack.c.h.b16 %v277
      %v551 = vunpack.c.l.b16 %v278
      %v552 = vunpack.c.h.b16 %v278
      %v553 = vunpack.c.l.b16 %v279
      %v554 = vunpack.c.h.b16 %v279
      %v555 = vunpack.c.l.b16 %v280
      %v556 = vunpack.c.h.b16 %v280
      %v557 = vunpack.c.l.b16 %v281
      %v558 = vunpack.c.h.b16 %v281
      %v559 = vunpack.c.l.b16 %v282
      %v560 = vunpack.c.h.b16 %v282
      %v561 = vunpack.c.l.b16 %v283
      %v562 = vunpack.c.h.b16 %v283
      %v563 = vunpack.c.l.b16 %v284
      %v564 = vunpack.c.h.b16 %v284
      %v565 = vunpack.c.l.b16 %v285
      %v566 = vunpack.c.h.b16 %v285
      %v567 = vunpack.c.l.b16 %v286
      %v568 = vunpack.c.h.b16 %v286
      %v569 = vunpack.c.l.b16 %v287
      %v570 = vunpack.c.h.b16 %v287
      %v571 = vunpack.c.l.b16 %v288
      %v572 = vunpack.c.h.b16 %v288
      %v573 = vunpack.c.l.b16 %v289
      %v574 = vunpack.c.h.b16 %v289
      %v575 = vunpack.c.l.b16 %v290
      %v576 = vunpack.c.h.b16 %v290
      %v577 = vunpack.c.l.b16 %v291
      %v578 = vunpack.c.h.b16 %v291
      %v579 = vunpack.c.l.b16 %v292
      %v580 = vunpack.c.h.b16 %v292
      %v581 = vunpack.c.l.b16 %v293
      %v582 = vunpack.c.h.b16 %v293
      %v583 = vunpack.c.l.b16 %v294
      %v584 = vunpack.c.h.b16 %v294
      %v585 = vunpack.c.l.b16 %v295
      %v586 = vunpack.c.h.b16 %v295
      %v587 = vunpack.c.l.b16 %v296
      %v588 = vunpack.c.h.b16 %v296
      %v589 = vunpack.c.l.b16 %v297
      %v590 = vunpack.c.h.b16 %v297
      %v591 = vunpack.c.l.b16 %v298
      %v592 = vunpack.c.h.b16 %v298
      %v593 = vunpack.c.l.b16 %v299
      %v594 = vunpack.c.h.b16 %v299
      %v595 = vunpack.c.l.b16 %v300
      %v596 = vunpack.c.h.b16 %v300
      %v597 = vunpack.c.l.b16 %v301
      %v598 = vunpack.c.h.b16 %v301
      %v599 = vunpack.c.l.b16 %v302
      %v600 = vunpack.c.h.b16 %v302
      %v601 = vunpack.c.l.b16 %v303
      %v602 = vunpack.c.h.b16 %v303
      %v603 = vunpack.c.l.b16 %v304
      %v604 = vunpack.c.h.b16 %v304
      %v605 = vunpack.c.l.b16 %v305
      %v606 = vunpack.c.h.b16 %v305
      %v607 = vunpack.c.l.b16 %v306
      %v608 = vunpack.c.h.b16 %v306
      %v609 = vunpack.c.l.b16 %v307
      %v610 = vunpack.c.h.b16 %v307
      %v611 = vunpack.c.l.b16 %v308
      %v612 = vunpack.c.h.b16 %v308
      %v613 = vunpack.c.l.b16 %v309
      %v614 = vunpack.c.h.b16 %v309
      %v615 = vunpack.c.l.b16 %v310
      %v616 = vunpack.c.h.b16 %v310
      %v617 = vunpack.c.l.b16 %v311
      %v618 = vunpack.c.h.b16 %v311
      %v619 = vunpack.c.l.b16 %v312
      %v620 = vunpack.c.h.b16 %v312
      %v621 = vunpack.c.l.b16 %v313
      %v622 = vunpack.c.h.b16 %v313
      %v623 = vunpack.c.l.b16 %v314
      %v624 = vunpack.c.h.b16 %v314
      %v625 = vunpack.c.l.b16 %v315
      %v626 = vunpack.c.h.b16 %v315
      %v627 = vunpack.c.l.b16 %v316
      %v628 = vunpack.c.h.b16 %v316
      %v629 = vunpack.c.l.b16 %v317
      %v630 = vunpack.c.h.b16 %v317
      %v631 = vunpack.c.l.b16 %v318
      %v632 = vunpack.c.h.b16 %v318
      %v633 = vunpack.c.l.b16 %v319
      %v634 = vunpack.c.h.b16 %v319
      %v635 = vunpack.c.l.b16 %v320
      %v636 = vunpack.c.h.b16 %v320
      %v637 = vunpack.c.l.b16 %v321
      %v638 = vunpack.c.h.b16 %v321
      %v639 = vunpack.c.l.b16 %v322
      %v640 = vunpack.c.h.b16 %v322
      %v641 = vunpack.c.l.b16 %v323
      %v642 = vunpack.c.h.b16 %v323
      %v643 = vunpack.c.l.b16 %v324
      %v644 = vunpack.c.h.b16 %v324
      %v645 = vpack.c.b16 %v525, %v517
      %v646 = vpack.c.b16 %v526, %v518
      %v647 = vpack.c.b16 %v527, %v519
      %v648 = vpack.c.b16 %v528, %v520
      %v649 = vpack.c.b16 %v529, %v521
      %v650 = vpack.c.b16 %v530, %v522
      %v651 = vpack.c.b16 %v531, %v523
      %v652 = vpack.c.b16 %v532, %v524
      %v653 = vpack.c.b16 %v541, %v533
      %v654 = vpack.c.b16 %v542, %v534
      %v655 = vpack.c.b16 %v543, %v535
      %v656 = vpack.c.b16 %v544, %v536
      %v657 = vpack.c.b16 %v545, %v537
      %v658 = vpack.c.b16 %v546, %v538
      %v659 = vpack.c.b16 %v547, %v539
      %v660 = vpack.c.b16 %v548, %v540
      %v661 = vpack.c.b16 %v557, %v549
      %v662 = vpack.c.b16 %v558, %v550
      %v663 = vpack.c.b16 %v559, %v551
      %v664 = vpack.c.b16 %v560, %v552
      %v665 = vpack.c.b16 %v561, %v553
      %v666 = vpack.c.b16 %v562, %v554
      %v667 = vpack.c.b16 %v563, %v555
      %v668 = vpack.c.b16 %v564, %v556
      %v669 = vpack.c.b16 %v573, %v565
      %v670 = vpack.c.b16 %v574, %v566
      %v671 = vpack.c.b16 %v575, %v567
      %v672 = vpack.c.b16 %v576, %v568
      %v673 = vpack.c.b16 %v577, %v569
      %v674 = vpack.c.b16 %v578, %v570
      %v675 = vpack.c.b16 %v579, %v571
      %v676 = vpack.c.b16 %v580, %v572
      %v677 = vpack.c.b16 %v589, %v581
      %v678 = vpack.c.b16 %v590, %v582
      %v679 = vpack.c.b16 %v591, %v583
      %v680 = vpack.c.b16 %v592, %v584
      %v681 = vpack.c.b16 %v593, %v585
      %v682 = vpack.c.b16 %v594, %v586
      %v683 = vpack.c.b16 %v595, %v587
      %v684 = vpack.c.b16 %v596, %v588
      %v685 = vpack.c.b16 %v605, %v597
      %v686 = vpack.c.b16 %v606, %v598
      %v687 = vpack.c.b16 %v607, %v599
      %v688 = vpack.c.b16 %v608, %v600
      %v689 = vpack.c.b16 %v609, %v601
      %v690 = vpack.c.b16 %v610, %v602
      %v691 = vpack.c.b16 %v611, %v603
      %v692 = vpack.c.b16 %v612, %v604
      %v693 = vpack.c.b16 %v621, %v613
      %v694 = vpack.c.b16 %v622, %v614
      %v695 = vpack.c.b16 %v623, %v615
      %v696 = vpack.c.b16 %v624, %v616
      %v697 = vpack.c.b16 %v625, %v617
      %v698 = vpack.c.b16 %v626, %v618
      %v699 = vpack.c.b16 %v627, %v619
      %v700 = vpack.c.b16 %v628, %v620
      %v701 = vpack.c.b16 %v637, %v629
      %v702 = vpack.c.b16 %v638, %v630
      %v703 = vpack.c.b16 %v639, %v631
      %v704 = vpack.c.b16 %v640, %v632
      %v705 = vpack.c.b16 %v641, %v633
      %v706 = vpack.c.b16 %v642, %v634
      %v707 = vpack.c.b16 %v643, %v635
      %v708 = vpack.c.b16 %v644, %v636
      %v901 = vunpack.c.l.b16 %v325
      %v902 = vunpack.c.l.b16 %v326
      %v903 = vunpack.c.l.b16 %v327
      %v904 = vunpack.c.l.b16 %v328
      %v905 = vunpack.c.l.b16 %v329
      %v906 = vunpack.c.l.b16 %v330
      %v907 = vunpack.c.l.b16 %v331
      %v908 = vunpack.c.l.b16 %v332
      %v909 = vunpack.c.l.b16 %v333
      %v910 = vunpack.c.l.b16 %v334
      %v911 = vunpack.c.l.b16 %v335
      %v912 = vunpack.c.l.b16 %v336
      %v913 = vunpack.c.l.b16 %v337
      %v914 = vunpack.c.l.b16 %v338
      %v915 = vunpack.c.l.b16 %v339
      %v916 = vunpack.c.l.b16 %v340
      %v917 = vunpack.c.l.b16 %v341
      %v918 = vunpack.c.l.b16 %v342
      %v919 = vunpack.c.l.b16 %v343
      %v920 = vunpack.c.l.b16 %v344
      %v921 = vunpack.c.l.b16 %v345
      %v922 = vunpack.c.l.b16 %v346
      %v923 = vunpack.c.l.b16 %v347
      %v924 = vunpack.c.l.b16 %v348
      %v925 = vunpack.c.l.b16 %v349
      %v926 = vunpack.c.l.b16 %v350
      %v927 = vunpack.c.l.b16 %v351
      %v928 = vunpack.c.l.b16 %v352
      %v929 = vunpack.c.l.b16 %v353
      %v930 = vunpack.c.l.b16 %v354
      %v931 = vunpack.c.l.b16 %v355
      %v932 = vunpack.c.l.b16 %v356
      %v933 = vunpack.c.l.b16 %v357
      %v934 = vunpack.c.l.b16 %v358
      %v935 = vunpack.c.l.b16 %v359
      %v936 = vunpack.c.l.b16 %v360
      %v937 = vunpack.c.l.b16 %v361
      %v938 = vunpack.c.l.b16 %v362
      %v939 = vunpack.c.l.b16 %v363
      %v940 = vunpack.c.l.b16 %v364
      %v941 = vunpack.c.l.b16 %v365
      %v942 = vunpack.c.l.b16 %v366
      %v943 = vunpack.c.l.b16 %v367
      %v944 = vunpack.c.l.b16 %v368
      %v945 = vunpack.c.l.b16 %v369
      %v946 = vunpack.c.l.b16 %v370
      %v947 = vunpack.c.l.b16 %v371
      %v948 = vunpack.c.l.b16 %v372
      %v949 = vunpack.c.l.b16 %v373
      %v950 = vunpack.c.l.b16 %v374
      %v951 = vunpack.c.l.b16 %v375
      %v952 = vunpack.c.l.b16 %v376
      %v953 = vunpack.c.l.b16 %v377
      %v954 = vunpack.c.l.b16 %v378
      %v955 = vunpack.c.l.b16 %v379
      %v956 = vunpack.c.l.b16 %v380
      %v957 = vunpack.c.l.b16 %v381
      %v958 = vunpack.c.l.b16 %v382
      %v959 = vunpack.c.l.b16 %v383
      %v960 = vunpack.c.l.b16 %v384
      %v961 = vunpack.c.l.b16 %v385
      %v962 = vunpack.c.l.b16 %v386
      %v963 = vunpack.c.l.b16 %v387
      %v964 = vunpack.c.l.b16 %v388
      %v965 = vunpack.c.l.b16 %v389
      %v966 = vunpack.c.l.b16 %v390
      %v967 = vunpack.c.l.b16 %v391
      %v968 = vunpack.c.l.b16 %v392
      %v969 = vunpack.c.l.b16 %v393
      %v970 = vunpack.c.l.b16 %v394
      %v971 = vunpack.c.l.b16 %v395
      %v972 = vunpack.c.l.b16 %v396
      %v973 = vunpack.c.l.b16 %v397
      %v974 = vunpack.c.l.b16 %v398
      %v975 = vunpack.c.l.b16 %v399
      %v976 = vunpack.c.l.b16 %v400
      %v977 = vunpack.c.l.b16 %v401
      %v978 = vunpack.c.l.b16 %v402
      %v979 = vunpack.c.l.b16 %v403
      %v980 = vunpack.c.l.b16 %v404
      %v981 = vunpack.c.l.b16 %v405
      %v982 = vunpack.c.l.b16 %v406
      %v983 = vunpack.c.l.b16 %v407
      %v984 = vunpack.c.l.b16 %v408
      %v985 = vunpack.c.l.b16 %v409
      %v986 = vunpack.c.l.b16 %v410
      %v987 = vunpack.c.l.b16 %v411
      %v988 = vunpack.c.l.b16 %v412
      %v989 = vunpack.c.l.b16 %v413
      %v990 = vunpack.c.l.b16 %v414
      %v991 = vunpack.c.l.b16 %v415
      %v992 = vunpack.c.l.b16 %v416
      %v993 = vunpack.c.l.b16 %v417
      %v994 = vunpack.c.l.b16 %v418
      %v995 = vunpack.c.l.b16 %v419
      %v996 = vunpack.c.l.b16 %v420
      %v997 = vunpack.c.l.b16 %v421
      %v998 = vunpack.c.l.b16 %v422
      %v999 = vunpack.c.l.b16 %v423
      %v1000 = vunpack.c.l.b16 %v424
      %v1001 = vunpack.c.l.b16 %v425
      %v1002 = vunpack.c.l.b16 %v426
      %v1003 = vunpack.c.l.b16 %v427
      %v1004 = vunpack.c.l.b16 %v428
      %v1005 = vunpack.c.l.b16 %v429
      %v1006 = vunpack.c.l.b16 %v430
      %v1007 = vunpack.c.l.b16 %v431
      %v1008 = vunpack.c.l.b16 %v432
      %v1009 = vunpack.c.l.b16 %v433
      %v1010 = vunpack.c.l.b16 %v434
      %v1011 = vunpack.c.l.b16 %v435
      %v1012 = vunpack.c.l.b16 %v436
      %v1013 = vunpack.c.l.b16 %v437
      %v1014 = vunpack.c.l.b16 %v438
      %v1015 = vunpack.c.l.b16 %v439
      %v1016 = vunpack.c.l.b16 %v440
      %v1017 = vunpack.c.l.b16 %v441
      %v1018 = vunpack.c.l.b16 %v442
      %v1019 = vunpack.c.l.b16 %v443
      %v1020 = vunpack.c.l.b16 %v444
      %v1021 = vunpack.c.l.b16 %v445
      %v1022 = vunpack.c.l.b16 %v446
      %v1023 = vunpack.c.l.b16 %v447
      %v1024 = vunpack.c.l.b16 %v448
      %v1025 = vunpack.c.l.b16 %v449
      %v1026 = vunpack.c.l.b16 %v450
      %v1027 = vunpack.c.l.b16 %v451
      %v1028 = vunpack.c.l.b16 %v452
      %v1029 = vpack.c.b16 %v902, %v901
      %v1030 = vpack.c.b16 %v904, %v903
      %v1031 = vpack.c.b16 %v906, %v905
      %v1032 = vpack.c.b16 %v908, %v907
      %v1033 = vpack.c.b16 %v910, %v909
      %v1034 = vpack.c.b16 %v912, %v911
      %v1035 = vpack.c.b16 %v914, %v913
      %v1036 = vpack.c.b16 %v916, %v915
      %v1037 = vpack.c.b16 %v918, %v917
      %v1038 = vpack.c.b16 %v920, %v919
      %v1039 = vpack.c.b16 %v922, %v921
      %v1040 = vpack.c.b16 %v924, %v923
      %v1041 = vpack.c.b16 %v926, %v925
      %v1042 = vpack.c.b16 %v928, %v927
      %v1043 = vpack.c.b16 %v930, %v929
      %v1044 = vpack.c.b16 %v932, %v931
      %v1045 = vpack.c.b16 %v934, %v933
      %v1046 = vpack.c.b16 %v936, %v935
      %v1047 = vpack.c.b16 %v938, %v937
      %v1048 = vpack.c.b16 %v940, %v939
      %v1049 = vpack.c.b16 %v942, %v941
      %v1050 = vpack.c.b16 %v944, %v943
      %v1051 = vpack.c.b16 %v946, %v945
      %v1052 = vpack.c.b16 %v948, %v947
      %v1053 = vpack.c.b16 %v950, %v949
      %v1054 = vpack.c.b16 %v952, %v951
      %v1055 = vpack.c.b16 %v954, %v953
      %v1056 = vpack.c.b16 %v956, %v955
      %v1057 = vpack.c.b16 %v958, %v957
      %v1058 = vpack.c.b16 %v960, %v959
      %v1059 = vpack.c.b16 %v962, %v961
      %v1060 = vpack.c.b16 %v964, %v963
      %v1061 = vpack.c.b16 %v966, %v965
      %v1062 = vpack.c.b16 %v968, %v967
      %v1063 = vpack.c.b16 %v970, %v969
      %v1064 = vpack.c.b16 %v972, %v971
      %v1065 = vpack.c.b16 %v974, %v973
      %v1066 = vpack.c.b16 %v976, %v975
      %v1067 = vpack.c.b16 %v978, %v977
      %v1068 = vpack.c.b16 %v980, %v979
      %v1069 = vpack.c.b16 %v982, %v981
      %v1070 = vpack.c.b16 %v984, %v983
      %v1071 = vpack.c.b16 %v986, %v985
      %v1072 = vpack.c.b16 %v988, %v987
      %v1073 = vpack.c.b16 %v990, %v989
      %v1074 = vpack.c.b16 %v992, %v991
      %v1075 = vpack.c.b16 %v994, %v993
      %v1076 = vpack.c.b16 %v996, %v995
      %v1077 = vpack.c.b16 %v998, %v997
      %v1078 = vpack.c.b16 %v1000, %v999
      %v1079 = vpack.c.b16 %v1002, %v1001
      %v1080 = vpack.c.b16 %v1004, %v1003
      %v1081 = vpack.c.b16 %v1006, %v1005
      %v1082 = vpack.c.b16 %v1008, %v1007
      %v1083 = vpack.c.b16 %v1010, %v1009
      %v1084 = vpack.c.b16 %v1012, %v1011
      %v1085 = vpack.c.b16 %v1014, %v1013
      %v1086 = vpack.c.b16 %v1016, %v1015
      %v1087 = vpack.c.b16 %v1018, %v1017
      %v1088 = vpack.c.b16 %v1020, %v1019
      %v1089 = vpack.c.b16 %v1022, %v1021
      %v1090 = vpack.c.b16 %v1024, %v1023
      %v1091 = vpack.c.b16 %v1026, %v1025
      %v1092 = vpack.c.b16 %v1028, %v1027
      %1157 = vmatprep.subr.bf16.mxu0 0
      %1158 = vmatpush1.bf16.msra.mxu0 %v1029
      %1159 = vmatprep.subr.bf16.mxu0 0
      %1160 = vmatpush1.bf16.msra.mxu0 %v1030
      %1161 = vmatprep.subr.bf16.mxu0 0
      %1162 = vmatpush1.bf16.msra.mxu0 %v1031
      %1163 = vmatprep.subr.bf16.mxu0 0
      %1164 = vmatpush1.bf16.msra.mxu0 %v1032
      %1165 = vmatprep.subr.bf16.mxu0 0
      %1166 = vmatpush1.bf16.msra.mxu0 %v1033
      %1167 = vmatprep.subr.bf16.mxu0 0
      %1168 = vmatpush1.bf16.msra.mxu0 %v1034
      %1169 = vmatprep.subr.bf16.mxu0 0
      %1170 = vmatpush1.bf16.msra.mxu0 %v1035
      %1171 = vmatprep.subr.bf16.mxu0 0
      %1172 = vmatpush1.bf16.msra.mxu0 %v1036
      %1173 = vmatprep.subr.bf16.mxu0 0
      %1174 = vmatpush1.bf16.msra.mxu0 %v1037
      %1175 = vmatprep.subr.bf16.mxu0 0
      %1176 = vmatpush1.bf16.msra.mxu0 %v1038
      %1177 = vmatprep.subr.bf16.mxu0 0
      %1178 = vmatpush1.bf16.msra.mxu0 %v1039
      %1179 = vmatprep.subr.bf16.mxu0 0
      %1180 = vmatpush1.bf16.msra.mxu0 %v1040
      %1181 = vmatprep.subr.bf16.mxu0 0
      %1182 = vmatpush1.bf16.msra.mxu0 %v1041
      %1183 = vmatprep.subr.bf16.mxu0 0
      %1184 = vmatpush1.bf16.msra.mxu0 %v1042
      %1185 = vmatprep.subr.bf16.mxu0 0
      %1186 = vmatpush1.bf16.msra.mxu0 %v1043
      %1187 = vmatprep.subr.bf16.mxu0 0
      %1188 = vmatpush1.bf16.msra.mxu0 %v1044
      %1189 = vmatprep.mubr.bf16.mxu0 %v646
      %1190 = vmatmul.mubr.bf16.gmra.mrb[0].mxu0 %v645
      %v1191 = vpop.f32.mrb[0].mxu0
      %v1192 = vadd.f32 0.0, %v1191
      %v1193 = vpop.f32.mrb[0].mxu0
      %v1194 = vpop.f32.mrb[0].mxu0
      %v1195 = vadd.f32 0.0, %v1194
      %v1196 = vpop.f32.mrb[0].mxu0
      %1197 = vmatprep.mubr.bf16.mxu0 %v654
      %1198 = vmatmul.mubr.bf16.gmra.mrb[0].mxu0 %v653
      %v1199 = vpop.f32.mrb[0].mxu0
      %v1200 = vadd.f32 0.0, %v1199
      %v1201 = vpop.f32.mrb[0].mxu0
      %v1202 = vpop.f32.mrb[0].mxu0
      %v1203 = vadd.f32 0.0, %v1202
      %v1204 = vpop.f32.mrb[0].mxu0
      %1205 = vmatprep.mubr.bf16.mxu0 %v662
      %1206 = vmatmul.mubr.bf16.gmra.mrb[0].mxu0 %v661
      %v1207 = vpop.f32.mrb[0].mxu0
      %v1208 = vadd.f32 0.0, %v1207
      %v1209 = vpop.f32.mrb[0].mxu0
      %v1210 = vpop.f32.mrb[0].mxu0
      %v1211 = vadd.f32 0.0, %v1210
      %v1212 = vpop.f32.mrb[0].mxu0
      %1213 = vmatprep.mubr.bf16.mxu0 %v670
      %1214 = vmatmul.mubr.bf16.gmra.mrb[0].mxu0 %v669
      %v1215 = vpop.f32.mrb[0].mxu0
      %v1216 = vadd.f32 0.0, %v1215
      %v1217 = vpop.f32.mrb[0].mxu0
      %v1218 = vpop.f32.mrb[0].mxu0
      %v1219 = vadd.f32 0.0, %v1218
      %v1220 = vpop.f32.mrb[0].mxu0
      %1221 = vmatprep.mubr.bf16.mxu0 %v678
      %1222 = vmatmul.mubr.bf16.gmra.mrb[0].mxu0 %v677
      %v1223 = vpop.f32.mrb[0].mxu0
      %v1224 = vadd.f32 0.0, %v1223
      %v1225 = vpop.f32.mrb[0].mxu0
      %v1226 = vpop.f32.mrb[0].mxu0
      %v1227 = vadd.f32 0.0, %v1226
      %v1228 = vpop.f32.mrb[0].mxu0
      %1229 = vmatprep.mubr.bf16.mxu0 %v686
      %1230 = vmatmul.mubr.bf16.gmra.mrb[0].mxu0 %v685
      %v1231 = vpop.f32.mrb[0].mxu0
      %v1232 = vadd.f32 0.0, %v1231
      %v1233 = vpop.f32.mrb[0].mxu0
      %v1234 = vpop.f32.mrb[0].mxu0
      %v1235 = vadd.f32 0.0, %v1234
      %v1236 = vpop.f32.mrb[0].mxu0
      %1237 = vmatprep.mubr.bf16.mxu0 %v694
      %1238 = vmatmul.mubr.bf16.gmra.mrb[0].mxu0 %v693
      %v1239 = vpop.f32.mrb[0].mxu0
      %v1240 = vadd.f32 0.0, %v1239
      %v1241 = vpop.f32.mrb[0].mxu0
      %v1242 = vpop.f32.mrb[0].mxu0
      %v1243 = vadd.f32 0.0, %v1242
      %v1244 = vpop.f32.mrb[0].mxu0
      %1245 = vmatprep.mubr.bf16.mxu0 %v702
      %1246 = vmatmul.mubr.bf16.gmra.mrb[0].mxu0 %v701
      %v1247 = vpop.f32.mrb[0].mxu0
      %v1248 = vadd.f32 0.0, %v1247
      %v1249 = vpop.f32.mrb[0].mxu0
      %v1250 = vpop.f32.mrb[0].mxu0
      %v1251 = vadd.f32 0.0, %v1250
      %v1252 = vpop.f32.mrb[0].mxu0
      %1253 = vdwg.mxu0
      %1254 = vmatprep.subr.bf16.mxu0 0
      %1255 = vmatpush1.bf16.msra.mxu0 %v1045
      %1256 = vmatprep.subr.bf16.mxu0 0
      %1257 = vmatpush1.bf16.msra.mxu0 %v1046
      %1258 = vmatprep.subr.bf16.mxu0 0
      %1259 = vmatpush1.bf16.msra.mxu0 %v1047
      %1260 = vmatprep.subr.bf16.mxu0 0
      %1261 = vmatpush1.bf16.msra.mxu0 %v1048
      %1262 = vmatprep.subr.bf16.mxu0 0
      %1263 = vmatpush1.bf16.msra.mxu0 %v1049
      %1264 = vmatprep.subr.bf16.mxu0 0
      %1265 = vmatpush1.bf16.msra.mxu0 %v1050
      %1266 = vmatprep.subr.bf16.mxu0 0
      %1267 = vmatpush1.bf16.msra.mxu0 %v1051
      %1268 = vmatprep.subr.bf16.mxu0 0
      %1269 = vmatpush1.bf16.msra.mxu0 %v1052
      %1270 = vmatprep.subr.bf16.mxu0 0
      %1271 = vmatpush1.bf16.msra.mxu0 %v1053
      %1272 = vmatprep.subr.bf16.mxu0 0
      %1273 = vmatpush1.bf16.msra.mxu0 %v1054
      %1274 = vmatprep.subr.bf16.mxu0 0
      %1275 = vmatpush1.bf16.msra.mxu0 %v1055
      %1276 = vmatprep.subr.bf16.mxu0 0
      %1277 = vmatpush1.bf16.msra.mxu0 %v1056
      %1278 = vmatprep.subr.bf16.mxu0 0
      %1279 = vmatpush1.bf16.msra.mxu0 %v1057
      %1280 = vmatprep.subr.bf16.mxu0 0
      %1281 = vmatpush1.bf16.msra.mxu0 %v1058
      %1282 = vmatprep.subr.bf16.mxu0 0
      %1283 = vmatpush1.bf16.msra.mxu0 %v1059
      %1284 = vmatprep.subr.bf16.mxu0 0
      %1285 = vmatpush1.bf16.msra.mxu0 %v1060
      %1286 = vmatprep.mubr.bf16.mxu0 %v648
      %1287 = vmatmul.mubr.bf16.gmra.mrb[0].mxu0 %v647
      %v1288 = vpop.f32.mrb[0].mxu0
      %v1289 = vadd.f32 %v1192, %v1288
      %v1290 = vpop.f32.mrb[0].mxu0
      %v1291 = vpop.f32.mrb[0].mxu0
      %v1292 = vadd.f32 %v1195, %v1291
      %v1293 = vpop.f32.mrb[0].mxu0
      %1294 = vmatprep.mubr.bf16.mxu0 %v656
      %1295 = vmatmul.mubr.bf16.gmra.mrb[0].mxu0 %v655
      %v1296 = vpop.f32.mrb[0].mxu0
      %v1297 = vadd.f32 %v1200, %v1296
      %v1298 = vpop.f32.mrb[0].mxu0
      %v1299 = vpop.f32.mrb[0].mxu0
      %v1300 = vadd.f32 %v1203, %v1299
      %v1301 = vpop.f32.mrb[0].mxu0
      %1302 = vmatprep.mubr.bf16.mxu0 %v664
      %1303 = vmatmul.mubr.bf16.gmra.mrb[0].mxu0 %v663
      %v1304 = vpop.f32.mrb[0].mxu0
      %v1305 = vadd.f32 %v1208, %v1304
      %v1306 = vpop.f32.mrb[0].mxu0
      %v1307 = vpop.f32.mrb[0].mxu0
      %v1308 = vadd.f32 %v1211, %v1307
      %v1309 = vpop.f32.mrb[0].mxu0
      %1310 = vmatprep.mubr.bf16.mxu0 %v672
      %1311 = vmatmul.mubr.bf16.gmra.mrb[0].mxu0 %v671
      %v1312 = vpop.f32.mrb[0].mxu0
      %v1313 = vadd.f32 %v1216, %v1312
      %v1314 = vpop.f32.mrb[0].mxu0
      %v1315 = vpop.f32.mrb[0].mxu0
      %v1316 = vadd.f32 %v1219, %v1315
      %v1317 = vpop.f32.mrb[0].mxu0
      %1318 = vmatprep.mubr.bf16.mxu0 %v680
      %1319 = vmatmul.mubr.bf16.gmra.mrb[0].mxu0 %v679
      %v1320 = vpop.f32.mrb[0].mxu0
      %v1321 = vadd.f32 %v1224, %v1320
      %v1322 = vpop.f32.mrb[0].mxu0
      %v1323 = vpop.f32.mrb[0].mxu0
      %v1324 = vadd.f32 %v1227, %v1323
      %v1325 = vpop.f32.mrb[0].mxu0
      %1326 = vmatprep.mubr.bf16.mxu0 %v688
      %1327 = vmatmul.mubr.bf16.gmra.mrb[0].mxu0 %v687
      %v1328 = vpop.f32.mrb[0].mxu0
      %v1329 = vadd.f32 %v1232, %v1328
      %v1330 = vpop.f32.mrb[0].mxu0
      %v1331 = vpop.f32.mrb[0].mxu0
      %v1332 = vadd.f32 %v1235, %v1331
      %v1333 = vpop.f32.mrb[0].mxu0
      %1334 = vmatprep.mubr.bf16.mxu0 %v696
      %1335 = vmatmul.mubr.bf16.gmra.mrb[0].mxu0 %v695
      %v1336 = vpop.f32.mrb[0].mxu0
      %v1337 = vadd.f32 %v1240, %v1336
      %v1338 = vpop.f32.mrb[0].mxu0
      %v1339 = vpop.f32.mrb[0].mxu0
      %v1340 = vadd.f32 %v1243, %v1339
      %v1341 = vpop.f32.mrb[0].mxu0
      %1342 = vmatprep.mubr.bf16.mxu0 %v704
      %1343 = vmatmul.mubr.bf16.gmra.mrb[0].mxu0 %v703
      %v1344 = vpop.f32.mrb[0].mxu0
      %v1345 = vadd.f32 %v1248, %v1344
      %v1346 = vpop.f32.mrb[0].mxu0
      %v1347 = vpop.f32.mrb[0].mxu0
      %v1348 = vadd.f32 %v1251, %v1347
      %v1349 = vpop.f32.mrb[0].mxu0
      %1350 = vdwg.mxu0
      %1351 = vmatprep.subr.bf16.mxu0 0
      %1352 = vmatpush1.bf16.msra.mxu0 %v1061
      %1353 = vmatprep.subr.bf16.mxu0 0
      %1354 = vmatpush1.bf16.msra.mxu0 %v1062
      %1355 = vmatprep.subr.bf16.mxu0 0
      %1356 = vmatpush1.bf16.msra.mxu0 %v1063
      %1357 = vmatprep.subr.bf16.mxu0 0
      %1358 = vmatpush1.bf16.msra.mxu0 %v1064
      %1359 = vmatprep.subr.bf16.mxu0 0
      %1360 = vmatpush1.bf16.msra.mxu0 %v1065
      %1361 = vmatprep.subr.bf16.mxu0 0
      %1362 = vmatpush1.bf16.msra.mxu0 %v1066
      %1363 = vmatprep.subr.bf16.mxu0 0
      %1364 = vmatpush1.bf16.msra.mxu0 %v1067
      %1365 = vmatprep.subr.bf16.mxu0 0
      %1366 = vmatpush1.bf16.msra.mxu0 %v1068
      %1367 = vmatprep.subr.bf16.mxu0 0
      %1368 = vmatpush1.bf16.msra.mxu0 %v1069
      %1369 = vmatprep.subr.bf16.mxu0 0
      %1370 = vmatpush1.bf16.msra.mxu0 %v1070
      %1371 = vmatprep.subr.bf16.mxu0 0
      %1372 = vmatpush1.bf16.msra.mxu0 %v1071
      %1373 = vmatprep.subr.bf16.mxu0 0
      %1374 = vmatpush1.bf16.msra.mxu0 %v1072
      %1375 = vmatprep.subr.bf16.mxu0 0
      %1376 = vmatpush1.bf16.msra.mxu0 %v1073
      %1377 = vmatprep.subr.bf16.mxu0 0
      %1378 = vmatpush1.bf16.msra.mxu0 %v1074
      %1379 = vmatprep.subr.bf16.mxu0 0
      %1380 = vmatpush1.bf16.msra.mxu0 %v1075
      %1381 = vmatprep.subr.bf16.mxu0 0
      %1382 = vmatpush1.bf16.msra.mxu0 %v1076
      %1383 = vmatprep.mubr.bf16.mxu0 %v650
      %1384 = vmatmul.mubr.bf16.gmra.mrb[0].mxu0 %v649
      %v1385 = vpop.f32.mrb[0].mxu0
      %v1386 = vadd.f32 %v1289, %v1385
      %v1387 = vpop.f32.mrb[0].mxu0
      %v1388 = vpop.f32.mrb[0].mxu0
      %v1389 = vadd.f32 %v1292, %v1388
      %v1390 = vpop.f32.mrb[0].mxu0
      %1391 = vmatprep.mubr.bf16.mxu0 %v658
      %1392 = vmatmul.mubr.bf16.gmra.mrb[0].mxu0 %v657
      %v1393 = vpop.f32.mrb[0].mxu0
      %v1394 = vadd.f32 %v1297, %v1393
      %v1395 = vpop.f32.mrb[0].mxu0
      %v1396 = vpop.f32.mrb[0].mxu0
      %v1397 = vadd.f32 %v1300, %v1396
      %v1398 = vpop.f32.mrb[0].mxu0
      %1399 = vmatprep.mubr.bf16.mxu0 %v666
      %1400 = vmatmul.mubr.bf16.gmra.mrb[0].mxu0 %v665
      %v1401 = vpop.f32.mrb[0].mxu0
      %v1402 = vadd.f32 %v1305, %v1401
      %v1403 = vpop.f32.mrb[0].mxu0
      %v1404 = vpop.f32.mrb[0].mxu0
      %v1405 = vadd.f32 %v1308, %v1404
      %v1406 = vpop.f32.mrb[0].mxu0
      %1407 = vmatprep.mubr.bf16.mxu0 %v674
      %1408 = vmatmul.mubr.bf16.gmra.mrb[0].mxu0 %v673
      %v1409 = vpop.f32.mrb[0].mxu0
      %v1410 = vadd.f32 %v1313, %v1409
      %v1411 = vpop.f32.mrb[0].mxu0
      %v1412 = vpop.f32.mrb[0].mxu0
      %v1413 = vadd.f32 %v1316, %v1412
      %v1414 = vpop.f32.mrb[0].mxu0
      %1415 = vmatprep.mubr.bf16.mxu0 %v682
      %1416 = vmatmul.mubr.bf16.gmra.mrb[0].mxu0 %v681
      %v1417 = vpop.f32.mrb[0].mxu0
      %v1418 = vadd.f32 %v1321, %v1417
      %v1419 = vpop.f32.mrb[0].mxu0
      %v1420 = vpop.f32.mrb[0].mxu0
      %v1421 = vadd.f32 %v1324, %v1420
      %v1422 = vpop.f32.mrb[0].mxu0
      %1423 = vmatprep.mubr.bf16.mxu0 %v690
      %1424 = vmatmul.mubr.bf16.gmra.mrb[0].mxu0 %v689
      %v1425 = vpop.f32.mrb[0].mxu0
      %v1426 = vadd.f32 %v1329, %v1425
      %v1427 = vpop.f32.mrb[0].mxu0
      %v1428 = vpop.f32.mrb[0].mxu0
      %v1429 = vadd.f32 %v1332, %v1428
      %v1430 = vpop.f32.mrb[0].mxu0
      %1431 = vmatprep.mubr.bf16.mxu0 %v698
      %1432 = vmatmul.mubr.bf16.gmra.mrb[0].mxu0 %v697
      %v1433 = vpop.f32.mrb[0].mxu0
      %v1434 = vadd.f32 %v1337, %v1433
      %v1435 = vpop.f32.mrb[0].mxu0
      %v1436 = vpop.f32.mrb[0].mxu0
      %v1437 = vadd.f32 %v1340, %v1436
      %v1438 = vpop.f32.mrb[0].mxu0
      %1439 = vmatprep.mubr.bf16.mxu0 %v706
      %1440 = vmatmul.mubr.bf16.gmra.mrb[0].mxu0 %v705
      %v1441 = vpop.f32.mrb[0].mxu0
      %v1442 = vadd.f32 %v1345, %v1441
      %v1443 = vpop.f32.mrb[0].mxu0
      %v1444 = vpop.f32.mrb[0].mxu0
      %v1445 = vadd.f32 %v1348, %v1444
      %v1446 = vpop.f32.mrb[0].mxu0
      %1447 = vdwg.mxu0
      %1448 = vmatprep.subr.bf16.mxu0 0
      %1449 = vmatpush1.bf16.msra.mxu0 %v1077
      %1450 = vmatprep.subr.bf16.mxu0 0
      %1451 = vmatpush1.bf16.msra.mxu0 %v1078
      %1452 = vmatprep.subr.bf16.mxu0 0
      %1453 = vmatpush1.bf16.msra.mxu0 %v1079
      %1454 = vmatprep.subr.bf16.mxu0 0
      %1455 = vmatpush1.bf16.msra.mxu0 %v1080
      %1456 = vmatprep.subr.bf16.mxu0 0
      %1457 = vmatpush1.bf16.msra.mxu0 %v1081
      %1458 = vmatprep.subr.bf16.mxu0 0
      %1459 = vmatpush1.bf16.msra.mxu0 %v1082
      %1460 = vmatprep.subr.bf16.mxu0 0
      %1461 = vmatpush1.bf16.msra.mxu0 %v1083
      %1462 = vmatprep.subr.bf16.mxu0 0
      %1463 = vmatpush1.bf16.msra.mxu0 %v1084
      %1464 = vmatprep.subr.bf16.mxu0 0
      %1465 = vmatpush1.bf16.msra.mxu0 %v1085
      %1466 = vmatprep.subr.bf16.mxu0 0
      %1467 = vmatpush1.bf16.msra.mxu0 %v1086
      %1468 = vmatprep.subr.bf16.mxu0 0
      %1469 = vmatpush1.bf16.msra.mxu0 %v1087
      %1470 = vmatprep.subr.bf16.mxu0 0
      %1471 = vmatpush1.bf16.msra.mxu0 %v1088
      %1472 = vmatprep.subr.bf16.mxu0 0
      %1473 = vmatpush1.bf16.msra.mxu0 %v1089
      %1474 = vmatprep.subr.bf16.mxu0 0
      %1475 = vmatpush1.bf16.msra.mxu0 %v1090
      %1476 = vmatprep.subr.bf16.mxu0 0
      %1477 = vmatpush1.bf16.msra.mxu0 %v1091
      %1478 = vmatprep.subr.bf16.mxu0 0
      %1479 = vmatpush1.bf16.msra.mxu0 %v1092
      %1480 = vmatprep.mubr.bf16.mxu0 %v652
      %1481 = vmatmul.mubr.bf16.gmra.mrb[0].mxu0 %v651
      %v1482 = vpop.f32.mrb[0].mxu0
      %v1483 = vadd.f32 %v1386, %v1482
      %v1484 = vpop.f32.mrb[0].mxu0
      %v1485 = vpop.f32.mrb[0].mxu0
      %v1486 = vadd.f32 %v1389, %v1485
      %v1487 = vpop.f32.mrb[0].mxu0
      %1488 = vmatprep.mubr.bf16.mxu0 %v660
      %1489 = vmatmul.mubr.bf16.gmra.mrb[0].mxu0 %v659
      %v1490 = vpop.f32.mrb[0].mxu0
      %v1491 = vadd.f32 %v1394, %v1490
      %v1492 = vpop.f32.mrb[0].mxu0
      %v1493 = vpop.f32.mrb[0].mxu0
      %v1494 = vadd.f32 %v1397, %v1493
      %v1495 = vpop.f32.mrb[0].mxu0
      %1496 = vmatprep.mubr.bf16.mxu0 %v668
      %1497 = vmatmul.mubr.bf16.gmra.mrb[0].mxu0 %v667
      %v1498 = vpop.f32.mrb[0].mxu0
      %v1499 = vadd.f32 %v1402, %v1498
      %v1500 = vpop.f32.mrb[0].mxu0
      %v1501 = vpop.f32.mrb[0].mxu0
      %v1502 = vadd.f32 %v1405, %v1501
      %v1503 = vpop.f32.mrb[0].mxu0
      %1504 = vmatprep.mubr.bf16.mxu0 %v676
      %1505 = vmatmul.mubr.bf16.gmra.mrb[0].mxu0 %v675
      %v1506 = vpop.f32.mrb[0].mxu0
      %v1507 = vadd.f32 %v1410, %v1506
      %v1508 = vpop.f32.mrb[0].mxu0
      %v1509 = vpop.f32.mrb[0].mxu0
      %v1510 = vadd.f32 %v1413, %v1509
      %v1511 = vpop.f32.mrb[0].mxu0
      %1512 = vmatprep.mubr.bf16.mxu0 %v684
      %1513 = vmatmul.mubr.bf16.gmra.mrb[0].mxu0 %v683
      %v1514 = vpop.f32.mrb[0].mxu0
      %v1515 = vadd.f32 %v1418, %v1514
      %v1516 = vpop.f32.mrb[0].mxu0
      %v1517 = vpop.f32.mrb[0].mxu0
      %v1518 = vadd.f32 %v1421, %v1517
      %v1519 = vpop.f32.mrb[0].mxu0
      %1520 = vmatprep.mubr.bf16.mxu0 %v692
      %1521 = vmatmul.mubr.bf16.gmra.mrb[0].mxu0 %v691
      %v1522 = vpop.f32.mrb[0].mxu0
      %v1523 = vadd.f32 %v1426, %v1522
      %v1524 = vpop.f32.mrb[0].mxu0
      %v1525 = vpop.f32.mrb[0].mxu0
      %v1526 = vadd.f32 %v1429, %v1525
      %v1527 = vpop.f32.mrb[0].mxu0
      %1528 = vmatprep.mubr.bf16.mxu0 %v700
      %1529 = vmatmul.mubr.bf16.gmra.mrb[0].mxu0 %v699
      %v1530 = vpop.f32.mrb[0].mxu0
      %v1531 = vadd.f32 %v1434, %v1530
      %v1532 = vpop.f32.mrb[0].mxu0
      %v1533 = vpop.f32.mrb[0].mxu0
      %v1534 = vadd.f32 %v1437, %v1533
      %v1535 = vpop.f32.mrb[0].mxu0
      %1536 = vmatprep.mubr.bf16.mxu0 %v708
      %1537 = vmatmul.mubr.bf16.gmra.mrb[0].mxu0 %v707
      %v1538 = vpop.f32.mrb[0].mxu0
      %v1539 = vadd.f32 %v1442, %v1538
      %v1540 = vpop.f32.mrb[0].mxu0
      %v1541 = vpop.f32.mrb[0].mxu0
      %v1542 = vadd.f32 %v1445, %v1541
      %v1543 = vpop.f32.mrb[0].mxu0
      %1544 = vdwg.mxu0
      %v1545 = vld [vmem:[%s2] sm:$0x1]
      %v1547 = vlaneseq
      %v1548 = vshrl.u32 %v1547, 7
      %v1549 = vsub.s32 0, %v1548
      %v1550 = vrot.slane %v1545, %v1549
      %v1552 = vmul.f32 %v1483, %v1550
      %v1553 = vmul.f32 %v1486, %v1550
      %v1554 = vmul.f32 %v1491, %v1550
      %v1555 = vmul.f32 %v1494, %v1550
      %v1556 = vmul.f32 %v1499, %v1550
      %v1557 = vmul.f32 %v1502, %v1550
      %v1558 = vmul.f32 %v1507, %v1550
      %v1559 = vmul.f32 %v1510, %v1550
      %v1560 = vmul.f32 %v1515, %v1550
      %v1561 = vmul.f32 %v1518, %v1550
      %v1562 = vmul.f32 %v1523, %v1550
      %v1563 = vmul.f32 %v1526, %v1550
      %v1564 = vmul.f32 %v1531, %v1550
      %v1565 = vmul.f32 %v1534, %v1550
      %v1566 = vmul.f32 %v1539, %v1550
      %v1567 = vmul.f32 %v1542, %v1550
      %v1568 = vld [vmem:[%s3] sm:$0x1]
      %v1570 = vlaneseq
      %v1571 = vshrl.u32 %v1570, 7
      %v1572 = vsub.s32 0, %v1571
      %v1573 = vrot.slane %v1568, %v1572
      %v1575 = vadd.f32 %v1552, %v1573
      %v1576 = vadd.f32 %v1553, %v1573
      %v1577 = vadd.f32 %v1554, %v1573
      %v1578 = vadd.f32 %v1555, %v1573
      %v1579 = vadd.f32 %v1556, %v1573
      %v1580 = vadd.f32 %v1557, %v1573
      %v1581 = vadd.f32 %v1558, %v1573
      %v1582 = vadd.f32 %v1559, %v1573
      %v1583 = vadd.f32 %v1560, %v1573
      %v1584 = vadd.f32 %v1561, %v1573
      %v1585 = vadd.f32 %v1562, %v1573
      %v1586 = vadd.f32 %v1563, %v1573
      %v1587 = vadd.f32 %v1564, %v1573
      %v1588 = vadd.f32 %v1565, %v1573
      %v1589 = vadd.f32 %v1566, %v1573
      %v1590 = vadd.f32 %v1567, %v1573
      %v1591 = vmax.f32 %v1575, 0.0
      %v1592 = vmax.f32 %v1576, 0.0
      %v1593 = vmax.f32 %v1577, 0.0
      %v1594 = vmax.f32 %v1578, 0.0
      %v1595 = vmax.f32 %v1579, 0.0
      %v1596 = vmax.f32 %v1580, 0.0
      %v1597 = vmax.f32 %v1581, 0.0
      %v1598 = vmax.f32 %v1582, 0.0
      %v1599 = vmax.f32 %v1583, 0.0
      %v1600 = vmax.f32 %v1584, 0.0
      %v1601 = vmax.f32 %v1585, 0.0
      %v1602 = vmax.f32 %v1586, 0.0
      %v1603 = vmax.f32 %v1587, 0.0
      %v1604 = vmax.f32 %v1588, 0.0
      %v1605 = vmax.f32 %v1589, 0.0
      %v1606 = vmax.f32 %v1590, 0.0
      %v1607 = vpack.c.bf16 %v1592, %v1591
      %v1608 = vpack.c.bf16 %v1594, %v1593
      %v1609 = vpack.c.bf16 %v1596, %v1595
      %v1610 = vpack.c.bf16 %v1598, %v1597
      %v1611 = vpack.c.bf16 %v1600, %v1599
      %v1612 = vpack.c.bf16 %v1602, %v1601
      %v1613 = vpack.c.bf16 %v1604, %v1603
      %v1614 = vpack.c.bf16 %v1606, %v1605
      %v1623 = vunpack.c.l.b16 %v1607
      %v1624 = vunpack.c.h.b16 %v1607
      %v1625 = vunpack.c.l.b16 %v1608
      %v1626 = vunpack.c.h.b16 %v1608
      %v1627 = vunpack.c.l.b16 %v1609
      %v1628 = vunpack.c.h.b16 %v1609
      %v1629 = vunpack.c.l.b16 %v1610
      %v1630 = vunpack.c.h.b16 %v1610
      %v1631 = vunpack.c.l.b16 %v1611
      %v1632 = vunpack.c.h.b16 %v1611
      %v1633 = vunpack.c.l.b16 %v1612
      %v1634 = vunpack.c.h.b16 %v1612
      %v1635 = vunpack.c.l.b16 %v1613
      %v1636 = vunpack.c.h.b16 %v1613
      %v1637 = vunpack.c.l.b16 %v1614
      %v1638 = vunpack.c.h.b16 %v1614
      %v1639 = vpack.c.b16 %v1623, %v1623
      %v1640 = vpack.c.b16 %v1624, %v1624
      %v1641 = vpack.c.b16 %v1625, %v1625
      %v1642 = vpack.c.b16 %v1626, %v1626
      %v1643 = vpack.c.b16 %v1627, %v1627
      %v1644 = vpack.c.b16 %v1628, %v1628
      %v1645 = vpack.c.b16 %v1629, %v1629
      %v1646 = vpack.c.b16 %v1630, %v1630
      %v1647 = vpack.c.b16 %v1631, %v1631
      %v1648 = vpack.c.b16 %v1632, %v1632
      %v1649 = vpack.c.b16 %v1633, %v1633
      %v1650 = vpack.c.b16 %v1634, %v1634
      %v1651 = vpack.c.b16 %v1635, %v1635
      %v1652 = vpack.c.b16 %v1636, %v1636
      %v1653 = vpack.c.b16 %v1637, %v1637
      %v1654 = vpack.c.b16 %v1638, %v1638
      %1671 = vst [vmem:[%s258] sm:$0xf] %v1639
      %1672 = vst [vmem:[%s258 + $0x4] sm:$0xf] %v1640
      %1673 = vst [vmem:[%s258 + $0x8] sm:$0xf] %v1641
      %1674 = vst [vmem:[%s258 + $0xc] sm:$0xf] %v1642
      %1675 = vst [vmem:[%s258 + $0x10] sm:$0xf] %v1643
      %1676 = vst [vmem:[%s258 + $0x14] sm:$0xf] %v1644
      %1677 = vst [vmem:[%s258 + $0x18] sm:$0xf] %v1645
      %1678 = vst [vmem:[%s258 + $0x1c] sm:$0xf] %v1646
      %1679 = vst [vmem:[%s258 + $0x20] sm:$0xf] %v1647
      %1680 = vst [vmem:[%s258 + $0x24] sm:$0xf] %v1648
      %1681 = vst [vmem:[%s258 + $0x28] sm:$0xf] %v1649
      %1682 = vst [vmem:[%s258 + $0x2c] sm:$0xf] %v1650
      %1683 = vst [vmem:[%s258 + $0x30] sm:$0xf] %v1651
      %1684 = vst [vmem:[%s258 + $0x34] sm:$0xf] %v1652
      %1685 = vst [vmem:[%s258 + $0x38] sm:$0xf] %v1653
      %1686 = vst [vmem:[%s258 + $0x3c] sm:$0xf] %v1654
      %s1687 = smul.u32 16, %s20
      %p1688 = scmp.lt.s32.totalorder %s19, 3
      %s1689 = scalar_select %p1688, %s19, 3
      %p1690 = scmp.lt.s32.totalorder %s1687, 15
      %s1691 = scalar_select %p1690, %s1687, 15
      %s1692 = smul.addr %s1689, 16
      %s1693 = sadd.s32 %s1691, %s1692
      %s1694 = smul.addr %s1693, 4
      %s1695 = scalar_lea.vmem %s4, %s1694
      // Predicated region
      $region37: #{decoder_forward.15} parent=35 // pred_check
        %p1696 = pneg %p143
      $region38: #{decoder_forward.15} parent=35 // pred_check_branch
        %1698 = sbr.rel (%p1696) target = $region40
      $region39: #{decoder_forward.15} parent=35 // pred_region
        %s1699 = smul.u32 16, %s20
      $region40: #{decoder_forward.15} parent=35 // pred_fallthru
        _
    $region36: #{decoder_forward.15} parent=5 // pred_fallthru
      _
    %p1700 = scmp.le.s32.totalorder 2, %s10
    // Predicated region
    $region41: #{decoder_forward.15} parent=5 // pred_check
      %p1701 = pneg %p1700
    $region42: #{decoder_forward.15} parent=5 // pred_check_branch
      %1703 = sbr.rel (%p1701) target = $region44
    $region43: #{decoder_forward.15} parent=5 // pred_region
      %s1704 = ssub.s32 %s10, 2
      // Predicated region
      $region45: #{decoder_forward.15} parent=43 // pred_check
        %p1705 = pneg %p149
      $region46: #{decoder_forward.15} parent=43 // pred_check_branch
        %1707 = sbr.rel (%p1705) target = $region48
      $region47: #{decoder_forward.15} parent=43 // pred_region
        %s1708 = smul.u32 16, %s22
        %p1709 = scmp.lt.s32.totalorder %s21, 3
        %s1710 = scalar_select %p1709, %s21, 3
        %p1711 = scmp.lt.s32.totalorder %s1708, 15
        %s1712 = scalar_select %p1711, %s1708, 15
        %s1713 = smul.addr %s1710, 16
        %s1714 = sadd.s32 %s1712, %s1713
        %s1715 = smul.addr %s1714, 4
        %s1716 = scalar_lea.vmem %s4, %s1715
      $region48: #{decoder_forward.15} parent=43 // pred_fallthru
        _
    $region44: #{decoder_forward.15} parent=5 // pred_fallthru
      _
  $region6: #{decoder_forward.15} parent=0 // loop_footer
    %s14 = sadd.s32 1, %s10
  $region7: #{decoder_forward.15} parent=0 // loop_footer_branch
    %9 = sbr.rel target = $region3
  $region8: #{decoder_forward.15} parent=0 // loop_exit
    _

// kernel: decoder_forward.16
$region0: #{decoder_forward.16}
  #allocation0 [shape = 'u32[]', space=smem, size = 0x4, offset = 0x4, fixed_abs, tag = 'smem constant byte address 0x4 - core index']
  #allocation1 [shape = 'u32[144,128]{1,0:T(1,128)}', space=vmem, size = 0x12000, scoped, tag = 'internal scratch']
  %s0 = inlined_call_operand.vmem [shape: bf16[1,512,128], index: 0, kind: input, shape index: {}]
  %s1 = inlined_call_operand.vmem [shape: bf16[1,128,128], index: 1, kind: input, shape index: {}]
  %s2 = inlined_call_operand.vmem [shape: f32[1,128], index: 2, kind: input, shape index: {}]
  %s3 = inlined_call_operand.vmem [shape: f32[1,128], index: 3, kind: input, shape index: {}]
  %s4 = inlined_call_operand.vmem [shape: bf16[1,512,128], index: 4, kind: output, shape index: {}]
  %s5 = sld [smem:[#allocation0]]
  $region49: #{decoder_forward.16} parent=0
    _
  %s7 = ssub.s32 1, %s5
  %s8 = scalar_select 0, %s7, %s5
  loop: start=0, step=1, limit=4
  $region2: #{decoder_forward.16} parent=0 // loop_pre_header
    _
  $region3: #{decoder_forward.16} parent=0 // loop_header
    %s10 = sphi 0, %s14
    %p11 = scmp.ge.s32.totalorder %s10, 4
    %s17 = sphi 0, %s29
    %s18 = sphi 0, %s25
    %s19 = sphi 0, %s17
    %s20 = sphi 0, %s18
    %s21 = sphi 0, %s19
    %s22 = sphi 0, %s20
    %s34 = sphi 0, %s36
    %s37 = sphi 0, %s34
    %s38 = sphi 0, %s37
    %s54 = sphi 0, %s38
    %s60 = sphi 0, %s62
    %s63 = sphi 0, %s60
    %s64 = sphi 0, %s63
    %s80 = sphi 0, %s64
    %s84 = sphi 0, %s84
    %s86 = sphi 0, %s84
    %s87 = sphi 0, %s86
    %s101 = sphi 0, %s87
    %s105 = sphi 0, %s105
    %s107 = sphi 0, %s105
    %s108 = sphi 0, %s107
    %s122 = sphi 0, %s108
    %s130 = sphi 0, %s132
    %s133 = sphi 0, %s130
    %s134 = sphi 0, %s133
    %s150 = sphi 0, %s134
  $region4: #{decoder_forward.16} parent=0 // loop_header_branch
    %13 = sbr.rel (%p11) target = $region8
  $region5: #{decoder_forward.16} parent=0 // loop_body
    %s15 = ssub.s32 %s10, 1
    %s16 = ssub.s32 %s10, 2
    %s23 = sadd.s32 1, %s18
    %p24 = scmp.ge.s32.totalorder %s23, 2
    %s25 = scalar_select %p24, 0, %s23
    %s26 = sadd.s32 1, %s17
    %s27 = scalar_select %p24, %s26, %s17
    %p28 = scmp.ge.s32.totalorder %s27, 1
    %s29 = scalar_select %p28, 0, %s27
    %s30 = ssub.s32 %s17, %s29
    %s31 = ssub.s32 %s18, %s25
    %s32 = sor.u32 %s30, %s31
    %p33 = scmp.eq.s32.totalorder %s32, 0
    %s35 = sadd.s32 %s34, 1
    %s36 = scalar_select %p33, %s34, %s35
    %p39 = pneg %p33
    %p40 = scmp.eq.s32.totalorder %s10, 1
    %p41 = por %p39, %p40
    %p42 = scmp.ne.s32.totalorder %s34, %s37
    %p43 = scmp.eq.s32.totalorder %s10, 0
    %p44 = por %p42, %p43
    %p45 = scmp.ne.s32.totalorder %s34, %s37
    %p46 = scmp.eq.s32.totalorder %s15, 1
    %p47 = por %p45, %p46
    %p48 = scmp.ne.s32.totalorder %s37, %s38
    %p49 = scmp.eq.s32.totalorder %s15, 0
    %p50 = por %p48, %p49
    %p51 = scmp.ne.s32.totalorder %s37, %s38
    %p52 = scmp.eq.s32.totalorder %s16, 1
    %p53 = por %p51, %p52
    %p55 = scmp.ne.s32.totalorder %s38, %s54
    %p56 = scmp.eq.s32.totalorder %s16, 0
    %p57 = por %p55, %p56
    %s58 = ssub.s32 %s17, %s29
    %p59 = scmp.eq.s32.totalorder %s58, 0
    %s61 = sadd.s32 %s60, 1
    %s62 = scalar_select %p59, %s60, %s61
    %p65 = pneg %p59
    %p66 = scmp.eq.s32.totalorder %s10, 1
    %p67 = por %p65, %p66
    %p68 = scmp.ne.s32.totalorder %s60, %s63
    %p69 = scmp.eq.s32.totalorder %s10, 0
    %p70 = por %p68, %p69
    %p71 = scmp.ne.s32.totalorder %s60, %s63
    %p72 = scmp.eq.s32.totalorder %s15, 1
    %p73 = por %p71, %p72
    %p74 = scmp.ne.s32.totalorder %s63, %s64
    %p75 = scmp.eq.s32.totalorder %s15, 0
    %p76 = por %p74, %p75
    %p77 = scmp.ne.s32.totalorder %s63, %s64
    %p78 = scmp.eq.s32.totalorder %s16, 1
    %p79 = por %p77, %p78
    %p81 = scmp.ne.s32.totalorder %s64, %s80
    %p82 = scmp.eq.s32.totalorder %s16, 0
    %p83 = por %p81, %p82
    %s85 = sadd.s32 %s84, 1
    %p88 = scmp.eq.s32.totalorder %s10, 1
    %p89 = scmp.ne.s32.totalorder %s84, %s86
    %p90 = scmp.eq.s32.totalorder %s10, 0
    %p91 = por %p89, %p90
    %p92 = scmp.ne.s32.totalorder %s84, %s86
    %p93 = scmp.eq.s32.totalorder %s15, 1
    %p94 = por %p92, %p93
    %p95 = scmp.ne.s32.totalorder %s86, %s87
    %p96 = scmp.eq.s32.totalorder %s15, 0
    %p97 = por %p95, %p96
    %p98 = scmp.ne.s32.totalorder %s86, %s87
    %p99 = scmp.eq.s32.totalorder %s16, 1
    %p100 = por %p98, %p99
    %p102 = scmp.ne.s32.totalorder %s87, %s101
    %p103 = scmp.eq.s32.totalorder %s16, 0
    %p104 = por %p102, %p103
    %s106 = sadd.s32 %s105, 1
    %p109 = scmp.eq.s32.totalorder %s10, 1
    %p110 = scmp.ne.s32.totalorder %s105, %s107
    %p111 = scmp.eq.s32.totalorder %s10, 0
    %p112 = por %p110, %p111
    %p113 = scmp.ne.s32.totalorder %s105, %s107
    %p114 = scmp.eq.s32.totalorder %s15, 1
    %p115 = por %p113, %p114
    %p116 = scmp.ne.s32.totalorder %s107, %s108
    %p117 = scmp.eq.s32.totalorder %s15, 0
    %p118 = por %p116, %p117
    %p119 = scmp.ne.s32.totalorder %s107, %s108
    %p120 = scmp.eq.s32.totalorder %s16, 1
    %p121 = por %p119, %p120
    %p123 = scmp.ne.s32.totalorder %s108, %s122
    %p124 = scmp.eq.s32.totalorder %s16, 0
    %p125 = por %p123, %p124
    %s126 = ssub.s32 %s17, %s29
    %s127 = ssub.s32 %s18, %s25
    %s128 = sor.u32 %s126, %s127
    %p129 = scmp.eq.s32.totalorder %s128, 0
    %s131 = sadd.s32 %s130, 1
    %s132 = scalar_select %p129, %s130, %s131
    %p135 = pneg %p129
    %p136 = scmp.eq.s32.totalorder %s10, 1
    %p137 = por %p135, %p136
    %p138 = scmp.ne.s32.totalorder %s130, %s133
    %p139 = scmp.eq.s32.totalorder %s10, 0
    %p140 = por %p138, %p139
    %p141 = scmp.ne.s32.totalorder %s130, %s133
    %p142 = scmp.eq.s32.totalorder %s15, 1
    %p143 = por %p141, %p142
    %p144 = scmp.ne.s32.totalorder %s133, %s134
    %p145 = scmp.eq.s32.totalorder %s15, 0
    %p146 = por %p144, %p145
    %p147 = scmp.ne.s32.totalorder %s133, %s134
    %p148 = scmp.eq.s32.totalorder %s16, 1
    %p149 = por %p147, %p148
    %p151 = scmp.ne.s32.totalorder %s134, %s150
    %p152 = scmp.eq.s32.totalorder %s16, 0
    %p153 = por %p151, %p152
    %p154 = scmp.le.s32.totalorder 1, %s10
    %p155 = scmp.lt.s32.totalorder %s10, 3
    %p156 = pnand %p154, %p155
    %p157 = pneg %p156
    // Predicated region
    $region9: #{decoder_forward.16} parent=5 // pred_check
      _
    $region10: #{decoder_forward.16} parent=5 // pred_check_branch
      %159 = sbr.rel (%p156) target = $region12
    $region11: #{decoder_forward.16} parent=5 // pred_region
      %s160 = ssub.s32 %s10, 1
      // Predicated region
      $region13: #{decoder_forward.16} parent=11 // pred_check
        %p161 = pneg %p76
      $region14: #{decoder_forward.16} parent=11 // pred_check_branch
        %163 = sbr.rel (%p161) target = $region16
      $region15: #{decoder_forward.16} parent=11 // pred_region
        %p164 = scmp.lt.s32.totalorder %s19, 0
        %s165 = scalar_select %p164, %s19, 0
        %s166 = smul.addr %s165, 16
        %s167 = smul.addr %s166, 4
        %s168 = scalar_lea.vmem %s1, %s167
      $region16: #{decoder_forward.16} parent=11 // pred_fallthru
        _
      // Predicated region
      $region17: #{decoder_forward.16} parent=11 // pred_check
        %p169 = pneg %p97
      $region18: #{decoder_forward.16} parent=11 // pred_check_branch
        %171 = sbr.rel (%p169) target = $region20
      $region19: #{decoder_forward.16} parent=11 // pred_region
        _
      $region20: #{decoder_forward.16} parent=11 // pred_fallthru
        _
      // Predicated region
      $region21: #{decoder_forward.16} parent=11 // pred_check
        %p172 = pneg %p118
      $region22: #{decoder_forward.16} parent=11 // pred_check_branch
        %174 = sbr.rel (%p172) target = $region24
      $region23: #{decoder_forward.16} parent=11 // pred_region
        _
      $region24: #{decoder_forward.16} parent=11 // pred_fallthru
        _
    $region12: #{decoder_forward.16} parent=5 // pred_fallthru
      _
    %p175 = scmp.lt.s32.totalorder %s10, 2
    // Predicated region
    $region25: #{decoder_forward.16} parent=5 // pred_check
      %p176 = pneg %p175
    $region26: #{decoder_forward.16} parent=5 // pred_check_branch
      %178 = sbr.rel (%p176) target = $region28
    $region27: #{decoder_forward.16} parent=5 // pred_region
      // Predicated region
      $region29: #{decoder_forward.16} parent=27 // pred_check
        %p179 = pneg %p44
      $region30: #{decoder_forward.16} parent=27 // pred_check_branch
        %181 = sbr.rel (%p179) target = $region32
      $region31: #{decoder_forward.16} parent=27 // pred_region
        %s182 = smul.u32 32, %s18
        %p183 = scmp.lt.s32.totalorder %s17, 0
        %s184 = scalar_select %p183, %s17, 0
        %p185 = scmp.lt.s32.totalorder %s182, 63
        %s186 = scalar_select %p185, %s182, 63
        %s187 = smul.addr %s184, 64
        %s188 = sadd.s32 %s186, %s187
        %s189 = smul.addr %s188, 4
        %s190 = scalar_lea.vmem %s0, %s189
        %s191 = smul.u32 32, %s18
      $region32: #{decoder_forward.16} parent=27 // pred_fallthru
        _
    $region28: #{decoder_forward.16} parent=5 // pred_fallthru
      _
    %p192 = scmp.le.s32.totalorder 1, %s10
    %p193 = scmp.lt.s32.totalorder %s10, 3
    %p194 = pnand %p192, %p193
    %p195 = pneg %p194
    // Predicated region
    $region33: #{decoder_forward.16} parent=5 // pred_check
      _
    $region34: #{decoder_forward.16} parent=5 // pred_check_branch
      %197 = sbr.rel (%p194) target = $region36
    $region35: #{decoder_forward.16} parent=5 // pred_region
      %s198 = ssub.s32 %s10, 1
      %s199 = smul.u32 32, %s20
      %p200 = scmp.lt.s32.totalorder %s19, 0
      %s201 = scalar_select %p200, %s19, 0
      %p202 = scmp.lt.s32.totalorder %s199, 63
      %s203 = scalar_select %p202, %s199, 63
      %s204 = smul.addr %s201, 64
      %s205 = sadd.s32 %s203, %s204
      %s206 = smul.addr %s205, 4
      %s207 = scalar_lea.vmem %s0, %s206
      %p208 = pneg %p50
      %p209 = pneg %p47
      %p210 = scmp.lt.s32.totalorder %s19, 0
      %s211 = scalar_select %p210, %s19, 0
      %s212 = smul.addr %s211, 16
      %s213 = smul.addr %s212, 4
      %s214 = scalar_lea.vmem %s1, %s213
      %p215 = pneg %p76
      %p216 = pneg %p73
      %p217 = pneg %p97
      %p218 = pneg %p94
      %p219 = pneg %p118
      %p220 = pneg %p115
      %p221 = pneg %p146
      %p222 = pneg %p143
      %s223 = smul.u32 32, %s20
      %p224 = scmp.lt.s32.totalorder %s19, 0
      %s225 = scalar_select %p224, %s19, 0
      %p226 = scmp.lt.s32.totalorder %s223, 63
      %s227 = scalar_select %p226, %s223, 63
      %s228 = smul.addr %s225, 64
      %s229 = sadd.s32 %s227, %s228
      %s230 = smul.addr %s229, 4
      %s231 = scalar_lea.vmem %s4, %s230
      %s232 = smul.u32 32, %s20
      %p233 = scmp.lt.s32.totalorder %s19, 0
      %s234 = scalar_select %p233, %s19, 0
      %p235 = scmp.lt.s32.totalorder %s232, 63
      %s236 = scalar_select %p235, %s232, 63
      %s237 = smul.addr %s234, 64
      %s238 = sadd.s32 %s236, %s237
      %s239 = smul.addr %s238, 4
      %s240 = scalar_lea.vmem %s0, %s239
      %s241 = smul.u32 32, %s20
      %p242 = scmp.lt.s32.totalorder %s19, 0
      %s243 = scalar_select %p242, %s19, 0
      %s244 = smul.addr %s243, 16
      %s245 = smul.addr %s244, 4
      %s246 = scalar_lea.vmem %s1, %s245
      %s247 = smul.u32 32, %s20
      %p248 = scmp.lt.s32.totalorder %s19, 0
      %s249 = scalar_select %p248, %s19, 0
      %p250 = scmp.lt.s32.totalorder %s247, 63
      %s251 = scalar_select %p250, %s247, 63
      %s252 = smul.addr %s249, 64
      %s253 = sadd.s32 %s251, %s252
      %s254 = smul.addr %s253, 4
      %s255 = scalar_lea.vmem %s4, %s254
      %s256 = smul.u32 32, %s20
      %v258 = vld [vmem:[%s240] sm:$0xf]
      %v259 = vld [vmem:[%s240 + $0x4] sm:$0xf]
      %v260 = vld [vmem:[%s240 + $0x8] sm:$0xf]
      %v261 = vld [vmem:[%s240 + $0xc] sm:$0xf]
      %v262 = vld [vmem:[%s240 + $0x10] sm:$0xf]
      %v263 = vld [vmem:[%s240 + $0x14] sm:$0xf]
      %v264 = vld [vmem:[%s240 + $0x18] sm:$0xf]
      %v265 = vld [vmem:[%s240 + $0x1c] sm:$0xf]
      %v266 = vld [vmem:[%s240 + $0x20] sm:$0xf]
      %v267 = vld [vmem:[%s240 + $0x24] sm:$0xf]
      %v268 = vld [vmem:[%s240 + $0x28] sm:$0xf]
      %v269 = vld [vmem:[%s240 + $0x2c] sm:$0xf]
      %v270 = vld [vmem:[%s240 + $0x30] sm:$0xf]
      %v271 = vld [vmem:[%s240 + $0x34] sm:$0xf]
      %v272 = vld [vmem:[%s240 + $0x38] sm:$0xf]
      %v273 = vld [vmem:[%s240 + $0x3c] sm:$0xf]
      %v274 = vld [vmem:[%s240 + $0x40] sm:$0xf]
      %v275 = vld [vmem:[%s240 + $0x44] sm:$0xf]
      %v276 = vld [vmem:[%s240 + $0x48] sm:$0xf]
      %v277 = vld [vmem:[%s240 + $0x4c] sm:$0xf]
      %v278 = vld [vmem:[%s240 + $0x50] sm:$0xf]
      %v279 = vld [vmem:[%s240 + $0x54] sm:$0xf]
      %v280 = vld [vmem:[%s240 + $0x58] sm:$0xf]
      %v281 = vld [vmem:[%s240 + $0x5c] sm:$0xf]
      %v282 = vld [vmem:[%s240 + $0x60] sm:$0xf]
      %v283 = vld [vmem:[%s240 + $0x64] sm:$0xf]
      %v284 = vld [vmem:[%s240 + $0x68] sm:$0xf]
      %v285 = vld [vmem:[%s240 + $0x6c] sm:$0xf]
      %v286 = vld [vmem:[%s240 + $0x70] sm:$0xf]
      %v287 = vld [vmem:[%s240 + $0x74] sm:$0xf]
      %v288 = vld [vmem:[%s240 + $0x78] sm:$0xf]
      %v289 = vld [vmem:[%s240 + $0x7c] sm:$0xf]
      %v290 = vld [vmem:[%s246] sm:$0xf]
      %v291 = vld [vmem:[%s246 + $0x4] sm:$0xf]
      %v292 = vld [vmem:[%s246 + $0x8] sm:$0xf]
      %v293 = vld [vmem:[%s246 + $0xc] sm:$0xf]
      %v294 = vld [vmem:[%s246 + $0x10] sm:$0xf]
      %v295 = vld [vmem:[%s246 + $0x14] sm:$0xf]
      %v296 = vld [vmem:[%s246 + $0x18] sm:$0xf]
      %v297 = vld [vmem:[%s246 + $0x1c] sm:$0xf]
      %v298 = vld [vmem:[%s246 + $0x20] sm:$0xf]
      %v299 = vld [vmem:[%s246 + $0x24] sm:$0xf]
      %v300 = vld [vmem:[%s246 + $0x28] sm:$0xf]
      %v301 = vld [vmem:[%s246 + $0x2c] sm:$0xf]
      %v302 = vld [vmem:[%s246 + $0x30] sm:$0xf]
      %v303 = vld [vmem:[%s246 + $0x34] sm:$0xf]
      %v304 = vld [vmem:[%s246 + $0x38] sm:$0xf]
      %v305 = vld [vmem:[%s246 + $0x3c] sm:$0xf]
      %v338 = vunpack.c.l.b16 %v258
      %v339 = vunpack.c.l.b16 %v259
      %v340 = vunpack.c.l.b16 %v260
      %v341 = vunpack.c.l.b16 %v261
      %v342 = vunpack.c.l.b16 %v262
      %v343 = vunpack.c.l.b16 %v263
      %v344 = vunpack.c.l.b16 %v264
      %v345 = vunpack.c.l.b16 %v265
      %v346 = vunpack.c.l.b16 %v266
      %v347 = vunpack.c.l.b16 %v267
      %v348 = vunpack.c.l.b16 %v268
      %v349 = vunpack.c.l.b16 %v269
      %v350 = vunpack.c.l.b16 %v270
      %v351 = vunpack.c.l.b16 %v271
      %v352 = vunpack.c.l.b16 %v272
      %v353 = vunpack.c.l.b16 %v273
      %v354 = vunpack.c.l.b16 %v274
      %v355 = vunpack.c.l.b16 %v275
      %v356 = vunpack.c.l.b16 %v276
      %v357 = vunpack.c.l.b16 %v277
      %v358 = vunpack.c.l.b16 %v278
      %v359 = vunpack.c.l.b16 %v279
      %v360 = vunpack.c.l.b16 %v280
      %v361 = vunpack.c.l.b16 %v281
      %v362 = vunpack.c.l.b16 %v282
      %v363 = vunpack.c.l.b16 %v283
      %v364 = vunpack.c.l.b16 %v284
      %v365 = vunpack.c.l.b16 %v285
      %v366 = vunpack.c.l.b16 %v286
      %v367 = vunpack.c.l.b16 %v287
      %v368 = vunpack.c.l.b16 %v288
      %v369 = vunpack.c.l.b16 %v289
      %v370 = vpack.c.b16 %v339, %v338
      %v371 = vpack.c.b16 %v341, %v340
      %v372 = vpack.c.b16 %v343, %v342
      %v373 = vpack.c.b16 %v345, %v344
      %v374 = vpack.c.b16 %v347, %v346
      %v375 = vpack.c.b16 %v349, %v348
      %v376 = vpack.c.b16 %v351, %v350
      %v377 = vpack.c.b16 %v353, %v352
      %v378 = vpack.c.b16 %v355, %v354
      %v379 = vpack.c.b16 %v357, %v356
      %v380 = vpack.c.b16 %v359, %v358
      %v381 = vpack.c.b16 %v361, %v360
      %v382 = vpack.c.b16 %v363, %v362
      %v383 = vpack.c.b16 %v365, %v364
      %v384 = vpack.c.b16 %v367, %v366
      %v385 = vpack.c.b16 %v369, %v368
      %v418 = vunpack.c.l.b16 %v290
      %v419 = vunpack.c.l.b16 %v291
      %v420 = vunpack.c.l.b16 %v292
      %v421 = vunpack.c.l.b16 %v293
      %v422 = vunpack.c.l.b16 %v294
      %v423 = vunpack.c.l.b16 %v295
      %v424 = vunpack.c.l.b16 %v296
      %v425 = vunpack.c.l.b16 %v297
      %v426 = vunpack.c.l.b16 %v298
      %v427 = vunpack.c.l.b16 %v299
      %v428 = vunpack.c.l.b16 %v300
      %v429 = vunpack.c.l.b16 %v301
      %v430 = vunpack.c.l.b16 %v302
      %v431 = vunpack.c.l.b16 %v303
      %v432 = vunpack.c.l.b16 %v304
      %v433 = vunpack.c.l.b16 %v305
      %v434 = vpack.c.b16 %v419, %v418
      %v435 = vpack.c.b16 %v421, %v420
      %v436 = vpack.c.b16 %v423, %v422
      %v437 = vpack.c.b16 %v425, %v424
      %v438 = vpack.c.b16 %v427, %v426
      %v439 = vpack.c.b16 %v429, %v428
      %v440 = vpack.c.b16 %v431, %v430
      %v441 = vpack.c.b16 %v433, %v432
      %450 = vmatprep.subr.bf16.mxu0 0
      %451 = vmatpush1.bf16.msra.mxu0 %v434
      %452 = vmatprep.subr.bf16.mxu0 0
      %453 = vmatpush1.bf16.msra.mxu0 %v435
      %454 = vmatprep.subr.bf16.mxu0 0
      %455 = vmatpush1.bf16.msra.mxu0 %v436
      %456 = vmatprep.subr.bf16.mxu0 0
      %457 = vmatpush1.bf16.msra.mxu0 %v437
      %458 = vmatprep.subr.bf16.mxu0 0
      %459 = vmatpush1.bf16.msra.mxu0 %v438
      %460 = vmatprep.subr.bf16.mxu0 0
      %461 = vmatpush1.bf16.msra.mxu0 %v439
      %462 = vmatprep.subr.bf16.mxu0 0
      %463 = vmatpush1.bf16.msra.mxu0 %v440
      %464 = vmatprep.subr.bf16.mxu0 0
      %465 = vmatpush1.bf16.msra.mxu0 %v441
      %466 = vmatprep.subr.bf16.mxu0 0
      %467 = vmatpush1.bf16.msra.mxu0 0
      %468 = vmatprep.subr.bf16.mxu0 0
      %469 = vmatpush1.bf16.msra.mxu0 0
      %470 = vmatprep.subr.bf16.mxu0 0
      %471 = vmatpush1.bf16.msra.mxu0 0
      %472 = vmatprep.subr.bf16.mxu0 0
      %473 = vmatpush1.bf16.msra.mxu0 0
      %474 = vmatprep.subr.bf16.mxu0 0
      %475 = vmatpush1.bf16.msra.mxu0 0
      %476 = vmatprep.subr.bf16.mxu0 0
      %477 = vmatpush1.bf16.msra.mxu0 0
      %478 = vmatprep.subr.bf16.mxu0 0
      %479 = vmatpush1.bf16.msra.mxu0 0
      %480 = vmatprep.subr.bf16.mxu0 0
      %481 = vmatpush1.bf16.msra.mxu0 0
      %482 = vmatprep.mubr.bf16.mxu0 0
      %483 = vmatmul.mubr.bf16.gmra.mrb[0].mxu0 %v370
      %v484 = vpop.f32.mrb[0].mxu0
      %v485 = vadd.f32 0.0, %v484
      %v486 = vpop.f32.mrb[0].mxu0
      %v487 = vpop.f32.mrb[0].mxu0
      %v488 = vadd.f32 0.0, %v487
      %v489 = vpop.f32.mrb[0].mxu0
      %490 = vmatprep.mubr.bf16.mxu0 0
      %491 = vmatmul.mubr.bf16.gmra.mrb[0].mxu0 %v371
      %v492 = vpop.f32.mrb[0].mxu0
      %v493 = vadd.f32 0.0, %v492
      %v494 = vpop.f32.mrb[0].mxu0
      %v495 = vpop.f32.mrb[0].mxu0
      %v496 = vadd.f32 0.0, %v495
      %v497 = vpop.f32.mrb[0].mxu0
      %498 = vmatprep.mubr.bf16.mxu0 0
      %499 = vmatmul.mubr.bf16.gmra.mrb[0].mxu0 %v372
      %v500 = vpop.f32.mrb[0].mxu0
      %v501 = vadd.f32 0.0, %v500
      %v502 = vpop.f32.mrb[0].mxu0
      %v503 = vpop.f32.mrb[0].mxu0
      %v504 = vadd.f32 0.0, %v503
      %v505 = vpop.f32.mrb[0].mxu0
      %506 = vmatprep.mubr.bf16.mxu0 0
      %507 = vmatmul.mubr.bf16.gmra.mrb[0].mxu0 %v373
      %v508 = vpop.f32.mrb[0].mxu0
      %v509 = vadd.f32 0.0, %v508
      %v510 = vpop.f32.mrb[0].mxu0
      %v511 = vpop.f32.mrb[0].mxu0
      %v512 = vadd.f32 0.0, %v511
      %v513 = vpop.f32.mrb[0].mxu0
      %514 = vmatprep.mubr.bf16.mxu0 0
      %515 = vmatmul.mubr.bf16.gmra.mrb[0].mxu0 %v374
      %v516 = vpop.f32.mrb[0].mxu0
      %v517 = vadd.f32 0.0, %v516
      %v518 = vpop.f32.mrb[0].mxu0
      %v519 = vpop.f32.mrb[0].mxu0
      %v520 = vadd.f32 0.0, %v519
      %v521 = vpop.f32.mrb[0].mxu0
      %522 = vmatprep.mubr.bf16.mxu0 0
      %523 = vmatmul.mubr.bf16.gmra.mrb[0].mxu0 %v375
      %v524 = vpop.f32.mrb[0].mxu0
      %v525 = vadd.f32 0.0, %v524
      %v526 = vpop.f32.mrb[0].mxu0
      %v527 = vpop.f32.mrb[0].mxu0
      %v528 = vadd.f32 0.0, %v527
      %v529 = vpop.f32.mrb[0].mxu0
      %530 = vmatprep.mubr.bf16.mxu0 0
      %531 = vmatmul.mubr.bf16.gmra.mrb[0].mxu0 %v376
      %v532 = vpop.f32.mrb[0].mxu0
      %v533 = vadd.f32 0.0, %v532
      %v534 = vpop.f32.mrb[0].mxu0
      %v535 = vpop.f32.mrb[0].mxu0
      %v536 = vadd.f32 0.0, %v535
      %v537 = vpop.f32.mrb[0].mxu0
      %538 = vmatprep.mubr.bf16.mxu0 0
      %539 = vmatmul.mubr.bf16.gmra.mrb[0].mxu0 %v377
      %v540 = vpop.f32.mrb[0].mxu0
      %v541 = vadd.f32 0.0, %v540
      %v542 = vpop.f32.mrb[0].mxu0
      %v543 = vpop.f32.mrb[0].mxu0
      %v544 = vadd.f32 0.0, %v543
      %v545 = vpop.f32.mrb[0].mxu0
      %546 = vmatprep.mubr.bf16.mxu0 0
      %547 = vmatmul.mubr.bf16.gmra.mrb[0].mxu0 %v378
      %v548 = vpop.f32.mrb[0].mxu0
      %v549 = vadd.f32 0.0, %v548
      %v550 = vpop.f32.mrb[0].mxu0
      %v551 = vpop.f32.mrb[0].mxu0
      %v552 = vadd.f32 0.0, %v551
      %v553 = vpop.f32.mrb[0].mxu0
      %554 = vmatprep.mubr.bf16.mxu0 0
      %555 = vmatmul.mubr.bf16.gmra.mrb[0].mxu0 %v379
      %v556 = vpop.f32.mrb[0].mxu0
      %v557 = vadd.f32 0.0, %v556
      %v558 = vpop.f32.mrb[0].mxu0
      %v559 = vpop.f32.mrb[0].mxu0
      %v560 = vadd.f32 0.0, %v559
      %v561 = vpop.f32.mrb[0].mxu0
      %562 = vmatprep.mubr.bf16.mxu0 0
      %563 = vmatmul.mubr.bf16.gmra.mrb[0].mxu0 %v380
      %v564 = vpop.f32.mrb[0].mxu0
      %v565 = vadd.f32 0.0, %v564
      %v566 = vpop.f32.mrb[0].mxu0
      %v567 = vpop.f32.mrb[0].mxu0
      %v568 = vadd.f32 0.0, %v567
      %v569 = vpop.f32.mrb[0].mxu0
      %570 = vmatprep.mubr.bf16.mxu0 0
      %571 = vmatmul.mubr.bf16.gmra.mrb[0].mxu0 %v381
      %v572 = vpop.f32.mrb[0].mxu0
      %v573 = vadd.f32 0.0, %v572
      %v574 = vpop.f32.mrb[0].mxu0
      %v575 = vpop.f32.mrb[0].mxu0
      %v576 = vadd.f32 0.0, %v575
      %v577 = vpop.f32.mrb[0].mxu0
      %578 = vmatprep.mubr.bf16.mxu0 0
      %579 = vmatmul.mubr.bf16.gmra.mrb[0].mxu0 %v382
      %v580 = vpop.f32.mrb[0].mxu0
      %v581 = vadd.f32 0.0, %v580
      %v582 = vpop.f32.mrb[0].mxu0
      %v583 = vpop.f32.mrb[0].mxu0
      %v584 = vadd.f32 0.0, %v583
      %v585 = vpop.f32.mrb[0].mxu0
      %586 = vmatprep.mubr.bf16.mxu0 0
      %587 = vmatmul.mubr.bf16.gmra.mrb[0].mxu0 %v383
      %v588 = vpop.f32.mrb[0].mxu0
      %v589 = vadd.f32 0.0, %v588
      %v590 = vpop.f32.mrb[0].mxu0
      %v591 = vpop.f32.mrb[0].mxu0
      %v592 = vadd.f32 0.0, %v591
      %v593 = vpop.f32.mrb[0].mxu0
      %594 = vmatprep.mubr.bf16.mxu0 0
      %595 = vmatmul.mubr.bf16.gmra.mrb[0].mxu0 %v384
      %v596 = vpop.f32.mrb[0].mxu0
      %v597 = vadd.f32 0.0, %v596
      %v598 = vpop.f32.mrb[0].mxu0
      %v599 = vpop.f32.mrb[0].mxu0
      %v600 = vadd.f32 0.0, %v599
      %v601 = vpop.f32.mrb[0].mxu0
      %602 = vmatprep.mubr.bf16.mxu0 0
      %603 = vmatmul.mubr.bf16.gmra.mrb[0].mxu0 %v385
      %v604 = vpop.f32.mrb[0].mxu0
      %v605 = vadd.f32 0.0, %v604
      %v606 = vpop.f32.mrb[0].mxu0
      %v607 = vpop.f32.mrb[0].mxu0
      %v608 = vadd.f32 0.0, %v607
      %v609 = vpop.f32.mrb[0].mxu0
      %610 = vdwg.mxu0
      %v611 = vld [vmem:[%s2] sm:$0x1]
      %v613 = vlaneseq
      %v614 = vshrl.u32 %v613, 7
      %v615 = vsub.s32 0, %v614
      %v616 = vrot.slane %v611, %v615
      %v618 = vmul.f32 %v485, %v616
      %v619 = vmul.f32 %v488, %v616
      %v620 = vmul.f32 %v493, %v616
      %v621 = vmul.f32 %v496, %v616
      %v622 = vmul.f32 %v501, %v616
      %v623 = vmul.f32 %v504, %v616
      %v624 = vmul.f32 %v509, %v616
      %v625 = vmul.f32 %v512, %v616
      %v626 = vmul.f32 %v517, %v616
      %v627 = vmul.f32 %v520, %v616
      %v628 = vmul.f32 %v525, %v616
      %v629 = vmul.f32 %v528, %v616
      %v630 = vmul.f32 %v533, %v616
      %v631 = vmul.f32 %v536, %v616
      %v632 = vmul.f32 %v541, %v616
      %v633 = vmul.f32 %v544, %v616
      %v634 = vmul.f32 %v549, %v616
      %v635 = vmul.f32 %v552, %v616
      %v636 = vmul.f32 %v557, %v616
      %v637 = vmul.f32 %v560, %v616
      %v638 = vmul.f32 %v565, %v616
      %v639 = vmul.f32 %v568, %v616
      %v640 = vmul.f32 %v573, %v616
      %v641 = vmul.f32 %v576, %v616
      %v642 = vmul.f32 %v581, %v616
      %v643 = vmul.f32 %v584, %v616
      %v644 = vmul.f32 %v589, %v616
      %v645 = vmul.f32 %v592, %v616
      %v646 = vmul.f32 %v597, %v616
      %v647 = vmul.f32 %v600, %v616
      %v648 = vmul.f32 %v605, %v616
      %v649 = vmul.f32 %v608, %v616
      %v650 = vld [vmem:[%s3] sm:$0x1]
      %v652 = vlaneseq
      %v653 = vshrl.u32 %v652, 7
      %v654 = vsub.s32 0, %v653
      %v655 = vrot.slane %v650, %v654
      %v657 = vadd.f32 %v618, %v655
      %v658 = vadd.f32 %v619, %v655
      %v659 = vadd.f32 %v620, %v655
      %v660 = vadd.f32 %v621, %v655
      %v661 = vadd.f32 %v622, %v655
      %v662 = vadd.f32 %v623, %v655
      %v663 = vadd.f32 %v624, %v655
      %v664 = vadd.f32 %v625, %v655
      %v665 = vadd.f32 %v626, %v655
      %v666 = vadd.f32 %v627, %v655
      %v667 = vadd.f32 %v628, %v655
      %v668 = vadd.f32 %v629, %v655
      %v669 = vadd.f32 %v630, %v655
      %v670 = vadd.f32 %v631, %v655
      %v671 = vadd.f32 %v632, %v655
      %v672 = vadd.f32 %v633, %v655
      %v673 = vadd.f32 %v634, %v655
      %v674 = vadd.f32 %v635, %v655
      %v675 = vadd.f32 %v636, %v655
      %v676 = vadd.f32 %v637, %v655
      %v677 = vadd.f32 %v638, %v655
      %v678 = vadd.f32 %v639, %v655
      %v679 = vadd.f32 %v640, %v655
      %v680 = vadd.f32 %v641, %v655
      %v681 = vadd.f32 %v642, %v655
      %v682 = vadd.f32 %v643, %v655
      %v683 = vadd.f32 %v644, %v655
      %v684 = vadd.f32 %v645, %v655
      %v685 = vadd.f32 %v646, %v655
      %v686 = vadd.f32 %v647, %v655
      %v687 = vadd.f32 %v648, %v655
      %v688 = vadd.f32 %v649, %v655
      %v689 = vmax.f32 %v657, 0.0
      %v690 = vmax.f32 %v658, 0.0
      %v691 = vmax.f32 %v659, 0.0
      %v692 = vmax.f32 %v660, 0.0
      %v693 = vmax.f32 %v661, 0.0
      %v694 = vmax.f32 %v662, 0.0
      %v695 = vmax.f32 %v663, 0.0
      %v696 = vmax.f32 %v664, 0.0
      %v697 = vmax.f32 %v665, 0.0
      %v698 = vmax.f32 %v666, 0.0
      %v699 = vmax.f32 %v667, 0.0
      %v700 = vmax.f32 %v668, 0.0
      %v701 = vmax.f32 %v669, 0.0
      %v702 = vmax.f32 %v670, 0.0
      %v703 = vmax.f32 %v671, 0.0
      %v704 = vmax.f32 %v672, 0.0
      %v705 = vmax.f32 %v673, 0.0
      %v706 = vmax.f32 %v674, 0.0
      %v707 = vmax.f32 %v675, 0.0
      %v708 = vmax.f32 %v676, 0.0
      %v709 = vmax.f32 %v677, 0.0
      %v710 = vmax.f32 %v678, 0.0
      %v711 = vmax.f32 %v679, 0.0
      %v712 = vmax.f32 %v680, 0.0
      %v713 = vmax.f32 %v681, 0.0
      %v714 = vmax.f32 %v682, 0.0
      %v715 = vmax.f32 %v683, 0.0
      %v716 = vmax.f32 %v684, 0.0
      %v717 = vmax.f32 %v685, 0.0
      %v718 = vmax.f32 %v686, 0.0
      %v719 = vmax.f32 %v687, 0.0
      %v720 = vmax.f32 %v688, 0.0
      %v721 = vpack.c.bf16 %v690, %v689
      %v722 = vpack.c.bf16 %v692, %v691
      %v723 = vpack.c.bf16 %v694, %v693
      %v724 = vpack.c.bf16 %v696, %v695
      %v725 = vpack.c.bf16 %v698, %v697
      %v726 = vpack.c.bf16 %v700, %v699
      %v727 = vpack.c.bf16 %v702, %v701
      %v728 = vpack.c.bf16 %v704, %v703
      %v729 = vpack.c.bf16 %v706, %v705
      %v730 = vpack.c.bf16 %v708, %v707
      %v731 = vpack.c.bf16 %v710, %v709
      %v732 = vpack.c.bf16 %v712, %v711
      %v733 = vpack.c.bf16 %v714, %v713
      %v734 = vpack.c.bf16 %v716, %v715
      %v735 = vpack.c.bf16 %v718, %v717
      %v736 = vpack.c.bf16 %v720, %v719
      %v753 = vunpack.c.l.b16 %v721
      %v754 = vunpack.c.h.b16 %v721
      %v755 = vunpack.c.l.b16 %v722
      %v756 = vunpack.c.h.b16 %v722
      %v757 = vunpack.c.l.b16 %v723
      %v758 = vunpack.c.h.b16 %v723
      %v759 = vunpack.c.l.b16 %v724
      %v760 = vunpack.c.h.b16 %v724
      %v761 = vunpack.c.l.b16 %v725
      %v762 = vunpack.c.h.b16 %v725
      %v763 = vunpack.c.l.b16 %v726
      %v764 = vunpack.c.h.b16 %v726
      %v765 = vunpack.c.l.b16 %v727
      %v766 = vunpack.c.h.b16 %v727
      %v767 = vunpack.c.l.b16 %v728
      %v768 = vunpack.c.h.b16 %v728
      %v769 = vunpack.c.l.b16 %v729
      %v770 = vunpack.c.h.b16 %v729
      %v771 = vunpack.c.l.b16 %v730
      %v772 = vunpack.c.h.b16 %v730
      %v773 = vunpack.c.l.b16 %v731
      %v774 = vunpack.c.h.b16 %v731
      %v775 = vunpack.c.l.b16 %v732
      %v776 = vunpack.c.h.b16 %v732
      %v777 = vunpack.c.l.b16 %v733
      %v778 = vunpack.c.h.b16 %v733
      %v779 = vunpack.c.l.b16 %v734
      %v780 = vunpack.c.h.b16 %v734
      %v781 = vunpack.c.l.b16 %v735
      %v782 = vunpack.c.h.b16 %v735
      %v783 = vunpack.c.l.b16 %v736
      %v784 = vunpack.c.h.b16 %v736
      %v785 = vpack.c.b16 %v753, %v753
      %v786 = vpack.c.b16 %v754, %v754
      %v787 = vpack.c.b16 %v755, %v755
      %v788 = vpack.c.b16 %v756, %v756
      %v789 = vpack.c.b16 %v757, %v757
      %v790 = vpack.c.b16 %v758, %v758
      %v791 = vpack.c.b16 %v759, %v759
      %v792 = vpack.c.b16 %v760, %v760
      %v793 = vpack.c.b16 %v761, %v761
      %v794 = vpack.c.b16 %v762, %v762
      %v795 = vpack.c.b16 %v763, %v763
      %v796 = vpack.c.b16 %v764, %v764
      %v797 = vpack.c.b16 %v765, %v765
      %v798 = vpack.c.b16 %v766, %v766
      %v799 = vpack.c.b16 %v767, %v767
      %v800 = vpack.c.b16 %v768, %v768
      %v801 = vpack.c.b16 %v769, %v769
      %v802 = vpack.c.b16 %v770, %v770
      %v803 = vpack.c.b16 %v771, %v771
      %v804 = vpack.c.b16 %v772, %v772
      %v805 = vpack.c.b16 %v773, %v773
      %v806 = vpack.c.b16 %v774, %v774
      %v807 = vpack.c.b16 %v775, %v775
      %v808 = vpack.c.b16 %v776, %v776
      %v809 = vpack.c.b16 %v777, %v777
      %v810 = vpack.c.b16 %v778, %v778
      %v811 = vpack.c.b16 %v779, %v779
      %v812 = vpack.c.b16 %v780, %v780
      %v813 = vpack.c.b16 %v781, %v781
      %v814 = vpack.c.b16 %v782, %v782
      %v815 = vpack.c.b16 %v783, %v783
      %v816 = vpack.c.b16 %v784, %v784
      %849 = vst [vmem:[%s255] sm:$0xf] %v785
      %850 = vst [vmem:[%s255 + $0x4] sm:$0xf] %v786
      %851 = vst [vmem:[%s255 + $0x8] sm:$0xf] %v787
      %852 = vst [vmem:[%s255 + $0xc] sm:$0xf] %v788
      %853 = vst [vmem:[%s255 + $0x10] sm:$0xf] %v789
      %854 = vst [vmem:[%s255 + $0x14] sm:$0xf] %v790
      %855 = vst [vmem:[%s255 + $0x18] sm:$0xf] %v791
      %856 = vst [vmem:[%s255 + $0x1c] sm:$0xf] %v792
      %857 = vst [vmem:[%s255 + $0x20] sm:$0xf] %v793
      %858 = vst [vmem:[%s255 + $0x24] sm:$0xf] %v794
      %859 = vst [vmem:[%s255 + $0x28] sm:$0xf] %v795
      %860 = vst [vmem:[%s255 + $0x2c] sm:$0xf] %v796
      %861 = vst [vmem:[%s255 + $0x30] sm:$0xf] %v797
      %862 = vst [vmem:[%s255 + $0x34] sm:$0xf] %v798
      %863 = vst [vmem:[%s255 + $0x38] sm:$0xf] %v799
      %864 = vst [vmem:[%s255 + $0x3c] sm:$0xf] %v800
      %865 = vst [vmem:[%s255 + $0x40] sm:$0xf] %v801
      %866 = vst [vmem:[%s255 + $0x44] sm:$0xf] %v802
      %867 = vst [vmem:[%s255 + $0x48] sm:$0xf] %v803
      %868 = vst [vmem:[%s255 + $0x4c] sm:$0xf] %v804
      %869 = vst [vmem:[%s255 + $0x50] sm:$0xf] %v805
      %870 = vst [vmem:[%s255 + $0x54] sm:$0xf] %v806
      %871 = vst [vmem:[%s255 + $0x58] sm:$0xf] %v807
      %872 = vst [vmem:[%s255 + $0x5c] sm:$0xf] %v808
      %873 = vst [vmem:[%s255 + $0x60] sm:$0xf] %v809
      %874 = vst [vmem:[%s255 + $0x64] sm:$0xf] %v810
      %875 = vst [vmem:[%s255 + $0x68] sm:$0xf] %v811
      %876 = vst [vmem:[%s255 + $0x6c] sm:$0xf] %v812
      %877 = vst [vmem:[%s255 + $0x70] sm:$0xf] %v813
      %878 = vst [vmem:[%s255 + $0x74] sm:$0xf] %v814
      %879 = vst [vmem:[%s255 + $0x78] sm:$0xf] %v815
      %880 = vst [vmem:[%s255 + $0x7c] sm:$0xf] %v816
      %s881 = smul.u32 32, %s20
      %p882 = scmp.lt.s32.totalorder %s19, 0
      %s883 = scalar_select %p882, %s19, 0
      %p884 = scmp.lt.s32.totalorder %s881, 63
      %s885 = scalar_select %p884, %s881, 63
      %s886 = smul.addr %s883, 64
      %s887 = sadd.s32 %s885, %s886
      %s888 = smul.addr %s887, 4
      %s889 = scalar_lea.vmem %s4, %s888
      // Predicated region
      $region37: #{decoder_forward.16} parent=35 // pred_check
        %p890 = pneg %p143
      $region38: #{decoder_forward.16} parent=35 // pred_check_branch
        %892 = sbr.rel (%p890) target = $region40
      $region39: #{decoder_forward.16} parent=35 // pred_region
        %s893 = smul.u32 32, %s20
      $region40: #{decoder_forward.16} parent=35 // pred_fallthru
        _
    $region36: #{decoder_forward.16} parent=5 // pred_fallthru
      _
    %p894 = scmp.le.s32.totalorder 2, %s10
    // Predicated region
    $region41: #{decoder_forward.16} parent=5 // pred_check
      %p895 = pneg %p894
    $region42: #{decoder_forward.16} parent=5 // pred_check_branch
      %897 = sbr.rel (%p895) target = $region44
    $region43: #{decoder_forward.16} parent=5 // pred_region
      %s898 = ssub.s32 %s10, 2
      // Predicated region
      $region45: #{decoder_forward.16} parent=43 // pred_check
        %p899 = pneg %p149
      $region46: #{decoder_forward.16} parent=43 // pred_check_branch
        %901 = sbr.rel (%p899) target = $region48
      $region47: #{decoder_forward.16} parent=43 // pred_region
        %s902 = smul.u32 32, %s22
        %p903 = scmp.lt.s32.totalorder %s21, 0
        %s904 = scalar_select %p903, %s21, 0
        %p905 = scmp.lt.s32.totalorder %s902, 63
        %s906 = scalar_select %p905, %s902, 63
        %s907 = smul.addr %s904, 64
        %s908 = sadd.s32 %s906, %s907
        %s909 = smul.addr %s908, 4
        %s910 = scalar_lea.vmem %s4, %s909
      $region48: #{decoder_forward.16} parent=43 // pred_fallthru
        _
    $region44: #{decoder_forward.16} parent=5 // pred_fallthru
      _
  $region6: #{decoder_forward.16} parent=0 // loop_footer
    %s14 = sadd.s32 1, %s10
  $region7: #{decoder_forward.16} parent=0 // loop_footer_branch
    %9 = sbr.rel target = $region3
  $region8: #{decoder_forward.16} parent=0 // loop_exit
    _

// kernel: decoder_forward.17
$region0: #{decoder_forward.17}
  #allocation0 [shape = 'u32[]', space=smem, size = 0x4, offset = 0x4, fixed_abs, tag = 'smem constant byte address 0x4 - core index']
  #allocation1 [shape = 'u32[144,128]{1,0:T(1,128)}', space=vmem, size = 0x12000, scoped, tag = 'internal scratch']
  %s0 = inlined_call_operand.vmem [shape: bf16[1,512,256], index: 0, kind: input, shape index: {}]
  %s1 = inlined_call_operand.vmem [shape: bf16[1,256,128], index: 1, kind: input, shape index: {}]
  %s2 = inlined_call_operand.vmem [shape: f32[1,128], index: 2, kind: input, shape index: {}]
  %s3 = inlined_call_operand.vmem [shape: f32[1,128], index: 3, kind: input, shape index: {}]
  %s4 = inlined_call_operand.vmem [shape: f32[1,512,128], index: 4, kind: output, shape index: {}]
  %s5 = sld [smem:[#allocation0]]
  $region49: #{decoder_forward.17} parent=0
    _
  %s7 = ssub.s32 1, %s5
  %s8 = scalar_select 0, %s7, %s5
  loop: start=0, step=1, limit=4
  $region2: #{decoder_forward.17} parent=0 // loop_pre_header
    _
  $region3: #{decoder_forward.17} parent=0 // loop_header
    %s10 = sphi 0, %s14
    %p11 = scmp.ge.s32.totalorder %s10, 4
    %s17 = sphi 0, %s29
    %s18 = sphi 0, %s25
    %s19 = sphi 0, %s17
    %s20 = sphi 0, %s18
    %s21 = sphi 0, %s19
    %s22 = sphi 0, %s20
    %s34 = sphi 0, %s36
    %s37 = sphi 0, %s34
    %s38 = sphi 0, %s37
    %s54 = sphi 0, %s38
    %s60 = sphi 0, %s62
    %s63 = sphi 0, %s60
    %s64 = sphi 0, %s63
    %s80 = sphi 0, %s64
    %s84 = sphi 0, %s84
    %s86 = sphi 0, %s84
    %s87 = sphi 0, %s86
    %s101 = sphi 0, %s87
    %s105 = sphi 0, %s105
    %s107 = sphi 0, %s105
    %s108 = sphi 0, %s107
    %s122 = sphi 0, %s108
    %s130 = sphi 0, %s132
    %s133 = sphi 0, %s130
    %s134 = sphi 0, %s133
    %s150 = sphi 0, %s134
  $region4: #{decoder_forward.17} parent=0 // loop_header_branch
    %13 = sbr.rel (%p11) target = $region8
  $region5: #{decoder_forward.17} parent=0 // loop_body
    %s15 = ssub.s32 %s10, 1
    %s16 = ssub.s32 %s10, 2
    %s23 = sadd.s32 1, %s18
    %p24 = scmp.ge.s32.totalorder %s23, 2
    %s25 = scalar_select %p24, 0, %s23
    %s26 = sadd.s32 1, %s17
    %s27 = scalar_select %p24, %s26, %s17
    %p28 = scmp.ge.s32.totalorder %s27, 1
    %s29 = scalar_select %p28, 0, %s27
    %s30 = ssub.s32 %s17, %s29
    %s31 = ssub.s32 %s18, %s25
    %s32 = sor.u32 %s30, %s31
    %p33 = scmp.eq.s32.totalorder %s32, 0
    %s35 = sadd.s32 %s34, 1
    %s36 = scalar_select %p33, %s34, %s35
    %p39 = pneg %p33
    %p40 = scmp.eq.s32.totalorder %s10, 1
    %p41 = por %p39, %p40
    %p42 = scmp.ne.s32.totalorder %s34, %s37
    %p43 = scmp.eq.s32.totalorder %s10, 0
    %p44 = por %p42, %p43
    %p45 = scmp.ne.s32.totalorder %s34, %s37
    %p46 = scmp.eq.s32.totalorder %s15, 1
    %p47 = por %p45, %p46
    %p48 = scmp.ne.s32.totalorder %s37, %s38
    %p49 = scmp.eq.s32.totalorder %s15, 0
    %p50 = por %p48, %p49
    %p51 = scmp.ne.s32.totalorder %s37, %s38
    %p52 = scmp.eq.s32.totalorder %s16, 1
    %p53 = por %p51, %p52
    %p55 = scmp.ne.s32.totalorder %s38, %s54
    %p56 = scmp.eq.s32.totalorder %s16, 0
    %p57 = por %p55, %p56
    %s58 = ssub.s32 %s17, %s29
    %p59 = scmp.eq.s32.totalorder %s58, 0
    %s61 = sadd.s32 %s60, 1
    %s62 = scalar_select %p59, %s60, %s61
    %p65 = pneg %p59
    %p66 = scmp.eq.s32.totalorder %s10, 1
    %p67 = por %p65, %p66
    %p68 = scmp.ne.s32.totalorder %s60, %s63
    %p69 = scmp.eq.s32.totalorder %s10, 0
    %p70 = por %p68, %p69
    %p71 = scmp.ne.s32.totalorder %s60, %s63
    %p72 = scmp.eq.s32.totalorder %s15, 1
    %p73 = por %p71, %p72
    %p74 = scmp.ne.s32.totalorder %s63, %s64
    %p75 = scmp.eq.s32.totalorder %s15, 0
    %p76 = por %p74, %p75
    %p77 = scmp.ne.s32.totalorder %s63, %s64
    %p78 = scmp.eq.s32.totalorder %s16, 1
    %p79 = por %p77, %p78
    %p81 = scmp.ne.s32.totalorder %s64, %s80
    %p82 = scmp.eq.s32.totalorder %s16, 0
    %p83 = por %p81, %p82
    %s85 = sadd.s32 %s84, 1
    %p88 = scmp.eq.s32.totalorder %s10, 1
    %p89 = scmp.ne.s32.totalorder %s84, %s86
    %p90 = scmp.eq.s32.totalorder %s10, 0
    %p91 = por %p89, %p90
    %p92 = scmp.ne.s32.totalorder %s84, %s86
    %p93 = scmp.eq.s32.totalorder %s15, 1
    %p94 = por %p92, %p93
    %p95 = scmp.ne.s32.totalorder %s86, %s87
    %p96 = scmp.eq.s32.totalorder %s15, 0
    %p97 = por %p95, %p96
    %p98 = scmp.ne.s32.totalorder %s86, %s87
    %p99 = scmp.eq.s32.totalorder %s16, 1
    %p100 = por %p98, %p99
    %p102 = scmp.ne.s32.totalorder %s87, %s101
    %p103 = scmp.eq.s32.totalorder %s16, 0
    %p104 = por %p102, %p103
    %s106 = sadd.s32 %s105, 1
    %p109 = scmp.eq.s32.totalorder %s10, 1
    %p110 = scmp.ne.s32.totalorder %s105, %s107
    %p111 = scmp.eq.s32.totalorder %s10, 0
    %p112 = por %p110, %p111
    %p113 = scmp.ne.s32.totalorder %s105, %s107
    %p114 = scmp.eq.s32.totalorder %s15, 1
    %p115 = por %p113, %p114
    %p116 = scmp.ne.s32.totalorder %s107, %s108
    %p117 = scmp.eq.s32.totalorder %s15, 0
    %p118 = por %p116, %p117
    %p119 = scmp.ne.s32.totalorder %s107, %s108
    %p120 = scmp.eq.s32.totalorder %s16, 1
    %p121 = por %p119, %p120
    %p123 = scmp.ne.s32.totalorder %s108, %s122
    %p124 = scmp.eq.s32.totalorder %s16, 0
    %p125 = por %p123, %p124
    %s126 = ssub.s32 %s17, %s29
    %s127 = ssub.s32 %s18, %s25
    %s128 = sor.u32 %s126, %s127
    %p129 = scmp.eq.s32.totalorder %s128, 0
    %s131 = sadd.s32 %s130, 1
    %s132 = scalar_select %p129, %s130, %s131
    %p135 = pneg %p129
    %p136 = scmp.eq.s32.totalorder %s10, 1
    %p137 = por %p135, %p136
    %p138 = scmp.ne.s32.totalorder %s130, %s133
    %p139 = scmp.eq.s32.totalorder %s10, 0
    %p140 = por %p138, %p139
    %p141 = scmp.ne.s32.totalorder %s130, %s133
    %p142 = scmp.eq.s32.totalorder %s15, 1
    %p143 = por %p141, %p142
    %p144 = scmp.ne.s32.totalorder %s133, %s134
    %p145 = scmp.eq.s32.totalorder %s15, 0
    %p146 = por %p144, %p145
    %p147 = scmp.ne.s32.totalorder %s133, %s134
    %p148 = scmp.eq.s32.totalorder %s16, 1
    %p149 = por %p147, %p148
    %p151 = scmp.ne.s32.totalorder %s134, %s150
    %p152 = scmp.eq.s32.totalorder %s16, 0
    %p153 = por %p151, %p152
    %p154 = scmp.le.s32.totalorder 1, %s10
    %p155 = scmp.lt.s32.totalorder %s10, 3
    %p156 = pnand %p154, %p155
    %p157 = pneg %p156
    // Predicated region
    $region9: #{decoder_forward.17} parent=5 // pred_check
      _
    $region10: #{decoder_forward.17} parent=5 // pred_check_branch
      %159 = sbr.rel (%p156) target = $region12
    $region11: #{decoder_forward.17} parent=5 // pred_region
      %s160 = ssub.s32 %s10, 1
      // Predicated region
      $region13: #{decoder_forward.17} parent=11 // pred_check
        %p161 = pneg %p76
      $region14: #{decoder_forward.17} parent=11 // pred_check_branch
        %163 = sbr.rel (%p161) target = $region16
      $region15: #{decoder_forward.17} parent=11 // pred_region
        %p164 = scmp.lt.s32.totalorder %s19, 0
        %s165 = scalar_select %p164, %s19, 0
        %s166 = smul.addr %s165, 32
        %s167 = smul.addr %s166, 4
        %s168 = scalar_lea.vmem %s1, %s167
      $region16: #{decoder_forward.17} parent=11 // pred_fallthru
        _
      // Predicated region
      $region17: #{decoder_forward.17} parent=11 // pred_check
        %p169 = pneg %p97
      $region18: #{decoder_forward.17} parent=11 // pred_check_branch
        %171 = sbr.rel (%p169) target = $region20
      $region19: #{decoder_forward.17} parent=11 // pred_region
        _
      $region20: #{decoder_forward.17} parent=11 // pred_fallthru
        _
      // Predicated region
      $region21: #{decoder_forward.17} parent=11 // pred_check
        %p172 = pneg %p118
      $region22: #{decoder_forward.17} parent=11 // pred_check_branch
        %174 = sbr.rel (%p172) target = $region24
      $region23: #{decoder_forward.17} parent=11 // pred_region
        _
      $region24: #{decoder_forward.17} parent=11 // pred_fallthru
        _
    $region12: #{decoder_forward.17} parent=5 // pred_fallthru
      _
    %p175 = scmp.lt.s32.totalorder %s10, 2
    // Predicated region
    $region25: #{decoder_forward.17} parent=5 // pred_check
      %p176 = pneg %p175
    $region26: #{decoder_forward.17} parent=5 // pred_check_branch
      %178 = sbr.rel (%p176) target = $region28
    $region27: #{decoder_forward.17} parent=5 // pred_region
      // Predicated region
      $region29: #{decoder_forward.17} parent=27 // pred_check
        %p179 = pneg %p44
      $region30: #{decoder_forward.17} parent=27 // pred_check_branch
        %181 = sbr.rel (%p179) target = $region32
      $region31: #{decoder_forward.17} parent=27 // pred_region
        %s182 = smul.u32 32, %s18
        %p183 = scmp.lt.s32.totalorder %s17, 0
        %s184 = scalar_select %p183, %s17, 0
        %p185 = scmp.lt.s32.totalorder %s182, 63
        %s186 = scalar_select %p185, %s182, 63
        %s187 = smul.addr %s186, 2
        %s188 = smul.addr %s184, 128
        %s189 = sadd.s32 %s187, %s188
        %s190 = smul.addr %s189, 4
        %s191 = scalar_lea.vmem %s0, %s190
        %s192 = smul.u32 32, %s18
      $region32: #{decoder_forward.17} parent=27 // pred_fallthru
        _
    $region28: #{decoder_forward.17} parent=5 // pred_fallthru
      _
    %p193 = scmp.le.s32.totalorder 1, %s10
    %p194 = scmp.lt.s32.totalorder %s10, 3
    %p195 = pnand %p193, %p194
    %p196 = pneg %p195
    // Predicated region
    $region33: #{decoder_forward.17} parent=5 // pred_check
      _
    $region34: #{decoder_forward.17} parent=5 // pred_check_branch
      %198 = sbr.rel (%p195) target = $region36
    $region35: #{decoder_forward.17} parent=5 // pred_region
      %s199 = ssub.s32 %s10, 1
      %s200 = smul.u32 32, %s20
      %p201 = scmp.lt.s32.totalorder %s19, 0
      %s202 = scalar_select %p201, %s19, 0
      %p203 = scmp.lt.s32.totalorder %s200, 63
      %s204 = scalar_select %p203, %s200, 63
      %s205 = smul.addr %s204, 2
      %s206 = smul.addr %s202, 128
      %s207 = sadd.s32 %s205, %s206
      %s208 = smul.addr %s207, 4
      %s209 = scalar_lea.vmem %s0, %s208
      %p210 = pneg %p50
      %p211 = pneg %p47
      %p212 = scmp.lt.s32.totalorder %s19, 0
      %s213 = scalar_select %p212, %s19, 0
      %s214 = smul.addr %s213, 32
      %s215 = smul.addr %s214, 4
      %s216 = scalar_lea.vmem %s1, %s215
      %p217 = pneg %p76
      %p218 = pneg %p73
      %p219 = pneg %p97
      %p220 = pneg %p94
      %p221 = pneg %p118
      %p222 = pneg %p115
      %p223 = pneg %p146
      %p224 = pneg %p143
      %s225 = smul.u32 32, %s20
      %p226 = scmp.lt.s32.totalorder %s19, 0
      %s227 = scalar_select %p226, %s19, 0
      %p228 = scmp.lt.s32.totalorder %s225, 63
      %s229 = scalar_select %p228, %s225, 63
      %s230 = smul.addr %s227, 64
      %s231 = sadd.s32 %s229, %s230
      %s232 = smul.addr %s231, 8
      %s233 = scalar_lea.vmem %s4, %s232
      %s234 = smul.u32 32, %s20
      %p235 = scmp.lt.s32.totalorder %s19, 0
      %s236 = scalar_select %p235, %s19, 0
      %p237 = scmp.lt.s32.totalorder %s234, 63
      %s238 = scalar_select %p237, %s234, 63
      %s239 = smul.addr %s238, 2
      %s240 = smul.addr %s236, 128
      %s241 = sadd.s32 %s239, %s240
      %s242 = smul.addr %s241, 4
      %s243 = scalar_lea.vmem %s0, %s242
      %s244 = smul.u32 32, %s20
      %p245 = scmp.lt.s32.totalorder %s19, 0
      %s246 = scalar_select %p245, %s19, 0
      %s247 = smul.addr %s246, 32
      %s248 = smul.addr %s247, 4
      %s249 = scalar_lea.vmem %s1, %s248
      %s250 = smul.u32 32, %s20
      %p251 = scmp.lt.s32.totalorder %s19, 0
      %s252 = scalar_select %p251, %s19, 0
      %p253 = scmp.lt.s32.totalorder %s250, 63
      %s254 = scalar_select %p253, %s250, 63
      %s255 = smul.addr %s252, 64
      %s256 = sadd.s32 %s254, %s255
      %s257 = smul.addr %s256, 8
      %s258 = scalar_lea.vmem %s4, %s257
      %s259 = smul.u32 32, %s20
      %v261 = vld [vmem:[%s243] sm:$0xff]
      %v262 = vld [vmem:[%s243 + $0x8] sm:$0xff]
      %v263 = vld [vmem:[%s243 + $0x10] sm:$0xff]
      %v264 = vld [vmem:[%s243 + $0x18] sm:$0xff]
      %v265 = vld [vmem:[%s243 + $0x20] sm:$0xff]
      %v266 = vld [vmem:[%s243 + $0x28] sm:$0xff]
      %v267 = vld [vmem:[%s243 + $0x30] sm:$0xff]
      %v268 = vld [vmem:[%s243 + $0x38] sm:$0xff]
      %v269 = vld [vmem:[%s243 + $0x40] sm:$0xff]
      %v270 = vld [vmem:[%s243 + $0x48] sm:$0xff]
      %v271 = vld [vmem:[%s243 + $0x50] sm:$0xff]
      %v272 = vld [vmem:[%s243 + $0x58] sm:$0xff]
      %v273 = vld [vmem:[%s243 + $0x60] sm:$0xff]
      %v274 = vld [vmem:[%s243 + $0x68] sm:$0xff]
      %v275 = vld [vmem:[%s243 + $0x70] sm:$0xff]
      %v276 = vld [vmem:[%s243 + $0x78] sm:$0xff]
      %v277 = vld [vmem:[%s243 + $0x80] sm:$0xff]
      %v278 = vld [vmem:[%s243 + $0x88] sm:$0xff]
      %v279 = vld [vmem:[%s243 + $0x90] sm:$0xff]
      %v280 = vld [vmem:[%s243 + $0x98] sm:$0xff]
      %v281 = vld [vmem:[%s243 + $0xa0] sm:$0xff]
      %v282 = vld [vmem:[%s243 + $0xa8] sm:$0xff]
      %v283 = vld [vmem:[%s243 + $0xb0] sm:$0xff]
      %v284 = vld [vmem:[%s243 + $0xb8] sm:$0xff]
      %v285 = vld [vmem:[%s243 + $0xc0] sm:$0xff]
      %v286 = vld [vmem:[%s243 + $0xc8] sm:$0xff]
      %v287 = vld [vmem:[%s243 + $0xd0] sm:$0xff]
      %v288 = vld [vmem:[%s243 + $0xd8] sm:$0xff]
      %v289 = vld [vmem:[%s243 + $0xe0] sm:$0xff]
      %v290 = vld [vmem:[%s243 + $0xe8] sm:$0xff]
      %v291 = vld [vmem:[%s243 + $0xf0] sm:$0xff]
      %v292 = vld [vmem:[%s243 + $0xf8] sm:$0xff]
      %v293 = vld [vmem:[%s249] sm:$0xf]
      %v294 = vld [vmem:[%s249 + $0x4] sm:$0xf]
      %v295 = vld [vmem:[%s249 + $0x8] sm:$0xf]
      %v296 = vld [vmem:[%s249 + $0xc] sm:$0xf]
      %v297 = vld [vmem:[%s249 + $0x10] sm:$0xf]
      %v298 = vld [vmem:[%s249 + $0x14] sm:$0xf]
      %v299 = vld [vmem:[%s249 + $0x18] sm:$0xf]
      %v300 = vld [vmem:[%s249 + $0x1c] sm:$0xf]
      %v301 = vld [vmem:[%s249 + $0x20] sm:$0xf]
      %v302 = vld [vmem:[%s249 + $0x24] sm:$0xf]
      %v303 = vld [vmem:[%s249 + $0x28] sm:$0xf]
      %v304 = vld [vmem:[%s249 + $0x2c] sm:$0xf]
      %v305 = vld [vmem:[%s249 + $0x30] sm:$0xf]
      %v306 = vld [vmem:[%s249 + $0x34] sm:$0xf]
      %v307 = vld [vmem:[%s249 + $0x38] sm:$0xf]
      %v308 = vld [vmem:[%s249 + $0x3c] sm:$0xf]
      %v309 = vld [vmem:[%s249 + $0x40] sm:$0xf]
      %v310 = vld [vmem:[%s249 + $0x44] sm:$0xf]
      %v311 = vld [vmem:[%s249 + $0x48] sm:$0xf]
      %v312 = vld [vmem:[%s249 + $0x4c] sm:$0xf]
      %v313 = vld [vmem:[%s249 + $0x50] sm:$0xf]
      %v314 = vld [vmem:[%s249 + $0x54] sm:$0xf]
      %v315 = vld [vmem:[%s249 + $0x58] sm:$0xf]
      %v316 = vld [vmem:[%s249 + $0x5c] sm:$0xf]
      %v317 = vld [vmem:[%s249 + $0x60] sm:$0xf]
      %v318 = vld [vmem:[%s249 + $0x64] sm:$0xf]
      %v319 = vld [vmem:[%s249 + $0x68] sm:$0xf]
      %v320 = vld [vmem:[%s249 + $0x6c] sm:$0xf]
      %v321 = vld [vmem:[%s249 + $0x70] sm:$0xf]
      %v322 = vld [vmem:[%s249 + $0x74] sm:$0xf]
      %v323 = vld [vmem:[%s249 + $0x78] sm:$0xf]
      %v324 = vld [vmem:[%s249 + $0x7c] sm:$0xf]
      %v357 = vunpack.c.l.b16 %v261
      %v358 = vunpack.c.h.b16 %v261
      %v359 = vunpack.c.l.b16 %v262
      %v360 = vunpack.c.h.b16 %v262
      %v361 = vunpack.c.l.b16 %v263
      %v362 = vunpack.c.h.b16 %v263
      %v363 = vunpack.c.l.b16 %v264
      %v364 = vunpack.c.h.b16 %v264
      %v365 = vunpack.c.l.b16 %v265
      %v366 = vunpack.c.h.b16 %v265
      %v367 = vunpack.c.l.b16 %v266
      %v368 = vunpack.c.h.b16 %v266
      %v369 = vunpack.c.l.b16 %v267
      %v370 = vunpack.c.h.b16 %v267
      %v371 = vunpack.c.l.b16 %v268
      %v372 = vunpack.c.h.b16 %v268
      %v373 = vunpack.c.l.b16 %v269
      %v374 = vunpack.c.h.b16 %v269
      %v375 = vunpack.c.l.b16 %v270
      %v376 = vunpack.c.h.b16 %v270
      %v377 = vunpack.c.l.b16 %v271
      %v378 = vunpack.c.h.b16 %v271
      %v379 = vunpack.c.l.b16 %v272
      %v380 = vunpack.c.h.b16 %v272
      %v381 = vunpack.c.l.b16 %v273
      %v382 = vunpack.c.h.b16 %v273
      %v383 = vunpack.c.l.b16 %v274
      %v384 = vunpack.c.h.b16 %v274
      %v385 = vunpack.c.l.b16 %v275
      %v386 = vunpack.c.h.b16 %v275
      %v387 = vunpack.c.l.b16 %v276
      %v388 = vunpack.c.h.b16 %v276
      %v389 = vunpack.c.l.b16 %v277
      %v390 = vunpack.c.h.b16 %v277
      %v391 = vunpack.c.l.b16 %v278
      %v392 = vunpack.c.h.b16 %v278
      %v393 = vunpack.c.l.b16 %v279
      %v394 = vunpack.c.h.b16 %v279
      %v395 = vunpack.c.l.b16 %v280
      %v396 = vunpack.c.h.b16 %v280
      %v397 = vunpack.c.l.b16 %v281
      %v398 = vunpack.c.h.b16 %v281
      %v399 = vunpack.c.l.b16 %v282
      %v400 = vunpack.c.h.b16 %v282
      %v401 = vunpack.c.l.b16 %v283
      %v402 = vunpack.c.h.b16 %v283
      %v403 = vunpack.c.l.b16 %v284
      %v404 = vunpack.c.h.b16 %v284
      %v405 = vunpack.c.l.b16 %v285
      %v406 = vunpack.c.h.b16 %v285
      %v407 = vunpack.c.l.b16 %v286
      %v408 = vunpack.c.h.b16 %v286
      %v409 = vunpack.c.l.b16 %v287
      %v410 = vunpack.c.h.b16 %v287
      %v411 = vunpack.c.l.b16 %v288
      %v412 = vunpack.c.h.b16 %v288
      %v413 = vunpack.c.l.b16 %v289
      %v414 = vunpack.c.h.b16 %v289
      %v415 = vunpack.c.l.b16 %v290
      %v416 = vunpack.c.h.b16 %v290
      %v417 = vunpack.c.l.b16 %v291
      %v418 = vunpack.c.h.b16 %v291
      %v419 = vunpack.c.l.b16 %v292
      %v420 = vunpack.c.h.b16 %v292
      %v421 = vpack.c.b16 %v359, %v357
      %v422 = vpack.c.b16 %v360, %v358
      %v423 = vpack.c.b16 %v363, %v361
      %v424 = vpack.c.b16 %v364, %v362
      %v425 = vpack.c.b16 %v367, %v365
      %v426 = vpack.c.b16 %v368, %v366
      %v427 = vpack.c.b16 %v371, %v369
      %v428 = vpack.c.b16 %v372, %v370
      %v429 = vpack.c.b16 %v375, %v373
      %v430 = vpack.c.b16 %v376, %v374
      %v431 = vpack.c.b16 %v379, %v377
      %v432 = vpack.c.b16 %v380, %v378
      %v433 = vpack.c.b16 %v383, %v381
      %v434 = vpack.c.b16 %v384, %v382
      %v435 = vpack.c.b16 %v387, %v385
      %v436 = vpack.c.b16 %v388, %v386
      %v437 = vpack.c.b16 %v391, %v389
      %v438 = vpack.c.b16 %v392, %v390
      %v439 = vpack.c.b16 %v395, %v393
      %v440 = vpack.c.b16 %v396, %v394
      %v441 = vpack.c.b16 %v399, %v397
      %v442 = vpack.c.b16 %v400, %v398
      %v443 = vpack.c.b16 %v403, %v401
      %v444 = vpack.c.b16 %v404, %v402
      %v445 = vpack.c.b16 %v407, %v405
      %v446 = vpack.c.b16 %v408, %v406
      %v447 = vpack.c.b16 %v411, %v409
      %v448 = vpack.c.b16 %v412, %v410
      %v449 = vpack.c.b16 %v415, %v413
      %v450 = vpack.c.b16 %v416, %v414
      %v451 = vpack.c.b16 %v419, %v417
      %v452 = vpack.c.b16 %v420, %v418
      %v517 = vunpack.c.l.b16 %v293
      %v518 = vunpack.c.l.b16 %v294
      %v519 = vunpack.c.l.b16 %v295
      %v520 = vunpack.c.l.b16 %v296
      %v521 = vunpack.c.l.b16 %v297
      %v522 = vunpack.c.l.b16 %v298
      %v523 = vunpack.c.l.b16 %v299
      %v524 = vunpack.c.l.b16 %v300
      %v525 = vunpack.c.l.b16 %v301
      %v526 = vunpack.c.l.b16 %v302
      %v527 = vunpack.c.l.b16 %v303
      %v528 = vunpack.c.l.b16 %v304
      %v529 = vunpack.c.l.b16 %v305
      %v530 = vunpack.c.l.b16 %v306
      %v531 = vunpack.c.l.b16 %v307
      %v532 = vunpack.c.l.b16 %v308
      %v533 = vunpack.c.l.b16 %v309
      %v534 = vunpack.c.l.b16 %v310
      %v535 = vunpack.c.l.b16 %v311
      %v536 = vunpack.c.l.b16 %v312
      %v537 = vunpack.c.l.b16 %v313
      %v538 = vunpack.c.l.b16 %v314
      %v539 = vunpack.c.l.b16 %v315
      %v540 = vunpack.c.l.b16 %v316
      %v541 = vunpack.c.l.b16 %v317
      %v542 = vunpack.c.l.b16 %v318
      %v543 = vunpack.c.l.b16 %v319
      %v544 = vunpack.c.l.b16 %v320
      %v545 = vunpack.c.l.b16 %v321
      %v546 = vunpack.c.l.b16 %v322
      %v547 = vunpack.c.l.b16 %v323
      %v548 = vunpack.c.l.b16 %v324
      %v549 = vpack.c.b16 %v518, %v517
      %v550 = vpack.c.b16 %v520, %v519
      %v551 = vpack.c.b16 %v522, %v521
      %v552 = vpack.c.b16 %v524, %v523
      %v553 = vpack.c.b16 %v526, %v525
      %v554 = vpack.c.b16 %v528, %v527
      %v555 = vpack.c.b16 %v530, %v529
      %v556 = vpack.c.b16 %v532, %v531
      %v557 = vpack.c.b16 %v534, %v533
      %v558 = vpack.c.b16 %v536, %v535
      %v559 = vpack.c.b16 %v538, %v537
      %v560 = vpack.c.b16 %v540, %v539
      %v561 = vpack.c.b16 %v542, %v541
      %v562 = vpack.c.b16 %v544, %v543
      %v563 = vpack.c.b16 %v546, %v545
      %v564 = vpack.c.b16 %v548, %v547
      %581 = vmatprep.subr.bf16.mxu0 0
      %582 = vmatpush1.bf16.msra.mxu0 %v549
      %583 = vmatprep.subr.bf16.mxu0 0
      %584 = vmatpush1.bf16.msra.mxu0 %v550
      %585 = vmatprep.subr.bf16.mxu0 0
      %586 = vmatpush1.bf16.msra.mxu0 %v551
      %587 = vmatprep.subr.bf16.mxu0 0
      %588 = vmatpush1.bf16.msra.mxu0 %v552
      %589 = vmatprep.subr.bf16.mxu0 0
      %590 = vmatpush1.bf16.msra.mxu0 %v553
      %591 = vmatprep.subr.bf16.mxu0 0
      %592 = vmatpush1.bf16.msra.mxu0 %v554
      %593 = vmatprep.subr.bf16.mxu0 0
      %594 = vmatpush1.bf16.msra.mxu0 %v555
      %595 = vmatprep.subr.bf16.mxu0 0
      %596 = vmatpush1.bf16.msra.mxu0 %v556
      %597 = vmatprep.subr.bf16.mxu0 0
      %598 = vmatpush1.bf16.msra.mxu0 %v557
      %599 = vmatprep.subr.bf16.mxu0 0
      %600 = vmatpush1.bf16.msra.mxu0 %v558
      %601 = vmatprep.subr.bf16.mxu0 0
      %602 = vmatpush1.bf16.msra.mxu0 %v559
      %603 = vmatprep.subr.bf16.mxu0 0
      %604 = vmatpush1.bf16.msra.mxu0 %v560
      %605 = vmatprep.subr.bf16.mxu0 0
      %606 = vmatpush1.bf16.msra.mxu0 %v561
      %607 = vmatprep.subr.bf16.mxu0 0
      %608 = vmatpush1.bf16.msra.mxu0 %v562
      %609 = vmatprep.subr.bf16.mxu0 0
      %610 = vmatpush1.bf16.msra.mxu0 %v563
      %611 = vmatprep.subr.bf16.mxu0 0
      %612 = vmatpush1.bf16.msra.mxu0 %v564
      %613 = vmatprep.mubr.bf16.mxu0 %v422
      %614 = vmatmul.mubr.bf16.gmra.mrb[0].mxu0 %v421
      %v615 = vpop.f32.mrb[0].mxu0
      %v616 = vadd.f32 0.0, %v615
      %v617 = vpop.f32.mrb[0].mxu0
      %v618 = vpop.f32.mrb[0].mxu0
      %v619 = vadd.f32 0.0, %v618
      %v620 = vpop.f32.mrb[0].mxu0
      %621 = vmatprep.mubr.bf16.mxu0 %v424
      %622 = vmatmul.mubr.bf16.gmra.mrb[0].mxu0 %v423
      %v623 = vpop.f32.mrb[0].mxu0
      %v624 = vadd.f32 0.0, %v623
      %v625 = vpop.f32.mrb[0].mxu0
      %v626 = vpop.f32.mrb[0].mxu0
      %v627 = vadd.f32 0.0, %v626
      %v628 = vpop.f32.mrb[0].mxu0
      %629 = vmatprep.mubr.bf16.mxu0 %v426
      %630 = vmatmul.mubr.bf16.gmra.mrb[0].mxu0 %v425
      %v631 = vpop.f32.mrb[0].mxu0
      %v632 = vadd.f32 0.0, %v631
      %v633 = vpop.f32.mrb[0].mxu0
      %v634 = vpop.f32.mrb[0].mxu0
      %v635 = vadd.f32 0.0, %v634
      %v636 = vpop.f32.mrb[0].mxu0
      %637 = vmatprep.mubr.bf16.mxu0 %v428
      %638 = vmatmul.mubr.bf16.gmra.mrb[0].mxu0 %v427
      %v639 = vpop.f32.mrb[0].mxu0
      %v640 = vadd.f32 0.0, %v639
      %v641 = vpop.f32.mrb[0].mxu0
      %v642 = vpop.f32.mrb[0].mxu0
      %v643 = vadd.f32 0.0, %v642
      %v644 = vpop.f32.mrb[0].mxu0
      %645 = vmatprep.mubr.bf16.mxu0 %v430
      %646 = vmatmul.mubr.bf16.gmra.mrb[0].mxu0 %v429
      %v647 = vpop.f32.mrb[0].mxu0
      %v648 = vadd.f32 0.0, %v647
      %v649 = vpop.f32.mrb[0].mxu0
      %v650 = vpop.f32.mrb[0].mxu0
      %v651 = vadd.f32 0.0, %v650
      %v652 = vpop.f32.mrb[0].mxu0
      %653 = vmatprep.mubr.bf16.mxu0 %v432
      %654 = vmatmul.mubr.bf16.gmra.mrb[0].mxu0 %v431
      %v655 = vpop.f32.mrb[0].mxu0
      %v656 = vadd.f32 0.0, %v655
      %v657 = vpop.f32.mrb[0].mxu0
      %v658 = vpop.f32.mrb[0].mxu0
      %v659 = vadd.f32 0.0, %v658
      %v660 = vpop.f32.mrb[0].mxu0
      %661 = vmatprep.mubr.bf16.mxu0 %v434
      %662 = vmatmul.mubr.bf16.gmra.mrb[0].mxu0 %v433
      %v663 = vpop.f32.mrb[0].mxu0
      %v664 = vadd.f32 0.0, %v663
      %v665 = vpop.f32.mrb[0].mxu0
      %v666 = vpop.f32.mrb[0].mxu0
      %v667 = vadd.f32 0.0, %v666
      %v668 = vpop.f32.mrb[0].mxu0
      %669 = vmatprep.mubr.bf16.mxu0 %v436
      %670 = vmatmul.mubr.bf16.gmra.mrb[0].mxu0 %v435
      %v671 = vpop.f32.mrb[0].mxu0
      %v672 = vadd.f32 0.0, %v671
      %v673 = vpop.f32.mrb[0].mxu0
      %v674 = vpop.f32.mrb[0].mxu0
      %v675 = vadd.f32 0.0, %v674
      %v676 = vpop.f32.mrb[0].mxu0
      %677 = vmatprep.mubr.bf16.mxu0 %v438
      %678 = vmatmul.mubr.bf16.gmra.mrb[0].mxu0 %v437
      %v679 = vpop.f32.mrb[0].mxu0
      %v680 = vadd.f32 0.0, %v679
      %v681 = vpop.f32.mrb[0].mxu0
      %v682 = vpop.f32.mrb[0].mxu0
      %v683 = vadd.f32 0.0, %v682
      %v684 = vpop.f32.mrb[0].mxu0
      %685 = vmatprep.mubr.bf16.mxu0 %v440
      %686 = vmatmul.mubr.bf16.gmra.mrb[0].mxu0 %v439
      %v687 = vpop.f32.mrb[0].mxu0
      %v688 = vadd.f32 0.0, %v687
      %v689 = vpop.f32.mrb[0].mxu0
      %v690 = vpop.f32.mrb[0].mxu0
      %v691 = vadd.f32 0.0, %v690
      %v692 = vpop.f32.mrb[0].mxu0
      %693 = vmatprep.mubr.bf16.mxu0 %v442
      %694 = vmatmul.mubr.bf16.gmra.mrb[0].mxu0 %v441
      %v695 = vpop.f32.mrb[0].mxu0
      %v696 = vadd.f32 0.0, %v695
      %v697 = vpop.f32.mrb[0].mxu0
      %v698 = vpop.f32.mrb[0].mxu0
      %v699 = vadd.f32 0.0, %v698
      %v700 = vpop.f32.mrb[0].mxu0
      %701 = vmatprep.mubr.bf16.mxu0 %v444
      %702 = vmatmul.mubr.bf16.gmra.mrb[0].mxu0 %v443
      %v703 = vpop.f32.mrb[0].mxu0
      %v704 = vadd.f32 0.0, %v703
      %v705 = vpop.f32.mrb[0].mxu0
      %v706 = vpop.f32.mrb[0].mxu0
      %v707 = vadd.f32 0.0, %v706
      %v708 = vpop.f32.mrb[0].mxu0
      %709 = vmatprep.mubr.bf16.mxu0 %v446
      %710 = vmatmul.mubr.bf16.gmra.mrb[0].mxu0 %v445
      %v711 = vpop.f32.mrb[0].mxu0
      %v712 = vadd.f32 0.0, %v711
      %v713 = vpop.f32.mrb[0].mxu0
      %v714 = vpop.f32.mrb[0].mxu0
      %v715 = vadd.f32 0.0, %v714
      %v716 = vpop.f32.mrb[0].mxu0
      %717 = vmatprep.mubr.bf16.mxu0 %v448
      %718 = vmatmul.mubr.bf16.gmra.mrb[0].mxu0 %v447
      %v719 = vpop.f32.mrb[0].mxu0
      %v720 = vadd.f32 0.0, %v719
      %v721 = vpop.f32.mrb[0].mxu0
      %v722 = vpop.f32.mrb[0].mxu0
      %v723 = vadd.f32 0.0, %v722
      %v724 = vpop.f32.mrb[0].mxu0
      %725 = vmatprep.mubr.bf16.mxu0 %v450
      %726 = vmatmul.mubr.bf16.gmra.mrb[0].mxu0 %v449
      %v727 = vpop.f32.mrb[0].mxu0
      %v728 = vadd.f32 0.0, %v727
      %v729 = vpop.f32.mrb[0].mxu0
      %v730 = vpop.f32.mrb[0].mxu0
      %v731 = vadd.f32 0.0, %v730
      %v732 = vpop.f32.mrb[0].mxu0
      %733 = vmatprep.mubr.bf16.mxu0 %v452
      %734 = vmatmul.mubr.bf16.gmra.mrb[0].mxu0 %v451
      %v735 = vpop.f32.mrb[0].mxu0
      %v736 = vadd.f32 0.0, %v735
      %v737 = vpop.f32.mrb[0].mxu0
      %v738 = vpop.f32.mrb[0].mxu0
      %v739 = vadd.f32 0.0, %v738
      %v740 = vpop.f32.mrb[0].mxu0
      %741 = vdwg.mxu0
      %v742 = vld [vmem:[%s2] sm:$0x1]
      %v744 = vlaneseq
      %v745 = vshrl.u32 %v744, 7
      %v746 = vsub.s32 0, %v745
      %v747 = vrot.slane %v742, %v746
      %v749 = vmul.f32 %v616, %v747
      %v750 = vmul.f32 %v619, %v747
      %v751 = vmul.f32 %v624, %v747
      %v752 = vmul.f32 %v627, %v747
      %v753 = vmul.f32 %v632, %v747
      %v754 = vmul.f32 %v635, %v747
      %v755 = vmul.f32 %v640, %v747
      %v756 = vmul.f32 %v643, %v747
      %v757 = vmul.f32 %v648, %v747
      %v758 = vmul.f32 %v651, %v747
      %v759 = vmul.f32 %v656, %v747
      %v760 = vmul.f32 %v659, %v747
      %v761 = vmul.f32 %v664, %v747
      %v762 = vmul.f32 %v667, %v747
      %v763 = vmul.f32 %v672, %v747
      %v764 = vmul.f32 %v675, %v747
      %v765 = vmul.f32 %v680, %v747
      %v766 = vmul.f32 %v683, %v747
      %v767 = vmul.f32 %v688, %v747
      %v768 = vmul.f32 %v691, %v747
      %v769 = vmul.f32 %v696, %v747
      %v770 = vmul.f32 %v699, %v747
      %v771 = vmul.f32 %v704, %v747
      %v772 = vmul.f32 %v707, %v747
      %v773 = vmul.f32 %v712, %v747
      %v774 = vmul.f32 %v715, %v747
      %v775 = vmul.f32 %v720, %v747
      %v776 = vmul.f32 %v723, %v747
      %v777 = vmul.f32 %v728, %v747
      %v778 = vmul.f32 %v731, %v747
      %v779 = vmul.f32 %v736, %v747
      %v780 = vmul.f32 %v739, %v747
      %v781 = vld [vmem:[%s3] sm:$0x1]
      %v783 = vlaneseq
      %v784 = vshrl.u32 %v783, 7
      %v785 = vsub.s32 0, %v784
      %v786 = vrot.slane %v781, %v785
      %v788 = vadd.f32 %v749, %v786
      %v789 = vadd.f32 %v750, %v786
      %v790 = vadd.f32 %v751, %v786
      %v791 = vadd.f32 %v752, %v786
      %v792 = vadd.f32 %v753, %v786
      %v793 = vadd.f32 %v754, %v786
      %v794 = vadd.f32 %v755, %v786
      %v795 = vadd.f32 %v756, %v786
      %v796 = vadd.f32 %v757, %v786
      %v797 = vadd.f32 %v758, %v786
      %v798 = vadd.f32 %v759, %v786
      %v799 = vadd.f32 %v760, %v786
      %v800 = vadd.f32 %v761, %v786
      %v801 = vadd.f32 %v762, %v786
      %v802 = vadd.f32 %v763, %v786
      %v803 = vadd.f32 %v764, %v786
      %v804 = vadd.f32 %v765, %v786
      %v805 = vadd.f32 %v766, %v786
      %v806 = vadd.f32 %v767, %v786
      %v807 = vadd.f32 %v768, %v786
      %v808 = vadd.f32 %v769, %v786
      %v809 = vadd.f32 %v770, %v786
      %v810 = vadd.f32 %v771, %v786
      %v811 = vadd.f32 %v772, %v786
      %v812 = vadd.f32 %v773, %v786
      %v813 = vadd.f32 %v774, %v786
      %v814 = vadd.f32 %v775, %v786
      %v815 = vadd.f32 %v776, %v786
      %v816 = vadd.f32 %v777, %v786
      %v817 = vadd.f32 %v778, %v786
      %v818 = vadd.f32 %v779, %v786
      %v819 = vadd.f32 %v780, %v786
      %820 = vst [vmem:[%s258] sm:$0xff] %v788
      %821 = vst [vmem:[%s258 + $0x8] sm:$0xff] %v789
      %822 = vst [vmem:[%s258 + $0x10] sm:$0xff] %v790
      %823 = vst [vmem:[%s258 + $0x18] sm:$0xff] %v791
      %824 = vst [vmem:[%s258 + $0x20] sm:$0xff] %v792
      %825 = vst [vmem:[%s258 + $0x28] sm:$0xff] %v793
      %826 = vst [vmem:[%s258 + $0x30] sm:$0xff] %v794
      %827 = vst [vmem:[%s258 + $0x38] sm:$0xff] %v795
      %828 = vst [vmem:[%s258 + $0x40] sm:$0xff] %v796
      %829 = vst [vmem:[%s258 + $0x48] sm:$0xff] %v797
      %830 = vst [vmem:[%s258 + $0x50] sm:$0xff] %v798
      %831 = vst [vmem:[%s258 + $0x58] sm:$0xff] %v799
      %832 = vst [vmem:[%s258 + $0x60] sm:$0xff] %v800
      %833 = vst [vmem:[%s258 + $0x68] sm:$0xff] %v801
      %834 = vst [vmem:[%s258 + $0x70] sm:$0xff] %v802
      %835 = vst [vmem:[%s258 + $0x78] sm:$0xff] %v803
      %836 = vst [vmem:[%s258 + $0x80] sm:$0xff] %v804
      %837 = vst [vmem:[%s258 + $0x88] sm:$0xff] %v805
      %838 = vst [vmem:[%s258 + $0x90] sm:$0xff] %v806
      %839 = vst [vmem:[%s258 + $0x98] sm:$0xff] %v807
      %840 = vst [vmem:[%s258 + $0xa0] sm:$0xff] %v808
      %841 = vst [vmem:[%s258 + $0xa8] sm:$0xff] %v809
      %842 = vst [vmem:[%s258 + $0xb0] sm:$0xff] %v810
      %843 = vst [vmem:[%s258 + $0xb8] sm:$0xff] %v811
      %844 = vst [vmem:[%s258 + $0xc0] sm:$0xff] %v812
      %845 = vst [vmem:[%s258 + $0xc8] sm:$0xff] %v813
      %846 = vst [vmem:[%s258 + $0xd0] sm:$0xff] %v814
      %847 = vst [vmem:[%s258 + $0xd8] sm:$0xff] %v815
      %848 = vst [vmem:[%s258 + $0xe0] sm:$0xff] %v816
      %849 = vst [vmem:[%s258 + $0xe8] sm:$0xff] %v817
      %850 = vst [vmem:[%s258 + $0xf0] sm:$0xff] %v818
      %851 = vst [vmem:[%s258 + $0xf8] sm:$0xff] %v819
      %s852 = smul.u32 32, %s20
      %p853 = scmp.lt.s32.totalorder %s19, 0
      %s854 = scalar_select %p853, %s19, 0
      %p855 = scmp.lt.s32.totalorder %s852, 63
      %s856 = scalar_select %p855, %s852, 63
      %s857 = smul.addr %s854, 64
      %s858 = sadd.s32 %s856, %s857
      %s859 = smul.addr %s858, 8
      %s860 = scalar_lea.vmem %s4, %s859
      // Predicated region
      $region37: #{decoder_forward.17} parent=35 // pred_check
        %p861 = pneg %p143
      $region38: #{decoder_forward.17} parent=35 // pred_check_branch
        %863 = sbr.rel (%p861) target = $region40
      $region39: #{decoder_forward.17} parent=35 // pred_region
        %s864 = smul.u32 32, %s20
      $region40: #{decoder_forward.17} parent=35 // pred_fallthru
        _
    $region36: #{decoder_forward.17} parent=5 // pred_fallthru
      _
    %p865 = scmp.le.s32.totalorder 2, %s10
    // Predicated region
    $region41: #{decoder_forward.17} parent=5 // pred_check
      %p866 = pneg %p865
    $region42: #{decoder_forward.17} parent=5 // pred_check_branch
      %868 = sbr.rel (%p866) target = $region44
    $region43: #{decoder_forward.17} parent=5 // pred_region
      %s869 = ssub.s32 %s10, 2
      // Predicated region
      $region45: #{decoder_forward.17} parent=43 // pred_check
        %p870 = pneg %p149
      $region46: #{decoder_forward.17} parent=43 // pred_check_branch
        %872 = sbr.rel (%p870) target = $region48
      $region47: #{decoder_forward.17} parent=43 // pred_region
        %s873 = smul.u32 32, %s22
        %p874 = scmp.lt.s32.totalorder %s21, 0
        %s875 = scalar_select %p874, %s21, 0
        %p876 = scmp.lt.s32.totalorder %s873, 63
        %s877 = scalar_select %p876, %s873, 63
        %s878 = smul.addr %s875, 64
        %s879 = sadd.s32 %s877, %s878
        %s880 = smul.addr %s879, 8
        %s881 = scalar_lea.vmem %s4, %s880
      $region48: #{decoder_forward.17} parent=43 // pred_fallthru
        _
    $region44: #{decoder_forward.17} parent=5 // pred_fallthru
      _
  $region6: #{decoder_forward.17} parent=0 // loop_footer
    %s14 = sadd.s32 1, %s10
  $region7: #{decoder_forward.17} parent=0 // loop_footer_branch
    %9 = sbr.rel target = $region3
  $region8: #{decoder_forward.17} parent=0 // loop_exit
    _

</llo_original>
